<compile_context>
chip_gen: v5e
topology: v5e:2x2
jax: 0.10.0
libtpu: 0.0.40
codegen_flags: <defaults>
</compile_context>

<pallas_src>
import jax
import jax.numpy as jnp
from jax.experimental import pallas as pl
from jax.experimental.pallas import tpu as pltpu


# ---------------------------------------------------------------------------
# Fused Pallas kernel: one grid step == one sample, everything in VMEM.
# ---------------------------------------------------------------------------
def lenet_kernel(x_ref, w1k_ref, b1k_ref, w2k_ref, b2k_ref,
                 sel1_ref, sel2_ref,
                 w1f_ref, b1f_ref, w2f_ref, b2f_ref, w3f_ref, b3f_ref,
                 o_ref):
    f32 = jnp.float32
    x = x_ref[0]                                        # (26, 26, 1) NHWC, C=1

    # ---- conv1: 3x3 VALID, 1 -> 6 channels (shift-and-broadcast FMA on VPU)
    acc1 = jnp.zeros((24, 24, 6), f32)
    for dy in range(3):
        for dx in range(3):
            patch = x[dy:dy + 24, dx:dx + 24, :]        # (24, 24, 1)
            acc1 = acc1 + patch * w1k_ref[dy * 3 + dx, :]   # broadcast to 6 ch
    a1 = jnp.maximum(acc1 + b1k_ref[0, :], 0.0)         # (24, 24, 6)

    # ---- pool1: 2x2 / stride 2.  H: pairwise max over the leading dim.
    #      W: adjacent-pair max, then exact 0/1 selection matmul picks even w.
    hp1 = jnp.stack([jnp.maximum(a1[2 * i], a1[2 * i + 1]) for i in range(12)],
                    axis=0)                              # (12, 24, 6)
    tp1 = jnp.maximum(hp1[:, 0:23, :], hp1[:, 1:24, :])  # (12, 23, 6)
    sel1 = sel1_ref[...]                                 # (12, 23), one-hot rows
    p1 = jnp.stack(
        [jnp.dot(sel1, tp1[i], preferred_element_type=f32) for i in range(12)],
        axis=0)                                          # (12, 12, 6)

    # ---- conv2: 3x3 VALID, 6 -> 12 channels
    acc2 = jnp.zeros((10, 10, 12), f32)
    for dy in range(3):
        for dx in range(3):
            for ci in range(6):
                sl = p1[dy:dy + 10, dx:dx + 10, ci:ci + 1]       # (10, 10, 1)
                acc2 = acc2 + sl * w2k_ref[(dy * 3 + dx) * 6 + ci, :]
    a2 = jnp.maximum(acc2 + b2k_ref[0, :], 0.0)          # (10, 10, 12)

    # ---- pool2: 2x2 / stride 2
    hp2 = jnp.stack([jnp.maximum(a2[2 * i], a2[2 * i + 1]) for i in range(5)],
                    axis=0)                              # (5, 10, 12)
    tp2 = jnp.maximum(hp2[:, 0:9, :], hp2[:, 1:10, :])   # (5, 9, 12)
    sel2 = sel2_ref[...]                                 # (5, 9)
    p2 = jnp.stack(
        [jnp.dot(sel2, tp2[i], preferred_element_type=f32) for i in range(5)],
        axis=0)                                          # (5, 5, 12)

    # ---- fc1 (+ReLU): flatten order folded into w1f's row permutation,
    #      computed as 25 small (1,12)@(12,128) MXU matmuls summed in VMEM.
    h1 = b1f_ref[...]                                    # (1, 128), cols>=120 are 0
    for hh in range(5):
        for ww in range(5):
            h1 = h1 + jnp.dot(p2[hh, ww:ww + 1, :], w1f_ref[hh * 5 + ww],
                              preferred_element_type=f32)
    h1 = jnp.maximum(h1, 0.0)

    # ---- fc2 (+ReLU), fc3, log_softmax (10 real logits, no padding)
    h2 = jnp.maximum(
        jnp.dot(h1, w2f_ref[...], preferred_element_type=f32) + b2f_ref[...], 0.0)
    logits = jnp.dot(h2, w3f_ref[...], preferred_element_type=f32) + b3f_ref[...]
    m = jnp.max(logits, axis=-1, keepdims=True)
    s = logits - m
    lse = jnp.log(jnp.sum(jnp.exp(s), axis=-1, keepdims=True))
    o_ref[0] = s - lse                                   # (1, 10)


# ---------------------------------------------------------------------------
# One-time weight packing (permutations / 128-lane padding done outside jit)
# ---------------------------------------------------------------------------
def pack_params(p):
    f32 = jnp.float32
    # conv1 (6,1,3,3) -> rows (dy*3+dx), cols cout
    w1k = jnp.transpose(p["conv1_w"], (2, 3, 1, 0)).reshape(9, 6).astype(f32)
    b1k = p["conv1_b"].reshape(1, 6).astype(f32)
    # conv2 (12,6,3,3) -> rows ((dy*3+dx)*6+ci), cols cout
    w2k = jnp.transpose(p["conv2_w"], (2, 3, 1, 0)).reshape(54, 12).astype(f32)
    b2k = p["conv2_b"].reshape(1, 12).astype(f32)
    # fc1 (120, 300) with PyTorch flatten order f = c*25 + h*5 + w
    #   -> (25 spatial blocks, 12 channels, 120->128 outputs)
    w1f = p["fc1_w"].reshape(120, 12, 5, 5)              # (out, c, h, w)
    w1f = jnp.transpose(w1f, (2, 3, 1, 0)).reshape(25, 12, 120)
    w1f = jnp.pad(w1f, ((0, 0), (0, 0), (0, 8))).astype(f32)      # (25,12,128)
    b1f = jnp.pad(p["fc1_b"], (0, 8)).reshape(1, 128).astype(f32)
    # fc2 (84,120) -> (128,128), fc3 (10,84) -> (128,10): zero-padded, so the
    # padded activation lanes stay exactly zero and never contaminate results.
    w2f = jnp.pad(p["fc2_w"].T, ((0, 8), (0, 44))).astype(f32)    # (128,128)
    b2f = jnp.pad(p["fc2_b"], (0, 44)).reshape(1, 128).astype(f32)
    w3f = jnp.pad(p["fc3_w"].T, ((0, 44), (0, 0))).astype(f32)    # (128,10)
    b3f = p["fc3_b"].reshape(1, 10).astype(f32)
    # exact 0/1 even-index selection matrices used by the in-kernel max-pools
    sel1 = (jnp.arange(23)[None, :] == (2 * jnp.arange(12))[:, None]).astype(f32)
    sel2 = (jnp.arange(9)[None, :] == (2 * jnp.arange(5))[:, None]).astype(f32)
    return dict(w1k=w1k, b1k=b1k, w2k=w2k, b2k=b2k, sel1=sel1, sel2=sel2,
                w1f=w1f, b1f=b1f, w2f=w2f, b2f=b2f, w3f=w3f, b3f=b3f)


# ---------------------------------------------------------------------------
# Forward wrapper: single pallas_call, grid over batch ("parallel" for v7x)
# ---------------------------------------------------------------------------
def lenet_forward_fn(x_nchw, pk):
    n = x_nchw.shape[0]
    assert x_nchw.shape[1:] == (1, 26, 26)
    # Cin == 1, so NCHW -> NHWC is a pure (free) reshape.
    x = x_nchw.astype(jnp.float32).reshape(n, 26, 26, 1)

    out = pl.pallas_call(
        lenet_kernel,
        out_shape=jax.ShapeDtypeStruct((n, 1, 10), jnp.float32),
        grid_spec=pltpu.PrefetchScalarGridSpec(
            num_scalar_prefetch=0,
            grid=(n,),
            in_specs=[
                pl.BlockSpec((1, 26, 26, 1), lambda i: (i, 0, 0, 0)),
                pl.BlockSpec((9, 6), lambda i: (0, 0)),
                pl.BlockSpec((1, 6), lambda i: (0, 0)),
                pl.BlockSpec((54, 12), lambda i: (0, 0)),
                pl.BlockSpec((1, 12), lambda i: (0, 0)),
                pl.BlockSpec((12, 23), lambda i: (0, 0)),
                pl.BlockSpec((5, 9), lambda i: (0, 0)),
                pl.BlockSpec((25, 12, 128), lambda i: (0, 0, 0)),
                pl.BlockSpec((1, 128), lambda i: (0, 0)),
                pl.BlockSpec((128, 128), lambda i: (0, 0)),
                pl.BlockSpec((1, 128), lambda i: (0, 0)),
                pl.BlockSpec((128, 10), lambda i: (0, 0)),
                pl.BlockSpec((1, 10), lambda i: (0, 0)),
            ],
            out_specs=pl.BlockSpec((1, 1, 10), lambda i: (i, 0, 0)),
        ),
        compiler_params=pltpu.CompilerParams(
            dimension_semantics=("parallel",)),
    )(x, pk["w1k"], pk["b1k"], pk["w2k"], pk["b2k"], pk["sel1"], pk["sel2"],
      pk["w1f"], pk["b1f"], pk["w2f"], pk["b2f"], pk["w3f"], pk["b3f"])
    return out.reshape(n, 10)


lenet_forward = jax.jit(lenet_forward_fn)


# ---------------------------------------------------------------------------
# Pure-JAX reference (PyTorch semantics) for a correctness check
# ---------------------------------------------------------------------------
def lenet_reference(x_nchw, p):
    x = x_nchw.astype(jnp.float32)

    def conv(x, w, b):
        y = jax.lax.conv_general_dilated(
            x, w, (1, 1), "VALID",
            dimension_numbers=("NCHW", "OIHW", "NCHW"))
        return jax.nn.relu(y + b[None, :, None, None])

    def pool(x):
        return jax.lax.reduce_window(x, -jnp.inf, jax.lax.max,
                                     (1, 1, 2, 2), (1, 1, 2, 2), "VALID")

    x = pool(conv(x, p["conv1_w"], p["conv1_b"]))
    x = pool(conv(x, p["conv2_w"], p["conv2_b"]))
    n = x.shape[0]
    x = x.reshape(n, -1)                                  # (C,H,W) flatten order
    x = jax.nn.relu(x @ p["fc1_w"].T + p["fc1_b"])
    x = jax.nn.relu(x @ p["fc2_w"].T + p["fc2_b"])
    x = x @ p["fc3_w"].T + p["fc3_b"]
    return jax.nn.log_softmax(x, axis=-1)


# ---------------------------------------------------------------------------
# Deterministic PyTorch-layout parameter init (uniform(+-1/sqrt(fan_in)))
# ---------------------------------------------------------------------------
def init_params(key):
    def u(k, shape, fan_in):
        bound = 1.0 / (fan_in ** 0.5)
        return jax.random.uniform(k, shape, jnp.float32, -bound, bound)

    ks = jax.random.split(key, 10)
    return {
        "conv1_w": u(ks[0], (6, 1, 3, 3), 9),
        "conv1_b": u(ks[1], (6,), 9),
        "conv2_w": u(ks[2], (12, 6, 3, 3), 54),
        "conv2_b": u(ks[3], (12,), 54),
        "fc1_w": u(ks[4], (120, 300), 300),
        "fc1_b": u(ks[5], (120,), 300),
        "fc2_w": u(ks[6], (84, 120), 120),
        "fc2_b": u(ks[7], (84,), 120),
        "fc3_w": u(ks[8], (10, 84), 84),
        "fc3_b": u(ks[9], (10,), 84),
    }


if __name__ == "__main__":
    root = jax.random.PRNGKey(0)
    k_params, k_x = jax.random.split(root)
    params = init_params(k_params)
    packed = pack_params(params)

    # 26x26 single-channel input => 5x5x12 => fc1 in = 300 (matches nn.Linear(12*5*5, 120))
    x = jax.random.normal(k_x, (2, 1, 26, 26), dtype=jnp.float32)

    out = jax.block_until_ready(lenet_forward(x, packed))
    ref = jax.block_until_ready(lenet_reference(x, params))

    assert out.shape == (2, 10)
    # log_softmax rows must exponentiate-sum to ~1
    assert bool(jnp.all(jnp.abs(jnp.sum(jnp.exp(out), axis=1) - 1.0) < 1e-4))
    # match the pure-JAX (PyTorch-semantics) reference
    assert bool(jnp.allclose(out, ref, atol=1e-3, rtol=1e-3)), (out, ref)
    print("KERNEL_OK")
</pallas_src>

<mosaic_0001>
module attributes {stable_mosaic.version = 11 : i64} {
  func.func @lenet_kernel(%arg0: i32, %arg1: memref<1x26x26x1xf32, #tpu.memory_space<vmem>>, %arg2: memref<9x6xf32, #tpu.memory_space<vmem>>, %arg3: memref<1x6xf32, #tpu.memory_space<vmem>>, %arg4: memref<54x12xf32, #tpu.memory_space<vmem>>, %arg5: memref<1x12xf32, #tpu.memory_space<vmem>>, %arg6: memref<12x23xf32, #tpu.memory_space<vmem>>, %arg7: memref<5x9xf32, #tpu.memory_space<vmem>>, %arg8: memref<25x12x128xf32, #tpu.memory_space<vmem>>, %arg9: memref<1x128xf32, #tpu.memory_space<vmem>>, %arg10: memref<128x128xf32, #tpu.memory_space<vmem>>, %arg11: memref<1x128xf32, #tpu.memory_space<vmem>>, %arg12: memref<128x10xf32, #tpu.memory_space<vmem>>, %arg13: memref<1x10xf32, #tpu.memory_space<vmem>>, %arg14: memref<1x1x10xf32, #tpu.memory_space<vmem>>) attributes {dimension_semantics = [#tpu.dimension_semantics<parallel>], iteration_bounds = array<i64: 2>, scalar_prefetch = 0 : i64, scratch_operands = 0 : i64, tpu.core_type = #tpu.core_type<tc>, window_params = [{transform_indices = @transform_0, window_bounds = array<i64: 1, 26, 26, 1>}, {pipeline_mode = #tpu.pipeline_mode<synchronous>, transform_indices = @transform_1, window_bounds = array<i64: 9, 6>}, {pipeline_mode = #tpu.pipeline_mode<synchronous>, transform_indices = @transform_2, window_bounds = array<i64: 1, 6>}, {pipeline_mode = #tpu.pipeline_mode<synchronous>, transform_indices = @transform_3, window_bounds = array<i64: 54, 12>}, {pipeline_mode = #tpu.pipeline_mode<synchronous>, transform_indices = @transform_4, window_bounds = array<i64: 1, 12>}, {pipeline_mode = #tpu.pipeline_mode<synchronous>, transform_indices = @transform_5, window_bounds = array<i64: 12, 23>}, {pipeline_mode = #tpu.pipeline_mode<synchronous>, transform_indices = @transform_6, window_bounds = array<i64: 5, 9>}, {pipeline_mode = #tpu.pipeline_mode<synchronous>, transform_indices = @transform_7, window_bounds = array<i64: 25, 12, 128>}, {pipeline_mode = #tpu.pipeline_mode<synchronous>, transform_indices = @transform_8, window_bounds = array<i64: 1, 128>}, {pipeline_mode = #tpu.pipeline_mode<synchronous>, transform_indices = @transform_9, window_bounds = array<i64: 128, 128>}, {pipeline_mode = #tpu.pipeline_mode<synchronous>, transform_indices = @transform_10, window_bounds = array<i64: 1, 128>}, {pipeline_mode = #tpu.pipeline_mode<synchronous>, transform_indices = @transform_11, window_bounds = array<i64: 128, 10>}, {pipeline_mode = #tpu.pipeline_mode<synchronous>, transform_indices = @transform_12, window_bounds = array<i64: 1, 10>}, {transform_indices = @transform_13, window_bounds = array<i64: 1, 1, 10>}]} {
    %c0 = arith.constant 0 : index
    %c0_0 = arith.constant 0 : index
    %c0_1 = arith.constant 0 : index
    %c0_2 = arith.constant 0 : index
    %0 = vector.load %arg1[%c0, %c0_0, %c0_1, %c0_2] : memref<1x26x26x1xf32, #tpu.memory_space<vmem>>, vector<1x26x26x1xf32>
    %1 = vector.shape_cast %0 : vector<1x26x26x1xf32> to vector<26x26x1xf32>
    %cst = arith.constant 0.000000e+00 : f32
    %2 = vector.broadcast %cst : f32 to vector<24x24x6xf32>
    %3 = vector.extract_strided_slice %1 {offsets = [0, 0, 0], sizes = [24, 24, 1], strides = [1, 1, 1]} : vector<26x26x1xf32> to vector<24x24x1xf32>
    %c0_3 = arith.constant 0 : index
    %c0_4 = arith.constant 0 : index
    %4 = vector.load %arg2[%c0_3, %c0_4] : memref<9x6xf32, #tpu.memory_space<vmem>>, vector<1x6xf32>
    %5 = vector.shape_cast %4 : vector<1x6xf32> to vector<6xf32>
    %6 = vector.shape_cast %5 : vector<6xf32> to vector<1x1x6xf32>
    %7 = vector.broadcast %3 : vector<24x24x1xf32> to vector<24x24x6xf32>
    %8 = vector.broadcast %6 : vector<1x1x6xf32> to vector<24x24x6xf32>
    %9 = arith.mulf %7, %8 : vector<24x24x6xf32>
    %10 = arith.addf %2, %9 : vector<24x24x6xf32>
    %11 = vector.extract_strided_slice %1 {offsets = [0, 1, 0], sizes = [24, 24, 1], strides = [1, 1, 1]} : vector<26x26x1xf32> to vector<24x24x1xf32>
    %c1 = arith.constant 1 : index
    %c0_5 = arith.constant 0 : index
    %12 = vector.load %arg2[%c1, %c0_5] : memref<9x6xf32, #tpu.memory_space<vmem>>, vector<1x6xf32>
    %13 = vector.shape_cast %12 : vector<1x6xf32> to vector<6xf32>
    %14 = vector.shape_cast %13 : vector<6xf32> to vector<1x1x6xf32>
    %15 = vector.broadcast %11 : vector<24x24x1xf32> to vector<24x24x6xf32>
    %16 = vector.broadcast %14 : vector<1x1x6xf32> to vector<24x24x6xf32>
    %17 = arith.mulf %15, %16 : vector<24x24x6xf32>
    %18 = arith.addf %10, %17 : vector<24x24x6xf32>
    %19 = vector.extract_strided_slice %1 {offsets = [0, 2, 0], sizes = [24, 24, 1], strides = [1, 1, 1]} : vector<26x26x1xf32> to vector<24x24x1xf32>
    %c2 = arith.constant 2 : index
    %c0_6 = arith.constant 0 : index
    %20 = vector.load %arg2[%c2, %c0_6] : memref<9x6xf32, #tpu.memory_space<vmem>>, vector<1x6xf32>
    %21 = vector.shape_cast %20 : vector<1x6xf32> to vector<6xf32>
    %22 = vector.shape_cast %21 : vector<6xf32> to vector<1x1x6xf32>
    %23 = vector.broadcast %19 : vector<24x24x1xf32> to vector<24x24x6xf32>
    %24 = vector.broadcast %22 : vector<1x1x6xf32> to vector<24x24x6xf32>
    %25 = arith.mulf %23, %24 : vector<24x24x6xf32>
    %26 = arith.addf %18, %25 : vector<24x24x6xf32>
    %27 = vector.extract_strided_slice %1 {offsets = [1, 0, 0], sizes = [24, 24, 1], strides = [1, 1, 1]} : vector<26x26x1xf32> to vector<24x24x1xf32>
    %c3 = arith.constant 3 : index
    %c0_7 = arith.constant 0 : index
    %28 = vector.load %arg2[%c3, %c0_7] : memref<9x6xf32, #tpu.memory_space<vmem>>, vector<1x6xf32>
    %29 = vector.shape_cast %28 : vector<1x6xf32> to vector<6xf32>
    %30 = vector.shape_cast %29 : vector<6xf32> to vector<1x1x6xf32>
    %31 = vector.broadcast %27 : vector<24x24x1xf32> to vector<24x24x6xf32>
    %32 = vector.broadcast %30 : vector<1x1x6xf32> to vector<24x24x6xf32>
    %33 = arith.mulf %31, %32 : vector<24x24x6xf32>
    %34 = arith.addf %26, %33 : vector<24x24x6xf32>
    %35 = vector.extract_strided_slice %1 {offsets = [1, 1, 0], sizes = [24, 24, 1], strides = [1, 1, 1]} : vector<26x26x1xf32> to vector<24x24x1xf32>
    %c4 = arith.constant 4 : index
    %c0_8 = arith.constant 0 : index
    %36 = vector.load %arg2[%c4, %c0_8] : memref<9x6xf32, #tpu.memory_space<vmem>>, vector<1x6xf32>
    %37 = vector.shape_cast %36 : vector<1x6xf32> to vector<6xf32>
    %38 = vector.shape_cast %37 : vector<6xf32> to vector<1x1x6xf32>
    %39 = vector.broadcast %35 : vector<24x24x1xf32> to vector<24x24x6xf32>
    %40 = vector.broadcast %38 : vector<1x1x6xf32> to vector<24x24x6xf32>
    %41 = arith.mulf %39, %40 : vector<24x24x6xf32>
    %42 = arith.addf %34, %41 : vector<24x24x6xf32>
    %43 = vector.extract_strided_slice %1 {offsets = [1, 2, 0], sizes = [24, 24, 1], strides = [1, 1, 1]} : vector<26x26x1xf32> to vector<24x24x1xf32>
    %c5 = arith.constant 5 : index
    %c0_9 = arith.constant 0 : index
    %44 = vector.load %arg2[%c5, %c0_9] : memref<9x6xf32, #tpu.memory_space<vmem>>, vector<1x6xf32>
    %45 = vector.shape_cast %44 : vector<1x6xf32> to vector<6xf32>
    %46 = vector.shape_cast %45 : vector<6xf32> to vector<1x1x6xf32>
    %47 = vector.broadcast %43 : vector<24x24x1xf32> to vector<24x24x6xf32>
    %48 = vector.broadcast %46 : vector<1x1x6xf32> to vector<24x24x6xf32>
    %49 = arith.mulf %47, %48 : vector<24x24x6xf32>
    %50 = arith.addf %42, %49 : vector<24x24x6xf32>
    %51 = vector.extract_strided_slice %1 {offsets = [2, 0, 0], sizes = [24, 24, 1], strides = [1, 1, 1]} : vector<26x26x1xf32> to vector<24x24x1xf32>
    %c6 = arith.constant 6 : index
    %c0_10 = arith.constant 0 : index
    %52 = vector.load %arg2[%c6, %c0_10] : memref<9x6xf32, #tpu.memory_space<vmem>>, vector<1x6xf32>
    %53 = vector.shape_cast %52 : vector<1x6xf32> to vector<6xf32>
    %54 = vector.shape_cast %53 : vector<6xf32> to vector<1x1x6xf32>
    %55 = vector.broadcast %51 : vector<24x24x1xf32> to vector<24x24x6xf32>
    %56 = vector.broadcast %54 : vector<1x1x6xf32> to vector<24x24x6xf32>
    %57 = arith.mulf %55, %56 : vector<24x24x6xf32>
    %58 = arith.addf %50, %57 : vector<24x24x6xf32>
    %59 = vector.extract_strided_slice %1 {offsets = [2, 1, 0], sizes = [24, 24, 1], strides = [1, 1, 1]} : vector<26x26x1xf32> to vector<24x24x1xf32>
    %c7 = arith.constant 7 : index
    %c0_11 = arith.constant 0 : index
    %60 = vector.load %arg2[%c7, %c0_11] : memref<9x6xf32, #tpu.memory_space<vmem>>, vector<1x6xf32>
    %61 = vector.shape_cast %60 : vector<1x6xf32> to vector<6xf32>
    %62 = vector.shape_cast %61 : vector<6xf32> to vector<1x1x6xf32>
    %63 = vector.broadcast %59 : vector<24x24x1xf32> to vector<24x24x6xf32>
    %64 = vector.broadcast %62 : vector<1x1x6xf32> to vector<24x24x6xf32>
    %65 = arith.mulf %63, %64 : vector<24x24x6xf32>
    %66 = arith.addf %58, %65 : vector<24x24x6xf32>
    %67 = vector.extract_strided_slice %1 {offsets = [2, 2, 0], sizes = [24, 24, 1], strides = [1, 1, 1]} : vector<26x26x1xf32> to vector<24x24x1xf32>
    %c8 = arith.constant 8 : index
    %c0_12 = arith.constant 0 : index
    %68 = vector.load %arg2[%c8, %c0_12] : memref<9x6xf32, #tpu.memory_space<vmem>>, vector<1x6xf32>
    %69 = vector.shape_cast %68 : vector<1x6xf32> to vector<6xf32>
    %70 = vector.shape_cast %69 : vector<6xf32> to vector<1x1x6xf32>
    %71 = vector.broadcast %67 : vector<24x24x1xf32> to vector<24x24x6xf32>
    %72 = vector.broadcast %70 : vector<1x1x6xf32> to vector<24x24x6xf32>
    %73 = arith.mulf %71, %72 : vector<24x24x6xf32>
    %74 = arith.addf %66, %73 : vector<24x24x6xf32>
    %c0_13 = arith.constant 0 : index
    %c0_14 = arith.constant 0 : index
    %75 = vector.load %arg3[%c0_13, %c0_14] : memref<1x6xf32, #tpu.memory_space<vmem>>, vector<1x6xf32>
    %76 = vector.shape_cast %75 : vector<1x6xf32> to vector<6xf32>
    %77 = vector.shape_cast %76 : vector<6xf32> to vector<1x1x6xf32>
    %78 = vector.broadcast %77 : vector<1x1x6xf32> to vector<24x24x6xf32>
    %79 = arith.addf %74, %78 : vector<24x24x6xf32>
    %cst_15 = arith.constant 0.000000e+00 : f32
    %80 = vector.broadcast %cst_15 : f32 to vector<24x24x6xf32>
    %81 = arith.maximumf %79, %80 : vector<24x24x6xf32>
    %82 = vector.extract_strided_slice %81 {offsets = [0, 0, 0], sizes = [1, 24, 6], strides = [1, 1, 1]} : vector<24x24x6xf32> to vector<1x24x6xf32>
    %83 = vector.shape_cast %82 : vector<1x24x6xf32> to vector<24x6xf32>
    %84 = vector.extract_strided_slice %81 {offsets = [1, 0, 0], sizes = [1, 24, 6], strides = [1, 1, 1]} : vector<24x24x6xf32> to vector<1x24x6xf32>
    %85 = vector.shape_cast %84 : vector<1x24x6xf32> to vector<24x6xf32>
    %86 = arith.maximumf %83, %85 : vector<24x6xf32>
    %87 = vector.extract_strided_slice %81 {offsets = [2, 0, 0], sizes = [1, 24, 6], strides = [1, 1, 1]} : vector<24x24x6xf32> to vector<1x24x6xf32>
    %88 = vector.shape_cast %87 : vector<1x24x6xf32> to vector<24x6xf32>
    %89 = vector.extract_strided_slice %81 {offsets = [3, 0, 0], sizes = [1, 24, 6], strides = [1, 1, 1]} : vector<24x24x6xf32> to vector<1x24x6xf32>
    %90 = vector.shape_cast %89 : vector<1x24x6xf32> to vector<24x6xf32>
    %91 = arith.maximumf %88, %90 : vector<24x6xf32>
    %92 = vector.extract_strided_slice %81 {offsets = [4, 0, 0], sizes = [1, 24, 6], strides = [1, 1, 1]} : vector<24x24x6xf32> to vector<1x24x6xf32>
    %93 = vector.shape_cast %92 : vector<1x24x6xf32> to vector<24x6xf32>
    %94 = vector.extract_strided_slice %81 {offsets = [5, 0, 0], sizes = [1, 24, 6], strides = [1, 1, 1]} : vector<24x24x6xf32> to vector<1x24x6xf32>
    %95 = vector.shape_cast %94 : vector<1x24x6xf32> to vector<24x6xf32>
    %96 = arith.maximumf %93, %95 : vector<24x6xf32>
    %97 = vector.extract_strided_slice %81 {offsets = [6, 0, 0], sizes = [1, 24, 6], strides = [1, 1, 1]} : vector<24x24x6xf32> to vector<1x24x6xf32>
    %98 = vector.shape_cast %97 : vector<1x24x6xf32> to vector<24x6xf32>
    %99 = vector.extract_strided_slice %81 {offsets = [7, 0, 0], sizes = [1, 24, 6], strides = [1, 1, 1]} : vector<24x24x6xf32> to vector<1x24x6xf32>
    %100 = vector.shape_cast %99 : vector<1x24x6xf32> to vector<24x6xf32>
    %101 = arith.maximumf %98, %100 : vector<24x6xf32>
    %102 = vector.extract_strided_slice %81 {offsets = [8, 0, 0], sizes = [1, 24, 6], strides = [1, 1, 1]} : vector<24x24x6xf32> to vector<1x24x6xf32>
    %103 = vector.shape_cast %102 : vector<1x24x6xf32> to vector<24x6xf32>
    %104 = vector.extract_strided_slice %81 {offsets = [9, 0, 0], sizes = [1, 24, 6], strides = [1, 1, 1]} : vector<24x24x6xf32> to vector<1x24x6xf32>
    %105 = vector.shape_cast %104 : vector<1x24x6xf32> to vector<24x6xf32>
    %106 = arith.maximumf %103, %105 : vector<24x6xf32>
    %107 = vector.extract_strided_slice %81 {offsets = [10, 0, 0], sizes = [1, 24, 6], strides = [1, 1, 1]} : vector<24x24x6xf32> to vector<1x24x6xf32>
    %108 = vector.shape_cast %107 : vector<1x24x6xf32> to vector<24x6xf32>
    %109 = vector.extract_strided_slice %81 {offsets = [11, 0, 0], sizes = [1, 24, 6], strides = [1, 1, 1]} : vector<24x24x6xf32> to vector<1x24x6xf32>
    %110 = vector.shape_cast %109 : vector<1x24x6xf32> to vector<24x6xf32>
    %111 = arith.maximumf %108, %110 : vector<24x6xf32>
    %112 = vector.extract_strided_slice %81 {offsets = [12, 0, 0], sizes = [1, 24, 6], strides = [1, 1, 1]} : vector<24x24x6xf32> to vector<1x24x6xf32>
    %113 = vector.shape_cast %112 : vector<1x24x6xf32> to vector<24x6xf32>
    %114 = vector.extract_strided_slice %81 {offsets = [13, 0, 0], sizes = [1, 24, 6], strides = [1, 1, 1]} : vector<24x24x6xf32> to vector<1x24x6xf32>
    %115 = vector.shape_cast %114 : vector<1x24x6xf32> to vector<24x6xf32>
    %116 = arith.maximumf %113, %115 : vector<24x6xf32>
    %117 = vector.extract_strided_slice %81 {offsets = [14, 0, 0], sizes = [1, 24, 6], strides = [1, 1, 1]} : vector<24x24x6xf32> to vector<1x24x6xf32>
    %118 = vector.shape_cast %117 : vector<1x24x6xf32> to vector<24x6xf32>
    %119 = vector.extract_strided_slice %81 {offsets = [15, 0, 0], sizes = [1, 24, 6], strides = [1, 1, 1]} : vector<24x24x6xf32> to vector<1x24x6xf32>
    %120 = vector.shape_cast %119 : vector<1x24x6xf32> to vector<24x6xf32>
    %121 = arith.maximumf %118, %120 : vector<24x6xf32>
    %122 = vector.extract_strided_slice %81 {offsets = [16, 0, 0], sizes = [1, 24, 6], strides = [1, 1, 1]} : vector<24x24x6xf32> to vector<1x24x6xf32>
    %123 = vector.shape_cast %122 : vector<1x24x6xf32> to vector<24x6xf32>
    %124 = vector.extract_strided_slice %81 {offsets = [17, 0, 0], sizes = [1, 24, 6], strides = [1, 1, 1]} : vector<24x24x6xf32> to vector<1x24x6xf32>
    %125 = vector.shape_cast %124 : vector<1x24x6xf32> to vector<24x6xf32>
    %126 = arith.maximumf %123, %125 : vector<24x6xf32>
    %127 = vector.extract_strided_slice %81 {offsets = [18, 0, 0], sizes = [1, 24, 6], strides = [1, 1, 1]} : vector<24x24x6xf32> to vector<1x24x6xf32>
    %128 = vector.shape_cast %127 : vector<1x24x6xf32> to vector<24x6xf32>
    %129 = vector.extract_strided_slice %81 {offsets = [19, 0, 0], sizes = [1, 24, 6], strides = [1, 1, 1]} : vector<24x24x6xf32> to vector<1x24x6xf32>
    %130 = vector.shape_cast %129 : vector<1x24x6xf32> to vector<24x6xf32>
    %131 = arith.maximumf %128, %130 : vector<24x6xf32>
    %132 = vector.extract_strided_slice %81 {offsets = [20, 0, 0], sizes = [1, 24, 6], strides = [1, 1, 1]} : vector<24x24x6xf32> to vector<1x24x6xf32>
    %133 = vector.shape_cast %132 : vector<1x24x6xf32> to vector<24x6xf32>
    %134 = vector.extract_strided_slice %81 {offsets = [21, 0, 0], sizes = [1, 24, 6], strides = [1, 1, 1]} : vector<24x24x6xf32> to vector<1x24x6xf32>
    %135 = vector.shape_cast %134 : vector<1x24x6xf32> to vector<24x6xf32>
    %136 = arith.maximumf %133, %135 : vector<24x6xf32>
    %137 = vector.extract_strided_slice %81 {offsets = [22, 0, 0], sizes = [1, 24, 6], strides = [1, 1, 1]} : vector<24x24x6xf32> to vector<1x24x6xf32>
    %138 = vector.shape_cast %137 : vector<1x24x6xf32> to vector<24x6xf32>
    %139 = vector.extract_strided_slice %81 {offsets = [23, 0, 0], sizes = [1, 24, 6], strides = [1, 1, 1]} : vector<24x24x6xf32> to vector<1x24x6xf32>
    %140 = vector.shape_cast %139 : vector<1x24x6xf32> to vector<24x6xf32>
    %141 = arith.maximumf %138, %140 : vector<24x6xf32>
    %142 = vector.shape_cast %86 : vector<24x6xf32> to vector<1x24x6xf32>
    %143 = vector.shape_cast %91 : vector<24x6xf32> to vector<1x24x6xf32>
    %144 = vector.shape_cast %96 : vector<24x6xf32> to vector<1x24x6xf32>
    %145 = vector.shape_cast %101 : vector<24x6xf32> to vector<1x24x6xf32>
    %146 = vector.shape_cast %106 : vector<24x6xf32> to vector<1x24x6xf32>
    %147 = vector.shape_cast %111 : vector<24x6xf32> to vector<1x24x6xf32>
    %148 = vector.shape_cast %116 : vector<24x6xf32> to vector<1x24x6xf32>
    %149 = vector.shape_cast %121 : vector<24x6xf32> to vector<1x24x6xf32>
    %150 = vector.shape_cast %126 : vector<24x6xf32> to vector<1x24x6xf32>
    %151 = vector.shape_cast %131 : vector<24x6xf32> to vector<1x24x6xf32>
    %152 = vector.shape_cast %136 : vector<24x6xf32> to vector<1x24x6xf32>
    %153 = vector.shape_cast %141 : vector<24x6xf32> to vector<1x24x6xf32>
    %154 = tpu.concatenate %142, %143, %144, %145, %146, %147, %148, %149, %150, %151, %152, %153 in 0 : vector<1x24x6xf32>, vector<1x24x6xf32>, vector<1x24x6xf32>, vector<1x24x6xf32>, vector<1x24x6xf32>, vector<1x24x6xf32>, vector<1x24x6xf32>, vector<1x24x6xf32>, vector<1x24x6xf32>, vector<1x24x6xf32>, vector<1x24x6xf32>, vector<1x24x6xf32> -> vector<12x24x6xf32>
    %155 = vector.extract_strided_slice %154 {offsets = [0, 0, 0], sizes = [12, 23, 6], strides = [1, 1, 1]} : vector<12x24x6xf32> to vector<12x23x6xf32>
    %156 = vector.extract_strided_slice %154 {offsets = [0, 1, 0], sizes = [12, 23, 6], strides = [1, 1, 1]} : vector<12x24x6xf32> to vector<12x23x6xf32>
    %157 = arith.maximumf %155, %156 : vector<12x23x6xf32>
    %c0_16 = arith.constant 0 : index
    %c0_17 = arith.constant 0 : index
    %158 = vector.load %arg6[%c0_16, %c0_17] : memref<12x23xf32, #tpu.memory_space<vmem>>, vector<12x23xf32>
    %159 = vector.extract_strided_slice %157 {offsets = [0, 0, 0], sizes = [1, 23, 6], strides = [1, 1, 1]} : vector<12x23x6xf32> to vector<1x23x6xf32>
    %160 = vector.shape_cast %159 : vector<1x23x6xf32> to vector<23x6xf32>
    %cst_18 = arith.constant dense<0.000000e+00> : vector<12x6xf32>
    %161 = tpu.matmul %158, %160, %cst_18 {dimension_numbers = #tpu.dot_dimension_numbers<[1], [0], [0], [1], [0, 0, 1, 1], [], []>} : vector<12x23xf32>, vector<23x6xf32>, vector<12x6xf32> -> vector<12x6xf32>
    %162 = vector.extract_strided_slice %157 {offsets = [1, 0, 0], sizes = [1, 23, 6], strides = [1, 1, 1]} : vector<12x23x6xf32> to vector<1x23x6xf32>
    %163 = vector.shape_cast %162 : vector<1x23x6xf32> to vector<23x6xf32>
    %cst_19 = arith.constant dense<0.000000e+00> : vector<12x6xf32>
    %164 = tpu.matmul %158, %163, %cst_19 {dimension_numbers = #tpu.dot_dimension_numbers<[1], [0], [0], [1], [0, 0, 1, 1], [], []>} : vector<12x23xf32>, vector<23x6xf32>, vector<12x6xf32> -> vector<12x6xf32>
    %165 = vector.extract_strided_slice %157 {offsets = [2, 0, 0], sizes = [1, 23, 6], strides = [1, 1, 1]} : vector<12x23x6xf32> to vector<1x23x6xf32>
    %166 = vector.shape_cast %165 : vector<1x23x6xf32> to vector<23x6xf32>
    %cst_20 = arith.constant dense<0.000000e+00> : vector<12x6xf32>
    %167 = tpu.matmul %158, %166, %cst_20 {dimension_numbers = #tpu.dot_dimension_numbers<[1], [0], [0], [1], [0, 0, 1, 1], [], []>} : vector<12x23xf32>, vector<23x6xf32>, vector<12x6xf32> -> vector<12x6xf32>
    %168 = vector.extract_strided_slice %157 {offsets = [3, 0, 0], sizes = [1, 23, 6], strides = [1, 1, 1]} : vector<12x23x6xf32> to vector<1x23x6xf32>
    %169 = vector.shape_cast %168 : vector<1x23x6xf32> to vector<23x6xf32>
    %cst_21 = arith.constant dense<0.000000e+00> : vector<12x6xf32>
    %170 = tpu.matmul %158, %169, %cst_21 {dimension_numbers = #tpu.dot_dimension_numbers<[1], [0], [0], [1], [0, 0, 1, 1], [], []>} : vector<12x23xf32>, vector<23x6xf32>, vector<12x6xf32> -> vector<12x6xf32>
    %171 = vector.extract_strided_slice %157 {offsets = [4, 0, 0], sizes = [1, 23, 6], strides = [1, 1, 1]} : vector<12x23x6xf32> to vector<1x23x6xf32>
    %172 = vector.shape_cast %171 : vector<1x23x6xf32> to vector<23x6xf32>
    %cst_22 = arith.constant dense<0.000000e+00> : vector<12x6xf32>
    %173 = tpu.matmul %158, %172, %cst_22 {dimension_numbers = #tpu.dot_dimension_numbers<[1], [0], [0], [1], [0, 0, 1, 1], [], []>} : vector<12x23xf32>, vector<23x6xf32>, vector<12x6xf32> -> vector<12x6xf32>
    %174 = vector.extract_strided_slice %157 {offsets = [5, 0, 0], sizes = [1, 23, 6], strides = [1, 1, 1]} : vector<12x23x6xf32> to vector<1x23x6xf32>
    %175 = vector.shape_cast %174 : vector<1x23x6xf32> to vector<23x6xf32>
    %cst_23 = arith.constant dense<0.000000e+00> : vector<12x6xf32>
    %176 = tpu.matmul %158, %175, %cst_23 {dimension_numbers = #tpu.dot_dimension_numbers<[1], [0], [0], [1], [0, 0, 1, 1], [], []>} : vector<12x23xf32>, vector<23x6xf32>, vector<12x6xf32> -> vector<12x6xf32>
    %177 = vector.extract_strided_slice %157 {offsets = [6, 0, 0], sizes = [1, 23, 6], strides = [1, 1, 1]} : vector<12x23x6xf32> to vector<1x23x6xf32>
    %178 = vector.shape_cast %177 : vector<1x23x6xf32> to vector<23x6xf32>
    %cst_24 = arith.constant dense<0.000000e+00> : vector<12x6xf32>
    %179 = tpu.matmul %158, %178, %cst_24 {dimension_numbers = #tpu.dot_dimension_numbers<[1], [0], [0], [1], [0, 0, 1, 1], [], []>} : vector<12x23xf32>, vector<23x6xf32>, vector<12x6xf32> -> vector<12x6xf32>
    %180 = vector.extract_strided_slice %157 {offsets = [7, 0, 0], sizes = [1, 23, 6], strides = [1, 1, 1]} : vector<12x23x6xf32> to vector<1x23x6xf32>
    %181 = vector.shape_cast %180 : vector<1x23x6xf32> to vector<23x6xf32>
    %cst_25 = arith.constant dense<0.000000e+00> : vector<12x6xf32>
    %182 = tpu.matmul %158, %181, %cst_25 {dimension_numbers = #tpu.dot_dimension_numbers<[1], [0], [0], [1], [0, 0, 1, 1], [], []>} : vector<12x23xf32>, vector<23x6xf32>, vector<12x6xf32> -> vector<12x6xf32>
    %183 = vector.extract_strided_slice %157 {offsets = [8, 0, 0], sizes = [1, 23, 6], strides = [1, 1, 1]} : vector<12x23x6xf32> to vector<1x23x6xf32>
    %184 = vector.shape_cast %183 : vector<1x23x6xf32> to vector<23x6xf32>
    %cst_26 = arith.constant dense<0.000000e+00> : vector<12x6xf32>
    %185 = tpu.matmul %158, %184, %cst_26 {dimension_numbers = #tpu.dot_dimension_numbers<[1], [0], [0], [1], [0, 0, 1, 1], [], []>} : vector<12x23xf32>, vector<23x6xf32>, vector<12x6xf32> -> vector<12x6xf32>
    %186 = vector.extract_strided_slice %157 {offsets = [9, 0, 0], sizes = [1, 23, 6], strides = [1, 1, 1]} : vector<12x23x6xf32> to vector<1x23x6xf32>
    %187 = vector.shape_cast %186 : vector<1x23x6xf32> to vector<23x6xf32>
    %cst_27 = arith.constant dense<0.000000e+00> : vector<12x6xf32>
    %188 = tpu.matmul %158, %187, %cst_27 {dimension_numbers = #tpu.dot_dimension_numbers<[1], [0], [0], [1], [0, 0, 1, 1], [], []>} : vector<12x23xf32>, vector<23x6xf32>, vector<12x6xf32> -> vector<12x6xf32>
    %189 = vector.extract_strided_slice %157 {offsets = [10, 0, 0], sizes = [1, 23, 6], strides = [1, 1, 1]} : vector<12x23x6xf32> to vector<1x23x6xf32>
    %190 = vector.shape_cast %189 : vector<1x23x6xf32> to vector<23x6xf32>
    %cst_28 = arith.constant dense<0.000000e+00> : vector<12x6xf32>
    %191 = tpu.matmul %158, %190, %cst_28 {dimension_numbers = #tpu.dot_dimension_numbers<[1], [0], [0], [1], [0, 0, 1, 1], [], []>} : vector<12x23xf32>, vector<23x6xf32>, vector<12x6xf32> -> vector<12x6xf32>
    %192 = vector.extract_strided_slice %157 {offsets = [11, 0, 0], sizes = [1, 23, 6], strides = [1, 1, 1]} : vector<12x23x6xf32> to vector<1x23x6xf32>
    %193 = vector.shape_cast %192 : vector<1x23x6xf32> to vector<23x6xf32>
    %cst_29 = arith.constant dense<0.000000e+00> : vector<12x6xf32>
    %194 = tpu.matmul %158, %193, %cst_29 {dimension_numbers = #tpu.dot_dimension_numbers<[1], [0], [0], [1], [0, 0, 1, 1], [], []>} : vector<12x23xf32>, vector<23x6xf32>, vector<12x6xf32> -> vector<12x6xf32>
    %195 = vector.shape_cast %161 : vector<12x6xf32> to vector<1x12x6xf32>
    %196 = vector.shape_cast %164 : vector<12x6xf32> to vector<1x12x6xf32>
    %197 = vector.shape_cast %167 : vector<12x6xf32> to vector<1x12x6xf32>
    %198 = vector.shape_cast %170 : vector<12x6xf32> to vector<1x12x6xf32>
    %199 = vector.shape_cast %173 : vector<12x6xf32> to vector<1x12x6xf32>
    %200 = vector.shape_cast %176 : vector<12x6xf32> to vector<1x12x6xf32>
    %201 = vector.shape_cast %179 : vector<12x6xf32> to vector<1x12x6xf32>
    %202 = vector.shape_cast %182 : vector<12x6xf32> to vector<1x12x6xf32>
    %203 = vector.shape_cast %185 : vector<12x6xf32> to vector<1x12x6xf32>
    %204 = vector.shape_cast %188 : vector<12x6xf32> to vector<1x12x6xf32>
    %205 = vector.shape_cast %191 : vector<12x6xf32> to vector<1x12x6xf32>
    %206 = vector.shape_cast %194 : vector<12x6xf32> to vector<1x12x6xf32>
    %207 = tpu.concatenate %195, %196, %197, %198, %199, %200, %201, %202, %203, %204, %205, %206 in 0 : vector<1x12x6xf32>, vector<1x12x6xf32>, vector<1x12x6xf32>, vector<1x12x6xf32>, vector<1x12x6xf32>, vector<1x12x6xf32>, vector<1x12x6xf32>, vector<1x12x6xf32>, vector<1x12x6xf32>, vector<1x12x6xf32>, vector<1x12x6xf32>, vector<1x12x6xf32> -> vector<12x12x6xf32>
    %cst_30 = arith.constant 0.000000e+00 : f32
    %208 = vector.broadcast %cst_30 : f32 to vector<10x10x12xf32>
    %209 = vector.extract_strided_slice %207 {offsets = [0, 0, 0], sizes = [10, 10, 1], strides = [1, 1, 1]} : vector<12x12x6xf32> to vector<10x10x1xf32>
    %c0_31 = arith.constant 0 : index
    %c0_32 = arith.constant 0 : index
    %210 = vector.load %arg4[%c0_31, %c0_32] : memref<54x12xf32, #tpu.memory_space<vmem>>, vector<1x12xf32>
    %211 = vector.shape_cast %210 : vector<1x12xf32> to vector<12xf32>
    %212 = vector.shape_cast %211 : vector<12xf32> to vector<1x1x12xf32>
    %213 = vector.broadcast %209 : vector<10x10x1xf32> to vector<10x10x12xf32>
    %214 = vector.broadcast %212 : vector<1x1x12xf32> to vector<10x10x12xf32>
    %215 = arith.mulf %213, %214 : vector<10x10x12xf32>
    %216 = arith.addf %208, %215 : vector<10x10x12xf32>
    %217 = vector.extract_strided_slice %207 {offsets = [0, 0, 1], sizes = [10, 10, 1], strides = [1, 1, 1]} : vector<12x12x6xf32> to vector<10x10x1xf32>
    %c1_33 = arith.constant 1 : index
    %c0_34 = arith.constant 0 : index
    %218 = vector.load %arg4[%c1_33, %c0_34] : memref<54x12xf32, #tpu.memory_space<vmem>>, vector<1x12xf32>
    %219 = vector.shape_cast %218 : vector<1x12xf32> to vector<12xf32>
    %220 = vector.shape_cast %219 : vector<12xf32> to vector<1x1x12xf32>
    %221 = vector.broadcast %217 : vector<10x10x1xf32> to vector<10x10x12xf32>
    %222 = vector.broadcast %220 : vector<1x1x12xf32> to vector<10x10x12xf32>
    %223 = arith.mulf %221, %222 : vector<10x10x12xf32>
    %224 = arith.addf %216, %223 : vector<10x10x12xf32>
    %225 = vector.extract_strided_slice %207 {offsets = [0, 0, 2], sizes = [10, 10, 1], strides = [1, 1, 1]} : vector<12x12x6xf32> to vector<10x10x1xf32>
    %c2_35 = arith.constant 2 : index
    %c0_36 = arith.constant 0 : index
    %226 = vector.load %arg4[%c2_35, %c0_36] : memref<54x12xf32, #tpu.memory_space<vmem>>, vector<1x12xf32>
    %227 = vector.shape_cast %226 : vector<1x12xf32> to vector<12xf32>
    %228 = vector.shape_cast %227 : vector<12xf32> to vector<1x1x12xf32>
    %229 = vector.broadcast %225 : vector<10x10x1xf32> to vector<10x10x12xf32>
    %230 = vector.broadcast %228 : vector<1x1x12xf32> to vector<10x10x12xf32>
    %231 = arith.mulf %229, %230 : vector<10x10x12xf32>
    %232 = arith.addf %224, %231 : vector<10x10x12xf32>
    %233 = vector.extract_strided_slice %207 {offsets = [0, 0, 3], sizes = [10, 10, 1], strides = [1, 1, 1]} : vector<12x12x6xf32> to vector<10x10x1xf32>
    %c3_37 = arith.constant 3 : index
    %c0_38 = arith.constant 0 : index
    %234 = vector.load %arg4[%c3_37, %c0_38] : memref<54x12xf32, #tpu.memory_space<vmem>>, vector<1x12xf32>
    %235 = vector.shape_cast %234 : vector<1x12xf32> to vector<12xf32>
    %236 = vector.shape_cast %235 : vector<12xf32> to vector<1x1x12xf32>
    %237 = vector.broadcast %233 : vector<10x10x1xf32> to vector<10x10x12xf32>
    %238 = vector.broadcast %236 : vector<1x1x12xf32> to vector<10x10x12xf32>
    %239 = arith.mulf %237, %238 : vector<10x10x12xf32>
    %240 = arith.addf %232, %239 : vector<10x10x12xf32>
    %241 = vector.extract_strided_slice %207 {offsets = [0, 0, 4], sizes = [10, 10, 1], strides = [1, 1, 1]} : vector<12x12x6xf32> to vector<10x10x1xf32>
    %c4_39 = arith.constant 4 : index
    %c0_40 = arith.constant 0 : index
    %242 = vector.load %arg4[%c4_39, %c0_40] : memref<54x12xf32, #tpu.memory_space<vmem>>, vector<1x12xf32>
    %243 = vector.shape_cast %242 : vector<1x12xf32> to vector<12xf32>
    %244 = vector.shape_cast %243 : vector<12xf32> to vector<1x1x12xf32>
    %245 = vector.broadcast %241 : vector<10x10x1xf32> to vector<10x10x12xf32>
    %246 = vector.broadcast %244 : vector<1x1x12xf32> to vector<10x10x12xf32>
    %247 = arith.mulf %245, %246 : vector<10x10x12xf32>
    %248 = arith.addf %240, %247 : vector<10x10x12xf32>
    %249 = vector.extract_strided_slice %207 {offsets = [0, 0, 5], sizes = [10, 10, 1], strides = [1, 1, 1]} : vector<12x12x6xf32> to vector<10x10x1xf32>
    %c5_41 = arith.constant 5 : index
    %c0_42 = arith.constant 0 : index
    %250 = vector.load %arg4[%c5_41, %c0_42] : memref<54x12xf32, #tpu.memory_space<vmem>>, vector<1x12xf32>
    %251 = vector.shape_cast %250 : vector<1x12xf32> to vector<12xf32>
    %252 = vector.shape_cast %251 : vector<12xf32> to vector<1x1x12xf32>
    %253 = vector.broadcast %249 : vector<10x10x1xf32> to vector<10x10x12xf32>
    %254 = vector.broadcast %252 : vector<1x1x12xf32> to vector<10x10x12xf32>
    %255 = arith.mulf %253, %254 : vector<10x10x12xf32>
    %256 = arith.addf %248, %255 : vector<10x10x12xf32>
    %257 = vector.extract_strided_slice %207 {offsets = [0, 1, 0], sizes = [10, 10, 1], strides = [1, 1, 1]} : vector<12x12x6xf32> to vector<10x10x1xf32>
    %c6_43 = arith.constant 6 : index
    %c0_44 = arith.constant 0 : index
    %258 = vector.load %arg4[%c6_43, %c0_44] : memref<54x12xf32, #tpu.memory_space<vmem>>, vector<1x12xf32>
    %259 = vector.shape_cast %258 : vector<1x12xf32> to vector<12xf32>
    %260 = vector.shape_cast %259 : vector<12xf32> to vector<1x1x12xf32>
    %261 = vector.broadcast %257 : vector<10x10x1xf32> to vector<10x10x12xf32>
    %262 = vector.broadcast %260 : vector<1x1x12xf32> to vector<10x10x12xf32>
    %263 = arith.mulf %261, %262 : vector<10x10x12xf32>
    %264 = arith.addf %256, %263 : vector<10x10x12xf32>
    %265 = vector.extract_strided_slice %207 {offsets = [0, 1, 1], sizes = [10, 10, 1], strides = [1, 1, 1]} : vector<12x12x6xf32> to vector<10x10x1xf32>
    %c7_45 = arith.constant 7 : index
    %c0_46 = arith.constant 0 : index
    %266 = vector.load %arg4[%c7_45, %c0_46] : memref<54x12xf32, #tpu.memory_space<vmem>>, vector<1x12xf32>
    %267 = vector.shape_cast %266 : vector<1x12xf32> to vector<12xf32>
    %268 = vector.shape_cast %267 : vector<12xf32> to vector<1x1x12xf32>
    %269 = vector.broadcast %265 : vector<10x10x1xf32> to vector<10x10x12xf32>
    %270 = vector.broadcast %268 : vector<1x1x12xf32> to vector<10x10x12xf32>
    %271 = arith.mulf %269, %270 : vector<10x10x12xf32>
    %272 = arith.addf %264, %271 : vector<10x10x12xf32>
    %273 = vector.extract_strided_slice %207 {offsets = [0, 1, 2], sizes = [10, 10, 1], strides = [1, 1, 1]} : vector<12x12x6xf32> to vector<10x10x1xf32>
    %c8_47 = arith.constant 8 : index
    %c0_48 = arith.constant 0 : index
    %274 = vector.load %arg4[%c8_47, %c0_48] : memref<54x12xf32, #tpu.memory_space<vmem>>, vector<1x12xf32>
    %275 = vector.shape_cast %274 : vector<1x12xf32> to vector<12xf32>
    %276 = vector.shape_cast %275 : vector<12xf32> to vector<1x1x12xf32>
    %277 = vector.broadcast %273 : vector<10x10x1xf32> to vector<10x10x12xf32>
    %278 = vector.broadcast %276 : vector<1x1x12xf32> to vector<10x10x12xf32>
    %279 = arith.mulf %277, %278 : vector<10x10x12xf32>
    %280 = arith.addf %272, %279 : vector<10x10x12xf32>
    %281 = vector.extract_strided_slice %207 {offsets = [0, 1, 3], sizes = [10, 10, 1], strides = [1, 1, 1]} : vector<12x12x6xf32> to vector<10x10x1xf32>
    %c9 = arith.constant 9 : index
    %c0_49 = arith.constant 0 : index
    %282 = vector.load %arg4[%c9, %c0_49] : memref<54x12xf32, #tpu.memory_space<vmem>>, vector<1x12xf32>
    %283 = vector.shape_cast %282 : vector<1x12xf32> to vector<12xf32>
    %284 = vector.shape_cast %283 : vector<12xf32> to vector<1x1x12xf32>
    %285 = vector.broadcast %281 : vector<10x10x1xf32> to vector<10x10x12xf32>
    %286 = vector.broadcast %284 : vector<1x1x12xf32> to vector<10x10x12xf32>
    %287 = arith.mulf %285, %286 : vector<10x10x12xf32>
    %288 = arith.addf %280, %287 : vector<10x10x12xf32>
    %289 = vector.extract_strided_slice %207 {offsets = [0, 1, 4], sizes = [10, 10, 1], strides = [1, 1, 1]} : vector<12x12x6xf32> to vector<10x10x1xf32>
    %c10 = arith.constant 10 : index
    %c0_50 = arith.constant 0 : index
    %290 = vector.load %arg4[%c10, %c0_50] : memref<54x12xf32, #tpu.memory_space<vmem>>, vector<1x12xf32>
    %291 = vector.shape_cast %290 : vector<1x12xf32> to vector<12xf32>
    %292 = vector.shape_cast %291 : vector<12xf32> to vector<1x1x12xf32>
    %293 = vector.broadcast %289 : vector<10x10x1xf32> to vector<10x10x12xf32>
    %294 = vector.broadcast %292 : vector<1x1x12xf32> to vector<10x10x12xf32>
    %295 = arith.mulf %293, %294 : vector<10x10x12xf32>
    %296 = arith.addf %288, %295 : vector<10x10x12xf32>
    %297 = vector.extract_strided_slice %207 {offsets = [0, 1, 5], sizes = [10, 10, 1], strides = [1, 1, 1]} : vector<12x12x6xf32> to vector<10x10x1xf32>
    %c11 = arith.constant 11 : index
    %c0_51 = arith.constant 0 : index
    %298 = vector.load %arg4[%c11, %c0_51] : memref<54x12xf32, #tpu.memory_space<vmem>>, vector<1x12xf32>
    %299 = vector.shape_cast %298 : vector<1x12xf32> to vector<12xf32>
    %300 = vector.shape_cast %299 : vector<12xf32> to vector<1x1x12xf32>
    %301 = vector.broadcast %297 : vector<10x10x1xf32> to vector<10x10x12xf32>
    %302 = vector.broadcast %300 : vector<1x1x12xf32> to vector<10x10x12xf32>
    %303 = arith.mulf %301, %302 : vector<10x10x12xf32>
    %304 = arith.addf %296, %303 : vector<10x10x12xf32>
    %305 = vector.extract_strided_slice %207 {offsets = [0, 2, 0], sizes = [10, 10, 1], strides = [1, 1, 1]} : vector<12x12x6xf32> to vector<10x10x1xf32>
    %c12 = arith.constant 12 : index
    %c0_52 = arith.constant 0 : index
    %306 = vector.load %arg4[%c12, %c0_52] : memref<54x12xf32, #tpu.memory_space<vmem>>, vector<1x12xf32>
    %307 = vector.shape_cast %306 : vector<1x12xf32> to vector<12xf32>
    %308 = vector.shape_cast %307 : vector<12xf32> to vector<1x1x12xf32>
    %309 = vector.broadcast %305 : vector<10x10x1xf32> to vector<10x10x12xf32>
    %310 = vector.broadcast %308 : vector<1x1x12xf32> to vector<10x10x12xf32>
    %311 = arith.mulf %309, %310 : vector<10x10x12xf32>
    %312 = arith.addf %304, %311 : vector<10x10x12xf32>
    %313 = vector.extract_strided_slice %207 {offsets = [0, 2, 1], sizes = [10, 10, 1], strides = [1, 1, 1]} : vector<12x12x6xf32> to vector<10x10x1xf32>
    %c13 = arith.constant 13 : index
    %c0_53 = arith.constant 0 : index
    %314 = vector.load %arg4[%c13, %c0_53] : memref<54x12xf32, #tpu.memory_space<vmem>>, vector<1x12xf32>
    %315 = vector.shape_cast %314 : vector<1x12xf32> to vector<12xf32>
    %316 = vector.shape_cast %315 : vector<12xf32> to vector<1x1x12xf32>
    %317 = vector.broadcast %313 : vector<10x10x1xf32> to vector<10x10x12xf32>
    %318 = vector.broadcast %316 : vector<1x1x12xf32> to vector<10x10x12xf32>
    %319 = arith.mulf %317, %318 : vector<10x10x12xf32>
    %320 = arith.addf %312, %319 : vector<10x10x12xf32>
    %321 = vector.extract_strided_slice %207 {offsets = [0, 2, 2], sizes = [10, 10, 1], strides = [1, 1, 1]} : vector<12x12x6xf32> to vector<10x10x1xf32>
    %c14 = arith.constant 14 : index
    %c0_54 = arith.constant 0 : index
    %322 = vector.load %arg4[%c14, %c0_54] : memref<54x12xf32, #tpu.memory_space<vmem>>, vector<1x12xf32>
    %323 = vector.shape_cast %322 : vector<1x12xf32> to vector<12xf32>
    %324 = vector.shape_cast %323 : vector<12xf32> to vector<1x1x12xf32>
    %325 = vector.broadcast %321 : vector<10x10x1xf32> to vector<10x10x12xf32>
    %326 = vector.broadcast %324 : vector<1x1x12xf32> to vector<10x10x12xf32>
    %327 = arith.mulf %325, %326 : vector<10x10x12xf32>
    %328 = arith.addf %320, %327 : vector<10x10x12xf32>
    %329 = vector.extract_strided_slice %207 {offsets = [0, 2, 3], sizes = [10, 10, 1], strides = [1, 1, 1]} : vector<12x12x6xf32> to vector<10x10x1xf32>
    %c15 = arith.constant 15 : index
    %c0_55 = arith.constant 0 : index
    %330 = vector.load %arg4[%c15, %c0_55] : memref<54x12xf32, #tpu.memory_space<vmem>>, vector<1x12xf32>
    %331 = vector.shape_cast %330 : vector<1x12xf32> to vector<12xf32>
    %332 = vector.shape_cast %331 : vector<12xf32> to vector<1x1x12xf32>
    %333 = vector.broadcast %329 : vector<10x10x1xf32> to vector<10x10x12xf32>
    %334 = vector.broadcast %332 : vector<1x1x12xf32> to vector<10x10x12xf32>
    %335 = arith.mulf %333, %334 : vector<10x10x12xf32>
    %336 = arith.addf %328, %335 : vector<10x10x12xf32>
    %337 = vector.extract_strided_slice %207 {offsets = [0, 2, 4], sizes = [10, 10, 1], strides = [1, 1, 1]} : vector<12x12x6xf32> to vector<10x10x1xf32>
    %c16 = arith.constant 16 : index
    %c0_56 = arith.constant 0 : index
    %338 = vector.load %arg4[%c16, %c0_56] : memref<54x12xf32, #tpu.memory_space<vmem>>, vector<1x12xf32>
    %339 = vector.shape_cast %338 : vector<1x12xf32> to vector<12xf32>
    %340 = vector.shape_cast %339 : vector<12xf32> to vector<1x1x12xf32>
    %341 = vector.broadcast %337 : vector<10x10x1xf32> to vector<10x10x12xf32>
    %342 = vector.broadcast %340 : vector<1x1x12xf32> to vector<10x10x12xf32>
    %343 = arith.mulf %341, %342 : vector<10x10x12xf32>
    %344 = arith.addf %336, %343 : vector<10x10x12xf32>
    %345 = vector.extract_strided_slice %207 {offsets = [0, 2, 5], sizes = [10, 10, 1], strides = [1, 1, 1]} : vector<12x12x6xf32> to vector<10x10x1xf32>
    %c17 = arith.constant 17 : index
    %c0_57 = arith.constant 0 : index
    %346 = vector.load %arg4[%c17, %c0_57] : memref<54x12xf32, #tpu.memory_space<vmem>>, vector<1x12xf32>
    %347 = vector.shape_cast %346 : vector<1x12xf32> to vector<12xf32>
    %348 = vector.shape_cast %347 : vector<12xf32> to vector<1x1x12xf32>
    %349 = vector.broadcast %345 : vector<10x10x1xf32> to vector<10x10x12xf32>
    %350 = vector.broadcast %348 : vector<1x1x12xf32> to vector<10x10x12xf32>
    %351 = arith.mulf %349, %350 : vector<10x10x12xf32>
    %352 = arith.addf %344, %351 : vector<10x10x12xf32>
    %353 = vector.extract_strided_slice %207 {offsets = [1, 0, 0], sizes = [10, 10, 1], strides = [1, 1, 1]} : vector<12x12x6xf32> to vector<10x10x1xf32>
    %c18 = arith.constant 18 : index
    %c0_58 = arith.constant 0 : index
    %354 = vector.load %arg4[%c18, %c0_58] : memref<54x12xf32, #tpu.memory_space<vmem>>, vector<1x12xf32>
    %355 = vector.shape_cast %354 : vector<1x12xf32> to vector<12xf32>
    %356 = vector.shape_cast %355 : vector<12xf32> to vector<1x1x12xf32>
    %357 = vector.broadcast %353 : vector<10x10x1xf32> to vector<10x10x12xf32>
    %358 = vector.broadcast %356 : vector<1x1x12xf32> to vector<10x10x12xf32>
    %359 = arith.mulf %357, %358 : vector<10x10x12xf32>
    %360 = arith.addf %352, %359 : vector<10x10x12xf32>
    %361 = vector.extract_strided_slice %207 {offsets = [1, 0, 1], sizes = [10, 10, 1], strides = [1, 1, 1]} : vector<12x12x6xf32> to vector<10x10x1xf32>
    %c19 = arith.constant 19 : index
    %c0_59 = arith.constant 0 : index
    %362 = vector.load %arg4[%c19, %c0_59] : memref<54x12xf32, #tpu.memory_space<vmem>>, vector<1x12xf32>
    %363 = vector.shape_cast %362 : vector<1x12xf32> to vector<12xf32>
    %364 = vector.shape_cast %363 : vector<12xf32> to vector<1x1x12xf32>
    %365 = vector.broadcast %361 : vector<10x10x1xf32> to vector<10x10x12xf32>
    %366 = vector.broadcast %364 : vector<1x1x12xf32> to vector<10x10x12xf32>
    %367 = arith.mulf %365, %366 : vector<10x10x12xf32>
    %368 = arith.addf %360, %367 : vector<10x10x12xf32>
    %369 = vector.extract_strided_slice %207 {offsets = [1, 0, 2], sizes = [10, 10, 1], strides = [1, 1, 1]} : vector<12x12x6xf32> to vector<10x10x1xf32>
    %c20 = arith.constant 20 : index
    %c0_60 = arith.constant 0 : index
    %370 = vector.load %arg4[%c20, %c0_60] : memref<54x12xf32, #tpu.memory_space<vmem>>, vector<1x12xf32>
    %371 = vector.shape_cast %370 : vector<1x12xf32> to vector<12xf32>
    %372 = vector.shape_cast %371 : vector<12xf32> to vector<1x1x12xf32>
    %373 = vector.broadcast %369 : vector<10x10x1xf32> to vector<10x10x12xf32>
    %374 = vector.broadcast %372 : vector<1x1x12xf32> to vector<10x10x12xf32>
    %375 = arith.mulf %373, %374 : vector<10x10x12xf32>
    %376 = arith.addf %368, %375 : vector<10x10x12xf32>
    %377 = vector.extract_strided_slice %207 {offsets = [1, 0, 3], sizes = [10, 10, 1], strides = [1, 1, 1]} : vector<12x12x6xf32> to vector<10x10x1xf32>
    %c21 = arith.constant 21 : index
    %c0_61 = arith.constant 0 : index
    %378 = vector.load %arg4[%c21, %c0_61] : memref<54x12xf32, #tpu.memory_space<vmem>>, vector<1x12xf32>
    %379 = vector.shape_cast %378 : vector<1x12xf32> to vector<12xf32>
    %380 = vector.shape_cast %379 : vector<12xf32> to vector<1x1x12xf32>
    %381 = vector.broadcast %377 : vector<10x10x1xf32> to vector<10x10x12xf32>
    %382 = vector.broadcast %380 : vector<1x1x12xf32> to vector<10x10x12xf32>
    %383 = arith.mulf %381, %382 : vector<10x10x12xf32>
    %384 = arith.addf %376, %383 : vector<10x10x12xf32>
    %385 = vector.extract_strided_slice %207 {offsets = [1, 0, 4], sizes = [10, 10, 1], strides = [1, 1, 1]} : vector<12x12x6xf32> to vector<10x10x1xf32>
    %c22 = arith.constant 22 : index
    %c0_62 = arith.constant 0 : index
    %386 = vector.load %arg4[%c22, %c0_62] : memref<54x12xf32, #tpu.memory_space<vmem>>, vector<1x12xf32>
    %387 = vector.shape_cast %386 : vector<1x12xf32> to vector<12xf32>
    %388 = vector.shape_cast %387 : vector<12xf32> to vector<1x1x12xf32>
    %389 = vector.broadcast %385 : vector<10x10x1xf32> to vector<10x10x12xf32>
    %390 = vector.broadcast %388 : vector<1x1x12xf32> to vector<10x10x12xf32>
    %391 = arith.mulf %389, %390 : vector<10x10x12xf32>
    %392 = arith.addf %384, %391 : vector<10x10x12xf32>
    %393 = vector.extract_strided_slice %207 {offsets = [1, 0, 5], sizes = [10, 10, 1], strides = [1, 1, 1]} : vector<12x12x6xf32> to vector<10x10x1xf32>
    %c23 = arith.constant 23 : index
    %c0_63 = arith.constant 0 : index
    %394 = vector.load %arg4[%c23, %c0_63] : memref<54x12xf32, #tpu.memory_space<vmem>>, vector<1x12xf32>
    %395 = vector.shape_cast %394 : vector<1x12xf32> to vector<12xf32>
    %396 = vector.shape_cast %395 : vector<12xf32> to vector<1x1x12xf32>
    %397 = vector.broadcast %393 : vector<10x10x1xf32> to vector<10x10x12xf32>
    %398 = vector.broadcast %396 : vector<1x1x12xf32> to vector<10x10x12xf32>
    %399 = arith.mulf %397, %398 : vector<10x10x12xf32>
    %400 = arith.addf %392, %399 : vector<10x10x12xf32>
    %401 = vector.extract_strided_slice %207 {offsets = [1, 1, 0], sizes = [10, 10, 1], strides = [1, 1, 1]} : vector<12x12x6xf32> to vector<10x10x1xf32>
    %c24 = arith.constant 24 : index
    %c0_64 = arith.constant 0 : index
    %402 = vector.load %arg4[%c24, %c0_64] : memref<54x12xf32, #tpu.memory_space<vmem>>, vector<1x12xf32>
    %403 = vector.shape_cast %402 : vector<1x12xf32> to vector<12xf32>
    %404 = vector.shape_cast %403 : vector<12xf32> to vector<1x1x12xf32>
    %405 = vector.broadcast %401 : vector<10x10x1xf32> to vector<10x10x12xf32>
    %406 = vector.broadcast %404 : vector<1x1x12xf32> to vector<10x10x12xf32>
    %407 = arith.mulf %405, %406 : vector<10x10x12xf32>
    %408 = arith.addf %400, %407 : vector<10x10x12xf32>
    %409 = vector.extract_strided_slice %207 {offsets = [1, 1, 1], sizes = [10, 10, 1], strides = [1, 1, 1]} : vector<12x12x6xf32> to vector<10x10x1xf32>
    %c25 = arith.constant 25 : index
    %c0_65 = arith.constant 0 : index
    %410 = vector.load %arg4[%c25, %c0_65] : memref<54x12xf32, #tpu.memory_space<vmem>>, vector<1x12xf32>
    %411 = vector.shape_cast %410 : vector<1x12xf32> to vector<12xf32>
    %412 = vector.shape_cast %411 : vector<12xf32> to vector<1x1x12xf32>
    %413 = vector.broadcast %409 : vector<10x10x1xf32> to vector<10x10x12xf32>
    %414 = vector.broadcast %412 : vector<1x1x12xf32> to vector<10x10x12xf32>
    %415 = arith.mulf %413, %414 : vector<10x10x12xf32>
    %416 = arith.addf %408, %415 : vector<10x10x12xf32>
    %417 = vector.extract_strided_slice %207 {offsets = [1, 1, 2], sizes = [10, 10, 1], strides = [1, 1, 1]} : vector<12x12x6xf32> to vector<10x10x1xf32>
    %c26 = arith.constant 26 : index
    %c0_66 = arith.constant 0 : index
    %418 = vector.load %arg4[%c26, %c0_66] : memref<54x12xf32, #tpu.memory_space<vmem>>, vector<1x12xf32>
    %419 = vector.shape_cast %418 : vector<1x12xf32> to vector<12xf32>
    %420 = vector.shape_cast %419 : vector<12xf32> to vector<1x1x12xf32>
    %421 = vector.broadcast %417 : vector<10x10x1xf32> to vector<10x10x12xf32>
    %422 = vector.broadcast %420 : vector<1x1x12xf32> to vector<10x10x12xf32>
    %423 = arith.mulf %421, %422 : vector<10x10x12xf32>
    %424 = arith.addf %416, %423 : vector<10x10x12xf32>
    %425 = vector.extract_strided_slice %207 {offsets = [1, 1, 3], sizes = [10, 10, 1], strides = [1, 1, 1]} : vector<12x12x6xf32> to vector<10x10x1xf32>
    %c27 = arith.constant 27 : index
    %c0_67 = arith.constant 0 : index
    %426 = vector.load %arg4[%c27, %c0_67] : memref<54x12xf32, #tpu.memory_space<vmem>>, vector<1x12xf32>
    %427 = vector.shape_cast %426 : vector<1x12xf32> to vector<12xf32>
    %428 = vector.shape_cast %427 : vector<12xf32> to vector<1x1x12xf32>
    %429 = vector.broadcast %425 : vector<10x10x1xf32> to vector<10x10x12xf32>
    %430 = vector.broadcast %428 : vector<1x1x12xf32> to vector<10x10x12xf32>
    %431 = arith.mulf %429, %430 : vector<10x10x12xf32>
    %432 = arith.addf %424, %431 : vector<10x10x12xf32>
    %433 = vector.extract_strided_slice %207 {offsets = [1, 1, 4], sizes = [10, 10, 1], strides = [1, 1, 1]} : vector<12x12x6xf32> to vector<10x10x1xf32>
    %c28 = arith.constant 28 : index
    %c0_68 = arith.constant 0 : index
    %434 = vector.load %arg4[%c28, %c0_68] : memref<54x12xf32, #tpu.memory_space<vmem>>, vector<1x12xf32>
    %435 = vector.shape_cast %434 : vector<1x12xf32> to vector<12xf32>
    %436 = vector.shape_cast %435 : vector<12xf32> to vector<1x1x12xf32>
    %437 = vector.broadcast %433 : vector<10x10x1xf32> to vector<10x10x12xf32>
    %438 = vector.broadcast %436 : vector<1x1x12xf32> to vector<10x10x12xf32>
    %439 = arith.mulf %437, %438 : vector<10x10x12xf32>
    %440 = arith.addf %432, %439 : vector<10x10x12xf32>
    %441 = vector.extract_strided_slice %207 {offsets = [1, 1, 5], sizes = [10, 10, 1], strides = [1, 1, 1]} : vector<12x12x6xf32> to vector<10x10x1xf32>
    %c29 = arith.constant 29 : index
    %c0_69 = arith.constant 0 : index
    %442 = vector.load %arg4[%c29, %c0_69] : memref<54x12xf32, #tpu.memory_space<vmem>>, vector<1x12xf32>
    %443 = vector.shape_cast %442 : vector<1x12xf32> to vector<12xf32>
    %444 = vector.shape_cast %443 : vector<12xf32> to vector<1x1x12xf32>
    %445 = vector.broadcast %441 : vector<10x10x1xf32> to vector<10x10x12xf32>
    %446 = vector.broadcast %444 : vector<1x1x12xf32> to vector<10x10x12xf32>
    %447 = arith.mulf %445, %446 : vector<10x10x12xf32>
    %448 = arith.addf %440, %447 : vector<10x10x12xf32>
    %449 = vector.extract_strided_slice %207 {offsets = [1, 2, 0], sizes = [10, 10, 1], strides = [1, 1, 1]} : vector<12x12x6xf32> to vector<10x10x1xf32>
    %c30 = arith.constant 30 : index
    %c0_70 = arith.constant 0 : index
    %450 = vector.load %arg4[%c30, %c0_70] : memref<54x12xf32, #tpu.memory_space<vmem>>, vector<1x12xf32>
    %451 = vector.shape_cast %450 : vector<1x12xf32> to vector<12xf32>
    %452 = vector.shape_cast %451 : vector<12xf32> to vector<1x1x12xf32>
    %453 = vector.broadcast %449 : vector<10x10x1xf32> to vector<10x10x12xf32>
    %454 = vector.broadcast %452 : vector<1x1x12xf32> to vector<10x10x12xf32>
    %455 = arith.mulf %453, %454 : vector<10x10x12xf32>
    %456 = arith.addf %448, %455 : vector<10x10x12xf32>
    %457 = vector.extract_strided_slice %207 {offsets = [1, 2, 1], sizes = [10, 10, 1], strides = [1, 1, 1]} : vector<12x12x6xf32> to vector<10x10x1xf32>
    %c31 = arith.constant 31 : index
    %c0_71 = arith.constant 0 : index
    %458 = vector.load %arg4[%c31, %c0_71] : memref<54x12xf32, #tpu.memory_space<vmem>>, vector<1x12xf32>
    %459 = vector.shape_cast %458 : vector<1x12xf32> to vector<12xf32>
    %460 = vector.shape_cast %459 : vector<12xf32> to vector<1x1x12xf32>
    %461 = vector.broadcast %457 : vector<10x10x1xf32> to vector<10x10x12xf32>
    %462 = vector.broadcast %460 : vector<1x1x12xf32> to vector<10x10x12xf32>
    %463 = arith.mulf %461, %462 : vector<10x10x12xf32>
    %464 = arith.addf %456, %463 : vector<10x10x12xf32>
    %465 = vector.extract_strided_slice %207 {offsets = [1, 2, 2], sizes = [10, 10, 1], strides = [1, 1, 1]} : vector<12x12x6xf32> to vector<10x10x1xf32>
    %c32 = arith.constant 32 : index
    %c0_72 = arith.constant 0 : index
    %466 = vector.load %arg4[%c32, %c0_72] : memref<54x12xf32, #tpu.memory_space<vmem>>, vector<1x12xf32>
    %467 = vector.shape_cast %466 : vector<1x12xf32> to vector<12xf32>
    %468 = vector.shape_cast %467 : vector<12xf32> to vector<1x1x12xf32>
    %469 = vector.broadcast %465 : vector<10x10x1xf32> to vector<10x10x12xf32>
    %470 = vector.broadcast %468 : vector<1x1x12xf32> to vector<10x10x12xf32>
    %471 = arith.mulf %469, %470 : vector<10x10x12xf32>
    %472 = arith.addf %464, %471 : vector<10x10x12xf32>
    %473 = vector.extract_strided_slice %207 {offsets = [1, 2, 3], sizes = [10, 10, 1], strides = [1, 1, 1]} : vector<12x12x6xf32> to vector<10x10x1xf32>
    %c33 = arith.constant 33 : index
    %c0_73 = arith.constant 0 : index
    %474 = vector.load %arg4[%c33, %c0_73] : memref<54x12xf32, #tpu.memory_space<vmem>>, vector<1x12xf32>
    %475 = vector.shape_cast %474 : vector<1x12xf32> to vector<12xf32>
    %476 = vector.shape_cast %475 : vector<12xf32> to vector<1x1x12xf32>
    %477 = vector.broadcast %473 : vector<10x10x1xf32> to vector<10x10x12xf32>
    %478 = vector.broadcast %476 : vector<1x1x12xf32> to vector<10x10x12xf32>
    %479 = arith.mulf %477, %478 : vector<10x10x12xf32>
    %480 = arith.addf %472, %479 : vector<10x10x12xf32>
    %481 = vector.extract_strided_slice %207 {offsets = [1, 2, 4], sizes = [10, 10, 1], strides = [1, 1, 1]} : vector<12x12x6xf32> to vector<10x10x1xf32>
    %c34 = arith.constant 34 : index
    %c0_74 = arith.constant 0 : index
    %482 = vector.load %arg4[%c34, %c0_74] : memref<54x12xf32, #tpu.memory_space<vmem>>, vector<1x12xf32>
    %483 = vector.shape_cast %482 : vector<1x12xf32> to vector<12xf32>
    %484 = vector.shape_cast %483 : vector<12xf32> to vector<1x1x12xf32>
    %485 = vector.broadcast %481 : vector<10x10x1xf32> to vector<10x10x12xf32>
    %486 = vector.broadcast %484 : vector<1x1x12xf32> to vector<10x10x12xf32>
    %487 = arith.mulf %485, %486 : vector<10x10x12xf32>
    %488 = arith.addf %480, %487 : vector<10x10x12xf32>
    %489 = vector.extract_strided_slice %207 {offsets = [1, 2, 5], sizes = [10, 10, 1], strides = [1, 1, 1]} : vector<12x12x6xf32> to vector<10x10x1xf32>
    %c35 = arith.constant 35 : index
    %c0_75 = arith.constant 0 : index
    %490 = vector.load %arg4[%c35, %c0_75] : memref<54x12xf32, #tpu.memory_space<vmem>>, vector<1x12xf32>
    %491 = vector.shape_cast %490 : vector<1x12xf32> to vector<12xf32>
    %492 = vector.shape_cast %491 : vector<12xf32> to vector<1x1x12xf32>
    %493 = vector.broadcast %489 : vector<10x10x1xf32> to vector<10x10x12xf32>
    %494 = vector.broadcast %492 : vector<1x1x12xf32> to vector<10x10x12xf32>
    %495 = arith.mulf %493, %494 : vector<10x10x12xf32>
    %496 = arith.addf %488, %495 : vector<10x10x12xf32>
    %497 = vector.extract_strided_slice %207 {offsets = [2, 0, 0], sizes = [10, 10, 1], strides = [1, 1, 1]} : vector<12x12x6xf32> to vector<10x10x1xf32>
    %c36 = arith.constant 36 : index
    %c0_76 = arith.constant 0 : index
    %498 = vector.load %arg4[%c36, %c0_76] : memref<54x12xf32, #tpu.memory_space<vmem>>, vector<1x12xf32>
    %499 = vector.shape_cast %498 : vector<1x12xf32> to vector<12xf32>
    %500 = vector.shape_cast %499 : vector<12xf32> to vector<1x1x12xf32>
    %501 = vector.broadcast %497 : vector<10x10x1xf32> to vector<10x10x12xf32>
    %502 = vector.broadcast %500 : vector<1x1x12xf32> to vector<10x10x12xf32>
    %503 = arith.mulf %501, %502 : vector<10x10x12xf32>
    %504 = arith.addf %496, %503 : vector<10x10x12xf32>
    %505 = vector.extract_strided_slice %207 {offsets = [2, 0, 1], sizes = [10, 10, 1], strides = [1, 1, 1]} : vector<12x12x6xf32> to vector<10x10x1xf32>
    %c37 = arith.constant 37 : index
    %c0_77 = arith.constant 0 : index
    %506 = vector.load %arg4[%c37, %c0_77] : memref<54x12xf32, #tpu.memory_space<vmem>>, vector<1x12xf32>
    %507 = vector.shape_cast %506 : vector<1x12xf32> to vector<12xf32>
    %508 = vector.shape_cast %507 : vector<12xf32> to vector<1x1x12xf32>
    %509 = vector.broadcast %505 : vector<10x10x1xf32> to vector<10x10x12xf32>
    %510 = vector.broadcast %508 : vector<1x1x12xf32> to vector<10x10x12xf32>
    %511 = arith.mulf %509, %510 : vector<10x10x12xf32>
    %512 = arith.addf %504, %511 : vector<10x10x12xf32>
    %513 = vector.extract_strided_slice %207 {offsets = [2, 0, 2], sizes = [10, 10, 1], strides = [1, 1, 1]} : vector<12x12x6xf32> to vector<10x10x1xf32>
    %c38 = arith.constant 38 : index
    %c0_78 = arith.constant 0 : index
    %514 = vector.load %arg4[%c38, %c0_78] : memref<54x12xf32, #tpu.memory_space<vmem>>, vector<1x12xf32>
    %515 = vector.shape_cast %514 : vector<1x12xf32> to vector<12xf32>
    %516 = vector.shape_cast %515 : vector<12xf32> to vector<1x1x12xf32>
    %517 = vector.broadcast %513 : vector<10x10x1xf32> to vector<10x10x12xf32>
    %518 = vector.broadcast %516 : vector<1x1x12xf32> to vector<10x10x12xf32>
    %519 = arith.mulf %517, %518 : vector<10x10x12xf32>
    %520 = arith.addf %512, %519 : vector<10x10x12xf32>
    %521 = vector.extract_strided_slice %207 {offsets = [2, 0, 3], sizes = [10, 10, 1], strides = [1, 1, 1]} : vector<12x12x6xf32> to vector<10x10x1xf32>
    %c39 = arith.constant 39 : index
    %c0_79 = arith.constant 0 : index
    %522 = vector.load %arg4[%c39, %c0_79] : memref<54x12xf32, #tpu.memory_space<vmem>>, vector<1x12xf32>
    %523 = vector.shape_cast %522 : vector<1x12xf32> to vector<12xf32>
    %524 = vector.shape_cast %523 : vector<12xf32> to vector<1x1x12xf32>
    %525 = vector.broadcast %521 : vector<10x10x1xf32> to vector<10x10x12xf32>
    %526 = vector.broadcast %524 : vector<1x1x12xf32> to vector<10x10x12xf32>
    %527 = arith.mulf %525, %526 : vector<10x10x12xf32>
    %528 = arith.addf %520, %527 : vector<10x10x12xf32>
    %529 = vector.extract_strided_slice %207 {offsets = [2, 0, 4], sizes = [10, 10, 1], strides = [1, 1, 1]} : vector<12x12x6xf32> to vector<10x10x1xf32>
    %c40 = arith.constant 40 : index
    %c0_80 = arith.constant 0 : index
    %530 = vector.load %arg4[%c40, %c0_80] : memref<54x12xf32, #tpu.memory_space<vmem>>, vector<1x12xf32>
    %531 = vector.shape_cast %530 : vector<1x12xf32> to vector<12xf32>
    %532 = vector.shape_cast %531 : vector<12xf32> to vector<1x1x12xf32>
    %533 = vector.broadcast %529 : vector<10x10x1xf32> to vector<10x10x12xf32>
    %534 = vector.broadcast %532 : vector<1x1x12xf32> to vector<10x10x12xf32>
    %535 = arith.mulf %533, %534 : vector<10x10x12xf32>
    %536 = arith.addf %528, %535 : vector<10x10x12xf32>
    %537 = vector.extract_strided_slice %207 {offsets = [2, 0, 5], sizes = [10, 10, 1], strides = [1, 1, 1]} : vector<12x12x6xf32> to vector<10x10x1xf32>
    %c41 = arith.constant 41 : index
    %c0_81 = arith.constant 0 : index
    %538 = vector.load %arg4[%c41, %c0_81] : memref<54x12xf32, #tpu.memory_space<vmem>>, vector<1x12xf32>
    %539 = vector.shape_cast %538 : vector<1x12xf32> to vector<12xf32>
    %540 = vector.shape_cast %539 : vector<12xf32> to vector<1x1x12xf32>
    %541 = vector.broadcast %537 : vector<10x10x1xf32> to vector<10x10x12xf32>
    %542 = vector.broadcast %540 : vector<1x1x12xf32> to vector<10x10x12xf32>
    %543 = arith.mulf %541, %542 : vector<10x10x12xf32>
    %544 = arith.addf %536, %543 : vector<10x10x12xf32>
    %545 = vector.extract_strided_slice %207 {offsets = [2, 1, 0], sizes = [10, 10, 1], strides = [1, 1, 1]} : vector<12x12x6xf32> to vector<10x10x1xf32>
    %c42 = arith.constant 42 : index
    %c0_82 = arith.constant 0 : index
    %546 = vector.load %arg4[%c42, %c0_82] : memref<54x12xf32, #tpu.memory_space<vmem>>, vector<1x12xf32>
    %547 = vector.shape_cast %546 : vector<1x12xf32> to vector<12xf32>
    %548 = vector.shape_cast %547 : vector<12xf32> to vector<1x1x12xf32>
    %549 = vector.broadcast %545 : vector<10x10x1xf32> to vector<10x10x12xf32>
    %550 = vector.broadcast %548 : vector<1x1x12xf32> to vector<10x10x12xf32>
    %551 = arith.mulf %549, %550 : vector<10x10x12xf32>
    %552 = arith.addf %544, %551 : vector<10x10x12xf32>
    %553 = vector.extract_strided_slice %207 {offsets = [2, 1, 1], sizes = [10, 10, 1], strides = [1, 1, 1]} : vector<12x12x6xf32> to vector<10x10x1xf32>
    %c43 = arith.constant 43 : index
    %c0_83 = arith.constant 0 : index
    %554 = vector.load %arg4[%c43, %c0_83] : memref<54x12xf32, #tpu.memory_space<vmem>>, vector<1x12xf32>
    %555 = vector.shape_cast %554 : vector<1x12xf32> to vector<12xf32>
    %556 = vector.shape_cast %555 : vector<12xf32> to vector<1x1x12xf32>
    %557 = vector.broadcast %553 : vector<10x10x1xf32> to vector<10x10x12xf32>
    %558 = vector.broadcast %556 : vector<1x1x12xf32> to vector<10x10x12xf32>
    %559 = arith.mulf %557, %558 : vector<10x10x12xf32>
    %560 = arith.addf %552, %559 : vector<10x10x12xf32>
    %561 = vector.extract_strided_slice %207 {offsets = [2, 1, 2], sizes = [10, 10, 1], strides = [1, 1, 1]} : vector<12x12x6xf32> to vector<10x10x1xf32>
    %c44 = arith.constant 44 : index
    %c0_84 = arith.constant 0 : index
    %562 = vector.load %arg4[%c44, %c0_84] : memref<54x12xf32, #tpu.memory_space<vmem>>, vector<1x12xf32>
    %563 = vector.shape_cast %562 : vector<1x12xf32> to vector<12xf32>
    %564 = vector.shape_cast %563 : vector<12xf32> to vector<1x1x12xf32>
    %565 = vector.broadcast %561 : vector<10x10x1xf32> to vector<10x10x12xf32>
    %566 = vector.broadcast %564 : vector<1x1x12xf32> to vector<10x10x12xf32>
    %567 = arith.mulf %565, %566 : vector<10x10x12xf32>
    %568 = arith.addf %560, %567 : vector<10x10x12xf32>
    %569 = vector.extract_strided_slice %207 {offsets = [2, 1, 3], sizes = [10, 10, 1], strides = [1, 1, 1]} : vector<12x12x6xf32> to vector<10x10x1xf32>
    %c45 = arith.constant 45 : index
    %c0_85 = arith.constant 0 : index
    %570 = vector.load %arg4[%c45, %c0_85] : memref<54x12xf32, #tpu.memory_space<vmem>>, vector<1x12xf32>
    %571 = vector.shape_cast %570 : vector<1x12xf32> to vector<12xf32>
    %572 = vector.shape_cast %571 : vector<12xf32> to vector<1x1x12xf32>
    %573 = vector.broadcast %569 : vector<10x10x1xf32> to vector<10x10x12xf32>
    %574 = vector.broadcast %572 : vector<1x1x12xf32> to vector<10x10x12xf32>
    %575 = arith.mulf %573, %574 : vector<10x10x12xf32>
    %576 = arith.addf %568, %575 : vector<10x10x12xf32>
    %577 = vector.extract_strided_slice %207 {offsets = [2, 1, 4], sizes = [10, 10, 1], strides = [1, 1, 1]} : vector<12x12x6xf32> to vector<10x10x1xf32>
    %c46 = arith.constant 46 : index
    %c0_86 = arith.constant 0 : index
    %578 = vector.load %arg4[%c46, %c0_86] : memref<54x12xf32, #tpu.memory_space<vmem>>, vector<1x12xf32>
    %579 = vector.shape_cast %578 : vector<1x12xf32> to vector<12xf32>
    %580 = vector.shape_cast %579 : vector<12xf32> to vector<1x1x12xf32>
    %581 = vector.broadcast %577 : vector<10x10x1xf32> to vector<10x10x12xf32>
    %582 = vector.broadcast %580 : vector<1x1x12xf32> to vector<10x10x12xf32>
    %583 = arith.mulf %581, %582 : vector<10x10x12xf32>
    %584 = arith.addf %576, %583 : vector<10x10x12xf32>
    %585 = vector.extract_strided_slice %207 {offsets = [2, 1, 5], sizes = [10, 10, 1], strides = [1, 1, 1]} : vector<12x12x6xf32> to vector<10x10x1xf32>
    %c47 = arith.constant 47 : index
    %c0_87 = arith.constant 0 : index
    %586 = vector.load %arg4[%c47, %c0_87] : memref<54x12xf32, #tpu.memory_space<vmem>>, vector<1x12xf32>
    %587 = vector.shape_cast %586 : vector<1x12xf32> to vector<12xf32>
    %588 = vector.shape_cast %587 : vector<12xf32> to vector<1x1x12xf32>
    %589 = vector.broadcast %585 : vector<10x10x1xf32> to vector<10x10x12xf32>
    %590 = vector.broadcast %588 : vector<1x1x12xf32> to vector<10x10x12xf32>
    %591 = arith.mulf %589, %590 : vector<10x10x12xf32>
    %592 = arith.addf %584, %591 : vector<10x10x12xf32>
    %593 = vector.extract_strided_slice %207 {offsets = [2, 2, 0], sizes = [10, 10, 1], strides = [1, 1, 1]} : vector<12x12x6xf32> to vector<10x10x1xf32>
    %c48 = arith.constant 48 : index
    %c0_88 = arith.constant 0 : index
    %594 = vector.load %arg4[%c48, %c0_88] : memref<54x12xf32, #tpu.memory_space<vmem>>, vector<1x12xf32>
    %595 = vector.shape_cast %594 : vector<1x12xf32> to vector<12xf32>
    %596 = vector.shape_cast %595 : vector<12xf32> to vector<1x1x12xf32>
    %597 = vector.broadcast %593 : vector<10x10x1xf32> to vector<10x10x12xf32>
    %598 = vector.broadcast %596 : vector<1x1x12xf32> to vector<10x10x12xf32>
    %599 = arith.mulf %597, %598 : vector<10x10x12xf32>
    %600 = arith.addf %592, %599 : vector<10x10x12xf32>
    %601 = vector.extract_strided_slice %207 {offsets = [2, 2, 1], sizes = [10, 10, 1], strides = [1, 1, 1]} : vector<12x12x6xf32> to vector<10x10x1xf32>
    %c49 = arith.constant 49 : index
    %c0_89 = arith.constant 0 : index
    %602 = vector.load %arg4[%c49, %c0_89] : memref<54x12xf32, #tpu.memory_space<vmem>>, vector<1x12xf32>
    %603 = vector.shape_cast %602 : vector<1x12xf32> to vector<12xf32>
    %604 = vector.shape_cast %603 : vector<12xf32> to vector<1x1x12xf32>
    %605 = vector.broadcast %601 : vector<10x10x1xf32> to vector<10x10x12xf32>
    %606 = vector.broadcast %604 : vector<1x1x12xf32> to vector<10x10x12xf32>
    %607 = arith.mulf %605, %606 : vector<10x10x12xf32>
    %608 = arith.addf %600, %607 : vector<10x10x12xf32>
    %609 = vector.extract_strided_slice %207 {offsets = [2, 2, 2], sizes = [10, 10, 1], strides = [1, 1, 1]} : vector<12x12x6xf32> to vector<10x10x1xf32>
    %c50 = arith.constant 50 : index
    %c0_90 = arith.constant 0 : index
    %610 = vector.load %arg4[%c50, %c0_90] : memref<54x12xf32, #tpu.memory_space<vmem>>, vector<1x12xf32>
    %611 = vector.shape_cast %610 : vector<1x12xf32> to vector<12xf32>
    %612 = vector.shape_cast %611 : vector<12xf32> to vector<1x1x12xf32>
    %613 = vector.broadcast %609 : vector<10x10x1xf32> to vector<10x10x12xf32>
    %614 = vector.broadcast %612 : vector<1x1x12xf32> to vector<10x10x12xf32>
    %615 = arith.mulf %613, %614 : vector<10x10x12xf32>
    %616 = arith.addf %608, %615 : vector<10x10x12xf32>
    %617 = vector.extract_strided_slice %207 {offsets = [2, 2, 3], sizes = [10, 10, 1], strides = [1, 1, 1]} : vector<12x12x6xf32> to vector<10x10x1xf32>
    %c51 = arith.constant 51 : index
    %c0_91 = arith.constant 0 : index
    %618 = vector.load %arg4[%c51, %c0_91] : memref<54x12xf32, #tpu.memory_space<vmem>>, vector<1x12xf32>
    %619 = vector.shape_cast %618 : vector<1x12xf32> to vector<12xf32>
    %620 = vector.shape_cast %619 : vector<12xf32> to vector<1x1x12xf32>
    %621 = vector.broadcast %617 : vector<10x10x1xf32> to vector<10x10x12xf32>
    %622 = vector.broadcast %620 : vector<1x1x12xf32> to vector<10x10x12xf32>
    %623 = arith.mulf %621, %622 : vector<10x10x12xf32>
    %624 = arith.addf %616, %623 : vector<10x10x12xf32>
    %625 = vector.extract_strided_slice %207 {offsets = [2, 2, 4], sizes = [10, 10, 1], strides = [1, 1, 1]} : vector<12x12x6xf32> to vector<10x10x1xf32>
    %c52 = arith.constant 52 : index
    %c0_92 = arith.constant 0 : index
    %626 = vector.load %arg4[%c52, %c0_92] : memref<54x12xf32, #tpu.memory_space<vmem>>, vector<1x12xf32>
    %627 = vector.shape_cast %626 : vector<1x12xf32> to vector<12xf32>
    %628 = vector.shape_cast %627 : vector<12xf32> to vector<1x1x12xf32>
    %629 = vector.broadcast %625 : vector<10x10x1xf32> to vector<10x10x12xf32>
    %630 = vector.broadcast %628 : vector<1x1x12xf32> to vector<10x10x12xf32>
    %631 = arith.mulf %629, %630 : vector<10x10x12xf32>
    %632 = arith.addf %624, %631 : vector<10x10x12xf32>
    %633 = vector.extract_strided_slice %207 {offsets = [2, 2, 5], sizes = [10, 10, 1], strides = [1, 1, 1]} : vector<12x12x6xf32> to vector<10x10x1xf32>
    %c53 = arith.constant 53 : index
    %c0_93 = arith.constant 0 : index
    %634 = vector.load %arg4[%c53, %c0_93] : memref<54x12xf32, #tpu.memory_space<vmem>>, vector<1x12xf32>
    %635 = vector.shape_cast %634 : vector<1x12xf32> to vector<12xf32>
    %636 = vector.shape_cast %635 : vector<12xf32> to vector<1x1x12xf32>
    %637 = vector.broadcast %633 : vector<10x10x1xf32> to vector<10x10x12xf32>
    %638 = vector.broadcast %636 : vector<1x1x12xf32> to vector<10x10x12xf32>
    %639 = arith.mulf %637, %638 : vector<10x10x12xf32>
    %640 = arith.addf %632, %639 : vector<10x10x12xf32>
    %c0_94 = arith.constant 0 : index
    %c0_95 = arith.constant 0 : index
    %641 = vector.load %arg5[%c0_94, %c0_95] : memref<1x12xf32, #tpu.memory_space<vmem>>, vector<1x12xf32>
    %642 = vector.shape_cast %641 : vector<1x12xf32> to vector<12xf32>
    %643 = vector.shape_cast %642 : vector<12xf32> to vector<1x1x12xf32>
    %644 = vector.broadcast %643 : vector<1x1x12xf32> to vector<10x10x12xf32>
    %645 = arith.addf %640, %644 : vector<10x10x12xf32>
    %cst_96 = arith.constant 0.000000e+00 : f32
    %646 = vector.broadcast %cst_96 : f32 to vector<10x10x12xf32>
    %647 = arith.maximumf %645, %646 : vector<10x10x12xf32>
    %648 = vector.extract_strided_slice %647 {offsets = [0, 0, 0], sizes = [1, 10, 12], strides = [1, 1, 1]} : vector<10x10x12xf32> to vector<1x10x12xf32>
    %649 = vector.shape_cast %648 : vector<1x10x12xf32> to vector<10x12xf32>
    %650 = vector.extract_strided_slice %647 {offsets = [1, 0, 0], sizes = [1, 10, 12], strides = [1, 1, 1]} : vector<10x10x12xf32> to vector<1x10x12xf32>
    %651 = vector.shape_cast %650 : vector<1x10x12xf32> to vector<10x12xf32>
    %652 = arith.maximumf %649, %651 : vector<10x12xf32>
    %653 = vector.extract_strided_slice %647 {offsets = [2, 0, 0], sizes = [1, 10, 12], strides = [1, 1, 1]} : vector<10x10x12xf32> to vector<1x10x12xf32>
    %654 = vector.shape_cast %653 : vector<1x10x12xf32> to vector<10x12xf32>
    %655 = vector.extract_strided_slice %647 {offsets = [3, 0, 0], sizes = [1, 10, 12], strides = [1, 1, 1]} : vector<10x10x12xf32> to vector<1x10x12xf32>
    %656 = vector.shape_cast %655 : vector<1x10x12xf32> to vector<10x12xf32>
    %657 = arith.maximumf %654, %656 : vector<10x12xf32>
    %658 = vector.extract_strided_slice %647 {offsets = [4, 0, 0], sizes = [1, 10, 12], strides = [1, 1, 1]} : vector<10x10x12xf32> to vector<1x10x12xf32>
    %659 = vector.shape_cast %658 : vector<1x10x12xf32> to vector<10x12xf32>
    %660 = vector.extract_strided_slice %647 {offsets = [5, 0, 0], sizes = [1, 10, 12], strides = [1, 1, 1]} : vector<10x10x12xf32> to vector<1x10x12xf32>
    %661 = vector.shape_cast %660 : vector<1x10x12xf32> to vector<10x12xf32>
    %662 = arith.maximumf %659, %661 : vector<10x12xf32>
    %663 = vector.extract_strided_slice %647 {offsets = [6, 0, 0], sizes = [1, 10, 12], strides = [1, 1, 1]} : vector<10x10x12xf32> to vector<1x10x12xf32>
    %664 = vector.shape_cast %663 : vector<1x10x12xf32> to vector<10x12xf32>
    %665 = vector.extract_strided_slice %647 {offsets = [7, 0, 0], sizes = [1, 10, 12], strides = [1, 1, 1]} : vector<10x10x12xf32> to vector<1x10x12xf32>
    %666 = vector.shape_cast %665 : vector<1x10x12xf32> to vector<10x12xf32>
    %667 = arith.maximumf %664, %666 : vector<10x12xf32>
    %668 = vector.extract_strided_slice %647 {offsets = [8, 0, 0], sizes = [1, 10, 12], strides = [1, 1, 1]} : vector<10x10x12xf32> to vector<1x10x12xf32>
    %669 = vector.shape_cast %668 : vector<1x10x12xf32> to vector<10x12xf32>
    %670 = vector.extract_strided_slice %647 {offsets = [9, 0, 0], sizes = [1, 10, 12], strides = [1, 1, 1]} : vector<10x10x12xf32> to vector<1x10x12xf32>
    %671 = vector.shape_cast %670 : vector<1x10x12xf32> to vector<10x12xf32>
    %672 = arith.maximumf %669, %671 : vector<10x12xf32>
    %673 = vector.shape_cast %652 : vector<10x12xf32> to vector<1x10x12xf32>
    %674 = vector.shape_cast %657 : vector<10x12xf32> to vector<1x10x12xf32>
    %675 = vector.shape_cast %662 : vector<10x12xf32> to vector<1x10x12xf32>
    %676 = vector.shape_cast %667 : vector<10x12xf32> to vector<1x10x12xf32>
    %677 = vector.shape_cast %672 : vector<10x12xf32> to vector<1x10x12xf32>
    %678 = tpu.concatenate %673, %674, %675, %676, %677 in 0 : vector<1x10x12xf32>, vector<1x10x12xf32>, vector<1x10x12xf32>, vector<1x10x12xf32>, vector<1x10x12xf32> -> vector<5x10x12xf32>
    %679 = vector.extract_strided_slice %678 {offsets = [0, 0, 0], sizes = [5, 9, 12], strides = [1, 1, 1]} : vector<5x10x12xf32> to vector<5x9x12xf32>
    %680 = vector.extract_strided_slice %678 {offsets = [0, 1, 0], sizes = [5, 9, 12], strides = [1, 1, 1]} : vector<5x10x12xf32> to vector<5x9x12xf32>
    %681 = arith.maximumf %679, %680 : vector<5x9x12xf32>
    %c0_97 = arith.constant 0 : index
    %c0_98 = arith.constant 0 : index
    %682 = vector.load %arg7[%c0_97, %c0_98] : memref<5x9xf32, #tpu.memory_space<vmem>>, vector<5x9xf32>
    %683 = vector.extract_strided_slice %681 {offsets = [0, 0, 0], sizes = [1, 9, 12], strides = [1, 1, 1]} : vector<5x9x12xf32> to vector<1x9x12xf32>
    %684 = vector.shape_cast %683 : vector<1x9x12xf32> to vector<9x12xf32>
    %cst_99 = arith.constant dense<0.000000e+00> : vector<5x12xf32>
    %685 = tpu.matmul %682, %684, %cst_99 {dimension_numbers = #tpu.dot_dimension_numbers<[1], [0], [0], [1], [0, 0, 1, 1], [], []>} : vector<5x9xf32>, vector<9x12xf32>, vector<5x12xf32> -> vector<5x12xf32>
    %686 = vector.extract_strided_slice %681 {offsets = [1, 0, 0], sizes = [1, 9, 12], strides = [1, 1, 1]} : vector<5x9x12xf32> to vector<1x9x12xf32>
    %687 = vector.shape_cast %686 : vector<1x9x12xf32> to vector<9x12xf32>
    %cst_100 = arith.constant dense<0.000000e+00> : vector<5x12xf32>
    %688 = tpu.matmul %682, %687, %cst_100 {dimension_numbers = #tpu.dot_dimension_numbers<[1], [0], [0], [1], [0, 0, 1, 1], [], []>} : vector<5x9xf32>, vector<9x12xf32>, vector<5x12xf32> -> vector<5x12xf32>
    %689 = vector.extract_strided_slice %681 {offsets = [2, 0, 0], sizes = [1, 9, 12], strides = [1, 1, 1]} : vector<5x9x12xf32> to vector<1x9x12xf32>
    %690 = vector.shape_cast %689 : vector<1x9x12xf32> to vector<9x12xf32>
    %cst_101 = arith.constant dense<0.000000e+00> : vector<5x12xf32>
    %691 = tpu.matmul %682, %690, %cst_101 {dimension_numbers = #tpu.dot_dimension_numbers<[1], [0], [0], [1], [0, 0, 1, 1], [], []>} : vector<5x9xf32>, vector<9x12xf32>, vector<5x12xf32> -> vector<5x12xf32>
    %692 = vector.extract_strided_slice %681 {offsets = [3, 0, 0], sizes = [1, 9, 12], strides = [1, 1, 1]} : vector<5x9x12xf32> to vector<1x9x12xf32>
    %693 = vector.shape_cast %692 : vector<1x9x12xf32> to vector<9x12xf32>
    %cst_102 = arith.constant dense<0.000000e+00> : vector<5x12xf32>
    %694 = tpu.matmul %682, %693, %cst_102 {dimension_numbers = #tpu.dot_dimension_numbers<[1], [0], [0], [1], [0, 0, 1, 1], [], []>} : vector<5x9xf32>, vector<9x12xf32>, vector<5x12xf32> -> vector<5x12xf32>
    %695 = vector.extract_strided_slice %681 {offsets = [4, 0, 0], sizes = [1, 9, 12], strides = [1, 1, 1]} : vector<5x9x12xf32> to vector<1x9x12xf32>
    %696 = vector.shape_cast %695 : vector<1x9x12xf32> to vector<9x12xf32>
    %cst_103 = arith.constant dense<0.000000e+00> : vector<5x12xf32>
    %697 = tpu.matmul %682, %696, %cst_103 {dimension_numbers = #tpu.dot_dimension_numbers<[1], [0], [0], [1], [0, 0, 1, 1], [], []>} : vector<5x9xf32>, vector<9x12xf32>, vector<5x12xf32> -> vector<5x12xf32>
    %698 = vector.shape_cast %685 : vector<5x12xf32> to vector<1x5x12xf32>
    %699 = vector.shape_cast %688 : vector<5x12xf32> to vector<1x5x12xf32>
    %700 = vector.shape_cast %691 : vector<5x12xf32> to vector<1x5x12xf32>
    %701 = vector.shape_cast %694 : vector<5x12xf32> to vector<1x5x12xf32>
    %702 = vector.shape_cast %697 : vector<5x12xf32> to vector<1x5x12xf32>
    %703 = tpu.concatenate %698, %699, %700, %701, %702 in 0 : vector<1x5x12xf32>, vector<1x5x12xf32>, vector<1x5x12xf32>, vector<1x5x12xf32>, vector<1x5x12xf32> -> vector<5x5x12xf32>
    %c0_104 = arith.constant 0 : index
    %c0_105 = arith.constant 0 : index
    %704 = vector.load %arg9[%c0_104, %c0_105] : memref<1x128xf32, #tpu.memory_space<vmem>>, vector<1x128xf32>
    %705 = vector.extract_strided_slice %703 {offsets = [0, 0, 0], sizes = [1, 1, 12], strides = [1, 1, 1]} : vector<5x5x12xf32> to vector<1x1x12xf32>
    %706 = vector.shape_cast %705 : vector<1x1x12xf32> to vector<1x12xf32>
    %c0_106 = arith.constant 0 : index
    %c0_107 = arith.constant 0 : index
    %c0_108 = arith.constant 0 : index
    %707 = vector.load %arg8[%c0_106, %c0_107, %c0_108] : memref<25x12x128xf32, #tpu.memory_space<vmem>>, vector<1x12x128xf32>
    %708 = vector.shape_cast %707 : vector<1x12x128xf32> to vector<12x128xf32>
    %cst_109 = arith.constant dense<0.000000e+00> : vector<1x128xf32>
    %709 = tpu.matmul %706, %708, %cst_109 {dimension_numbers = #tpu.dot_dimension_numbers<[1], [0], [0], [1], [0, 0, 1, 1], [], []>} : vector<1x12xf32>, vector<12x128xf32>, vector<1x128xf32> -> vector<1x128xf32>
    %710 = arith.addf %704, %709 : vector<1x128xf32>
    %711 = vector.extract_strided_slice %703 {offsets = [0, 1, 0], sizes = [1, 1, 12], strides = [1, 1, 1]} : vector<5x5x12xf32> to vector<1x1x12xf32>
    %712 = vector.shape_cast %711 : vector<1x1x12xf32> to vector<1x12xf32>
    %c1_110 = arith.constant 1 : index
    %c0_111 = arith.constant 0 : index
    %c0_112 = arith.constant 0 : index
    %713 = vector.load %arg8[%c1_110, %c0_111, %c0_112] : memref<25x12x128xf32, #tpu.memory_space<vmem>>, vector<1x12x128xf32>
    %714 = vector.shape_cast %713 : vector<1x12x128xf32> to vector<12x128xf32>
    %cst_113 = arith.constant dense<0.000000e+00> : vector<1x128xf32>
    %715 = tpu.matmul %712, %714, %cst_113 {dimension_numbers = #tpu.dot_dimension_numbers<[1], [0], [0], [1], [0, 0, 1, 1], [], []>} : vector<1x12xf32>, vector<12x128xf32>, vector<1x128xf32> -> vector<1x128xf32>
    %716 = arith.addf %710, %715 : vector<1x128xf32>
    %717 = vector.extract_strided_slice %703 {offsets = [0, 2, 0], sizes = [1, 1, 12], strides = [1, 1, 1]} : vector<5x5x12xf32> to vector<1x1x12xf32>
    %718 = vector.shape_cast %717 : vector<1x1x12xf32> to vector<1x12xf32>
    %c2_114 = arith.constant 2 : index
    %c0_115 = arith.constant 0 : index
    %c0_116 = arith.constant 0 : index
    %719 = vector.load %arg8[%c2_114, %c0_115, %c0_116] : memref<25x12x128xf32, #tpu.memory_space<vmem>>, vector<1x12x128xf32>
    %720 = vector.shape_cast %719 : vector<1x12x128xf32> to vector<12x128xf32>
    %cst_117 = arith.constant dense<0.000000e+00> : vector<1x128xf32>
    %721 = tpu.matmul %718, %720, %cst_117 {dimension_numbers = #tpu.dot_dimension_numbers<[1], [0], [0], [1], [0, 0, 1, 1], [], []>} : vector<1x12xf32>, vector<12x128xf32>, vector<1x128xf32> -> vector<1x128xf32>
    %722 = arith.addf %716, %721 : vector<1x128xf32>
    %723 = vector.extract_strided_slice %703 {offsets = [0, 3, 0], sizes = [1, 1, 12], strides = [1, 1, 1]} : vector<5x5x12xf32> to vector<1x1x12xf32>
    %724 = vector.shape_cast %723 : vector<1x1x12xf32> to vector<1x12xf32>
    %c3_118 = arith.constant 3 : index
    %c0_119 = arith.constant 0 : index
    %c0_120 = arith.constant 0 : index
    %725 = vector.load %arg8[%c3_118, %c0_119, %c0_120] : memref<25x12x128xf32, #tpu.memory_space<vmem>>, vector<1x12x128xf32>
    %726 = vector.shape_cast %725 : vector<1x12x128xf32> to vector<12x128xf32>
    %cst_121 = arith.constant dense<0.000000e+00> : vector<1x128xf32>
    %727 = tpu.matmul %724, %726, %cst_121 {dimension_numbers = #tpu.dot_dimension_numbers<[1], [0], [0], [1], [0, 0, 1, 1], [], []>} : vector<1x12xf32>, vector<12x128xf32>, vector<1x128xf32> -> vector<1x128xf32>
    %728 = arith.addf %722, %727 : vector<1x128xf32>
    %729 = vector.extract_strided_slice %703 {offsets = [0, 4, 0], sizes = [1, 1, 12], strides = [1, 1, 1]} : vector<5x5x12xf32> to vector<1x1x12xf32>
    %730 = vector.shape_cast %729 : vector<1x1x12xf32> to vector<1x12xf32>
    %c4_122 = arith.constant 4 : index
    %c0_123 = arith.constant 0 : index
    %c0_124 = arith.constant 0 : index
    %731 = vector.load %arg8[%c4_122, %c0_123, %c0_124] : memref<25x12x128xf32, #tpu.memory_space<vmem>>, vector<1x12x128xf32>
    %732 = vector.shape_cast %731 : vector<1x12x128xf32> to vector<12x128xf32>
    %cst_125 = arith.constant dense<0.000000e+00> : vector<1x128xf32>
    %733 = tpu.matmul %730, %732, %cst_125 {dimension_numbers = #tpu.dot_dimension_numbers<[1], [0], [0], [1], [0, 0, 1, 1], [], []>} : vector<1x12xf32>, vector<12x128xf32>, vector<1x128xf32> -> vector<1x128xf32>
    %734 = arith.addf %728, %733 : vector<1x128xf32>
    %735 = vector.extract_strided_slice %703 {offsets = [1, 0, 0], sizes = [1, 1, 12], strides = [1, 1, 1]} : vector<5x5x12xf32> to vector<1x1x12xf32>
    %736 = vector.shape_cast %735 : vector<1x1x12xf32> to vector<1x12xf32>
    %c5_126 = arith.constant 5 : index
    %c0_127 = arith.constant 0 : index
    %c0_128 = arith.constant 0 : index
    %737 = vector.load %arg8[%c5_126, %c0_127, %c0_128] : memref<25x12x128xf32, #tpu.memory_space<vmem>>, vector<1x12x128xf32>
    %738 = vector.shape_cast %737 : vector<1x12x128xf32> to vector<12x128xf32>
    %cst_129 = arith.constant dense<0.000000e+00> : vector<1x128xf32>
    %739 = tpu.matmul %736, %738, %cst_129 {dimension_numbers = #tpu.dot_dimension_numbers<[1], [0], [0], [1], [0, 0, 1, 1], [], []>} : vector<1x12xf32>, vector<12x128xf32>, vector<1x128xf32> -> vector<1x128xf32>
    %740 = arith.addf %734, %739 : vector<1x128xf32>
    %741 = vector.extract_strided_slice %703 {offsets = [1, 1, 0], sizes = [1, 1, 12], strides = [1, 1, 1]} : vector<5x5x12xf32> to vector<1x1x12xf32>
    %742 = vector.shape_cast %741 : vector<1x1x12xf32> to vector<1x12xf32>
    %c6_130 = arith.constant 6 : index
    %c0_131 = arith.constant 0 : index
    %c0_132 = arith.constant 0 : index
    %743 = vector.load %arg8[%c6_130, %c0_131, %c0_132] : memref<25x12x128xf32, #tpu.memory_space<vmem>>, vector<1x12x128xf32>
    %744 = vector.shape_cast %743 : vector<1x12x128xf32> to vector<12x128xf32>
    %cst_133 = arith.constant dense<0.000000e+00> : vector<1x128xf32>
    %745 = tpu.matmul %742, %744, %cst_133 {dimension_numbers = #tpu.dot_dimension_numbers<[1], [0], [0], [1], [0, 0, 1, 1], [], []>} : vector<1x12xf32>, vector<12x128xf32>, vector<1x128xf32> -> vector<1x128xf32>
    %746 = arith.addf %740, %745 : vector<1x128xf32>
    %747 = vector.extract_strided_slice %703 {offsets = [1, 2, 0], sizes = [1, 1, 12], strides = [1, 1, 1]} : vector<5x5x12xf32> to vector<1x1x12xf32>
    %748 = vector.shape_cast %747 : vector<1x1x12xf32> to vector<1x12xf32>
    %c7_134 = arith.constant 7 : index
    %c0_135 = arith.constant 0 : index
    %c0_136 = arith.constant 0 : index
    %749 = vector.load %arg8[%c7_134, %c0_135, %c0_136] : memref<25x12x128xf32, #tpu.memory_space<vmem>>, vector<1x12x128xf32>
    %750 = vector.shape_cast %749 : vector<1x12x128xf32> to vector<12x128xf32>
    %cst_137 = arith.constant dense<0.000000e+00> : vector<1x128xf32>
    %751 = tpu.matmul %748, %750, %cst_137 {dimension_numbers = #tpu.dot_dimension_numbers<[1], [0], [0], [1], [0, 0, 1, 1], [], []>} : vector<1x12xf32>, vector<12x128xf32>, vector<1x128xf32> -> vector<1x128xf32>
    %752 = arith.addf %746, %751 : vector<1x128xf32>
    %753 = vector.extract_strided_slice %703 {offsets = [1, 3, 0], sizes = [1, 1, 12], strides = [1, 1, 1]} : vector<5x5x12xf32> to vector<1x1x12xf32>
    %754 = vector.shape_cast %753 : vector<1x1x12xf32> to vector<1x12xf32>
    %c8_138 = arith.constant 8 : index
    %c0_139 = arith.constant 0 : index
    %c0_140 = arith.constant 0 : index
    %755 = vector.load %arg8[%c8_138, %c0_139, %c0_140] : memref<25x12x128xf32, #tpu.memory_space<vmem>>, vector<1x12x128xf32>
    %756 = vector.shape_cast %755 : vector<1x12x128xf32> to vector<12x128xf32>
    %cst_141 = arith.constant dense<0.000000e+00> : vector<1x128xf32>
    %757 = tpu.matmul %754, %756, %cst_141 {dimension_numbers = #tpu.dot_dimension_numbers<[1], [0], [0], [1], [0, 0, 1, 1], [], []>} : vector<1x12xf32>, vector<12x128xf32>, vector<1x128xf32> -> vector<1x128xf32>
    %758 = arith.addf %752, %757 : vector<1x128xf32>
    %759 = vector.extract_strided_slice %703 {offsets = [1, 4, 0], sizes = [1, 1, 12], strides = [1, 1, 1]} : vector<5x5x12xf32> to vector<1x1x12xf32>
    %760 = vector.shape_cast %759 : vector<1x1x12xf32> to vector<1x12xf32>
    %c9_142 = arith.constant 9 : index
    %c0_143 = arith.constant 0 : index
    %c0_144 = arith.constant 0 : index
    %761 = vector.load %arg8[%c9_142, %c0_143, %c0_144] : memref<25x12x128xf32, #tpu.memory_space<vmem>>, vector<1x12x128xf32>
    %762 = vector.shape_cast %761 : vector<1x12x128xf32> to vector<12x128xf32>
    %cst_145 = arith.constant dense<0.000000e+00> : vector<1x128xf32>
    %763 = tpu.matmul %760, %762, %cst_145 {dimension_numbers = #tpu.dot_dimension_numbers<[1], [0], [0], [1], [0, 0, 1, 1], [], []>} : vector<1x12xf32>, vector<12x128xf32>, vector<1x128xf32> -> vector<1x128xf32>
    %764 = arith.addf %758, %763 : vector<1x128xf32>
    %765 = vector.extract_strided_slice %703 {offsets = [2, 0, 0], sizes = [1, 1, 12], strides = [1, 1, 1]} : vector<5x5x12xf32> to vector<1x1x12xf32>
    %766 = vector.shape_cast %765 : vector<1x1x12xf32> to vector<1x12xf32>
    %c10_146 = arith.constant 10 : index
    %c0_147 = arith.constant 0 : index
    %c0_148 = arith.constant 0 : index
    %767 = vector.load %arg8[%c10_146, %c0_147, %c0_148] : memref<25x12x128xf32, #tpu.memory_space<vmem>>, vector<1x12x128xf32>
    %768 = vector.shape_cast %767 : vector<1x12x128xf32> to vector<12x128xf32>
    %cst_149 = arith.constant dense<0.000000e+00> : vector<1x128xf32>
    %769 = tpu.matmul %766, %768, %cst_149 {dimension_numbers = #tpu.dot_dimension_numbers<[1], [0], [0], [1], [0, 0, 1, 1], [], []>} : vector<1x12xf32>, vector<12x128xf32>, vector<1x128xf32> -> vector<1x128xf32>
    %770 = arith.addf %764, %769 : vector<1x128xf32>
    %771 = vector.extract_strided_slice %703 {offsets = [2, 1, 0], sizes = [1, 1, 12], strides = [1, 1, 1]} : vector<5x5x12xf32> to vector<1x1x12xf32>
    %772 = vector.shape_cast %771 : vector<1x1x12xf32> to vector<1x12xf32>
    %c11_150 = arith.constant 11 : index
    %c0_151 = arith.constant 0 : index
    %c0_152 = arith.constant 0 : index
    %773 = vector.load %arg8[%c11_150, %c0_151, %c0_152] : memref<25x12x128xf32, #tpu.memory_space<vmem>>, vector<1x12x128xf32>
    %774 = vector.shape_cast %773 : vector<1x12x128xf32> to vector<12x128xf32>
    %cst_153 = arith.constant dense<0.000000e+00> : vector<1x128xf32>
    %775 = tpu.matmul %772, %774, %cst_153 {dimension_numbers = #tpu.dot_dimension_numbers<[1], [0], [0], [1], [0, 0, 1, 1], [], []>} : vector<1x12xf32>, vector<12x128xf32>, vector<1x128xf32> -> vector<1x128xf32>
    %776 = arith.addf %770, %775 : vector<1x128xf32>
    %777 = vector.extract_strided_slice %703 {offsets = [2, 2, 0], sizes = [1, 1, 12], strides = [1, 1, 1]} : vector<5x5x12xf32> to vector<1x1x12xf32>
    %778 = vector.shape_cast %777 : vector<1x1x12xf32> to vector<1x12xf32>
    %c12_154 = arith.constant 12 : index
    %c0_155 = arith.constant 0 : index
    %c0_156 = arith.constant 0 : index
    %779 = vector.load %arg8[%c12_154, %c0_155, %c0_156] : memref<25x12x128xf32, #tpu.memory_space<vmem>>, vector<1x12x128xf32>
    %780 = vector.shape_cast %779 : vector<1x12x128xf32> to vector<12x128xf32>
    %cst_157 = arith.constant dense<0.000000e+00> : vector<1x128xf32>
    %781 = tpu.matmul %778, %780, %cst_157 {dimension_numbers = #tpu.dot_dimension_numbers<[1], [0], [0], [1], [0, 0, 1, 1], [], []>} : vector<1x12xf32>, vector<12x128xf32>, vector<1x128xf32> -> vector<1x128xf32>
    %782 = arith.addf %776, %781 : vector<1x128xf32>
    %783 = vector.extract_strided_slice %703 {offsets = [2, 3, 0], sizes = [1, 1, 12], strides = [1, 1, 1]} : vector<5x5x12xf32> to vector<1x1x12xf32>
    %784 = vector.shape_cast %783 : vector<1x1x12xf32> to vector<1x12xf32>
    %c13_158 = arith.constant 13 : index
    %c0_159 = arith.constant 0 : index
    %c0_160 = arith.constant 0 : index
    %785 = vector.load %arg8[%c13_158, %c0_159, %c0_160] : memref<25x12x128xf32, #tpu.memory_space<vmem>>, vector<1x12x128xf32>
    %786 = vector.shape_cast %785 : vector<1x12x128xf32> to vector<12x128xf32>
    %cst_161 = arith.constant dense<0.000000e+00> : vector<1x128xf32>
    %787 = tpu.matmul %784, %786, %cst_161 {dimension_numbers = #tpu.dot_dimension_numbers<[1], [0], [0], [1], [0, 0, 1, 1], [], []>} : vector<1x12xf32>, vector<12x128xf32>, vector<1x128xf32> -> vector<1x128xf32>
    %788 = arith.addf %782, %787 : vector<1x128xf32>
    %789 = vector.extract_strided_slice %703 {offsets = [2, 4, 0], sizes = [1, 1, 12], strides = [1, 1, 1]} : vector<5x5x12xf32> to vector<1x1x12xf32>
    %790 = vector.shape_cast %789 : vector<1x1x12xf32> to vector<1x12xf32>
    %c14_162 = arith.constant 14 : index
    %c0_163 = arith.constant 0 : index
    %c0_164 = arith.constant 0 : index
    %791 = vector.load %arg8[%c14_162, %c0_163, %c0_164] : memref<25x12x128xf32, #tpu.memory_space<vmem>>, vector<1x12x128xf32>
    %792 = vector.shape_cast %791 : vector<1x12x128xf32> to vector<12x128xf32>
    %cst_165 = arith.constant dense<0.000000e+00> : vector<1x128xf32>
    %793 = tpu.matmul %790, %792, %cst_165 {dimension_numbers = #tpu.dot_dimension_numbers<[1], [0], [0], [1], [0, 0, 1, 1], [], []>} : vector<1x12xf32>, vector<12x128xf32>, vector<1x128xf32> -> vector<1x128xf32>
    %794 = arith.addf %788, %793 : vector<1x128xf32>
    %795 = vector.extract_strided_slice %703 {offsets = [3, 0, 0], sizes = [1, 1, 12], strides = [1, 1, 1]} : vector<5x5x12xf32> to vector<1x1x12xf32>
    %796 = vector.shape_cast %795 : vector<1x1x12xf32> to vector<1x12xf32>
    %c15_166 = arith.constant 15 : index
    %c0_167 = arith.constant 0 : index
    %c0_168 = arith.constant 0 : index
    %797 = vector.load %arg8[%c15_166, %c0_167, %c0_168] : memref<25x12x128xf32, #tpu.memory_space<vmem>>, vector<1x12x128xf32>
    %798 = vector.shape_cast %797 : vector<1x12x128xf32> to vector<12x128xf32>
    %cst_169 = arith.constant dense<0.000000e+00> : vector<1x128xf32>
    %799 = tpu.matmul %796, %798, %cst_169 {dimension_numbers = #tpu.dot_dimension_numbers<[1], [0], [0], [1], [0, 0, 1, 1], [], []>} : vector<1x12xf32>, vector<12x128xf32>, vector<1x128xf32> -> vector<1x128xf32>
    %800 = arith.addf %794, %799 : vector<1x128xf32>
    %801 = vector.extract_strided_slice %703 {offsets = [3, 1, 0], sizes = [1, 1, 12], strides = [1, 1, 1]} : vector<5x5x12xf32> to vector<1x1x12xf32>
    %802 = vector.shape_cast %801 : vector<1x1x12xf32> to vector<1x12xf32>
    %c16_170 = arith.constant 16 : index
    %c0_171 = arith.constant 0 : index
    %c0_172 = arith.constant 0 : index
    %803 = vector.load %arg8[%c16_170, %c0_171, %c0_172] : memref<25x12x128xf32, #tpu.memory_space<vmem>>, vector<1x12x128xf32>
    %804 = vector.shape_cast %803 : vector<1x12x128xf32> to vector<12x128xf32>
    %cst_173 = arith.constant dense<0.000000e+00> : vector<1x128xf32>
    %805 = tpu.matmul %802, %804, %cst_173 {dimension_numbers = #tpu.dot_dimension_numbers<[1], [0], [0], [1], [0, 0, 1, 1], [], []>} : vector<1x12xf32>, vector<12x128xf32>, vector<1x128xf32> -> vector<1x128xf32>
    %806 = arith.addf %800, %805 : vector<1x128xf32>
    %807 = vector.extract_strided_slice %703 {offsets = [3, 2, 0], sizes = [1, 1, 12], strides = [1, 1, 1]} : vector<5x5x12xf32> to vector<1x1x12xf32>
    %808 = vector.shape_cast %807 : vector<1x1x12xf32> to vector<1x12xf32>
    %c17_174 = arith.constant 17 : index
    %c0_175 = arith.constant 0 : index
    %c0_176 = arith.constant 0 : index
    %809 = vector.load %arg8[%c17_174, %c0_175, %c0_176] : memref<25x12x128xf32, #tpu.memory_space<vmem>>, vector<1x12x128xf32>
    %810 = vector.shape_cast %809 : vector<1x12x128xf32> to vector<12x128xf32>
    %cst_177 = arith.constant dense<0.000000e+00> : vector<1x128xf32>
    %811 = tpu.matmul %808, %810, %cst_177 {dimension_numbers = #tpu.dot_dimension_numbers<[1], [0], [0], [1], [0, 0, 1, 1], [], []>} : vector<1x12xf32>, vector<12x128xf32>, vector<1x128xf32> -> vector<1x128xf32>
    %812 = arith.addf %806, %811 : vector<1x128xf32>
    %813 = vector.extract_strided_slice %703 {offsets = [3, 3, 0], sizes = [1, 1, 12], strides = [1, 1, 1]} : vector<5x5x12xf32> to vector<1x1x12xf32>
    %814 = vector.shape_cast %813 : vector<1x1x12xf32> to vector<1x12xf32>
    %c18_178 = arith.constant 18 : index
    %c0_179 = arith.constant 0 : index
    %c0_180 = arith.constant 0 : index
    %815 = vector.load %arg8[%c18_178, %c0_179, %c0_180] : memref<25x12x128xf32, #tpu.memory_space<vmem>>, vector<1x12x128xf32>
    %816 = vector.shape_cast %815 : vector<1x12x128xf32> to vector<12x128xf32>
    %cst_181 = arith.constant dense<0.000000e+00> : vector<1x128xf32>
    %817 = tpu.matmul %814, %816, %cst_181 {dimension_numbers = #tpu.dot_dimension_numbers<[1], [0], [0], [1], [0, 0, 1, 1], [], []>} : vector<1x12xf32>, vector<12x128xf32>, vector<1x128xf32> -> vector<1x128xf32>
    %818 = arith.addf %812, %817 : vector<1x128xf32>
    %819 = vector.extract_strided_slice %703 {offsets = [3, 4, 0], sizes = [1, 1, 12], strides = [1, 1, 1]} : vector<5x5x12xf32> to vector<1x1x12xf32>
    %820 = vector.shape_cast %819 : vector<1x1x12xf32> to vector<1x12xf32>
    %c19_182 = arith.constant 19 : index
    %c0_183 = arith.constant 0 : index
    %c0_184 = arith.constant 0 : index
    %821 = vector.load %arg8[%c19_182, %c0_183, %c0_184] : memref<25x12x128xf32, #tpu.memory_space<vmem>>, vector<1x12x128xf32>
    %822 = vector.shape_cast %821 : vector<1x12x128xf32> to vector<12x128xf32>
    %cst_185 = arith.constant dense<0.000000e+00> : vector<1x128xf32>
    %823 = tpu.matmul %820, %822, %cst_185 {dimension_numbers = #tpu.dot_dimension_numbers<[1], [0], [0], [1], [0, 0, 1, 1], [], []>} : vector<1x12xf32>, vector<12x128xf32>, vector<1x128xf32> -> vector<1x128xf32>
    %824 = arith.addf %818, %823 : vector<1x128xf32>
    %825 = vector.extract_strided_slice %703 {offsets = [4, 0, 0], sizes = [1, 1, 12], strides = [1, 1, 1]} : vector<5x5x12xf32> to vector<1x1x12xf32>
    %826 = vector.shape_cast %825 : vector<1x1x12xf32> to vector<1x12xf32>
    %c20_186 = arith.constant 20 : index
    %c0_187 = arith.constant 0 : index
    %c0_188 = arith.constant 0 : index
    %827 = vector.load %arg8[%c20_186, %c0_187, %c0_188] : memref<25x12x128xf32, #tpu.memory_space<vmem>>, vector<1x12x128xf32>
    %828 = vector.shape_cast %827 : vector<1x12x128xf32> to vector<12x128xf32>
    %cst_189 = arith.constant dense<0.000000e+00> : vector<1x128xf32>
    %829 = tpu.matmul %826, %828, %cst_189 {dimension_numbers = #tpu.dot_dimension_numbers<[1], [0], [0], [1], [0, 0, 1, 1], [], []>} : vector<1x12xf32>, vector<12x128xf32>, vector<1x128xf32> -> vector<1x128xf32>
    %830 = arith.addf %824, %829 : vector<1x128xf32>
    %831 = vector.extract_strided_slice %703 {offsets = [4, 1, 0], sizes = [1, 1, 12], strides = [1, 1, 1]} : vector<5x5x12xf32> to vector<1x1x12xf32>
    %832 = vector.shape_cast %831 : vector<1x1x12xf32> to vector<1x12xf32>
    %c21_190 = arith.constant 21 : index
    %c0_191 = arith.constant 0 : index
    %c0_192 = arith.constant 0 : index
    %833 = vector.load %arg8[%c21_190, %c0_191, %c0_192] : memref<25x12x128xf32, #tpu.memory_space<vmem>>, vector<1x12x128xf32>
    %834 = vector.shape_cast %833 : vector<1x12x128xf32> to vector<12x128xf32>
    %cst_193 = arith.constant dense<0.000000e+00> : vector<1x128xf32>
    %835 = tpu.matmul %832, %834, %cst_193 {dimension_numbers = #tpu.dot_dimension_numbers<[1], [0], [0], [1], [0, 0, 1, 1], [], []>} : vector<1x12xf32>, vector<12x128xf32>, vector<1x128xf32> -> vector<1x128xf32>
    %836 = arith.addf %830, %835 : vector<1x128xf32>
    %837 = vector.extract_strided_slice %703 {offsets = [4, 2, 0], sizes = [1, 1, 12], strides = [1, 1, 1]} : vector<5x5x12xf32> to vector<1x1x12xf32>
    %838 = vector.shape_cast %837 : vector<1x1x12xf32> to vector<1x12xf32>
    %c22_194 = arith.constant 22 : index
    %c0_195 = arith.constant 0 : index
    %c0_196 = arith.constant 0 : index
    %839 = vector.load %arg8[%c22_194, %c0_195, %c0_196] : memref<25x12x128xf32, #tpu.memory_space<vmem>>, vector<1x12x128xf32>
    %840 = vector.shape_cast %839 : vector<1x12x128xf32> to vector<12x128xf32>
    %cst_197 = arith.constant dense<0.000000e+00> : vector<1x128xf32>
    %841 = tpu.matmul %838, %840, %cst_197 {dimension_numbers = #tpu.dot_dimension_numbers<[1], [0], [0], [1], [0, 0, 1, 1], [], []>} : vector<1x12xf32>, vector<12x128xf32>, vector<1x128xf32> -> vector<1x128xf32>
    %842 = arith.addf %836, %841 : vector<1x128xf32>
    %843 = vector.extract_strided_slice %703 {offsets = [4, 3, 0], sizes = [1, 1, 12], strides = [1, 1, 1]} : vector<5x5x12xf32> to vector<1x1x12xf32>
    %844 = vector.shape_cast %843 : vector<1x1x12xf32> to vector<1x12xf32>
    %c23_198 = arith.constant 23 : index
    %c0_199 = arith.constant 0 : index
    %c0_200 = arith.constant 0 : index
    %845 = vector.load %arg8[%c23_198, %c0_199, %c0_200] : memref<25x12x128xf32, #tpu.memory_space<vmem>>, vector<1x12x128xf32>
    %846 = vector.shape_cast %845 : vector<1x12x128xf32> to vector<12x128xf32>
    %cst_201 = arith.constant dense<0.000000e+00> : vector<1x128xf32>
    %847 = tpu.matmul %844, %846, %cst_201 {dimension_numbers = #tpu.dot_dimension_numbers<[1], [0], [0], [1], [0, 0, 1, 1], [], []>} : vector<1x12xf32>, vector<12x128xf32>, vector<1x128xf32> -> vector<1x128xf32>
    %848 = arith.addf %842, %847 : vector<1x128xf32>
    %849 = vector.extract_strided_slice %703 {offsets = [4, 4, 0], sizes = [1, 1, 12], strides = [1, 1, 1]} : vector<5x5x12xf32> to vector<1x1x12xf32>
    %850 = vector.shape_cast %849 : vector<1x1x12xf32> to vector<1x12xf32>
    %c24_202 = arith.constant 24 : index
    %c0_203 = arith.constant 0 : index
    %c0_204 = arith.constant 0 : index
    %851 = vector.load %arg8[%c24_202, %c0_203, %c0_204] : memref<25x12x128xf32, #tpu.memory_space<vmem>>, vector<1x12x128xf32>
    %852 = vector.shape_cast %851 : vector<1x12x128xf32> to vector<12x128xf32>
    %cst_205 = arith.constant dense<0.000000e+00> : vector<1x128xf32>
    %853 = tpu.matmul %850, %852, %cst_205 {dimension_numbers = #tpu.dot_dimension_numbers<[1], [0], [0], [1], [0, 0, 1, 1], [], []>} : vector<1x12xf32>, vector<12x128xf32>, vector<1x128xf32> -> vector<1x128xf32>
    %854 = arith.addf %848, %853 : vector<1x128xf32>
    %cst_206 = arith.constant 0.000000e+00 : f32
    %855 = vector.broadcast %cst_206 : f32 to vector<1x128xf32>
    %856 = arith.maximumf %854, %855 : vector<1x128xf32>
    %c0_207 = arith.constant 0 : index
    %c0_208 = arith.constant 0 : index
    %857 = vector.load %arg10[%c0_207, %c0_208] : memref<128x128xf32, #tpu.memory_space<vmem>>, vector<128x128xf32>
    %cst_209 = arith.constant dense<0.000000e+00> : vector<1x128xf32>
    %858 = tpu.matmul %856, %857, %cst_209 {dimension_numbers = #tpu.dot_dimension_numbers<[1], [0], [0], [1], [0, 0, 1, 1], [], []>} : vector<1x128xf32>, vector<128x128xf32>, vector<1x128xf32> -> vector<1x128xf32>
    %c0_210 = arith.constant 0 : index
    %c0_211 = arith.constant 0 : index
    %859 = vector.load %arg11[%c0_210, %c0_211] : memref<1x128xf32, #tpu.memory_space<vmem>>, vector<1x128xf32>
    %860 = arith.addf %858, %859 : vector<1x128xf32>
    %cst_212 = arith.constant 0.000000e+00 : f32
    %861 = vector.broadcast %cst_212 : f32 to vector<1x128xf32>
    %862 = arith.maximumf %860, %861 : vector<1x128xf32>
    %c0_213 = arith.constant 0 : index
    %c0_214 = arith.constant 0 : index
    %863 = vector.load %arg12[%c0_213, %c0_214] : memref<128x10xf32, #tpu.memory_space<vmem>>, vector<128x10xf32>
    %cst_215 = arith.constant dense<0.000000e+00> : vector<1x10xf32>
    %864 = tpu.matmul %862, %863, %cst_215 {dimension_numbers = #tpu.dot_dimension_numbers<[1], [0], [0], [1], [0, 0, 1, 1], [], []>} : vector<1x128xf32>, vector<128x10xf32>, vector<1x10xf32> -> vector<1x10xf32>
    %c0_216 = arith.constant 0 : index
    %c0_217 = arith.constant 0 : index
    %865 = vector.load %arg13[%c0_216, %c0_217] : memref<1x10xf32, #tpu.memory_space<vmem>>, vector<1x10xf32>
    %866 = arith.addf %864, %865 : vector<1x10xf32>
    %cst_218 = arith.constant dense<0xFF800000> : vector<1xf32>
    %867 = vector.multi_reduction <maximumf>, %866, %cst_218 [1] : vector<1x10xf32> to vector<1xf32>
    %868 = vector.shape_cast %867 : vector<1xf32> to vector<1x1xf32>
    %869 = vector.broadcast %868 : vector<1x1xf32> to vector<1x10xf32>
    %870 = arith.subf %866, %869 : vector<1x10xf32>
    %871 = math.exp %870 : vector<1x10xf32>
    %cst_219 = arith.constant dense<0.000000e+00> : vector<1xf32>
    %872 = vector.multi_reduction <add>, %871, %cst_219 [1] : vector<1x10xf32> to vector<1xf32>
    %873 = vector.shape_cast %872 : vector<1xf32> to vector<1x1xf32>
    %874 = math.log %873 : vector<1x1xf32>
    %875 = vector.broadcast %874 : vector<1x1xf32> to vector<1x10xf32>
    %876 = arith.subf %870, %875 : vector<1x10xf32>
    %c0_220 = arith.constant 0 : index
    %c0_221 = arith.constant 0 : index
    %c0_222 = arith.constant 0 : index
    %877 = vector.load %arg14[%c0_220, %c0_221, %c0_222] : memref<1x1x10xf32, #tpu.memory_space<vmem>>, vector<1x1x10xf32>
    %878 = vector.shape_cast %877 : vector<1x1x10xf32> to vector<1x10xf32>
    %879 = vector.shape_cast %876 : vector<1x10xf32> to vector<1x1x10xf32>
    tpu.vector_store %arg14[%c0_220, %c0_221, %c0_222], %879 {strides = array<i32>} : memref<1x1x10xf32, #tpu.memory_space<vmem>>, vector<1x1x10xf32>,
    return
  }
  func.func @transform_0(%arg0: i32) -> (i32, i32, i32, i32) {
    %c0_i32 = arith.constant 0 : i32
    %c0_i32_0 = arith.constant 0 : i32
    %c0_i32_1 = arith.constant 0 : i32
    %c0_i32_2 = arith.constant 0 : i32
    return %arg0, %c0_i32, %c0_i32_0, %c0_i32_1 : i32, i32, i32, i32
  }
  func.func @transform_1(%arg0: i32) -> (i32, i32) {
    %c0_i32 = arith.constant 0 : i32
    %c0_i32_0 = arith.constant 0 : i32
    %c0_i32_1 = arith.constant 0 : i32
    return %c0_i32, %c0_i32_0 : i32, i32
  }
  func.func @transform_2(%arg0: i32) -> (i32, i32) {
    %c0_i32 = arith.constant 0 : i32
    %c0_i32_0 = arith.constant 0 : i32
    %c0_i32_1 = arith.constant 0 : i32
    return %c0_i32, %c0_i32_0 : i32, i32
  }
  func.func @transform_3(%arg0: i32) -> (i32, i32) {
    %c0_i32 = arith.constant 0 : i32
    %c0_i32_0 = arith.constant 0 : i32
    %c0_i32_1 = arith.constant 0 : i32
    return %c0_i32, %c0_i32_0 : i32, i32
  }
  func.func @transform_4(%arg0: i32) -> (i32, i32) {
    %c0_i32 = arith.constant 0 : i32
    %c0_i32_0 = arith.constant 0 : i32
    %c0_i32_1 = arith.constant 0 : i32
    return %c0_i32, %c0_i32_0 : i32, i32
  }
  func.func @transform_5(%arg0: i32) -> (i32, i32) {
    %c0_i32 = arith.constant 0 : i32
    %c0_i32_0 = arith.constant 0 : i32
    %c0_i32_1 = arith.constant 0 : i32
    return %c0_i32, %c0_i32_0 : i32, i32
  }
  func.func @transform_6(%arg0: i32) -> (i32, i32) {
    %c0_i32 = arith.constant 0 : i32
    %c0_i32_0 = arith.constant 0 : i32
    %c0_i32_1 = arith.constant 0 : i32
    return %c0_i32, %c0_i32_0 : i32, i32
  }
  func.func @transform_7(%arg0: i32) -> (i32, i32, i32) {
    %c0_i32 = arith.constant 0 : i32
    %c0_i32_0 = arith.constant 0 : i32
    %c0_i32_1 = arith.constant 0 : i32
    %c0_i32_2 = arith.constant 0 : i32
    return %c0_i32, %c0_i32_0, %c0_i32_1 : i32, i32, i32
  }
  func.func @transform_8(%arg0: i32) -> (i32, i32) {
    %c0_i32 = arith.constant 0 : i32
    %c0_i32_0 = arith.constant 0 : i32
    %c0_i32_1 = arith.constant 0 : i32
    return %c0_i32, %c0_i32_0 : i32, i32
  }
  func.func @transform_9(%arg0: i32) -> (i32, i32) {
    %c0_i32 = arith.constant 0 : i32
    %c0_i32_0 = arith.constant 0 : i32
    %c0_i32_1 = arith.constant 0 : i32
    return %c0_i32, %c0_i32_0 : i32, i32
  }
  func.func @transform_10(%arg0: i32) -> (i32, i32) {
    %c0_i32 = arith.constant 0 : i32
    %c0_i32_0 = arith.constant 0 : i32
    %c0_i32_1 = arith.constant 0 : i32
    return %c0_i32, %c0_i32_0 : i32, i32
  }
  func.func @transform_11(%arg0: i32) -> (i32, i32) {
    %c0_i32 = arith.constant 0 : i32
    %c0_i32_0 = arith.constant 0 : i32
    %c0_i32_1 = arith.constant 0 : i32
    return %c0_i32, %c0_i32_0 : i32, i32
  }
  func.func @transform_12(%arg0: i32) -> (i32, i32) {
    %c0_i32 = arith.constant 0 : i32
    %c0_i32_0 = arith.constant 0 : i32
    %c0_i32_1 = arith.constant 0 : i32
    return %c0_i32, %c0_i32_0 : i32, i32
  }
  func.func @transform_13(%arg0: i32) -> (i32, i32, i32) {
    %c0_i32 = arith.constant 0 : i32
    %c0_i32_0 = arith.constant 0 : i32
    %c0_i32_1 = arith.constant 0 : i32
    return %arg0, %c0_i32, %c0_i32_0 : i32, i32, i32
  }
}

</mosaic_0001>

<llo_original>
// kernel: lenet_forward_fn.1
$region0: #{lenet_forward_fn.1}
  #allocation0 [shape = 'u32[]', space=smem, size = 0x4, offset = 0x4, fixed_abs, tag = 'smem constant byte address 0x4 - core index']
  #allocation1 [shape = 'u32[72,128]{1,0:T(1,128)}', space=vmem, size = 0x9000, scoped, tag = 'internal scratch']
  %s0 = inlined_call_operand.vmem [shape: f32[2,26,26,1], index: 0, kind: input, shape index: {}]
  %s1 = inlined_call_operand.vmem [shape: f32[9,6], index: 1, kind: input, shape index: {}]
  %s2 = inlined_call_operand.vmem [shape: f32[1,6], index: 2, kind: input, shape index: {}]
  %s3 = inlined_call_operand.vmem [shape: f32[54,12], index: 3, kind: input, shape index: {}]
  %s4 = inlined_call_operand.vmem [shape: f32[1,12], index: 4, kind: input, shape index: {}]
  %s5 = inlined_call_operand.vmem [shape: f32[12,23], index: 5, kind: input, shape index: {}]
  %s6 = inlined_call_operand.vmem [shape: f32[5,9], index: 6, kind: input, shape index: {}]
  %s7 = inlined_call_operand.vmem [shape: f32[25,12,128], index: 7, kind: input, shape index: {}]
  %s8 = inlined_call_operand.vmem [shape: f32[1,128], index: 8, kind: input, shape index: {}]
  %s9 = inlined_call_operand.vmem [shape: f32[128,128], index: 9, kind: input, shape index: {}]
  %s10 = inlined_call_operand.vmem [shape: f32[1,128], index: 10, kind: input, shape index: {}]
  %s11 = inlined_call_operand.vmem [shape: f32[128,10], index: 11, kind: input, shape index: {}]
  %s12 = inlined_call_operand.vmem [shape: f32[1,10], index: 12, kind: input, shape index: {}]
  %s13 = inlined_call_operand.hbm [shape: f32[2,1,10], index: 13, kind: output, shape index: {}]
  %s14 = sld [smem:[#allocation0]]
  $region85: #{lenet_forward_fn.1} parent=0
    _
  %s16 = ssub.s32 1, %s14
  %s17 = scalar_select 0, %s16, %s14
  $region1: #{lenet_forward_fn.1} parent=0
    #allocation2 [shape = 'u8[1024]{0}', space=vmem, size = 0x400, scoped, tag = 'output window, operand 0']
    #allocation3 [shape = 's32[2]{0}', space=sflag, size = 0x8, scoped, tag = 'scoped memory for lenet_forward_fn.1']
    %18 = vsyncpa [#allocation3], 0
    %s19 = scalar_lea.sflag [#allocation3], 1
    %20 = vsyncpa %s19, 0
    loop: start=0, step=1, limit=4
    $region2: #{lenet_forward_fn.1} parent=1 // loop_pre_header
      _
    $region3: #{lenet_forward_fn.1} parent=1 // loop_header
      %s22 = sphi 0, %s26
      %p23 = scmp.ge.s32.totalorder %s22, 4
      %s32 = sphi 0, %s34
      %s35 = sphi 0, %s32
      %s36 = sphi 0, %s35
      %s52 = sphi 0, %s36
      %s56 = sphi 0, %s56
      %s58 = sphi 0, %s56
      %s59 = sphi 0, %s58
      %s73 = sphi 0, %s59
      %s77 = sphi 0, %s77
      %s79 = sphi 0, %s77
      %s80 = sphi 0, %s79
      %s94 = sphi 0, %s80
      %s98 = sphi 0, %s98
      %s100 = sphi 0, %s98
      %s101 = sphi 0, %s100
      %s115 = sphi 0, %s101
      %s119 = sphi 0, %s119
      %s121 = sphi 0, %s119
      %s122 = sphi 0, %s121
      %s136 = sphi 0, %s122
      %s140 = sphi 0, %s140
      %s142 = sphi 0, %s140
      %s143 = sphi 0, %s142
      %s157 = sphi 0, %s143
      %s161 = sphi 0, %s161
      %s163 = sphi 0, %s161
      %s164 = sphi 0, %s163
      %s178 = sphi 0, %s164
      %s182 = sphi 0, %s182
      %s184 = sphi 0, %s182
      %s185 = sphi 0, %s184
      %s199 = sphi 0, %s185
      %s203 = sphi 0, %s203
      %s205 = sphi 0, %s203
      %s206 = sphi 0, %s205
      %s220 = sphi 0, %s206
      %s224 = sphi 0, %s224
      %s226 = sphi 0, %s224
      %s227 = sphi 0, %s226
      %s241 = sphi 0, %s227
      %s245 = sphi 0, %s245
      %s247 = sphi 0, %s245
      %s248 = sphi 0, %s247
      %s262 = sphi 0, %s248
      %s266 = sphi 0, %s266
      %s268 = sphi 0, %s266
      %s269 = sphi 0, %s268
      %s283 = sphi 0, %s269
      %s287 = sphi 0, %s287
      %s289 = sphi 0, %s287
      %s290 = sphi 0, %s289
      %s304 = sphi 0, %s290
      %s310 = sphi 0, %s312
      %s313 = sphi 0, %s310
      %s314 = sphi 0, %s313
      %s330 = sphi 0, %s314
    $region4: #{lenet_forward_fn.1} parent=1 // loop_header_branch
      %25 = sbr.rel (%p23) target = $region8
    $region5: #{lenet_forward_fn.1} parent=1 // loop_body
      %s27 = ssub.s32 %s22, 1
      %s28 = ssub.s32 %s22, 2
      %s29 = sadd.s32 %s22, 1
      %s30 = ssub.s32 %s22, %s29
      %p31 = scmp.eq.s32.totalorder %s30, 0
      %s33 = sadd.s32 %s32, 1
      %s34 = scalar_select %p31, %s32, %s33
      %p37 = pneg %p31
      %p38 = scmp.eq.s32.totalorder %s22, 1
      %p39 = por %p37, %p38
      %p40 = scmp.ne.s32.totalorder %s32, %s35
      %p41 = scmp.eq.s32.totalorder %s22, 0
      %p42 = por %p40, %p41
      %p43 = scmp.ne.s32.totalorder %s32, %s35
      %p44 = scmp.eq.s32.totalorder %s27, 1
      %p45 = por %p43, %p44
      %p46 = scmp.ne.s32.totalorder %s35, %s36
      %p47 = scmp.eq.s32.totalorder %s27, 0
      %p48 = por %p46, %p47
      %p49 = scmp.ne.s32.totalorder %s35, %s36
      %p50 = scmp.eq.s32.totalorder %s28, 1
      %p51 = por %p49, %p50
      %p53 = scmp.ne.s32.totalorder %s36, %s52
      %p54 = scmp.eq.s32.totalorder %s28, 0
      %p55 = por %p53, %p54
      %s57 = sadd.s32 %s56, 1
      %p60 = scmp.eq.s32.totalorder %s22, 1
      %p61 = scmp.ne.s32.totalorder %s56, %s58
      %p62 = scmp.eq.s32.totalorder %s22, 0
      %p63 = por %p61, %p62
      %p64 = scmp.ne.s32.totalorder %s56, %s58
      %p65 = scmp.eq.s32.totalorder %s27, 1
      %p66 = por %p64, %p65
      %p67 = scmp.ne.s32.totalorder %s58, %s59
      %p68 = scmp.eq.s32.totalorder %s27, 0
      %p69 = por %p67, %p68
      %p70 = scmp.ne.s32.totalorder %s58, %s59
      %p71 = scmp.eq.s32.totalorder %s28, 1
      %p72 = por %p70, %p71
      %p74 = scmp.ne.s32.totalorder %s59, %s73
      %p75 = scmp.eq.s32.totalorder %s28, 0
      %p76 = por %p74, %p75
      %s78 = sadd.s32 %s77, 1
      %p81 = scmp.eq.s32.totalorder %s22, 1
      %p82 = scmp.ne.s32.totalorder %s77, %s79
      %p83 = scmp.eq.s32.totalorder %s22, 0
      %p84 = por %p82, %p83
      %p85 = scmp.ne.s32.totalorder %s77, %s79
      %p86 = scmp.eq.s32.totalorder %s27, 1
      %p87 = por %p85, %p86
      %p88 = scmp.ne.s32.totalorder %s79, %s80
      %p89 = scmp.eq.s32.totalorder %s27, 0
      %p90 = por %p88, %p89
      %p91 = scmp.ne.s32.totalorder %s79, %s80
      %p92 = scmp.eq.s32.totalorder %s28, 1
      %p93 = por %p91, %p92
      %p95 = scmp.ne.s32.totalorder %s80, %s94
      %p96 = scmp.eq.s32.totalorder %s28, 0
      %p97 = por %p95, %p96
      %s99 = sadd.s32 %s98, 1
      %p102 = scmp.eq.s32.totalorder %s22, 1
      %p103 = scmp.ne.s32.totalorder %s98, %s100
      %p104 = scmp.eq.s32.totalorder %s22, 0
      %p105 = por %p103, %p104
      %p106 = scmp.ne.s32.totalorder %s98, %s100
      %p107 = scmp.eq.s32.totalorder %s27, 1
      %p108 = por %p106, %p107
      %p109 = scmp.ne.s32.totalorder %s100, %s101
      %p110 = scmp.eq.s32.totalorder %s27, 0
      %p111 = por %p109, %p110
      %p112 = scmp.ne.s32.totalorder %s100, %s101
      %p113 = scmp.eq.s32.totalorder %s28, 1
      %p114 = por %p112, %p113
      %p116 = scmp.ne.s32.totalorder %s101, %s115
      %p117 = scmp.eq.s32.totalorder %s28, 0
      %p118 = por %p116, %p117
      %s120 = sadd.s32 %s119, 1
      %p123 = scmp.eq.s32.totalorder %s22, 1
      %p124 = scmp.ne.s32.totalorder %s119, %s121
      %p125 = scmp.eq.s32.totalorder %s22, 0
      %p126 = por %p124, %p125
      %p127 = scmp.ne.s32.totalorder %s119, %s121
      %p128 = scmp.eq.s32.totalorder %s27, 1
      %p129 = por %p127, %p128
      %p130 = scmp.ne.s32.totalorder %s121, %s122
      %p131 = scmp.eq.s32.totalorder %s27, 0
      %p132 = por %p130, %p131
      %p133 = scmp.ne.s32.totalorder %s121, %s122
      %p134 = scmp.eq.s32.totalorder %s28, 1
      %p135 = por %p133, %p134
      %p137 = scmp.ne.s32.totalorder %s122, %s136
      %p138 = scmp.eq.s32.totalorder %s28, 0
      %p139 = por %p137, %p138
      %s141 = sadd.s32 %s140, 1
      %p144 = scmp.eq.s32.totalorder %s22, 1
      %p145 = scmp.ne.s32.totalorder %s140, %s142
      %p146 = scmp.eq.s32.totalorder %s22, 0
      %p147 = por %p145, %p146
      %p148 = scmp.ne.s32.totalorder %s140, %s142
      %p149 = scmp.eq.s32.totalorder %s27, 1
      %p150 = por %p148, %p149
      %p151 = scmp.ne.s32.totalorder %s142, %s143
      %p152 = scmp.eq.s32.totalorder %s27, 0
      %p153 = por %p151, %p152
      %p154 = scmp.ne.s32.totalorder %s142, %s143
      %p155 = scmp.eq.s32.totalorder %s28, 1
      %p156 = por %p154, %p155
      %p158 = scmp.ne.s32.totalorder %s143, %s157
      %p159 = scmp.eq.s32.totalorder %s28, 0
      %p160 = por %p158, %p159
      %s162 = sadd.s32 %s161, 1
      %p165 = scmp.eq.s32.totalorder %s22, 1
      %p166 = scmp.ne.s32.totalorder %s161, %s163
      %p167 = scmp.eq.s32.totalorder %s22, 0
      %p168 = por %p166, %p167
      %p169 = scmp.ne.s32.totalorder %s161, %s163
      %p170 = scmp.eq.s32.totalorder %s27, 1
      %p171 = por %p169, %p170
      %p172 = scmp.ne.s32.totalorder %s163, %s164
      %p173 = scmp.eq.s32.totalorder %s27, 0
      %p174 = por %p172, %p173
      %p175 = scmp.ne.s32.totalorder %s163, %s164
      %p176 = scmp.eq.s32.totalorder %s28, 1
      %p177 = por %p175, %p176
      %p179 = scmp.ne.s32.totalorder %s164, %s178
      %p180 = scmp.eq.s32.totalorder %s28, 0
      %p181 = por %p179, %p180
      %s183 = sadd.s32 %s182, 1
      %p186 = scmp.eq.s32.totalorder %s22, 1
      %p187 = scmp.ne.s32.totalorder %s182, %s184
      %p188 = scmp.eq.s32.totalorder %s22, 0
      %p189 = por %p187, %p188
      %p190 = scmp.ne.s32.totalorder %s182, %s184
      %p191 = scmp.eq.s32.totalorder %s27, 1
      %p192 = por %p190, %p191
      %p193 = scmp.ne.s32.totalorder %s184, %s185
      %p194 = scmp.eq.s32.totalorder %s27, 0
      %p195 = por %p193, %p194
      %p196 = scmp.ne.s32.totalorder %s184, %s185
      %p197 = scmp.eq.s32.totalorder %s28, 1
      %p198 = por %p196, %p197
      %p200 = scmp.ne.s32.totalorder %s185, %s199
      %p201 = scmp.eq.s32.totalorder %s28, 0
      %p202 = por %p200, %p201
      %s204 = sadd.s32 %s203, 1
      %p207 = scmp.eq.s32.totalorder %s22, 1
      %p208 = scmp.ne.s32.totalorder %s203, %s205
      %p209 = scmp.eq.s32.totalorder %s22, 0
      %p210 = por %p208, %p209
      %p211 = scmp.ne.s32.totalorder %s203, %s205
      %p212 = scmp.eq.s32.totalorder %s27, 1
      %p213 = por %p211, %p212
      %p214 = scmp.ne.s32.totalorder %s205, %s206
      %p215 = scmp.eq.s32.totalorder %s27, 0
      %p216 = por %p214, %p215
      %p217 = scmp.ne.s32.totalorder %s205, %s206
      %p218 = scmp.eq.s32.totalorder %s28, 1
      %p219 = por %p217, %p218
      %p221 = scmp.ne.s32.totalorder %s206, %s220
      %p222 = scmp.eq.s32.totalorder %s28, 0
      %p223 = por %p221, %p222
      %s225 = sadd.s32 %s224, 1
      %p228 = scmp.eq.s32.totalorder %s22, 1
      %p229 = scmp.ne.s32.totalorder %s224, %s226
      %p230 = scmp.eq.s32.totalorder %s22, 0
      %p231 = por %p229, %p230
      %p232 = scmp.ne.s32.totalorder %s224, %s226
      %p233 = scmp.eq.s32.totalorder %s27, 1
      %p234 = por %p232, %p233
      %p235 = scmp.ne.s32.totalorder %s226, %s227
      %p236 = scmp.eq.s32.totalorder %s27, 0
      %p237 = por %p235, %p236
      %p238 = scmp.ne.s32.totalorder %s226, %s227
      %p239 = scmp.eq.s32.totalorder %s28, 1
      %p240 = por %p238, %p239
      %p242 = scmp.ne.s32.totalorder %s227, %s241
      %p243 = scmp.eq.s32.totalorder %s28, 0
      %p244 = por %p242, %p243
      %s246 = sadd.s32 %s245, 1
      %p249 = scmp.eq.s32.totalorder %s22, 1
      %p250 = scmp.ne.s32.totalorder %s245, %s247
      %p251 = scmp.eq.s32.totalorder %s22, 0
      %p252 = por %p250, %p251
      %p253 = scmp.ne.s32.totalorder %s245, %s247
      %p254 = scmp.eq.s32.totalorder %s27, 1
      %p255 = por %p253, %p254
      %p256 = scmp.ne.s32.totalorder %s247, %s248
      %p257 = scmp.eq.s32.totalorder %s27, 0
      %p258 = por %p256, %p257
      %p259 = scmp.ne.s32.totalorder %s247, %s248
      %p260 = scmp.eq.s32.totalorder %s28, 1
      %p261 = por %p259, %p260
      %p263 = scmp.ne.s32.totalorder %s248, %s262
      %p264 = scmp.eq.s32.totalorder %s28, 0
      %p265 = por %p263, %p264
      %s267 = sadd.s32 %s266, 1
      %p270 = scmp.eq.s32.totalorder %s22, 1
      %p271 = scmp.ne.s32.totalorder %s266, %s268
      %p272 = scmp.eq.s32.totalorder %s22, 0
      %p273 = por %p271, %p272
      %p274 = scmp.ne.s32.totalorder %s266, %s268
      %p275 = scmp.eq.s32.totalorder %s27, 1
      %p276 = por %p274, %p275
      %p277 = scmp.ne.s32.totalorder %s268, %s269
      %p278 = scmp.eq.s32.totalorder %s27, 0
      %p279 = por %p277, %p278
      %p280 = scmp.ne.s32.totalorder %s268, %s269
      %p281 = scmp.eq.s32.totalorder %s28, 1
      %p282 = por %p280, %p281
      %p284 = scmp.ne.s32.totalorder %s269, %s283
      %p285 = scmp.eq.s32.totalorder %s28, 0
      %p286 = por %p284, %p285
      %s288 = sadd.s32 %s287, 1
      %p291 = scmp.eq.s32.totalorder %s22, 1
      %p292 = scmp.ne.s32.totalorder %s287, %s289
      %p293 = scmp.eq.s32.totalorder %s22, 0
      %p294 = por %p292, %p293
      %p295 = scmp.ne.s32.totalorder %s287, %s289
      %p296 = scmp.eq.s32.totalorder %s27, 1
      %p297 = por %p295, %p296
      %p298 = scmp.ne.s32.totalorder %s289, %s290
      %p299 = scmp.eq.s32.totalorder %s27, 0
      %p300 = por %p298, %p299
      %p301 = scmp.ne.s32.totalorder %s289, %s290
      %p302 = scmp.eq.s32.totalorder %s28, 1
      %p303 = por %p301, %p302
      %p305 = scmp.ne.s32.totalorder %s290, %s304
      %p306 = scmp.eq.s32.totalorder %s28, 0
      %p307 = por %p305, %p306
      %s308 = ssub.s32 %s22, %s29
      %p309 = scmp.eq.s32.totalorder %s308, 0
      %s311 = sadd.s32 %s310, 1
      %s312 = scalar_select %p309, %s310, %s311
      %p315 = pneg %p309
      %p316 = scmp.eq.s32.totalorder %s22, 1
      %p317 = por %p315, %p316
      %p318 = scmp.ne.s32.totalorder %s310, %s313
      %p319 = scmp.eq.s32.totalorder %s22, 0
      %p320 = por %p318, %p319
      %p321 = scmp.ne.s32.totalorder %s310, %s313
      %p322 = scmp.eq.s32.totalorder %s27, 1
      %p323 = por %p321, %p322
      %p324 = scmp.ne.s32.totalorder %s313, %s314
      %p325 = scmp.eq.s32.totalorder %s27, 0
      %p326 = por %p324, %p325
      %p327 = scmp.ne.s32.totalorder %s313, %s314
      %p328 = scmp.eq.s32.totalorder %s28, 1
      %p329 = por %p327, %p328
      %p331 = scmp.ne.s32.totalorder %s314, %s330
      %p332 = scmp.eq.s32.totalorder %s28, 0
      %p333 = por %p331, %p332
      %p334 = scmp.le.s32.totalorder 1, %s22
      %p335 = scmp.lt.s32.totalorder %s22, 3
      %p336 = pnand %p334, %p335
      %p337 = pneg %p336
      // Predicated region
      $region9: #{lenet_forward_fn.1} parent=5 // pred_check
        _
      $region10: #{lenet_forward_fn.1} parent=5 // pred_check_branch
        %339 = sbr.rel (%p336) target = $region12
      $region11: #{lenet_forward_fn.1} parent=5 // pred_region
        %s340 = ssub.s32 %s22, 1
        // Predicated region
        $region13: #{lenet_forward_fn.1} parent=11 // pred_check
          %p341 = pneg %p69
        $region14: #{lenet_forward_fn.1} parent=11 // pred_check_branch
          %343 = sbr.rel (%p341) target = $region16
        $region15: #{lenet_forward_fn.1} parent=11 // pred_region
          _
        $region16: #{lenet_forward_fn.1} parent=11 // pred_fallthru
          _
        // Predicated region
        $region17: #{lenet_forward_fn.1} parent=11 // pred_check
          %p344 = pneg %p90
        $region18: #{lenet_forward_fn.1} parent=11 // pred_check_branch
          %346 = sbr.rel (%p344) target = $region20
        $region19: #{lenet_forward_fn.1} parent=11 // pred_region
          _
        $region20: #{lenet_forward_fn.1} parent=11 // pred_fallthru
          _
        // Predicated region
        $region21: #{lenet_forward_fn.1} parent=11 // pred_check
          %p347 = pneg %p111
        $region22: #{lenet_forward_fn.1} parent=11 // pred_check_branch
          %349 = sbr.rel (%p347) target = $region24
        $region23: #{lenet_forward_fn.1} parent=11 // pred_region
          _
        $region24: #{lenet_forward_fn.1} parent=11 // pred_fallthru
          _
        // Predicated region
        $region25: #{lenet_forward_fn.1} parent=11 // pred_check
          %p350 = pneg %p132
        $region26: #{lenet_forward_fn.1} parent=11 // pred_check_branch
          %352 = sbr.rel (%p350) target = $region28
        $region27: #{lenet_forward_fn.1} parent=11 // pred_region
          _
        $region28: #{lenet_forward_fn.1} parent=11 // pred_fallthru
          _
        // Predicated region
        $region29: #{lenet_forward_fn.1} parent=11 // pred_check
          %p353 = pneg %p153
        $region30: #{lenet_forward_fn.1} parent=11 // pred_check_branch
          %355 = sbr.rel (%p353) target = $region32
        $region31: #{lenet_forward_fn.1} parent=11 // pred_region
          _
        $region32: #{lenet_forward_fn.1} parent=11 // pred_fallthru
          _
        // Predicated region
        $region33: #{lenet_forward_fn.1} parent=11 // pred_check
          %p356 = pneg %p174
        $region34: #{lenet_forward_fn.1} parent=11 // pred_check_branch
          %358 = sbr.rel (%p356) target = $region36
        $region35: #{lenet_forward_fn.1} parent=11 // pred_region
          _
        $region36: #{lenet_forward_fn.1} parent=11 // pred_fallthru
          _
        // Predicated region
        $region37: #{lenet_forward_fn.1} parent=11 // pred_check
          %p359 = pneg %p195
        $region38: #{lenet_forward_fn.1} parent=11 // pred_check_branch
          %361 = sbr.rel (%p359) target = $region40
        $region39: #{lenet_forward_fn.1} parent=11 // pred_region
          _
        $region40: #{lenet_forward_fn.1} parent=11 // pred_fallthru
          _
        // Predicated region
        $region41: #{lenet_forward_fn.1} parent=11 // pred_check
          %p362 = pneg %p216
        $region42: #{lenet_forward_fn.1} parent=11 // pred_check_branch
          %364 = sbr.rel (%p362) target = $region44
        $region43: #{lenet_forward_fn.1} parent=11 // pred_region
          _
        $region44: #{lenet_forward_fn.1} parent=11 // pred_fallthru
          _
        // Predicated region
        $region45: #{lenet_forward_fn.1} parent=11 // pred_check
          %p365 = pneg %p237
        $region46: #{lenet_forward_fn.1} parent=11 // pred_check_branch
          %367 = sbr.rel (%p365) target = $region48
        $region47: #{lenet_forward_fn.1} parent=11 // pred_region
          _
        $region48: #{lenet_forward_fn.1} parent=11 // pred_fallthru
          _
        // Predicated region
        $region49: #{lenet_forward_fn.1} parent=11 // pred_check
          %p368 = pneg %p258
        $region50: #{lenet_forward_fn.1} parent=11 // pred_check_branch
          %370 = sbr.rel (%p368) target = $region52
        $region51: #{lenet_forward_fn.1} parent=11 // pred_region
          _
        $region52: #{lenet_forward_fn.1} parent=11 // pred_fallthru
          _
        // Predicated region
        $region53: #{lenet_forward_fn.1} parent=11 // pred_check
          %p371 = pneg %p279
        $region54: #{lenet_forward_fn.1} parent=11 // pred_check_branch
          %373 = sbr.rel (%p371) target = $region56
        $region55: #{lenet_forward_fn.1} parent=11 // pred_region
          _
        $region56: #{lenet_forward_fn.1} parent=11 // pred_fallthru
          _
        // Predicated region
        $region57: #{lenet_forward_fn.1} parent=11 // pred_check
          %p374 = pneg %p300
        $region58: #{lenet_forward_fn.1} parent=11 // pred_check_branch
          %376 = sbr.rel (%p374) target = $region60
        $region59: #{lenet_forward_fn.1} parent=11 // pred_region
          _
        $region60: #{lenet_forward_fn.1} parent=11 // pred_fallthru
          _
      $region12: #{lenet_forward_fn.1} parent=5 // pred_fallthru
        _
      %p377 = scmp.lt.s32.totalorder %s22, 2
      // Predicated region
      $region61: #{lenet_forward_fn.1} parent=5 // pred_check
        %p378 = pneg %p377
      $region62: #{lenet_forward_fn.1} parent=5 // pred_check_branch
        %380 = sbr.rel (%p378) target = $region64
      $region63: #{lenet_forward_fn.1} parent=5 // pred_region
        // Predicated region
        $region65: #{lenet_forward_fn.1} parent=63 // pred_check
          %p381 = pneg %p42
        $region66: #{lenet_forward_fn.1} parent=63 // pred_check_branch
          %383 = sbr.rel (%p381) target = $region68
        $region67: #{lenet_forward_fn.1} parent=63 // pred_region
          %p384 = scmp.lt.s32.totalorder %s22, 1
          %s385 = scalar_select %p384, %s22, 1
          %s386 = smul.addr %s385, 104
          %s387 = smul.addr %s386, 8
          %s388 = scalar_lea.vmem %s0, %s387
        $region68: #{lenet_forward_fn.1} parent=63 // pred_fallthru
          _
      $region64: #{lenet_forward_fn.1} parent=5 // pred_fallthru
        _
      %p389 = scmp.le.s32.totalorder 1, %s22
      %p390 = scmp.lt.s32.totalorder %s22, 3
      %p391 = pnand %p389, %p390
      %p392 = pneg %p391
      // Predicated region
      $region69: #{lenet_forward_fn.1} parent=5 // pred_check
        _
      $region70: #{lenet_forward_fn.1} parent=5 // pred_check_branch
        %394 = sbr.rel (%p391) target = $region72
      $region71: #{lenet_forward_fn.1} parent=5 // pred_region
        %s395 = ssub.s32 %s22, 1
        %p396 = scmp.lt.s32.totalorder %s27, 1
        %s397 = scalar_select %p396, %s27, 1
        %s398 = smul.addr %s397, 104
        %s399 = smul.addr %s398, 8
        %s400 = scalar_lea.vmem %s0, %s399
        %p401 = pneg %p48
        %p402 = pneg %p45
        %p403 = pneg %p69
        %p404 = pneg %p66
        %p405 = pneg %p90
        %p406 = pneg %p87
        %p407 = pneg %p111
        %p408 = pneg %p108
        %p409 = pneg %p132
        %p410 = pneg %p129
        %p411 = pneg %p153
        %p412 = pneg %p150
        %p413 = pneg %p174
        %p414 = pneg %p171
        %p415 = pneg %p195
        %p416 = pneg %p192
        %p417 = pneg %p216
        %p418 = pneg %p213
        %p419 = pneg %p237
        %p420 = pneg %p234
        %p421 = pneg %p258
        %p422 = pneg %p255
        %p423 = pneg %p279
        %p424 = pneg %p276
        %p425 = pneg %p300
        %p426 = pneg %p297
        %p427 = pneg %p326
        %p428 = pneg %p323
        %s429 = sand.u32 %s313, 1
        %s430 = scalar_lea.sflag [#allocation3], %s429
        %s431 = sand.u32 %s313, 1
        %s432 = scalar_lea.vmem [#allocation2], %s431
        %p433 = scmp.lt.s32.totalorder %s27, 1
        %s434 = scalar_select %p433, %s27, 1
        %s435 = smul.addr %s434, 104
        %s436 = smul.addr %s435, 8
        %s437 = scalar_lea.vmem %s0, %s436
        %v438 = vld [vmem:[%s437] sm:$0xff]
        %v439 = vld [vmem:[%s437 + $0x8] sm:$0xff]
        %v440 = vld [vmem:[%s437 + $0x10] sm:$0xff]
        %v441 = vld [vmem:[%s437 + $0x18] sm:$0x3]
        %v442 = vld [vmem:[%s437 + $0x20] sm:$0xff]
        %v443 = vld [vmem:[%s437 + $0x28] sm:$0xff]
        %v444 = vld [vmem:[%s437 + $0x30] sm:$0xff]
        %v445 = vld [vmem:[%s437 + $0x38] sm:$0x3]
        %v446 = vld [vmem:[%s437 + $0x40] sm:$0xff]
        %v447 = vld [vmem:[%s437 + $0x48] sm:$0xff]
        %v448 = vld [vmem:[%s437 + $0x50] sm:$0xff]
        %v449 = vld [vmem:[%s437 + $0x58] sm:$0x3]
        %v450 = vld [vmem:[%s437 + $0x60] sm:$0xff]
        %v451 = vld [vmem:[%s437 + $0x68] sm:$0xff]
        %v452 = vld [vmem:[%s437 + $0x70] sm:$0xff]
        %v453 = vld [vmem:[%s437 + $0x78] sm:$0x3]
        %v454 = vld [vmem:[%s437 + $0x80] sm:$0xff]
        %v455 = vld [vmem:[%s437 + $0x88] sm:$0xff]
        %v456 = vld [vmem:[%s437 + $0x90] sm:$0xff]
        %v457 = vld [vmem:[%s437 + $0x98] sm:$0x3]
        %v458 = vld [vmem:[%s437 + $0xa0] sm:$0xff]
        %v459 = vld [vmem:[%s437 + $0xa8] sm:$0xff]
        %v460 = vld [vmem:[%s437 + $0xb0] sm:$0xff]
        %v461 = vld [vmem:[%s437 + $0xb8] sm:$0x3]
        %v462 = vld [vmem:[%s437 + $0xc0] sm:$0xff]
        %v463 = vld [vmem:[%s437 + $0xc8] sm:$0xff]
        %v464 = vld [vmem:[%s437 + $0xd0] sm:$0xff]
        %v465 = vld [vmem:[%s437 + $0xd8] sm:$0x3]
        %v466 = vld [vmem:[%s437 + $0xe0] sm:$0xff]
        %v467 = vld [vmem:[%s437 + $0xe8] sm:$0xff]
        %v468 = vld [vmem:[%s437 + $0xf0] sm:$0xff]
        %v469 = vld [vmem:[%s437 + $0xf8] sm:$0x3]
        %v470 = vld [vmem:[%s437 + $0x100] sm:$0xff]
        %v471 = vld [vmem:[%s437 + $0x108] sm:$0xff]
        %v472 = vld [vmem:[%s437 + $0x110] sm:$0xff]
        %v473 = vld [vmem:[%s437 + $0x118] sm:$0x3]
        %v474 = vld [vmem:[%s437 + $0x120] sm:$0xff]
        %v475 = vld [vmem:[%s437 + $0x128] sm:$0xff]
        %v476 = vld [vmem:[%s437 + $0x130] sm:$0xff]
        %v477 = vld [vmem:[%s437 + $0x138] sm:$0x3]
        %v478 = vld [vmem:[%s437 + $0x140] sm:$0xff]
        %v479 = vld [vmem:[%s437 + $0x148] sm:$0xff]
        %v480 = vld [vmem:[%s437 + $0x150] sm:$0xff]
        %v481 = vld [vmem:[%s437 + $0x158] sm:$0x3]
        %v482 = vld [vmem:[%s437 + $0x160] sm:$0xff]
        %v483 = vld [vmem:[%s437 + $0x168] sm:$0xff]
        %v484 = vld [vmem:[%s437 + $0x170] sm:$0xff]
        %v485 = vld [vmem:[%s437 + $0x178] sm:$0x3]
        %v486 = vld [vmem:[%s437 + $0x180] sm:$0xff]
        %v487 = vld [vmem:[%s437 + $0x188] sm:$0xff]
        %v488 = vld [vmem:[%s437 + $0x190] sm:$0xff]
        %v489 = vld [vmem:[%s437 + $0x198] sm:$0x3]
        %v490 = vld [vmem:[%s437 + $0x1a0] sm:$0xff]
        %v491 = vld [vmem:[%s437 + $0x1a8] sm:$0xff]
        %v492 = vld [vmem:[%s437 + $0x1b0] sm:$0xff]
        %v493 = vld [vmem:[%s437 + $0x1b8] sm:$0x3]
        %v494 = vld [vmem:[%s437 + $0x1c0] sm:$0xff]
        %v495 = vld [vmem:[%s437 + $0x1c8] sm:$0xff]
        %v496 = vld [vmem:[%s437 + $0x1d0] sm:$0xff]
        %v497 = vld [vmem:[%s437 + $0x1d8] sm:$0x3]
        %v498 = vld [vmem:[%s437 + $0x1e0] sm:$0xff]
        %v499 = vld [vmem:[%s437 + $0x1e8] sm:$0xff]
        %v500 = vld [vmem:[%s437 + $0x1f0] sm:$0xff]
        %v501 = vld [vmem:[%s437 + $0x1f8] sm:$0x3]
        %v502 = vld [vmem:[%s437 + $0x200] sm:$0xff]
        %v503 = vld [vmem:[%s437 + $0x208] sm:$0xff]
        %v504 = vld [vmem:[%s437 + $0x210] sm:$0xff]
        %v505 = vld [vmem:[%s437 + $0x218] sm:$0x3]
        %v506 = vld [vmem:[%s437 + $0x220] sm:$0xff]
        %v507 = vld [vmem:[%s437 + $0x228] sm:$0xff]
        %v508 = vld [vmem:[%s437 + $0x230] sm:$0xff]
        %v509 = vld [vmem:[%s437 + $0x238] sm:$0x3]
        %v510 = vld [vmem:[%s437 + $0x240] sm:$0xff]
        %v511 = vld [vmem:[%s437 + $0x248] sm:$0xff]
        %v512 = vld [vmem:[%s437 + $0x250] sm:$0xff]
        %v513 = vld [vmem:[%s437 + $0x258] sm:$0x3]
        %v514 = vld [vmem:[%s437 + $0x260] sm:$0xff]
        %v515 = vld [vmem:[%s437 + $0x268] sm:$0xff]
        %v516 = vld [vmem:[%s437 + $0x270] sm:$0xff]
        %v517 = vld [vmem:[%s437 + $0x278] sm:$0x3]
        %v518 = vld [vmem:[%s437 + $0x280] sm:$0xff]
        %v519 = vld [vmem:[%s437 + $0x288] sm:$0xff]
        %v520 = vld [vmem:[%s437 + $0x290] sm:$0xff]
        %v521 = vld [vmem:[%s437 + $0x298] sm:$0x3]
        %v522 = vld [vmem:[%s437 + $0x2a0] sm:$0xff]
        %v523 = vld [vmem:[%s437 + $0x2a8] sm:$0xff]
        %v524 = vld [vmem:[%s437 + $0x2b0] sm:$0xff]
        %v525 = vld [vmem:[%s437 + $0x2b8] sm:$0x3]
        %v526 = vld [vmem:[%s437 + $0x2c0] sm:$0xff]
        %v527 = vld [vmem:[%s437 + $0x2c8] sm:$0xff]
        %v528 = vld [vmem:[%s437 + $0x2d0] sm:$0xff]
        %v529 = vld [vmem:[%s437 + $0x2d8] sm:$0x3]
        %v530 = vld [vmem:[%s437 + $0x2e0] sm:$0xff]
        %v531 = vld [vmem:[%s437 + $0x2e8] sm:$0xff]
        %v532 = vld [vmem:[%s437 + $0x2f0] sm:$0xff]
        %v533 = vld [vmem:[%s437 + $0x2f8] sm:$0x3]
        %v534 = vld [vmem:[%s437 + $0x300] sm:$0xff]
        %v535 = vld [vmem:[%s437 + $0x308] sm:$0xff]
        %v536 = vld [vmem:[%s437 + $0x310] sm:$0xff]
        %v537 = vld [vmem:[%s437 + $0x318] sm:$0x3]
        %v538 = vld [vmem:[%s437 + $0x320] sm:$0xff]
        %v539 = vld [vmem:[%s437 + $0x328] sm:$0xff]
        %v540 = vld [vmem:[%s437 + $0x330] sm:$0xff]
        %v541 = vld [vmem:[%s437 + $0x338] sm:$0x3]
        %v542 = vld [vmem:[%s1] sm:$0x1]
        %544 = vset.pattern.permute.xlu0 0
        %545 = vperm.xlu0 %544, %v438
        %v546 = vpop.permute.xlu0 %545
        %549 = vset.pattern.permute.xlu0 0
        %550 = vperm.xlu0 %549, %v439
        %v551 = vpop.permute.xlu0 %550
        %554 = vset.pattern.permute.xlu0 0
        %555 = vperm.xlu0 %554, %v440
        %v556 = vpop.permute.xlu0 %555
        %559 = vset.pattern.permute.xlu0 0
        %560 = vperm.xlu0 %559, %v442
        %v561 = vpop.permute.xlu0 %560
        %564 = vset.pattern.permute.xlu0 0
        %565 = vperm.xlu0 %564, %v443
        %v566 = vpop.permute.xlu0 %565
        %569 = vset.pattern.permute.xlu0 0
        %570 = vperm.xlu0 %569, %v444
        %v571 = vpop.permute.xlu0 %570
        %574 = vset.pattern.permute.xlu0 0
        %575 = vperm.xlu0 %574, %v446
        %v576 = vpop.permute.xlu0 %575
        %579 = vset.pattern.permute.xlu0 0
        %580 = vperm.xlu0 %579, %v447
        %v581 = vpop.permute.xlu0 %580
        %584 = vset.pattern.permute.xlu0 0
        %585 = vperm.xlu0 %584, %v448
        %v586 = vpop.permute.xlu0 %585
        %589 = vset.pattern.permute.xlu0 0
        %590 = vperm.xlu0 %589, %v450
        %v591 = vpop.permute.xlu0 %590
        %594 = vset.pattern.permute.xlu0 0
        %595 = vperm.xlu0 %594, %v451
        %v596 = vpop.permute.xlu0 %595
        %599 = vset.pattern.permute.xlu0 0
        %600 = vperm.xlu0 %599, %v452
        %v601 = vpop.permute.xlu0 %600
        %604 = vset.pattern.permute.xlu0 0
        %605 = vperm.xlu0 %604, %v454
        %v606 = vpop.permute.xlu0 %605
        %609 = vset.pattern.permute.xlu0 0
        %610 = vperm.xlu0 %609, %v455
        %v611 = vpop.permute.xlu0 %610
        %614 = vset.pattern.permute.xlu0 0
        %615 = vperm.xlu0 %614, %v456
        %v616 = vpop.permute.xlu0 %615
        %619 = vset.pattern.permute.xlu0 0
        %620 = vperm.xlu0 %619, %v458
        %v621 = vpop.permute.xlu0 %620
        %624 = vset.pattern.permute.xlu0 0
        %625 = vperm.xlu0 %624, %v459
        %v626 = vpop.permute.xlu0 %625
        %629 = vset.pattern.permute.xlu0 0
        %630 = vperm.xlu0 %629, %v460
        %v631 = vpop.permute.xlu0 %630
        %634 = vset.pattern.permute.xlu0 0
        %635 = vperm.xlu0 %634, %v462
        %v636 = vpop.permute.xlu0 %635
        %639 = vset.pattern.permute.xlu0 0
        %640 = vperm.xlu0 %639, %v463
        %v641 = vpop.permute.xlu0 %640
        %644 = vset.pattern.permute.xlu0 0
        %645 = vperm.xlu0 %644, %v464
        %v646 = vpop.permute.xlu0 %645
        %649 = vset.pattern.permute.xlu0 0
        %650 = vperm.xlu0 %649, %v466
        %v651 = vpop.permute.xlu0 %650
        %654 = vset.pattern.permute.xlu0 0
        %655 = vperm.xlu0 %654, %v467
        %v656 = vpop.permute.xlu0 %655
        %659 = vset.pattern.permute.xlu0 0
        %660 = vperm.xlu0 %659, %v468
        %v661 = vpop.permute.xlu0 %660
        %664 = vset.pattern.permute.xlu0 0
        %665 = vperm.xlu0 %664, %v470
        %v666 = vpop.permute.xlu0 %665
        %669 = vset.pattern.permute.xlu0 0
        %670 = vperm.xlu0 %669, %v471
        %v671 = vpop.permute.xlu0 %670
        %674 = vset.pattern.permute.xlu0 0
        %675 = vperm.xlu0 %674, %v472
        %v676 = vpop.permute.xlu0 %675
        %679 = vset.pattern.permute.xlu0 0
        %680 = vperm.xlu0 %679, %v474
        %v681 = vpop.permute.xlu0 %680
        %684 = vset.pattern.permute.xlu0 0
        %685 = vperm.xlu0 %684, %v475
        %v686 = vpop.permute.xlu0 %685
        %689 = vset.pattern.permute.xlu0 0
        %690 = vperm.xlu0 %689, %v476
        %v691 = vpop.permute.xlu0 %690
        %694 = vset.pattern.permute.xlu0 0
        %695 = vperm.xlu0 %694, %v478
        %v696 = vpop.permute.xlu0 %695
        %699 = vset.pattern.permute.xlu0 0
        %700 = vperm.xlu0 %699, %v479
        %v701 = vpop.permute.xlu0 %700
        %704 = vset.pattern.permute.xlu0 0
        %705 = vperm.xlu0 %704, %v480
        %v706 = vpop.permute.xlu0 %705
        %709 = vset.pattern.permute.xlu0 0
        %710 = vperm.xlu0 %709, %v482
        %v711 = vpop.permute.xlu0 %710
        %714 = vset.pattern.permute.xlu0 0
        %715 = vperm.xlu0 %714, %v483
        %v716 = vpop.permute.xlu0 %715
        %719 = vset.pattern.permute.xlu0 0
        %720 = vperm.xlu0 %719, %v484
        %v721 = vpop.permute.xlu0 %720
        %724 = vset.pattern.permute.xlu0 0
        %725 = vperm.xlu0 %724, %v486
        %v726 = vpop.permute.xlu0 %725
        %729 = vset.pattern.permute.xlu0 0
        %730 = vperm.xlu0 %729, %v487
        %v731 = vpop.permute.xlu0 %730
        %734 = vset.pattern.permute.xlu0 0
        %735 = vperm.xlu0 %734, %v488
        %v736 = vpop.permute.xlu0 %735
        %739 = vset.pattern.permute.xlu0 0
        %740 = vperm.xlu0 %739, %v490
        %v741 = vpop.permute.xlu0 %740
        %744 = vset.pattern.permute.xlu0 0
        %745 = vperm.xlu0 %744, %v491
        %v746 = vpop.permute.xlu0 %745
        %749 = vset.pattern.permute.xlu0 0
        %750 = vperm.xlu0 %749, %v492
        %v751 = vpop.permute.xlu0 %750
        %754 = vset.pattern.permute.xlu0 0
        %755 = vperm.xlu0 %754, %v494
        %v756 = vpop.permute.xlu0 %755
        %759 = vset.pattern.permute.xlu0 0
        %760 = vperm.xlu0 %759, %v495
        %v761 = vpop.permute.xlu0 %760
        %764 = vset.pattern.permute.xlu0 0
        %765 = vperm.xlu0 %764, %v496
        %v766 = vpop.permute.xlu0 %765
        %769 = vset.pattern.permute.xlu0 0
        %770 = vperm.xlu0 %769, %v498
        %v771 = vpop.permute.xlu0 %770
        %774 = vset.pattern.permute.xlu0 0
        %775 = vperm.xlu0 %774, %v499
        %v776 = vpop.permute.xlu0 %775
        %779 = vset.pattern.permute.xlu0 0
        %780 = vperm.xlu0 %779, %v500
        %v781 = vpop.permute.xlu0 %780
        %784 = vset.pattern.permute.xlu0 0
        %785 = vperm.xlu0 %784, %v502
        %v786 = vpop.permute.xlu0 %785
        %789 = vset.pattern.permute.xlu0 0
        %790 = vperm.xlu0 %789, %v503
        %v791 = vpop.permute.xlu0 %790
        %794 = vset.pattern.permute.xlu0 0
        %795 = vperm.xlu0 %794, %v504
        %v796 = vpop.permute.xlu0 %795
        %799 = vset.pattern.permute.xlu0 0
        %800 = vperm.xlu0 %799, %v506
        %v801 = vpop.permute.xlu0 %800
        %804 = vset.pattern.permute.xlu0 0
        %805 = vperm.xlu0 %804, %v507
        %v806 = vpop.permute.xlu0 %805
        %809 = vset.pattern.permute.xlu0 0
        %810 = vperm.xlu0 %809, %v508
        %v811 = vpop.permute.xlu0 %810
        %814 = vset.pattern.permute.xlu0 0
        %815 = vperm.xlu0 %814, %v510
        %v816 = vpop.permute.xlu0 %815
        %819 = vset.pattern.permute.xlu0 0
        %820 = vperm.xlu0 %819, %v511
        %v821 = vpop.permute.xlu0 %820
        %824 = vset.pattern.permute.xlu0 0
        %825 = vperm.xlu0 %824, %v512
        %v826 = vpop.permute.xlu0 %825
        %829 = vset.pattern.permute.xlu0 0
        %830 = vperm.xlu0 %829, %v514
        %v831 = vpop.permute.xlu0 %830
        %834 = vset.pattern.permute.xlu0 0
        %835 = vperm.xlu0 %834, %v515
        %v836 = vpop.permute.xlu0 %835
        %839 = vset.pattern.permute.xlu0 0
        %840 = vperm.xlu0 %839, %v516
        %v841 = vpop.permute.xlu0 %840
        %844 = vset.pattern.permute.xlu0 0
        %845 = vperm.xlu0 %844, %v518
        %v846 = vpop.permute.xlu0 %845
        %849 = vset.pattern.permute.xlu0 0
        %850 = vperm.xlu0 %849, %v519
        %v851 = vpop.permute.xlu0 %850
        %854 = vset.pattern.permute.xlu0 0
        %855 = vperm.xlu0 %854, %v520
        %v856 = vpop.permute.xlu0 %855
        %859 = vset.pattern.permute.xlu0 0
        %860 = vperm.xlu0 %859, %v522
        %v861 = vpop.permute.xlu0 %860
        %864 = vset.pattern.permute.xlu0 0
        %865 = vperm.xlu0 %864, %v523
        %v866 = vpop.permute.xlu0 %865
        %869 = vset.pattern.permute.xlu0 0
        %870 = vperm.xlu0 %869, %v524
        %v871 = vpop.permute.xlu0 %870
        %874 = vset.pattern.permute.xlu0 0
        %875 = vperm.xlu0 %874, %v526
        %v876 = vpop.permute.xlu0 %875
        %879 = vset.pattern.permute.xlu0 0
        %880 = vperm.xlu0 %879, %v527
        %v881 = vpop.permute.xlu0 %880
        %884 = vset.pattern.permute.xlu0 0
        %885 = vperm.xlu0 %884, %v528
        %v886 = vpop.permute.xlu0 %885
        %889 = vset.pattern.permute.xlu0 0
        %890 = vperm.xlu0 %889, %v530
        %v891 = vpop.permute.xlu0 %890
        %894 = vset.pattern.permute.xlu0 0
        %895 = vperm.xlu0 %894, %v531
        %v896 = vpop.permute.xlu0 %895
        %899 = vset.pattern.permute.xlu0 0
        %900 = vperm.xlu0 %899, %v532
        %v901 = vpop.permute.xlu0 %900
        %v903 = vperm.slane %v542, 0
        %v904 = vmul.f32 %v546, %v903
        %v905 = vmul.f32 %v551, %v903
        %v906 = vmul.f32 %v556, %v903
        %v907 = vmul.f32 %v561, %v903
        %v908 = vmul.f32 %v566, %v903
        %v909 = vmul.f32 %v571, %v903
        %v910 = vmul.f32 %v576, %v903
        %v911 = vmul.f32 %v581, %v903
        %v912 = vmul.f32 %v586, %v903
        %v913 = vmul.f32 %v591, %v903
        %v914 = vmul.f32 %v596, %v903
        %v915 = vmul.f32 %v601, %v903
        %v916 = vmul.f32 %v606, %v903
        %v917 = vmul.f32 %v611, %v903
        %v918 = vmul.f32 %v616, %v903
        %v919 = vmul.f32 %v621, %v903
        %v920 = vmul.f32 %v626, %v903
        %v921 = vmul.f32 %v631, %v903
        %v922 = vmul.f32 %v636, %v903
        %v923 = vmul.f32 %v641, %v903
        %v924 = vmul.f32 %v646, %v903
        %v925 = vmul.f32 %v651, %v903
        %v926 = vmul.f32 %v656, %v903
        %v927 = vmul.f32 %v661, %v903
        %v928 = vmul.f32 %v666, %v903
        %v929 = vmul.f32 %v671, %v903
        %v930 = vmul.f32 %v676, %v903
        %v931 = vmul.f32 %v681, %v903
        %v932 = vmul.f32 %v686, %v903
        %v933 = vmul.f32 %v691, %v903
        %v934 = vmul.f32 %v696, %v903
        %v935 = vmul.f32 %v701, %v903
        %v936 = vmul.f32 %v706, %v903
        %v937 = vmul.f32 %v711, %v903
        %v938 = vmul.f32 %v716, %v903
        %v939 = vmul.f32 %v721, %v903
        %v940 = vmul.f32 %v726, %v903
        %v941 = vmul.f32 %v731, %v903
        %v942 = vmul.f32 %v736, %v903
        %v943 = vmul.f32 %v741, %v903
        %v944 = vmul.f32 %v746, %v903
        %v945 = vmul.f32 %v751, %v903
        %v946 = vmul.f32 %v756, %v903
        %v947 = vmul.f32 %v761, %v903
        %v948 = vmul.f32 %v766, %v903
        %v949 = vmul.f32 %v771, %v903
        %v950 = vmul.f32 %v776, %v903
        %v951 = vmul.f32 %v781, %v903
        %v952 = vmul.f32 %v786, %v903
        %v953 = vmul.f32 %v791, %v903
        %v954 = vmul.f32 %v796, %v903
        %v955 = vmul.f32 %v801, %v903
        %v956 = vmul.f32 %v806, %v903
        %v957 = vmul.f32 %v811, %v903
        %v958 = vmul.f32 %v816, %v903
        %v959 = vmul.f32 %v821, %v903
        %v960 = vmul.f32 %v826, %v903
        %v961 = vmul.f32 %v831, %v903
        %v962 = vmul.f32 %v836, %v903
        %v963 = vmul.f32 %v841, %v903
        %v964 = vmul.f32 %v846, %v903
        %v965 = vmul.f32 %v851, %v903
        %v966 = vmul.f32 %v856, %v903
        %v967 = vmul.f32 %v861, %v903
        %v968 = vmul.f32 %v866, %v903
        %v969 = vmul.f32 %v871, %v903
        %v970 = vmul.f32 %v876, %v903
        %v971 = vmul.f32 %v881, %v903
        %v972 = vmul.f32 %v886, %v903
        %v973 = vmul.f32 %v891, %v903
        %v974 = vmul.f32 %v896, %v903
        %v975 = vmul.f32 %v901, %v903
        %v976 = vadd.f32 %v904, 0.0
        %v977 = vadd.f32 %v905, 0.0
        %v978 = vadd.f32 %v906, 0.0
        %v979 = vadd.f32 %v907, 0.0
        %v980 = vadd.f32 %v908, 0.0
        %v981 = vadd.f32 %v909, 0.0
        %v982 = vadd.f32 %v910, 0.0
        %v983 = vadd.f32 %v911, 0.0
        %v984 = vadd.f32 %v912, 0.0
        %v985 = vadd.f32 %v913, 0.0
        %v986 = vadd.f32 %v914, 0.0
        %v987 = vadd.f32 %v915, 0.0
        %v988 = vadd.f32 %v916, 0.0
        %v989 = vadd.f32 %v917, 0.0
        %v990 = vadd.f32 %v918, 0.0
        %v991 = vadd.f32 %v919, 0.0
        %v992 = vadd.f32 %v920, 0.0
        %v993 = vadd.f32 %v921, 0.0
        %v994 = vadd.f32 %v922, 0.0
        %v995 = vadd.f32 %v923, 0.0
        %v996 = vadd.f32 %v924, 0.0
        %v997 = vadd.f32 %v925, 0.0
        %v998 = vadd.f32 %v926, 0.0
        %v999 = vadd.f32 %v927, 0.0
        %v1000 = vadd.f32 %v928, 0.0
        %v1001 = vadd.f32 %v929, 0.0
        %v1002 = vadd.f32 %v930, 0.0
        %v1003 = vadd.f32 %v931, 0.0
        %v1004 = vadd.f32 %v932, 0.0
        %v1005 = vadd.f32 %v933, 0.0
        %v1006 = vadd.f32 %v934, 0.0
        %v1007 = vadd.f32 %v935, 0.0
        %v1008 = vadd.f32 %v936, 0.0
        %v1009 = vadd.f32 %v937, 0.0
        %v1010 = vadd.f32 %v938, 0.0
        %v1011 = vadd.f32 %v939, 0.0
        %v1012 = vadd.f32 %v940, 0.0
        %v1013 = vadd.f32 %v941, 0.0
        %v1014 = vadd.f32 %v942, 0.0
        %v1015 = vadd.f32 %v943, 0.0
        %v1016 = vadd.f32 %v944, 0.0
        %v1017 = vadd.f32 %v945, 0.0
        %v1018 = vadd.f32 %v946, 0.0
        %v1019 = vadd.f32 %v947, 0.0
        %v1020 = vadd.f32 %v948, 0.0
        %v1021 = vadd.f32 %v949, 0.0
        %v1022 = vadd.f32 %v950, 0.0
        %v1023 = vadd.f32 %v951, 0.0
        %v1024 = vadd.f32 %v952, 0.0
        %v1025 = vadd.f32 %v953, 0.0
        %v1026 = vadd.f32 %v954, 0.0
        %v1027 = vadd.f32 %v955, 0.0
        %v1028 = vadd.f32 %v956, 0.0
        %v1029 = vadd.f32 %v957, 0.0
        %v1030 = vadd.f32 %v958, 0.0
        %v1031 = vadd.f32 %v959, 0.0
        %v1032 = vadd.f32 %v960, 0.0
        %v1033 = vadd.f32 %v961, 0.0
        %v1034 = vadd.f32 %v962, 0.0
        %v1035 = vadd.f32 %v963, 0.0
        %v1036 = vadd.f32 %v964, 0.0
        %v1037 = vadd.f32 %v965, 0.0
        %v1038 = vadd.f32 %v966, 0.0
        %v1039 = vadd.f32 %v967, 0.0
        %v1040 = vadd.f32 %v968, 0.0
        %v1041 = vadd.f32 %v969, 0.0
        %v1042 = vadd.f32 %v970, 0.0
        %v1043 = vadd.f32 %v971, 0.0
        %v1044 = vadd.f32 %v972, 0.0
        %v1045 = vadd.f32 %v973, 0.0
        %v1046 = vadd.f32 %v974, 0.0
        %v1047 = vadd.f32 %v975, 0.0
        %v1048 = vld [vmem:[%s1 + $0x1] sm:$0x1]
        %1050 = vset.pattern.permute.xlu0 0
        %1051 = vperm.xlu0 %1050, %v441
        %v1052 = vpop.permute.xlu0 %1051
        %1055 = vset.pattern.permute.xlu0 0
        %1056 = vperm.xlu0 %1055, %v445
        %v1057 = vpop.permute.xlu0 %1056
        %1060 = vset.pattern.permute.xlu0 0
        %1061 = vperm.xlu0 %1060, %v449
        %v1062 = vpop.permute.xlu0 %1061
        %1065 = vset.pattern.permute.xlu0 0
        %1066 = vperm.xlu0 %1065, %v453
        %v1067 = vpop.permute.xlu0 %1066
        %1070 = vset.pattern.permute.xlu0 0
        %1071 = vperm.xlu0 %1070, %v457
        %v1072 = vpop.permute.xlu0 %1071
        %1075 = vset.pattern.permute.xlu0 0
        %1076 = vperm.xlu0 %1075, %v461
        %v1077 = vpop.permute.xlu0 %1076
        %1080 = vset.pattern.permute.xlu0 0
        %1081 = vperm.xlu0 %1080, %v465
        %v1082 = vpop.permute.xlu0 %1081
        %1085 = vset.pattern.permute.xlu0 0
        %1086 = vperm.xlu0 %1085, %v469
        %v1087 = vpop.permute.xlu0 %1086
        %1090 = vset.pattern.permute.xlu0 0
        %1091 = vperm.xlu0 %1090, %v473
        %v1092 = vpop.permute.xlu0 %1091
        %1095 = vset.pattern.permute.xlu0 0
        %1096 = vperm.xlu0 %1095, %v477
        %v1097 = vpop.permute.xlu0 %1096
        %1100 = vset.pattern.permute.xlu0 0
        %1101 = vperm.xlu0 %1100, %v481
        %v1102 = vpop.permute.xlu0 %1101
        %1105 = vset.pattern.permute.xlu0 0
        %1106 = vperm.xlu0 %1105, %v485
        %v1107 = vpop.permute.xlu0 %1106
        %1110 = vset.pattern.permute.xlu0 0
        %1111 = vperm.xlu0 %1110, %v489
        %v1112 = vpop.permute.xlu0 %1111
        %1115 = vset.pattern.permute.xlu0 0
        %1116 = vperm.xlu0 %1115, %v493
        %v1117 = vpop.permute.xlu0 %1116
        %1120 = vset.pattern.permute.xlu0 0
        %1121 = vperm.xlu0 %1120, %v497
        %v1122 = vpop.permute.xlu0 %1121
        %1125 = vset.pattern.permute.xlu0 0
        %1126 = vperm.xlu0 %1125, %v501
        %v1127 = vpop.permute.xlu0 %1126
        %1130 = vset.pattern.permute.xlu0 0
        %1131 = vperm.xlu0 %1130, %v505
        %v1132 = vpop.permute.xlu0 %1131
        %1135 = vset.pattern.permute.xlu0 0
        %1136 = vperm.xlu0 %1135, %v509
        %v1137 = vpop.permute.xlu0 %1136
        %1140 = vset.pattern.permute.xlu0 0
        %1141 = vperm.xlu0 %1140, %v513
        %v1142 = vpop.permute.xlu0 %1141
        %1145 = vset.pattern.permute.xlu0 0
        %1146 = vperm.xlu0 %1145, %v517
        %v1147 = vpop.permute.xlu0 %1146
        %1150 = vset.pattern.permute.xlu0 0
        %1151 = vperm.xlu0 %1150, %v521
        %v1152 = vpop.permute.xlu0 %1151
        %1155 = vset.pattern.permute.xlu0 0
        %1156 = vperm.xlu0 %1155, %v525
        %v1157 = vpop.permute.xlu0 %1156
        %1160 = vset.pattern.permute.xlu0 0
        %1161 = vperm.xlu0 %1160, %v529
        %v1162 = vpop.permute.xlu0 %1161
        %1165 = vset.pattern.permute.xlu0 0
        %1166 = vperm.xlu0 %1165, %v533
        %v1167 = vpop.permute.xlu0 %1166
        %v1169 = vperm.slane %v1048, 0
        %v1170 = vmul.f32 %v546, %v1169
        %v1171 = vmul.f32 %v551, %v1169
        %v1172 = vmul.f32 %v556, %v1169
        %v1173 = vmul.f32 %v1052, %v1169
        %v1174 = vmul.f32 %v561, %v1169
        %v1175 = vmul.f32 %v566, %v1169
        %v1176 = vmul.f32 %v571, %v1169
        %v1177 = vmul.f32 %v1057, %v1169
        %v1178 = vmul.f32 %v576, %v1169
        %v1179 = vmul.f32 %v581, %v1169
        %v1180 = vmul.f32 %v586, %v1169
        %v1181 = vmul.f32 %v1062, %v1169
        %v1182 = vmul.f32 %v591, %v1169
        %v1183 = vmul.f32 %v596, %v1169
        %v1184 = vmul.f32 %v601, %v1169
        %v1185 = vmul.f32 %v1067, %v1169
        %v1186 = vmul.f32 %v606, %v1169
        %v1187 = vmul.f32 %v611, %v1169
        %v1188 = vmul.f32 %v616, %v1169
        %v1189 = vmul.f32 %v1072, %v1169
        %v1190 = vmul.f32 %v621, %v1169
        %v1191 = vmul.f32 %v626, %v1169
        %v1192 = vmul.f32 %v631, %v1169
        %v1193 = vmul.f32 %v1077, %v1169
        %v1194 = vmul.f32 %v636, %v1169
        %v1195 = vmul.f32 %v641, %v1169
        %v1196 = vmul.f32 %v646, %v1169
        %v1197 = vmul.f32 %v1082, %v1169
        %v1198 = vmul.f32 %v651, %v1169
        %v1199 = vmul.f32 %v656, %v1169
        %v1200 = vmul.f32 %v661, %v1169
        %v1201 = vmul.f32 %v1087, %v1169
        %v1202 = vmul.f32 %v666, %v1169
        %v1203 = vmul.f32 %v671, %v1169
        %v1204 = vmul.f32 %v676, %v1169
        %v1205 = vmul.f32 %v1092, %v1169
        %v1206 = vmul.f32 %v681, %v1169
        %v1207 = vmul.f32 %v686, %v1169
        %v1208 = vmul.f32 %v691, %v1169
        %v1209 = vmul.f32 %v1097, %v1169
        %v1210 = vmul.f32 %v696, %v1169
        %v1211 = vmul.f32 %v701, %v1169
        %v1212 = vmul.f32 %v706, %v1169
        %v1213 = vmul.f32 %v1102, %v1169
        %v1214 = vmul.f32 %v711, %v1169
        %v1215 = vmul.f32 %v716, %v1169
        %v1216 = vmul.f32 %v721, %v1169
        %v1217 = vmul.f32 %v1107, %v1169
        %v1218 = vmul.f32 %v726, %v1169
        %v1219 = vmul.f32 %v731, %v1169
        %v1220 = vmul.f32 %v736, %v1169
        %v1221 = vmul.f32 %v1112, %v1169
        %v1222 = vmul.f32 %v741, %v1169
        %v1223 = vmul.f32 %v746, %v1169
        %v1224 = vmul.f32 %v751, %v1169
        %v1225 = vmul.f32 %v1117, %v1169
        %v1226 = vmul.f32 %v756, %v1169
        %v1227 = vmul.f32 %v761, %v1169
        %v1228 = vmul.f32 %v766, %v1169
        %v1229 = vmul.f32 %v1122, %v1169
        %v1230 = vmul.f32 %v771, %v1169
        %v1231 = vmul.f32 %v776, %v1169
        %v1232 = vmul.f32 %v781, %v1169
        %v1233 = vmul.f32 %v1127, %v1169
        %v1234 = vmul.f32 %v786, %v1169
        %v1235 = vmul.f32 %v791, %v1169
        %v1236 = vmul.f32 %v796, %v1169
        %v1237 = vmul.f32 %v1132, %v1169
        %v1238 = vmul.f32 %v801, %v1169
        %v1239 = vmul.f32 %v806, %v1169
        %v1240 = vmul.f32 %v811, %v1169
        %v1241 = vmul.f32 %v1137, %v1169
        %v1242 = vmul.f32 %v816, %v1169
        %v1243 = vmul.f32 %v821, %v1169
        %v1244 = vmul.f32 %v826, %v1169
        %v1245 = vmul.f32 %v1142, %v1169
        %v1246 = vmul.f32 %v831, %v1169
        %v1247 = vmul.f32 %v836, %v1169
        %v1248 = vmul.f32 %v841, %v1169
        %v1249 = vmul.f32 %v1147, %v1169
        %v1250 = vmul.f32 %v846, %v1169
        %v1251 = vmul.f32 %v851, %v1169
        %v1252 = vmul.f32 %v856, %v1169
        %v1253 = vmul.f32 %v1152, %v1169
        %v1254 = vmul.f32 %v861, %v1169
        %v1255 = vmul.f32 %v866, %v1169
        %v1256 = vmul.f32 %v871, %v1169
        %v1257 = vmul.f32 %v1157, %v1169
        %v1258 = vmul.f32 %v876, %v1169
        %v1259 = vmul.f32 %v881, %v1169
        %v1260 = vmul.f32 %v886, %v1169
        %v1261 = vmul.f32 %v1162, %v1169
        %v1262 = vmul.f32 %v891, %v1169
        %v1263 = vmul.f32 %v896, %v1169
        %v1264 = vmul.f32 %v901, %v1169
        %v1265 = vmul.f32 %v1167, %v1169
        %vm1362 = vcmask 1046528
        %v1363 = vrot.slane %v1170, 1
        %v1364 = vrot.slane %v1171, 1
        %v1365 = vsel %vm1362, %v1363, %v1364
        %v1366 = vrot.slane %v1172, 1
        %v1367 = vsel %vm1362, %v1364, %v1366
        %v1368 = vrot.slane %v1173, 1
        %v1369 = vsel %vm1362, %v1366, %v1368
        %v1370 = vrot.slane %v1174, 1
        %v1371 = vrot.slane %v1175, 1
        %v1372 = vsel %vm1362, %v1370, %v1371
        %v1373 = vrot.slane %v1176, 1
        %v1374 = vsel %vm1362, %v1371, %v1373
        %v1375 = vrot.slane %v1177, 1
        %v1376 = vsel %vm1362, %v1373, %v1375
        %v1377 = vrot.slane %v1178, 1
        %v1378 = vrot.slane %v1179, 1
        %v1379 = vsel %vm1362, %v1377, %v1378
        %v1380 = vrot.slane %v1180, 1
        %v1381 = vsel %vm1362, %v1378, %v1380
        %v1382 = vrot.slane %v1181, 1
        %v1383 = vsel %vm1362, %v1380, %v1382
        %v1384 = vrot.slane %v1182, 1
        %v1385 = vrot.slane %v1183, 1
        %v1386 = vsel %vm1362, %v1384, %v1385
        %v1387 = vrot.slane %v1184, 1
        %v1388 = vsel %vm1362, %v1385, %v1387
        %v1389 = vrot.slane %v1185, 1
        %v1390 = vsel %vm1362, %v1387, %v1389
        %v1391 = vrot.slane %v1186, 1
        %v1392 = vrot.slane %v1187, 1
        %v1393 = vsel %vm1362, %v1391, %v1392
        %v1394 = vrot.slane %v1188, 1
        %v1395 = vsel %vm1362, %v1392, %v1394
        %v1396 = vrot.slane %v1189, 1
        %v1397 = vsel %vm1362, %v1394, %v1396
        %v1398 = vrot.slane %v1190, 1
        %v1399 = vrot.slane %v1191, 1
        %v1400 = vsel %vm1362, %v1398, %v1399
        %v1401 = vrot.slane %v1192, 1
        %v1402 = vsel %vm1362, %v1399, %v1401
        %v1403 = vrot.slane %v1193, 1
        %v1404 = vsel %vm1362, %v1401, %v1403
        %v1405 = vrot.slane %v1194, 1
        %v1406 = vrot.slane %v1195, 1
        %v1407 = vsel %vm1362, %v1405, %v1406
        %v1408 = vrot.slane %v1196, 1
        %v1409 = vsel %vm1362, %v1406, %v1408
        %v1410 = vrot.slane %v1197, 1
        %v1411 = vsel %vm1362, %v1408, %v1410
        %v1412 = vrot.slane %v1198, 1
        %v1413 = vrot.slane %v1199, 1
        %v1414 = vsel %vm1362, %v1412, %v1413
        %v1415 = vrot.slane %v1200, 1
        %v1416 = vsel %vm1362, %v1413, %v1415
        %v1417 = vrot.slane %v1201, 1
        %v1418 = vsel %vm1362, %v1415, %v1417
        %v1419 = vrot.slane %v1202, 1
        %v1420 = vrot.slane %v1203, 1
        %v1421 = vsel %vm1362, %v1419, %v1420
        %v1422 = vrot.slane %v1204, 1
        %v1423 = vsel %vm1362, %v1420, %v1422
        %v1424 = vrot.slane %v1205, 1
        %v1425 = vsel %vm1362, %v1422, %v1424
        %v1426 = vrot.slane %v1206, 1
        %v1427 = vrot.slane %v1207, 1
        %v1428 = vsel %vm1362, %v1426, %v1427
        %v1429 = vrot.slane %v1208, 1
        %v1430 = vsel %vm1362, %v1427, %v1429
        %v1431 = vrot.slane %v1209, 1
        %v1432 = vsel %vm1362, %v1429, %v1431
        %v1433 = vrot.slane %v1210, 1
        %v1434 = vrot.slane %v1211, 1
        %v1435 = vsel %vm1362, %v1433, %v1434
        %v1436 = vrot.slane %v1212, 1
        %v1437 = vsel %vm1362, %v1434, %v1436
        %v1438 = vrot.slane %v1213, 1
        %v1439 = vsel %vm1362, %v1436, %v1438
        %v1440 = vrot.slane %v1214, 1
        %v1441 = vrot.slane %v1215, 1
        %v1442 = vsel %vm1362, %v1440, %v1441
        %v1443 = vrot.slane %v1216, 1
        %v1444 = vsel %vm1362, %v1441, %v1443
        %v1445 = vrot.slane %v1217, 1
        %v1446 = vsel %vm1362, %v1443, %v1445
        %v1447 = vrot.slane %v1218, 1
        %v1448 = vrot.slane %v1219, 1
        %v1449 = vsel %vm1362, %v1447, %v1448
        %v1450 = vrot.slane %v1220, 1
        %v1451 = vsel %vm1362, %v1448, %v1450
        %v1452 = vrot.slane %v1221, 1
        %v1453 = vsel %vm1362, %v1450, %v1452
        %v1454 = vrot.slane %v1222, 1
        %v1455 = vrot.slane %v1223, 1
        %v1456 = vsel %vm1362, %v1454, %v1455
        %v1457 = vrot.slane %v1224, 1
        %v1458 = vsel %vm1362, %v1455, %v1457
        %v1459 = vrot.slane %v1225, 1
        %v1460 = vsel %vm1362, %v1457, %v1459
        %v1461 = vrot.slane %v1226, 1
        %v1462 = vrot.slane %v1227, 1
        %v1463 = vsel %vm1362, %v1461, %v1462
        %v1464 = vrot.slane %v1228, 1
        %v1465 = vsel %vm1362, %v1462, %v1464
        %v1466 = vrot.slane %v1229, 1
        %v1467 = vsel %vm1362, %v1464, %v1466
        %v1468 = vrot.slane %v1230, 1
        %v1469 = vrot.slane %v1231, 1
        %v1470 = vsel %vm1362, %v1468, %v1469
        %v1471 = vrot.slane %v1232, 1
        %v1472 = vsel %vm1362, %v1469, %v1471
        %v1473 = vrot.slane %v1233, 1
        %v1474 = vsel %vm1362, %v1471, %v1473
        %v1475 = vrot.slane %v1234, 1
        %v1476 = vrot.slane %v1235, 1
        %v1477 = vsel %vm1362, %v1475, %v1476
        %v1478 = vrot.slane %v1236, 1
        %v1479 = vsel %vm1362, %v1476, %v1478
        %v1480 = vrot.slane %v1237, 1
        %v1481 = vsel %vm1362, %v1478, %v1480
        %v1482 = vrot.slane %v1238, 1
        %v1483 = vrot.slane %v1239, 1
        %v1484 = vsel %vm1362, %v1482, %v1483
        %v1485 = vrot.slane %v1240, 1
        %v1486 = vsel %vm1362, %v1483, %v1485
        %v1487 = vrot.slane %v1241, 1
        %v1488 = vsel %vm1362, %v1485, %v1487
        %v1489 = vrot.slane %v1242, 1
        %v1490 = vrot.slane %v1243, 1
        %v1491 = vsel %vm1362, %v1489, %v1490
        %v1492 = vrot.slane %v1244, 1
        %v1493 = vsel %vm1362, %v1490, %v1492
        %v1494 = vrot.slane %v1245, 1
        %v1495 = vsel %vm1362, %v1492, %v1494
        %v1496 = vrot.slane %v1246, 1
        %v1497 = vrot.slane %v1247, 1
        %v1498 = vsel %vm1362, %v1496, %v1497
        %v1499 = vrot.slane %v1248, 1
        %v1500 = vsel %vm1362, %v1497, %v1499
        %v1501 = vrot.slane %v1249, 1
        %v1502 = vsel %vm1362, %v1499, %v1501
        %v1503 = vrot.slane %v1250, 1
        %v1504 = vrot.slane %v1251, 1
        %v1505 = vsel %vm1362, %v1503, %v1504
        %v1506 = vrot.slane %v1252, 1
        %v1507 = vsel %vm1362, %v1504, %v1506
        %v1508 = vrot.slane %v1253, 1
        %v1509 = vsel %vm1362, %v1506, %v1508
        %v1510 = vrot.slane %v1254, 1
        %v1511 = vrot.slane %v1255, 1
        %v1512 = vsel %vm1362, %v1510, %v1511
        %v1513 = vrot.slane %v1256, 1
        %v1514 = vsel %vm1362, %v1511, %v1513
        %v1515 = vrot.slane %v1257, 1
        %v1516 = vsel %vm1362, %v1513, %v1515
        %v1517 = vrot.slane %v1258, 1
        %v1518 = vrot.slane %v1259, 1
        %v1519 = vsel %vm1362, %v1517, %v1518
        %v1520 = vrot.slane %v1260, 1
        %v1521 = vsel %vm1362, %v1518, %v1520
        %v1522 = vrot.slane %v1261, 1
        %v1523 = vsel %vm1362, %v1520, %v1522
        %v1524 = vrot.slane %v1262, 1
        %v1525 = vrot.slane %v1263, 1
        %v1526 = vsel %vm1362, %v1524, %v1525
        %v1527 = vrot.slane %v1264, 1
        %v1528 = vsel %vm1362, %v1525, %v1527
        %v1529 = vrot.slane %v1265, 1
        %v1530 = vsel %vm1362, %v1527, %v1529
        %v1603 = vadd.f32 %v976, %v1365
        %v1604 = vadd.f32 %v977, %v1367
        %v1605 = vadd.f32 %v978, %v1369
        %v1606 = vadd.f32 %v979, %v1372
        %v1607 = vadd.f32 %v980, %v1374
        %v1608 = vadd.f32 %v981, %v1376
        %v1609 = vadd.f32 %v982, %v1379
        %v1610 = vadd.f32 %v983, %v1381
        %v1611 = vadd.f32 %v984, %v1383
        %v1612 = vadd.f32 %v985, %v1386
        %v1613 = vadd.f32 %v986, %v1388
        %v1614 = vadd.f32 %v987, %v1390
        %v1615 = vadd.f32 %v988, %v1393
        %v1616 = vadd.f32 %v989, %v1395
        %v1617 = vadd.f32 %v990, %v1397
        %v1618 = vadd.f32 %v991, %v1400
        %v1619 = vadd.f32 %v992, %v1402
        %v1620 = vadd.f32 %v993, %v1404
        %v1621 = vadd.f32 %v994, %v1407
        %v1622 = vadd.f32 %v995, %v1409
        %v1623 = vadd.f32 %v996, %v1411
        %v1624 = vadd.f32 %v997, %v1414
        %v1625 = vadd.f32 %v998, %v1416
        %v1626 = vadd.f32 %v999, %v1418
        %v1627 = vadd.f32 %v1000, %v1421
        %v1628 = vadd.f32 %v1001, %v1423
        %v1629 = vadd.f32 %v1002, %v1425
        %v1630 = vadd.f32 %v1003, %v1428
        %v1631 = vadd.f32 %v1004, %v1430
        %v1632 = vadd.f32 %v1005, %v1432
        %v1633 = vadd.f32 %v1006, %v1435
        %v1634 = vadd.f32 %v1007, %v1437
        %v1635 = vadd.f32 %v1008, %v1439
        %v1636 = vadd.f32 %v1009, %v1442
        %v1637 = vadd.f32 %v1010, %v1444
        %v1638 = vadd.f32 %v1011, %v1446
        %v1639 = vadd.f32 %v1012, %v1449
        %v1640 = vadd.f32 %v1013, %v1451
        %v1641 = vadd.f32 %v1014, %v1453
        %v1642 = vadd.f32 %v1015, %v1456
        %v1643 = vadd.f32 %v1016, %v1458
        %v1644 = vadd.f32 %v1017, %v1460
        %v1645 = vadd.f32 %v1018, %v1463
        %v1646 = vadd.f32 %v1019, %v1465
        %v1647 = vadd.f32 %v1020, %v1467
        %v1648 = vadd.f32 %v1021, %v1470
        %v1649 = vadd.f32 %v1022, %v1472
        %v1650 = vadd.f32 %v1023, %v1474
        %v1651 = vadd.f32 %v1024, %v1477
        %v1652 = vadd.f32 %v1025, %v1479
        %v1653 = vadd.f32 %v1026, %v1481
        %v1654 = vadd.f32 %v1027, %v1484
        %v1655 = vadd.f32 %v1028, %v1486
        %v1656 = vadd.f32 %v1029, %v1488
        %v1657 = vadd.f32 %v1030, %v1491
        %v1658 = vadd.f32 %v1031, %v1493
        %v1659 = vadd.f32 %v1032, %v1495
        %v1660 = vadd.f32 %v1033, %v1498
        %v1661 = vadd.f32 %v1034, %v1500
        %v1662 = vadd.f32 %v1035, %v1502
        %v1663 = vadd.f32 %v1036, %v1505
        %v1664 = vadd.f32 %v1037, %v1507
        %v1665 = vadd.f32 %v1038, %v1509
        %v1666 = vadd.f32 %v1039, %v1512
        %v1667 = vadd.f32 %v1040, %v1514
        %v1668 = vadd.f32 %v1041, %v1516
        %v1669 = vadd.f32 %v1042, %v1519
        %v1670 = vadd.f32 %v1043, %v1521
        %v1671 = vadd.f32 %v1044, %v1523
        %v1672 = vadd.f32 %v1045, %v1526
        %v1673 = vadd.f32 %v1046, %v1528
        %v1674 = vadd.f32 %v1047, %v1530
        %v1675 = vld [vmem:[%s1 + $0x2] sm:$0x1]
        %v1676 = vperm.slane %v1675, 0
        %v1677 = vmul.f32 %v546, %v1676
        %v1678 = vmul.f32 %v551, %v1676
        %v1679 = vmul.f32 %v556, %v1676
        %v1680 = vmul.f32 %v1052, %v1676
        %v1681 = vmul.f32 %v561, %v1676
        %v1682 = vmul.f32 %v566, %v1676
        %v1683 = vmul.f32 %v571, %v1676
        %v1684 = vmul.f32 %v1057, %v1676
        %v1685 = vmul.f32 %v576, %v1676
        %v1686 = vmul.f32 %v581, %v1676
        %v1687 = vmul.f32 %v586, %v1676
        %v1688 = vmul.f32 %v1062, %v1676
        %v1689 = vmul.f32 %v591, %v1676
        %v1690 = vmul.f32 %v596, %v1676
        %v1691 = vmul.f32 %v601, %v1676
        %v1692 = vmul.f32 %v1067, %v1676
        %v1693 = vmul.f32 %v606, %v1676
        %v1694 = vmul.f32 %v611, %v1676
        %v1695 = vmul.f32 %v616, %v1676
        %v1696 = vmul.f32 %v1072, %v1676
        %v1697 = vmul.f32 %v621, %v1676
        %v1698 = vmul.f32 %v626, %v1676
        %v1699 = vmul.f32 %v631, %v1676
        %v1700 = vmul.f32 %v1077, %v1676
        %v1701 = vmul.f32 %v636, %v1676
        %v1702 = vmul.f32 %v641, %v1676
        %v1703 = vmul.f32 %v646, %v1676
        %v1704 = vmul.f32 %v1082, %v1676
        %v1705 = vmul.f32 %v651, %v1676
        %v1706 = vmul.f32 %v656, %v1676
        %v1707 = vmul.f32 %v661, %v1676
        %v1708 = vmul.f32 %v1087, %v1676
        %v1709 = vmul.f32 %v666, %v1676
        %v1710 = vmul.f32 %v671, %v1676
        %v1711 = vmul.f32 %v676, %v1676
        %v1712 = vmul.f32 %v1092, %v1676
        %v1713 = vmul.f32 %v681, %v1676
        %v1714 = vmul.f32 %v686, %v1676
        %v1715 = vmul.f32 %v691, %v1676
        %v1716 = vmul.f32 %v1097, %v1676
        %v1717 = vmul.f32 %v696, %v1676
        %v1718 = vmul.f32 %v701, %v1676
        %v1719 = vmul.f32 %v706, %v1676
        %v1720 = vmul.f32 %v1102, %v1676
        %v1721 = vmul.f32 %v711, %v1676
        %v1722 = vmul.f32 %v716, %v1676
        %v1723 = vmul.f32 %v721, %v1676
        %v1724 = vmul.f32 %v1107, %v1676
        %v1725 = vmul.f32 %v726, %v1676
        %v1726 = vmul.f32 %v731, %v1676
        %v1727 = vmul.f32 %v736, %v1676
        %v1728 = vmul.f32 %v1112, %v1676
        %v1729 = vmul.f32 %v741, %v1676
        %v1730 = vmul.f32 %v746, %v1676
        %v1731 = vmul.f32 %v751, %v1676
        %v1732 = vmul.f32 %v1117, %v1676
        %v1733 = vmul.f32 %v756, %v1676
        %v1734 = vmul.f32 %v761, %v1676
        %v1735 = vmul.f32 %v766, %v1676
        %v1736 = vmul.f32 %v1122, %v1676
        %v1737 = vmul.f32 %v771, %v1676
        %v1738 = vmul.f32 %v776, %v1676
        %v1739 = vmul.f32 %v781, %v1676
        %v1740 = vmul.f32 %v1127, %v1676
        %v1741 = vmul.f32 %v786, %v1676
        %v1742 = vmul.f32 %v791, %v1676
        %v1743 = vmul.f32 %v796, %v1676
        %v1744 = vmul.f32 %v1132, %v1676
        %v1745 = vmul.f32 %v801, %v1676
        %v1746 = vmul.f32 %v806, %v1676
        %v1747 = vmul.f32 %v811, %v1676
        %v1748 = vmul.f32 %v1137, %v1676
        %v1749 = vmul.f32 %v816, %v1676
        %v1750 = vmul.f32 %v821, %v1676
        %v1751 = vmul.f32 %v826, %v1676
        %v1752 = vmul.f32 %v1142, %v1676
        %v1753 = vmul.f32 %v831, %v1676
        %v1754 = vmul.f32 %v836, %v1676
        %v1755 = vmul.f32 %v841, %v1676
        %v1756 = vmul.f32 %v1147, %v1676
        %v1757 = vmul.f32 %v846, %v1676
        %v1758 = vmul.f32 %v851, %v1676
        %v1759 = vmul.f32 %v856, %v1676
        %v1760 = vmul.f32 %v1152, %v1676
        %v1761 = vmul.f32 %v861, %v1676
        %v1762 = vmul.f32 %v866, %v1676
        %v1763 = vmul.f32 %v871, %v1676
        %v1764 = vmul.f32 %v1157, %v1676
        %v1765 = vmul.f32 %v876, %v1676
        %v1766 = vmul.f32 %v881, %v1676
        %v1767 = vmul.f32 %v886, %v1676
        %v1768 = vmul.f32 %v1162, %v1676
        %v1769 = vmul.f32 %v891, %v1676
        %v1770 = vmul.f32 %v896, %v1676
        %v1771 = vmul.f32 %v901, %v1676
        %v1772 = vmul.f32 %v1167, %v1676
        %vm1869 = vcmask 1045504
        %v1870 = vrot.slane %v1677, 2
        %v1871 = vrot.slane %v1678, 2
        %v1872 = vsel %vm1869, %v1870, %v1871
        %v1873 = vrot.slane %v1679, 2
        %v1874 = vsel %vm1869, %v1871, %v1873
        %v1875 = vrot.slane %v1680, 2
        %v1876 = vsel %vm1869, %v1873, %v1875
        %v1877 = vrot.slane %v1681, 2
        %v1878 = vrot.slane %v1682, 2
        %v1879 = vsel %vm1869, %v1877, %v1878
        %v1880 = vrot.slane %v1683, 2
        %v1881 = vsel %vm1869, %v1878, %v1880
        %v1882 = vrot.slane %v1684, 2
        %v1883 = vsel %vm1869, %v1880, %v1882
        %v1884 = vrot.slane %v1685, 2
        %v1885 = vrot.slane %v1686, 2
        %v1886 = vsel %vm1869, %v1884, %v1885
        %v1887 = vrot.slane %v1687, 2
        %v1888 = vsel %vm1869, %v1885, %v1887
        %v1889 = vrot.slane %v1688, 2
        %v1890 = vsel %vm1869, %v1887, %v1889
        %v1891 = vrot.slane %v1689, 2
        %v1892 = vrot.slane %v1690, 2
        %v1893 = vsel %vm1869, %v1891, %v1892
        %v1894 = vrot.slane %v1691, 2
        %v1895 = vsel %vm1869, %v1892, %v1894
        %v1896 = vrot.slane %v1692, 2
        %v1897 = vsel %vm1869, %v1894, %v1896
        %v1898 = vrot.slane %v1693, 2
        %v1899 = vrot.slane %v1694, 2
        %v1900 = vsel %vm1869, %v1898, %v1899
        %v1901 = vrot.slane %v1695, 2
        %v1902 = vsel %vm1869, %v1899, %v1901
        %v1903 = vrot.slane %v1696, 2
        %v1904 = vsel %vm1869, %v1901, %v1903
        %v1905 = vrot.slane %v1697, 2
        %v1906 = vrot.slane %v1698, 2
        %v1907 = vsel %vm1869, %v1905, %v1906
        %v1908 = vrot.slane %v1699, 2
        %v1909 = vsel %vm1869, %v1906, %v1908
        %v1910 = vrot.slane %v1700, 2
        %v1911 = vsel %vm1869, %v1908, %v1910
        %v1912 = vrot.slane %v1701, 2
        %v1913 = vrot.slane %v1702, 2
        %v1914 = vsel %vm1869, %v1912, %v1913
        %v1915 = vrot.slane %v1703, 2
        %v1916 = vsel %vm1869, %v1913, %v1915
        %v1917 = vrot.slane %v1704, 2
        %v1918 = vsel %vm1869, %v1915, %v1917
        %v1919 = vrot.slane %v1705, 2
        %v1920 = vrot.slane %v1706, 2
        %v1921 = vsel %vm1869, %v1919, %v1920
        %v1922 = vrot.slane %v1707, 2
        %v1923 = vsel %vm1869, %v1920, %v1922
        %v1924 = vrot.slane %v1708, 2
        %v1925 = vsel %vm1869, %v1922, %v1924
        %v1926 = vrot.slane %v1709, 2
        %v1927 = vrot.slane %v1710, 2
        %v1928 = vsel %vm1869, %v1926, %v1927
        %v1929 = vrot.slane %v1711, 2
        %v1930 = vsel %vm1869, %v1927, %v1929
        %v1931 = vrot.slane %v1712, 2
        %v1932 = vsel %vm1869, %v1929, %v1931
        %v1933 = vrot.slane %v1713, 2
        %v1934 = vrot.slane %v1714, 2
        %v1935 = vsel %vm1869, %v1933, %v1934
        %v1936 = vrot.slane %v1715, 2
        %v1937 = vsel %vm1869, %v1934, %v1936
        %v1938 = vrot.slane %v1716, 2
        %v1939 = vsel %vm1869, %v1936, %v1938
        %v1940 = vrot.slane %v1717, 2
        %v1941 = vrot.slane %v1718, 2
        %v1942 = vsel %vm1869, %v1940, %v1941
        %v1943 = vrot.slane %v1719, 2
        %v1944 = vsel %vm1869, %v1941, %v1943
        %v1945 = vrot.slane %v1720, 2
        %v1946 = vsel %vm1869, %v1943, %v1945
        %v1947 = vrot.slane %v1721, 2
        %v1948 = vrot.slane %v1722, 2
        %v1949 = vsel %vm1869, %v1947, %v1948
        %v1950 = vrot.slane %v1723, 2
        %v1951 = vsel %vm1869, %v1948, %v1950
        %v1952 = vrot.slane %v1724, 2
        %v1953 = vsel %vm1869, %v1950, %v1952
        %v1954 = vrot.slane %v1725, 2
        %v1955 = vrot.slane %v1726, 2
        %v1956 = vsel %vm1869, %v1954, %v1955
        %v1957 = vrot.slane %v1727, 2
        %v1958 = vsel %vm1869, %v1955, %v1957
        %v1959 = vrot.slane %v1728, 2
        %v1960 = vsel %vm1869, %v1957, %v1959
        %v1961 = vrot.slane %v1729, 2
        %v1962 = vrot.slane %v1730, 2
        %v1963 = vsel %vm1869, %v1961, %v1962
        %v1964 = vrot.slane %v1731, 2
        %v1965 = vsel %vm1869, %v1962, %v1964
        %v1966 = vrot.slane %v1732, 2
        %v1967 = vsel %vm1869, %v1964, %v1966
        %v1968 = vrot.slane %v1733, 2
        %v1969 = vrot.slane %v1734, 2
        %v1970 = vsel %vm1869, %v1968, %v1969
        %v1971 = vrot.slane %v1735, 2
        %v1972 = vsel %vm1869, %v1969, %v1971
        %v1973 = vrot.slane %v1736, 2
        %v1974 = vsel %vm1869, %v1971, %v1973
        %v1975 = vrot.slane %v1737, 2
        %v1976 = vrot.slane %v1738, 2
        %v1977 = vsel %vm1869, %v1975, %v1976
        %v1978 = vrot.slane %v1739, 2
        %v1979 = vsel %vm1869, %v1976, %v1978
        %v1980 = vrot.slane %v1740, 2
        %v1981 = vsel %vm1869, %v1978, %v1980
        %v1982 = vrot.slane %v1741, 2
        %v1983 = vrot.slane %v1742, 2
        %v1984 = vsel %vm1869, %v1982, %v1983
        %v1985 = vrot.slane %v1743, 2
        %v1986 = vsel %vm1869, %v1983, %v1985
        %v1987 = vrot.slane %v1744, 2
        %v1988 = vsel %vm1869, %v1985, %v1987
        %v1989 = vrot.slane %v1745, 2
        %v1990 = vrot.slane %v1746, 2
        %v1991 = vsel %vm1869, %v1989, %v1990
        %v1992 = vrot.slane %v1747, 2
        %v1993 = vsel %vm1869, %v1990, %v1992
        %v1994 = vrot.slane %v1748, 2
        %v1995 = vsel %vm1869, %v1992, %v1994
        %v1996 = vrot.slane %v1749, 2
        %v1997 = vrot.slane %v1750, 2
        %v1998 = vsel %vm1869, %v1996, %v1997
        %v1999 = vrot.slane %v1751, 2
        %v2000 = vsel %vm1869, %v1997, %v1999
        %v2001 = vrot.slane %v1752, 2
        %v2002 = vsel %vm1869, %v1999, %v2001
        %v2003 = vrot.slane %v1753, 2
        %v2004 = vrot.slane %v1754, 2
        %v2005 = vsel %vm1869, %v2003, %v2004
        %v2006 = vrot.slane %v1755, 2
        %v2007 = vsel %vm1869, %v2004, %v2006
        %v2008 = vrot.slane %v1756, 2
        %v2009 = vsel %vm1869, %v2006, %v2008
        %v2010 = vrot.slane %v1757, 2
        %v2011 = vrot.slane %v1758, 2
        %v2012 = vsel %vm1869, %v2010, %v2011
        %v2013 = vrot.slane %v1759, 2
        %v2014 = vsel %vm1869, %v2011, %v2013
        %v2015 = vrot.slane %v1760, 2
        %v2016 = vsel %vm1869, %v2013, %v2015
        %v2017 = vrot.slane %v1761, 2
        %v2018 = vrot.slane %v1762, 2
        %v2019 = vsel %vm1869, %v2017, %v2018
        %v2020 = vrot.slane %v1763, 2
        %v2021 = vsel %vm1869, %v2018, %v2020
        %v2022 = vrot.slane %v1764, 2
        %v2023 = vsel %vm1869, %v2020, %v2022
        %v2024 = vrot.slane %v1765, 2
        %v2025 = vrot.slane %v1766, 2
        %v2026 = vsel %vm1869, %v2024, %v2025
        %v2027 = vrot.slane %v1767, 2
        %v2028 = vsel %vm1869, %v2025, %v2027
        %v2029 = vrot.slane %v1768, 2
        %v2030 = vsel %vm1869, %v2027, %v2029
        %v2031 = vrot.slane %v1769, 2
        %v2032 = vrot.slane %v1770, 2
        %v2033 = vsel %vm1869, %v2031, %v2032
        %v2034 = vrot.slane %v1771, 2
        %v2035 = vsel %vm1869, %v2032, %v2034
        %v2036 = vrot.slane %v1772, 2
        %v2037 = vsel %vm1869, %v2034, %v2036
        %v2110 = vadd.f32 %v1603, %v1872
        %v2111 = vadd.f32 %v1604, %v1874
        %v2112 = vadd.f32 %v1605, %v1876
        %v2113 = vadd.f32 %v1606, %v1879
        %v2114 = vadd.f32 %v1607, %v1881
        %v2115 = vadd.f32 %v1608, %v1883
        %v2116 = vadd.f32 %v1609, %v1886
        %v2117 = vadd.f32 %v1610, %v1888
        %v2118 = vadd.f32 %v1611, %v1890
        %v2119 = vadd.f32 %v1612, %v1893
        %v2120 = vadd.f32 %v1613, %v1895
        %v2121 = vadd.f32 %v1614, %v1897
        %v2122 = vadd.f32 %v1615, %v1900
        %v2123 = vadd.f32 %v1616, %v1902
        %v2124 = vadd.f32 %v1617, %v1904
        %v2125 = vadd.f32 %v1618, %v1907
        %v2126 = vadd.f32 %v1619, %v1909
        %v2127 = vadd.f32 %v1620, %v1911
        %v2128 = vadd.f32 %v1621, %v1914
        %v2129 = vadd.f32 %v1622, %v1916
        %v2130 = vadd.f32 %v1623, %v1918
        %v2131 = vadd.f32 %v1624, %v1921
        %v2132 = vadd.f32 %v1625, %v1923
        %v2133 = vadd.f32 %v1626, %v1925
        %v2134 = vadd.f32 %v1627, %v1928
        %v2135 = vadd.f32 %v1628, %v1930
        %v2136 = vadd.f32 %v1629, %v1932
        %v2137 = vadd.f32 %v1630, %v1935
        %v2138 = vadd.f32 %v1631, %v1937
        %v2139 = vadd.f32 %v1632, %v1939
        %v2140 = vadd.f32 %v1633, %v1942
        %v2141 = vadd.f32 %v1634, %v1944
        %v2142 = vadd.f32 %v1635, %v1946
        %v2143 = vadd.f32 %v1636, %v1949
        %v2144 = vadd.f32 %v1637, %v1951
        %v2145 = vadd.f32 %v1638, %v1953
        %v2146 = vadd.f32 %v1639, %v1956
        %v2147 = vadd.f32 %v1640, %v1958
        %v2148 = vadd.f32 %v1641, %v1960
        %v2149 = vadd.f32 %v1642, %v1963
        %v2150 = vadd.f32 %v1643, %v1965
        %v2151 = vadd.f32 %v1644, %v1967
        %v2152 = vadd.f32 %v1645, %v1970
        %v2153 = vadd.f32 %v1646, %v1972
        %v2154 = vadd.f32 %v1647, %v1974
        %v2155 = vadd.f32 %v1648, %v1977
        %v2156 = vadd.f32 %v1649, %v1979
        %v2157 = vadd.f32 %v1650, %v1981
        %v2158 = vadd.f32 %v1651, %v1984
        %v2159 = vadd.f32 %v1652, %v1986
        %v2160 = vadd.f32 %v1653, %v1988
        %v2161 = vadd.f32 %v1654, %v1991
        %v2162 = vadd.f32 %v1655, %v1993
        %v2163 = vadd.f32 %v1656, %v1995
        %v2164 = vadd.f32 %v1657, %v1998
        %v2165 = vadd.f32 %v1658, %v2000
        %v2166 = vadd.f32 %v1659, %v2002
        %v2167 = vadd.f32 %v1660, %v2005
        %v2168 = vadd.f32 %v1661, %v2007
        %v2169 = vadd.f32 %v1662, %v2009
        %v2170 = vadd.f32 %v1663, %v2012
        %v2171 = vadd.f32 %v1664, %v2014
        %v2172 = vadd.f32 %v1665, %v2016
        %v2173 = vadd.f32 %v1666, %v2019
        %v2174 = vadd.f32 %v1667, %v2021
        %v2175 = vadd.f32 %v1668, %v2023
        %v2176 = vadd.f32 %v1669, %v2026
        %v2177 = vadd.f32 %v1670, %v2028
        %v2178 = vadd.f32 %v1671, %v2030
        %v2179 = vadd.f32 %v1672, %v2033
        %v2180 = vadd.f32 %v1673, %v2035
        %v2181 = vadd.f32 %v1674, %v2037
        %v2182 = vld [vmem:[%s1 + $0x3] sm:$0x1]
        %2184 = vset.pattern.permute.xlu0 0
        %2185 = vperm.xlu0 %2184, %v534
        %v2186 = vpop.permute.xlu0 %2185
        %2189 = vset.pattern.permute.xlu0 0
        %2190 = vperm.xlu0 %2189, %v535
        %v2191 = vpop.permute.xlu0 %2190
        %2194 = vset.pattern.permute.xlu0 0
        %2195 = vperm.xlu0 %2194, %v536
        %v2196 = vpop.permute.xlu0 %2195
        %v2198 = vperm.slane %v2182, 0
        %v2199 = vmul.f32 %v561, %v2198
        %v2200 = vmul.f32 %v566, %v2198
        %v2201 = vmul.f32 %v571, %v2198
        %v2202 = vmul.f32 %v576, %v2198
        %v2203 = vmul.f32 %v581, %v2198
        %v2204 = vmul.f32 %v586, %v2198
        %v2205 = vmul.f32 %v591, %v2198
        %v2206 = vmul.f32 %v596, %v2198
        %v2207 = vmul.f32 %v601, %v2198
        %v2208 = vmul.f32 %v606, %v2198
        %v2209 = vmul.f32 %v611, %v2198
        %v2210 = vmul.f32 %v616, %v2198
        %v2211 = vmul.f32 %v621, %v2198
        %v2212 = vmul.f32 %v626, %v2198
        %v2213 = vmul.f32 %v631, %v2198
        %v2214 = vmul.f32 %v636, %v2198
        %v2215 = vmul.f32 %v641, %v2198
        %v2216 = vmul.f32 %v646, %v2198
        %v2217 = vmul.f32 %v651, %v2198
        %v2218 = vmul.f32 %v656, %v2198
        %v2219 = vmul.f32 %v661, %v2198
        %v2220 = vmul.f32 %v666, %v2198
        %v2221 = vmul.f32 %v671, %v2198
        %v2222 = vmul.f32 %v676, %v2198
        %v2223 = vmul.f32 %v681, %v2198
        %v2224 = vmul.f32 %v686, %v2198
        %v2225 = vmul.f32 %v691, %v2198
        %v2226 = vmul.f32 %v696, %v2198
        %v2227 = vmul.f32 %v701, %v2198
        %v2228 = vmul.f32 %v706, %v2198
        %v2229 = vmul.f32 %v711, %v2198
        %v2230 = vmul.f32 %v716, %v2198
        %v2231 = vmul.f32 %v721, %v2198
        %v2232 = vmul.f32 %v726, %v2198
        %v2233 = vmul.f32 %v731, %v2198
        %v2234 = vmul.f32 %v736, %v2198
        %v2235 = vmul.f32 %v741, %v2198
        %v2236 = vmul.f32 %v746, %v2198
        %v2237 = vmul.f32 %v751, %v2198
        %v2238 = vmul.f32 %v756, %v2198
        %v2239 = vmul.f32 %v761, %v2198
        %v2240 = vmul.f32 %v766, %v2198
        %v2241 = vmul.f32 %v771, %v2198
        %v2242 = vmul.f32 %v776, %v2198
        %v2243 = vmul.f32 %v781, %v2198
        %v2244 = vmul.f32 %v786, %v2198
        %v2245 = vmul.f32 %v791, %v2198
        %v2246 = vmul.f32 %v796, %v2198
        %v2247 = vmul.f32 %v801, %v2198
        %v2248 = vmul.f32 %v806, %v2198
        %v2249 = vmul.f32 %v811, %v2198
        %v2250 = vmul.f32 %v816, %v2198
        %v2251 = vmul.f32 %v821, %v2198
        %v2252 = vmul.f32 %v826, %v2198
        %v2253 = vmul.f32 %v831, %v2198
        %v2254 = vmul.f32 %v836, %v2198
        %v2255 = vmul.f32 %v841, %v2198
        %v2256 = vmul.f32 %v846, %v2198
        %v2257 = vmul.f32 %v851, %v2198
        %v2258 = vmul.f32 %v856, %v2198
        %v2259 = vmul.f32 %v861, %v2198
        %v2260 = vmul.f32 %v866, %v2198
        %v2261 = vmul.f32 %v871, %v2198
        %v2262 = vmul.f32 %v876, %v2198
        %v2263 = vmul.f32 %v881, %v2198
        %v2264 = vmul.f32 %v886, %v2198
        %v2265 = vmul.f32 %v891, %v2198
        %v2266 = vmul.f32 %v896, %v2198
        %v2267 = vmul.f32 %v901, %v2198
        %v2268 = vmul.f32 %v2186, %v2198
        %v2269 = vmul.f32 %v2191, %v2198
        %v2270 = vmul.f32 %v2196, %v2198
        %v2271 = vadd.f32 %v2110, %v2199
        %v2272 = vadd.f32 %v2111, %v2200
        %v2273 = vadd.f32 %v2112, %v2201
        %v2274 = vadd.f32 %v2113, %v2202
        %v2275 = vadd.f32 %v2114, %v2203
        %v2276 = vadd.f32 %v2115, %v2204
        %v2277 = vadd.f32 %v2116, %v2205
        %v2278 = vadd.f32 %v2117, %v2206
        %v2279 = vadd.f32 %v2118, %v2207
        %v2280 = vadd.f32 %v2119, %v2208
        %v2281 = vadd.f32 %v2120, %v2209
        %v2282 = vadd.f32 %v2121, %v2210
        %v2283 = vadd.f32 %v2122, %v2211
        %v2284 = vadd.f32 %v2123, %v2212
        %v2285 = vadd.f32 %v2124, %v2213
        %v2286 = vadd.f32 %v2125, %v2214
        %v2287 = vadd.f32 %v2126, %v2215
        %v2288 = vadd.f32 %v2127, %v2216
        %v2289 = vadd.f32 %v2128, %v2217
        %v2290 = vadd.f32 %v2129, %v2218
        %v2291 = vadd.f32 %v2130, %v2219
        %v2292 = vadd.f32 %v2131, %v2220
        %v2293 = vadd.f32 %v2132, %v2221
        %v2294 = vadd.f32 %v2133, %v2222
        %v2295 = vadd.f32 %v2134, %v2223
        %v2296 = vadd.f32 %v2135, %v2224
        %v2297 = vadd.f32 %v2136, %v2225
        %v2298 = vadd.f32 %v2137, %v2226
        %v2299 = vadd.f32 %v2138, %v2227
        %v2300 = vadd.f32 %v2139, %v2228
        %v2301 = vadd.f32 %v2140, %v2229
        %v2302 = vadd.f32 %v2141, %v2230
        %v2303 = vadd.f32 %v2142, %v2231
        %v2304 = vadd.f32 %v2143, %v2232
        %v2305 = vadd.f32 %v2144, %v2233
        %v2306 = vadd.f32 %v2145, %v2234
        %v2307 = vadd.f32 %v2146, %v2235
        %v2308 = vadd.f32 %v2147, %v2236
        %v2309 = vadd.f32 %v2148, %v2237
        %v2310 = vadd.f32 %v2149, %v2238
        %v2311 = vadd.f32 %v2150, %v2239
        %v2312 = vadd.f32 %v2151, %v2240
        %v2313 = vadd.f32 %v2152, %v2241
        %v2314 = vadd.f32 %v2153, %v2242
        %v2315 = vadd.f32 %v2154, %v2243
        %v2316 = vadd.f32 %v2155, %v2244
        %v2317 = vadd.f32 %v2156, %v2245
        %v2318 = vadd.f32 %v2157, %v2246
        %v2319 = vadd.f32 %v2158, %v2247
        %v2320 = vadd.f32 %v2159, %v2248
        %v2321 = vadd.f32 %v2160, %v2249
        %v2322 = vadd.f32 %v2161, %v2250
        %v2323 = vadd.f32 %v2162, %v2251
        %v2324 = vadd.f32 %v2163, %v2252
        %v2325 = vadd.f32 %v2164, %v2253
        %v2326 = vadd.f32 %v2165, %v2254
        %v2327 = vadd.f32 %v2166, %v2255
        %v2328 = vadd.f32 %v2167, %v2256
        %v2329 = vadd.f32 %v2168, %v2257
        %v2330 = vadd.f32 %v2169, %v2258
        %v2331 = vadd.f32 %v2170, %v2259
        %v2332 = vadd.f32 %v2171, %v2260
        %v2333 = vadd.f32 %v2172, %v2261
        %v2334 = vadd.f32 %v2173, %v2262
        %v2335 = vadd.f32 %v2174, %v2263
        %v2336 = vadd.f32 %v2175, %v2264
        %v2337 = vadd.f32 %v2176, %v2265
        %v2338 = vadd.f32 %v2177, %v2266
        %v2339 = vadd.f32 %v2178, %v2267
        %v2340 = vadd.f32 %v2179, %v2268
        %v2341 = vadd.f32 %v2180, %v2269
        %v2342 = vadd.f32 %v2181, %v2270
        %v2343 = vld [vmem:[%s1 + $0x4] sm:$0x1]
        %2345 = vset.pattern.permute.xlu0 0
        %2346 = vperm.xlu0 %2345, %v537
        %v2347 = vpop.permute.xlu0 %2346
        %v2349 = vperm.slane %v2343, 0
        %v2350 = vmul.f32 %v561, %v2349
        %v2351 = vmul.f32 %v566, %v2349
        %v2352 = vmul.f32 %v571, %v2349
        %v2353 = vmul.f32 %v1057, %v2349
        %v2354 = vmul.f32 %v576, %v2349
        %v2355 = vmul.f32 %v581, %v2349
        %v2356 = vmul.f32 %v586, %v2349
        %v2357 = vmul.f32 %v1062, %v2349
        %v2358 = vmul.f32 %v591, %v2349
        %v2359 = vmul.f32 %v596, %v2349
        %v2360 = vmul.f32 %v601, %v2349
        %v2361 = vmul.f32 %v1067, %v2349
        %v2362 = vmul.f32 %v606, %v2349
        %v2363 = vmul.f32 %v611, %v2349
        %v2364 = vmul.f32 %v616, %v2349
        %v2365 = vmul.f32 %v1072, %v2349
        %v2366 = vmul.f32 %v621, %v2349
        %v2367 = vmul.f32 %v626, %v2349
        %v2368 = vmul.f32 %v631, %v2349
        %v2369 = vmul.f32 %v1077, %v2349
        %v2370 = vmul.f32 %v636, %v2349
        %v2371 = vmul.f32 %v641, %v2349
        %v2372 = vmul.f32 %v646, %v2349
        %v2373 = vmul.f32 %v1082, %v2349
        %v2374 = vmul.f32 %v651, %v2349
        %v2375 = vmul.f32 %v656, %v2349
        %v2376 = vmul.f32 %v661, %v2349
        %v2377 = vmul.f32 %v1087, %v2349
        %v2378 = vmul.f32 %v666, %v2349
        %v2379 = vmul.f32 %v671, %v2349
        %v2380 = vmul.f32 %v676, %v2349
        %v2381 = vmul.f32 %v1092, %v2349
        %v2382 = vmul.f32 %v681, %v2349
        %v2383 = vmul.f32 %v686, %v2349
        %v2384 = vmul.f32 %v691, %v2349
        %v2385 = vmul.f32 %v1097, %v2349
        %v2386 = vmul.f32 %v696, %v2349
        %v2387 = vmul.f32 %v701, %v2349
        %v2388 = vmul.f32 %v706, %v2349
        %v2389 = vmul.f32 %v1102, %v2349
        %v2390 = vmul.f32 %v711, %v2349
        %v2391 = vmul.f32 %v716, %v2349
        %v2392 = vmul.f32 %v721, %v2349
        %v2393 = vmul.f32 %v1107, %v2349
        %v2394 = vmul.f32 %v726, %v2349
        %v2395 = vmul.f32 %v731, %v2349
        %v2396 = vmul.f32 %v736, %v2349
        %v2397 = vmul.f32 %v1112, %v2349
        %v2398 = vmul.f32 %v741, %v2349
        %v2399 = vmul.f32 %v746, %v2349
        %v2400 = vmul.f32 %v751, %v2349
        %v2401 = vmul.f32 %v1117, %v2349
        %v2402 = vmul.f32 %v756, %v2349
        %v2403 = vmul.f32 %v761, %v2349
        %v2404 = vmul.f32 %v766, %v2349
        %v2405 = vmul.f32 %v1122, %v2349
        %v2406 = vmul.f32 %v771, %v2349
        %v2407 = vmul.f32 %v776, %v2349
        %v2408 = vmul.f32 %v781, %v2349
        %v2409 = vmul.f32 %v1127, %v2349
        %v2410 = vmul.f32 %v786, %v2349
        %v2411 = vmul.f32 %v791, %v2349
        %v2412 = vmul.f32 %v796, %v2349
        %v2413 = vmul.f32 %v1132, %v2349
        %v2414 = vmul.f32 %v801, %v2349
        %v2415 = vmul.f32 %v806, %v2349
        %v2416 = vmul.f32 %v811, %v2349
        %v2417 = vmul.f32 %v1137, %v2349
        %v2418 = vmul.f32 %v816, %v2349
        %v2419 = vmul.f32 %v821, %v2349
        %v2420 = vmul.f32 %v826, %v2349
        %v2421 = vmul.f32 %v1142, %v2349
        %v2422 = vmul.f32 %v831, %v2349
        %v2423 = vmul.f32 %v836, %v2349
        %v2424 = vmul.f32 %v841, %v2349
        %v2425 = vmul.f32 %v1147, %v2349
        %v2426 = vmul.f32 %v846, %v2349
        %v2427 = vmul.f32 %v851, %v2349
        %v2428 = vmul.f32 %v856, %v2349
        %v2429 = vmul.f32 %v1152, %v2349
        %v2430 = vmul.f32 %v861, %v2349
        %v2431 = vmul.f32 %v866, %v2349
        %v2432 = vmul.f32 %v871, %v2349
        %v2433 = vmul.f32 %v1157, %v2349
        %v2434 = vmul.f32 %v876, %v2349
        %v2435 = vmul.f32 %v881, %v2349
        %v2436 = vmul.f32 %v886, %v2349
        %v2437 = vmul.f32 %v1162, %v2349
        %v2438 = vmul.f32 %v891, %v2349
        %v2439 = vmul.f32 %v896, %v2349
        %v2440 = vmul.f32 %v901, %v2349
        %v2441 = vmul.f32 %v1167, %v2349
        %v2442 = vmul.f32 %v2186, %v2349
        %v2443 = vmul.f32 %v2191, %v2349
        %v2444 = vmul.f32 %v2196, %v2349
        %v2445 = vmul.f32 %v2347, %v2349
        %v2542 = vrot.slane %v2350, 1
        %v2543 = vrot.slane %v2351, 1
        %v2544 = vsel %vm1362, %v2542, %v2543
        %v2545 = vrot.slane %v2352, 1
        %v2546 = vsel %vm1362, %v2543, %v2545
        %v2547 = vrot.slane %v2353, 1
        %v2548 = vsel %vm1362, %v2545, %v2547
        %v2549 = vrot.slane %v2354, 1
        %v2550 = vrot.slane %v2355, 1
        %v2551 = vsel %vm1362, %v2549, %v2550
        %v2552 = vrot.slane %v2356, 1
        %v2553 = vsel %vm1362, %v2550, %v2552
        %v2554 = vrot.slane %v2357, 1
        %v2555 = vsel %vm1362, %v2552, %v2554
        %v2556 = vrot.slane %v2358, 1
        %v2557 = vrot.slane %v2359, 1
        %v2558 = vsel %vm1362, %v2556, %v2557
        %v2559 = vrot.slane %v2360, 1
        %v2560 = vsel %vm1362, %v2557, %v2559
        %v2561 = vrot.slane %v2361, 1
        %v2562 = vsel %vm1362, %v2559, %v2561
        %v2563 = vrot.slane %v2362, 1
        %v2564 = vrot.slane %v2363, 1
        %v2565 = vsel %vm1362, %v2563, %v2564
        %v2566 = vrot.slane %v2364, 1
        %v2567 = vsel %vm1362, %v2564, %v2566
        %v2568 = vrot.slane %v2365, 1
        %v2569 = vsel %vm1362, %v2566, %v2568
        %v2570 = vrot.slane %v2366, 1
        %v2571 = vrot.slane %v2367, 1
        %v2572 = vsel %vm1362, %v2570, %v2571
        %v2573 = vrot.slane %v2368, 1
        %v2574 = vsel %vm1362, %v2571, %v2573
        %v2575 = vrot.slane %v2369, 1
        %v2576 = vsel %vm1362, %v2573, %v2575
        %v2577 = vrot.slane %v2370, 1
        %v2578 = vrot.slane %v2371, 1
        %v2579 = vsel %vm1362, %v2577, %v2578
        %v2580 = vrot.slane %v2372, 1
        %v2581 = vsel %vm1362, %v2578, %v2580
        %v2582 = vrot.slane %v2373, 1
        %v2583 = vsel %vm1362, %v2580, %v2582
        %v2584 = vrot.slane %v2374, 1
        %v2585 = vrot.slane %v2375, 1
        %v2586 = vsel %vm1362, %v2584, %v2585
        %v2587 = vrot.slane %v2376, 1
        %v2588 = vsel %vm1362, %v2585, %v2587
        %v2589 = vrot.slane %v2377, 1
        %v2590 = vsel %vm1362, %v2587, %v2589
        %v2591 = vrot.slane %v2378, 1
        %v2592 = vrot.slane %v2379, 1
        %v2593 = vsel %vm1362, %v2591, %v2592
        %v2594 = vrot.slane %v2380, 1
        %v2595 = vsel %vm1362, %v2592, %v2594
        %v2596 = vrot.slane %v2381, 1
        %v2597 = vsel %vm1362, %v2594, %v2596
        %v2598 = vrot.slane %v2382, 1
        %v2599 = vrot.slane %v2383, 1
        %v2600 = vsel %vm1362, %v2598, %v2599
        %v2601 = vrot.slane %v2384, 1
        %v2602 = vsel %vm1362, %v2599, %v2601
        %v2603 = vrot.slane %v2385, 1
        %v2604 = vsel %vm1362, %v2601, %v2603
        %v2605 = vrot.slane %v2386, 1
        %v2606 = vrot.slane %v2387, 1
        %v2607 = vsel %vm1362, %v2605, %v2606
        %v2608 = vrot.slane %v2388, 1
        %v2609 = vsel %vm1362, %v2606, %v2608
        %v2610 = vrot.slane %v2389, 1
        %v2611 = vsel %vm1362, %v2608, %v2610
        %v2612 = vrot.slane %v2390, 1
        %v2613 = vrot.slane %v2391, 1
        %v2614 = vsel %vm1362, %v2612, %v2613
        %v2615 = vrot.slane %v2392, 1
        %v2616 = vsel %vm1362, %v2613, %v2615
        %v2617 = vrot.slane %v2393, 1
        %v2618 = vsel %vm1362, %v2615, %v2617
        %v2619 = vrot.slane %v2394, 1
        %v2620 = vrot.slane %v2395, 1
        %v2621 = vsel %vm1362, %v2619, %v2620
        %v2622 = vrot.slane %v2396, 1
        %v2623 = vsel %vm1362, %v2620, %v2622
        %v2624 = vrot.slane %v2397, 1
        %v2625 = vsel %vm1362, %v2622, %v2624
        %v2626 = vrot.slane %v2398, 1
        %v2627 = vrot.slane %v2399, 1
        %v2628 = vsel %vm1362, %v2626, %v2627
        %v2629 = vrot.slane %v2400, 1
        %v2630 = vsel %vm1362, %v2627, %v2629
        %v2631 = vrot.slane %v2401, 1
        %v2632 = vsel %vm1362, %v2629, %v2631
        %v2633 = vrot.slane %v2402, 1
        %v2634 = vrot.slane %v2403, 1
        %v2635 = vsel %vm1362, %v2633, %v2634
        %v2636 = vrot.slane %v2404, 1
        %v2637 = vsel %vm1362, %v2634, %v2636
        %v2638 = vrot.slane %v2405, 1
        %v2639 = vsel %vm1362, %v2636, %v2638
        %v2640 = vrot.slane %v2406, 1
        %v2641 = vrot.slane %v2407, 1
        %v2642 = vsel %vm1362, %v2640, %v2641
        %v2643 = vrot.slane %v2408, 1
        %v2644 = vsel %vm1362, %v2641, %v2643
        %v2645 = vrot.slane %v2409, 1
        %v2646 = vsel %vm1362, %v2643, %v2645
        %v2647 = vrot.slane %v2410, 1
        %v2648 = vrot.slane %v2411, 1
        %v2649 = vsel %vm1362, %v2647, %v2648
        %v2650 = vrot.slane %v2412, 1
        %v2651 = vsel %vm1362, %v2648, %v2650
        %v2652 = vrot.slane %v2413, 1
        %v2653 = vsel %vm1362, %v2650, %v2652
        %v2654 = vrot.slane %v2414, 1
        %v2655 = vrot.slane %v2415, 1
        %v2656 = vsel %vm1362, %v2654, %v2655
        %v2657 = vrot.slane %v2416, 1
        %v2658 = vsel %vm1362, %v2655, %v2657
        %v2659 = vrot.slane %v2417, 1
        %v2660 = vsel %vm1362, %v2657, %v2659
        %v2661 = vrot.slane %v2418, 1
        %v2662 = vrot.slane %v2419, 1
        %v2663 = vsel %vm1362, %v2661, %v2662
        %v2664 = vrot.slane %v2420, 1
        %v2665 = vsel %vm1362, %v2662, %v2664
        %v2666 = vrot.slane %v2421, 1
        %v2667 = vsel %vm1362, %v2664, %v2666
        %v2668 = vrot.slane %v2422, 1
        %v2669 = vrot.slane %v2423, 1
        %v2670 = vsel %vm1362, %v2668, %v2669
        %v2671 = vrot.slane %v2424, 1
        %v2672 = vsel %vm1362, %v2669, %v2671
        %v2673 = vrot.slane %v2425, 1
        %v2674 = vsel %vm1362, %v2671, %v2673
        %v2675 = vrot.slane %v2426, 1
        %v2676 = vrot.slane %v2427, 1
        %v2677 = vsel %vm1362, %v2675, %v2676
        %v2678 = vrot.slane %v2428, 1
        %v2679 = vsel %vm1362, %v2676, %v2678
        %v2680 = vrot.slane %v2429, 1
        %v2681 = vsel %vm1362, %v2678, %v2680
        %v2682 = vrot.slane %v2430, 1
        %v2683 = vrot.slane %v2431, 1
        %v2684 = vsel %vm1362, %v2682, %v2683
        %v2685 = vrot.slane %v2432, 1
        %v2686 = vsel %vm1362, %v2683, %v2685
        %v2687 = vrot.slane %v2433, 1
        %v2688 = vsel %vm1362, %v2685, %v2687
        %v2689 = vrot.slane %v2434, 1
        %v2690 = vrot.slane %v2435, 1
        %v2691 = vsel %vm1362, %v2689, %v2690
        %v2692 = vrot.slane %v2436, 1
        %v2693 = vsel %vm1362, %v2690, %v2692
        %v2694 = vrot.slane %v2437, 1
        %v2695 = vsel %vm1362, %v2692, %v2694
        %v2696 = vrot.slane %v2438, 1
        %v2697 = vrot.slane %v2439, 1
        %v2698 = vsel %vm1362, %v2696, %v2697
        %v2699 = vrot.slane %v2440, 1
        %v2700 = vsel %vm1362, %v2697, %v2699
        %v2701 = vrot.slane %v2441, 1
        %v2702 = vsel %vm1362, %v2699, %v2701
        %v2703 = vrot.slane %v2442, 1
        %v2704 = vrot.slane %v2443, 1
        %v2705 = vsel %vm1362, %v2703, %v2704
        %v2706 = vrot.slane %v2444, 1
        %v2707 = vsel %vm1362, %v2704, %v2706
        %v2708 = vrot.slane %v2445, 1
        %v2709 = vsel %vm1362, %v2706, %v2708
        %v2782 = vadd.f32 %v2271, %v2544
        %v2783 = vadd.f32 %v2272, %v2546
        %v2784 = vadd.f32 %v2273, %v2548
        %v2785 = vadd.f32 %v2274, %v2551
        %v2786 = vadd.f32 %v2275, %v2553
        %v2787 = vadd.f32 %v2276, %v2555
        %v2788 = vadd.f32 %v2277, %v2558
        %v2789 = vadd.f32 %v2278, %v2560
        %v2790 = vadd.f32 %v2279, %v2562
        %v2791 = vadd.f32 %v2280, %v2565
        %v2792 = vadd.f32 %v2281, %v2567
        %v2793 = vadd.f32 %v2282, %v2569
        %v2794 = vadd.f32 %v2283, %v2572
        %v2795 = vadd.f32 %v2284, %v2574
        %v2796 = vadd.f32 %v2285, %v2576
        %v2797 = vadd.f32 %v2286, %v2579
        %v2798 = vadd.f32 %v2287, %v2581
        %v2799 = vadd.f32 %v2288, %v2583
        %v2800 = vadd.f32 %v2289, %v2586
        %v2801 = vadd.f32 %v2290, %v2588
        %v2802 = vadd.f32 %v2291, %v2590
        %v2803 = vadd.f32 %v2292, %v2593
        %v2804 = vadd.f32 %v2293, %v2595
        %v2805 = vadd.f32 %v2294, %v2597
        %v2806 = vadd.f32 %v2295, %v2600
        %v2807 = vadd.f32 %v2296, %v2602
        %v2808 = vadd.f32 %v2297, %v2604
        %v2809 = vadd.f32 %v2298, %v2607
        %v2810 = vadd.f32 %v2299, %v2609
        %v2811 = vadd.f32 %v2300, %v2611
        %v2812 = vadd.f32 %v2301, %v2614
        %v2813 = vadd.f32 %v2302, %v2616
        %v2814 = vadd.f32 %v2303, %v2618
        %v2815 = vadd.f32 %v2304, %v2621
        %v2816 = vadd.f32 %v2305, %v2623
        %v2817 = vadd.f32 %v2306, %v2625
        %v2818 = vadd.f32 %v2307, %v2628
        %v2819 = vadd.f32 %v2308, %v2630
        %v2820 = vadd.f32 %v2309, %v2632
        %v2821 = vadd.f32 %v2310, %v2635
        %v2822 = vadd.f32 %v2311, %v2637
        %v2823 = vadd.f32 %v2312, %v2639
        %v2824 = vadd.f32 %v2313, %v2642
        %v2825 = vadd.f32 %v2314, %v2644
        %v2826 = vadd.f32 %v2315, %v2646
        %v2827 = vadd.f32 %v2316, %v2649
        %v2828 = vadd.f32 %v2317, %v2651
        %v2829 = vadd.f32 %v2318, %v2653
        %v2830 = vadd.f32 %v2319, %v2656
        %v2831 = vadd.f32 %v2320, %v2658
        %v2832 = vadd.f32 %v2321, %v2660
        %v2833 = vadd.f32 %v2322, %v2663
        %v2834 = vadd.f32 %v2323, %v2665
        %v2835 = vadd.f32 %v2324, %v2667
        %v2836 = vadd.f32 %v2325, %v2670
        %v2837 = vadd.f32 %v2326, %v2672
        %v2838 = vadd.f32 %v2327, %v2674
        %v2839 = vadd.f32 %v2328, %v2677
        %v2840 = vadd.f32 %v2329, %v2679
        %v2841 = vadd.f32 %v2330, %v2681
        %v2842 = vadd.f32 %v2331, %v2684
        %v2843 = vadd.f32 %v2332, %v2686
        %v2844 = vadd.f32 %v2333, %v2688
        %v2845 = vadd.f32 %v2334, %v2691
        %v2846 = vadd.f32 %v2335, %v2693
        %v2847 = vadd.f32 %v2336, %v2695
        %v2848 = vadd.f32 %v2337, %v2698
        %v2849 = vadd.f32 %v2338, %v2700
        %v2850 = vadd.f32 %v2339, %v2702
        %v2851 = vadd.f32 %v2340, %v2705
        %v2852 = vadd.f32 %v2341, %v2707
        %v2853 = vadd.f32 %v2342, %v2709
        %v2854 = vld [vmem:[%s1 + $0x5] sm:$0x1]
        %v2855 = vperm.slane %v2854, 0
        %v2856 = vmul.f32 %v561, %v2855
        %v2857 = vmul.f32 %v566, %v2855
        %v2858 = vmul.f32 %v571, %v2855
        %v2859 = vmul.f32 %v1057, %v2855
        %v2860 = vmul.f32 %v576, %v2855
        %v2861 = vmul.f32 %v581, %v2855
        %v2862 = vmul.f32 %v586, %v2855
        %v2863 = vmul.f32 %v1062, %v2855
        %v2864 = vmul.f32 %v591, %v2855
        %v2865 = vmul.f32 %v596, %v2855
        %v2866 = vmul.f32 %v601, %v2855
        %v2867 = vmul.f32 %v1067, %v2855
        %v2868 = vmul.f32 %v606, %v2855
        %v2869 = vmul.f32 %v611, %v2855
        %v2870 = vmul.f32 %v616, %v2855
        %v2871 = vmul.f32 %v1072, %v2855
        %v2872 = vmul.f32 %v621, %v2855
        %v2873 = vmul.f32 %v626, %v2855
        %v2874 = vmul.f32 %v631, %v2855
        %v2875 = vmul.f32 %v1077, %v2855
        %v2876 = vmul.f32 %v636, %v2855
        %v2877 = vmul.f32 %v641, %v2855
        %v2878 = vmul.f32 %v646, %v2855
        %v2879 = vmul.f32 %v1082, %v2855
        %v2880 = vmul.f32 %v651, %v2855
        %v2881 = vmul.f32 %v656, %v2855
        %v2882 = vmul.f32 %v661, %v2855
        %v2883 = vmul.f32 %v1087, %v2855
        %v2884 = vmul.f32 %v666, %v2855
        %v2885 = vmul.f32 %v671, %v2855
        %v2886 = vmul.f32 %v676, %v2855
        %v2887 = vmul.f32 %v1092, %v2855
        %v2888 = vmul.f32 %v681, %v2855
        %v2889 = vmul.f32 %v686, %v2855
        %v2890 = vmul.f32 %v691, %v2855
        %v2891 = vmul.f32 %v1097, %v2855
        %v2892 = vmul.f32 %v696, %v2855
        %v2893 = vmul.f32 %v701, %v2855
        %v2894 = vmul.f32 %v706, %v2855
        %v2895 = vmul.f32 %v1102, %v2855
        %v2896 = vmul.f32 %v711, %v2855
        %v2897 = vmul.f32 %v716, %v2855
        %v2898 = vmul.f32 %v721, %v2855
        %v2899 = vmul.f32 %v1107, %v2855
        %v2900 = vmul.f32 %v726, %v2855
        %v2901 = vmul.f32 %v731, %v2855
        %v2902 = vmul.f32 %v736, %v2855
        %v2903 = vmul.f32 %v1112, %v2855
        %v2904 = vmul.f32 %v741, %v2855
        %v2905 = vmul.f32 %v746, %v2855
        %v2906 = vmul.f32 %v751, %v2855
        %v2907 = vmul.f32 %v1117, %v2855
        %v2908 = vmul.f32 %v756, %v2855
        %v2909 = vmul.f32 %v761, %v2855
        %v2910 = vmul.f32 %v766, %v2855
        %v2911 = vmul.f32 %v1122, %v2855
        %v2912 = vmul.f32 %v771, %v2855
        %v2913 = vmul.f32 %v776, %v2855
        %v2914 = vmul.f32 %v781, %v2855
        %v2915 = vmul.f32 %v1127, %v2855
        %v2916 = vmul.f32 %v786, %v2855
        %v2917 = vmul.f32 %v791, %v2855
        %v2918 = vmul.f32 %v796, %v2855
        %v2919 = vmul.f32 %v1132, %v2855
        %v2920 = vmul.f32 %v801, %v2855
        %v2921 = vmul.f32 %v806, %v2855
        %v2922 = vmul.f32 %v811, %v2855
        %v2923 = vmul.f32 %v1137, %v2855
        %v2924 = vmul.f32 %v816, %v2855
        %v2925 = vmul.f32 %v821, %v2855
        %v2926 = vmul.f32 %v826, %v2855
        %v2927 = vmul.f32 %v1142, %v2855
        %v2928 = vmul.f32 %v831, %v2855
        %v2929 = vmul.f32 %v836, %v2855
        %v2930 = vmul.f32 %v841, %v2855
        %v2931 = vmul.f32 %v1147, %v2855
        %v2932 = vmul.f32 %v846, %v2855
        %v2933 = vmul.f32 %v851, %v2855
        %v2934 = vmul.f32 %v856, %v2855
        %v2935 = vmul.f32 %v1152, %v2855
        %v2936 = vmul.f32 %v861, %v2855
        %v2937 = vmul.f32 %v866, %v2855
        %v2938 = vmul.f32 %v871, %v2855
        %v2939 = vmul.f32 %v1157, %v2855
        %v2940 = vmul.f32 %v876, %v2855
        %v2941 = vmul.f32 %v881, %v2855
        %v2942 = vmul.f32 %v886, %v2855
        %v2943 = vmul.f32 %v1162, %v2855
        %v2944 = vmul.f32 %v891, %v2855
        %v2945 = vmul.f32 %v896, %v2855
        %v2946 = vmul.f32 %v901, %v2855
        %v2947 = vmul.f32 %v1167, %v2855
        %v2948 = vmul.f32 %v2186, %v2855
        %v2949 = vmul.f32 %v2191, %v2855
        %v2950 = vmul.f32 %v2196, %v2855
        %v2951 = vmul.f32 %v2347, %v2855
        %v3048 = vrot.slane %v2856, 2
        %v3049 = vrot.slane %v2857, 2
        %v3050 = vsel %vm1869, %v3048, %v3049
        %v3051 = vrot.slane %v2858, 2
        %v3052 = vsel %vm1869, %v3049, %v3051
        %v3053 = vrot.slane %v2859, 2
        %v3054 = vsel %vm1869, %v3051, %v3053
        %v3055 = vrot.slane %v2860, 2
        %v3056 = vrot.slane %v2861, 2
        %v3057 = vsel %vm1869, %v3055, %v3056
        %v3058 = vrot.slane %v2862, 2
        %v3059 = vsel %vm1869, %v3056, %v3058
        %v3060 = vrot.slane %v2863, 2
        %v3061 = vsel %vm1869, %v3058, %v3060
        %v3062 = vrot.slane %v2864, 2
        %v3063 = vrot.slane %v2865, 2
        %v3064 = vsel %vm1869, %v3062, %v3063
        %v3065 = vrot.slane %v2866, 2
        %v3066 = vsel %vm1869, %v3063, %v3065
        %v3067 = vrot.slane %v2867, 2
        %v3068 = vsel %vm1869, %v3065, %v3067
        %v3069 = vrot.slane %v2868, 2
        %v3070 = vrot.slane %v2869, 2
        %v3071 = vsel %vm1869, %v3069, %v3070
        %v3072 = vrot.slane %v2870, 2
        %v3073 = vsel %vm1869, %v3070, %v3072
        %v3074 = vrot.slane %v2871, 2
        %v3075 = vsel %vm1869, %v3072, %v3074
        %v3076 = vrot.slane %v2872, 2
        %v3077 = vrot.slane %v2873, 2
        %v3078 = vsel %vm1869, %v3076, %v3077
        %v3079 = vrot.slane %v2874, 2
        %v3080 = vsel %vm1869, %v3077, %v3079
        %v3081 = vrot.slane %v2875, 2
        %v3082 = vsel %vm1869, %v3079, %v3081
        %v3083 = vrot.slane %v2876, 2
        %v3084 = vrot.slane %v2877, 2
        %v3085 = vsel %vm1869, %v3083, %v3084
        %v3086 = vrot.slane %v2878, 2
        %v3087 = vsel %vm1869, %v3084, %v3086
        %v3088 = vrot.slane %v2879, 2
        %v3089 = vsel %vm1869, %v3086, %v3088
        %v3090 = vrot.slane %v2880, 2
        %v3091 = vrot.slane %v2881, 2
        %v3092 = vsel %vm1869, %v3090, %v3091
        %v3093 = vrot.slane %v2882, 2
        %v3094 = vsel %vm1869, %v3091, %v3093
        %v3095 = vrot.slane %v2883, 2
        %v3096 = vsel %vm1869, %v3093, %v3095
        %v3097 = vrot.slane %v2884, 2
        %v3098 = vrot.slane %v2885, 2
        %v3099 = vsel %vm1869, %v3097, %v3098
        %v3100 = vrot.slane %v2886, 2
        %v3101 = vsel %vm1869, %v3098, %v3100
        %v3102 = vrot.slane %v2887, 2
        %v3103 = vsel %vm1869, %v3100, %v3102
        %v3104 = vrot.slane %v2888, 2
        %v3105 = vrot.slane %v2889, 2
        %v3106 = vsel %vm1869, %v3104, %v3105
        %v3107 = vrot.slane %v2890, 2
        %v3108 = vsel %vm1869, %v3105, %v3107
        %v3109 = vrot.slane %v2891, 2
        %v3110 = vsel %vm1869, %v3107, %v3109
        %v3111 = vrot.slane %v2892, 2
        %v3112 = vrot.slane %v2893, 2
        %v3113 = vsel %vm1869, %v3111, %v3112
        %v3114 = vrot.slane %v2894, 2
        %v3115 = vsel %vm1869, %v3112, %v3114
        %v3116 = vrot.slane %v2895, 2
        %v3117 = vsel %vm1869, %v3114, %v3116
        %v3118 = vrot.slane %v2896, 2
        %v3119 = vrot.slane %v2897, 2
        %v3120 = vsel %vm1869, %v3118, %v3119
        %v3121 = vrot.slane %v2898, 2
        %v3122 = vsel %vm1869, %v3119, %v3121
        %v3123 = vrot.slane %v2899, 2
        %v3124 = vsel %vm1869, %v3121, %v3123
        %v3125 = vrot.slane %v2900, 2
        %v3126 = vrot.slane %v2901, 2
        %v3127 = vsel %vm1869, %v3125, %v3126
        %v3128 = vrot.slane %v2902, 2
        %v3129 = vsel %vm1869, %v3126, %v3128
        %v3130 = vrot.slane %v2903, 2
        %v3131 = vsel %vm1869, %v3128, %v3130
        %v3132 = vrot.slane %v2904, 2
        %v3133 = vrot.slane %v2905, 2
        %v3134 = vsel %vm1869, %v3132, %v3133
        %v3135 = vrot.slane %v2906, 2
        %v3136 = vsel %vm1869, %v3133, %v3135
        %v3137 = vrot.slane %v2907, 2
        %v3138 = vsel %vm1869, %v3135, %v3137
        %v3139 = vrot.slane %v2908, 2
        %v3140 = vrot.slane %v2909, 2
        %v3141 = vsel %vm1869, %v3139, %v3140
        %v3142 = vrot.slane %v2910, 2
        %v3143 = vsel %vm1869, %v3140, %v3142
        %v3144 = vrot.slane %v2911, 2
        %v3145 = vsel %vm1869, %v3142, %v3144
        %v3146 = vrot.slane %v2912, 2
        %v3147 = vrot.slane %v2913, 2
        %v3148 = vsel %vm1869, %v3146, %v3147
        %v3149 = vrot.slane %v2914, 2
        %v3150 = vsel %vm1869, %v3147, %v3149
        %v3151 = vrot.slane %v2915, 2
        %v3152 = vsel %vm1869, %v3149, %v3151
        %v3153 = vrot.slane %v2916, 2
        %v3154 = vrot.slane %v2917, 2
        %v3155 = vsel %vm1869, %v3153, %v3154
        %v3156 = vrot.slane %v2918, 2
        %v3157 = vsel %vm1869, %v3154, %v3156
        %v3158 = vrot.slane %v2919, 2
        %v3159 = vsel %vm1869, %v3156, %v3158
        %v3160 = vrot.slane %v2920, 2
        %v3161 = vrot.slane %v2921, 2
        %v3162 = vsel %vm1869, %v3160, %v3161
        %v3163 = vrot.slane %v2922, 2
        %v3164 = vsel %vm1869, %v3161, %v3163
        %v3165 = vrot.slane %v2923, 2
        %v3166 = vsel %vm1869, %v3163, %v3165
        %v3167 = vrot.slane %v2924, 2
        %v3168 = vrot.slane %v2925, 2
        %v3169 = vsel %vm1869, %v3167, %v3168
        %v3170 = vrot.slane %v2926, 2
        %v3171 = vsel %vm1869, %v3168, %v3170
        %v3172 = vrot.slane %v2927, 2
        %v3173 = vsel %vm1869, %v3170, %v3172
        %v3174 = vrot.slane %v2928, 2
        %v3175 = vrot.slane %v2929, 2
        %v3176 = vsel %vm1869, %v3174, %v3175
        %v3177 = vrot.slane %v2930, 2
        %v3178 = vsel %vm1869, %v3175, %v3177
        %v3179 = vrot.slane %v2931, 2
        %v3180 = vsel %vm1869, %v3177, %v3179
        %v3181 = vrot.slane %v2932, 2
        %v3182 = vrot.slane %v2933, 2
        %v3183 = vsel %vm1869, %v3181, %v3182
        %v3184 = vrot.slane %v2934, 2
        %v3185 = vsel %vm1869, %v3182, %v3184
        %v3186 = vrot.slane %v2935, 2
        %v3187 = vsel %vm1869, %v3184, %v3186
        %v3188 = vrot.slane %v2936, 2
        %v3189 = vrot.slane %v2937, 2
        %v3190 = vsel %vm1869, %v3188, %v3189
        %v3191 = vrot.slane %v2938, 2
        %v3192 = vsel %vm1869, %v3189, %v3191
        %v3193 = vrot.slane %v2939, 2
        %v3194 = vsel %vm1869, %v3191, %v3193
        %v3195 = vrot.slane %v2940, 2
        %v3196 = vrot.slane %v2941, 2
        %v3197 = vsel %vm1869, %v3195, %v3196
        %v3198 = vrot.slane %v2942, 2
        %v3199 = vsel %vm1869, %v3196, %v3198
        %v3200 = vrot.slane %v2943, 2
        %v3201 = vsel %vm1869, %v3198, %v3200
        %v3202 = vrot.slane %v2944, 2
        %v3203 = vrot.slane %v2945, 2
        %v3204 = vsel %vm1869, %v3202, %v3203
        %v3205 = vrot.slane %v2946, 2
        %v3206 = vsel %vm1869, %v3203, %v3205
        %v3207 = vrot.slane %v2947, 2
        %v3208 = vsel %vm1869, %v3205, %v3207
        %v3209 = vrot.slane %v2948, 2
        %v3210 = vrot.slane %v2949, 2
        %v3211 = vsel %vm1869, %v3209, %v3210
        %v3212 = vrot.slane %v2950, 2
        %v3213 = vsel %vm1869, %v3210, %v3212
        %v3214 = vrot.slane %v2951, 2
        %v3215 = vsel %vm1869, %v3212, %v3214
        %v3288 = vadd.f32 %v2782, %v3050
        %v3289 = vadd.f32 %v2783, %v3052
        %v3290 = vadd.f32 %v2784, %v3054
        %v3291 = vadd.f32 %v2785, %v3057
        %v3292 = vadd.f32 %v2786, %v3059
        %v3293 = vadd.f32 %v2787, %v3061
        %v3294 = vadd.f32 %v2788, %v3064
        %v3295 = vadd.f32 %v2789, %v3066
        %v3296 = vadd.f32 %v2790, %v3068
        %v3297 = vadd.f32 %v2791, %v3071
        %v3298 = vadd.f32 %v2792, %v3073
        %v3299 = vadd.f32 %v2793, %v3075
        %v3300 = vadd.f32 %v2794, %v3078
        %v3301 = vadd.f32 %v2795, %v3080
        %v3302 = vadd.f32 %v2796, %v3082
        %v3303 = vadd.f32 %v2797, %v3085
        %v3304 = vadd.f32 %v2798, %v3087
        %v3305 = vadd.f32 %v2799, %v3089
        %v3306 = vadd.f32 %v2800, %v3092
        %v3307 = vadd.f32 %v2801, %v3094
        %v3308 = vadd.f32 %v2802, %v3096
        %v3309 = vadd.f32 %v2803, %v3099
        %v3310 = vadd.f32 %v2804, %v3101
        %v3311 = vadd.f32 %v2805, %v3103
        %v3312 = vadd.f32 %v2806, %v3106
        %v3313 = vadd.f32 %v2807, %v3108
        %v3314 = vadd.f32 %v2808, %v3110
        %v3315 = vadd.f32 %v2809, %v3113
        %v3316 = vadd.f32 %v2810, %v3115
        %v3317 = vadd.f32 %v2811, %v3117
        %v3318 = vadd.f32 %v2812, %v3120
        %v3319 = vadd.f32 %v2813, %v3122
        %v3320 = vadd.f32 %v2814, %v3124
        %v3321 = vadd.f32 %v2815, %v3127
        %v3322 = vadd.f32 %v2816, %v3129
        %v3323 = vadd.f32 %v2817, %v3131
        %v3324 = vadd.f32 %v2818, %v3134
        %v3325 = vadd.f32 %v2819, %v3136
        %v3326 = vadd.f32 %v2820, %v3138
        %v3327 = vadd.f32 %v2821, %v3141
        %v3328 = vadd.f32 %v2822, %v3143
        %v3329 = vadd.f32 %v2823, %v3145
        %v3330 = vadd.f32 %v2824, %v3148
        %v3331 = vadd.f32 %v2825, %v3150
        %v3332 = vadd.f32 %v2826, %v3152
        %v3333 = vadd.f32 %v2827, %v3155
        %v3334 = vadd.f32 %v2828, %v3157
        %v3335 = vadd.f32 %v2829, %v3159
        %v3336 = vadd.f32 %v2830, %v3162
        %v3337 = vadd.f32 %v2831, %v3164
        %v3338 = vadd.f32 %v2832, %v3166
        %v3339 = vadd.f32 %v2833, %v3169
        %v3340 = vadd.f32 %v2834, %v3171
        %v3341 = vadd.f32 %v2835, %v3173
        %v3342 = vadd.f32 %v2836, %v3176
        %v3343 = vadd.f32 %v2837, %v3178
        %v3344 = vadd.f32 %v2838, %v3180
        %v3345 = vadd.f32 %v2839, %v3183
        %v3346 = vadd.f32 %v2840, %v3185
        %v3347 = vadd.f32 %v2841, %v3187
        %v3348 = vadd.f32 %v2842, %v3190
        %v3349 = vadd.f32 %v2843, %v3192
        %v3350 = vadd.f32 %v2844, %v3194
        %v3351 = vadd.f32 %v2845, %v3197
        %v3352 = vadd.f32 %v2846, %v3199
        %v3353 = vadd.f32 %v2847, %v3201
        %v3354 = vadd.f32 %v2848, %v3204
        %v3355 = vadd.f32 %v2849, %v3206
        %v3356 = vadd.f32 %v2850, %v3208
        %v3357 = vadd.f32 %v2851, %v3211
        %v3358 = vadd.f32 %v2852, %v3213
        %v3359 = vadd.f32 %v2853, %v3215
        %v3360 = vld [vmem:[%s1 + $0x6] sm:$0x1]
        %3362 = vset.pattern.permute.xlu0 0
        %3363 = vperm.xlu0 %3362, %v538
        %v3364 = vpop.permute.xlu0 %3363
        %3367 = vset.pattern.permute.xlu0 0
        %3368 = vperm.xlu0 %3367, %v539
        %v3369 = vpop.permute.xlu0 %3368
        %3372 = vset.pattern.permute.xlu0 0
        %3373 = vperm.xlu0 %3372, %v540
        %v3374 = vpop.permute.xlu0 %3373
        %v3376 = vperm.slane %v3360, 0
        %v3377 = vmul.f32 %v576, %v3376
        %v3378 = vmul.f32 %v581, %v3376
        %v3379 = vmul.f32 %v586, %v3376
        %v3380 = vmul.f32 %v591, %v3376
        %v3381 = vmul.f32 %v596, %v3376
        %v3382 = vmul.f32 %v601, %v3376
        %v3383 = vmul.f32 %v606, %v3376
        %v3384 = vmul.f32 %v611, %v3376
        %v3385 = vmul.f32 %v616, %v3376
        %v3386 = vmul.f32 %v621, %v3376
        %v3387 = vmul.f32 %v626, %v3376
        %v3388 = vmul.f32 %v631, %v3376
        %v3389 = vmul.f32 %v636, %v3376
        %v3390 = vmul.f32 %v641, %v3376
        %v3391 = vmul.f32 %v646, %v3376
        %v3392 = vmul.f32 %v651, %v3376
        %v3393 = vmul.f32 %v656, %v3376
        %v3394 = vmul.f32 %v661, %v3376
        %v3395 = vmul.f32 %v666, %v3376
        %v3396 = vmul.f32 %v671, %v3376
        %v3397 = vmul.f32 %v676, %v3376
        %v3398 = vmul.f32 %v681, %v3376
        %v3399 = vmul.f32 %v686, %v3376
        %v3400 = vmul.f32 %v691, %v3376
        %v3401 = vmul.f32 %v696, %v3376
        %v3402 = vmul.f32 %v701, %v3376
        %v3403 = vmul.f32 %v706, %v3376
        %v3404 = vmul.f32 %v711, %v3376
        %v3405 = vmul.f32 %v716, %v3376
        %v3406 = vmul.f32 %v721, %v3376
        %v3407 = vmul.f32 %v726, %v3376
        %v3408 = vmul.f32 %v731, %v3376
        %v3409 = vmul.f32 %v736, %v3376
        %v3410 = vmul.f32 %v741, %v3376
        %v3411 = vmul.f32 %v746, %v3376
        %v3412 = vmul.f32 %v751, %v3376
        %v3413 = vmul.f32 %v756, %v3376
        %v3414 = vmul.f32 %v761, %v3376
        %v3415 = vmul.f32 %v766, %v3376
        %v3416 = vmul.f32 %v771, %v3376
        %v3417 = vmul.f32 %v776, %v3376
        %v3418 = vmul.f32 %v781, %v3376
        %v3419 = vmul.f32 %v786, %v3376
        %v3420 = vmul.f32 %v791, %v3376
        %v3421 = vmul.f32 %v796, %v3376
        %v3422 = vmul.f32 %v801, %v3376
        %v3423 = vmul.f32 %v806, %v3376
        %v3424 = vmul.f32 %v811, %v3376
        %v3425 = vmul.f32 %v816, %v3376
        %v3426 = vmul.f32 %v821, %v3376
        %v3427 = vmul.f32 %v826, %v3376
        %v3428 = vmul.f32 %v831, %v3376
        %v3429 = vmul.f32 %v836, %v3376
        %v3430 = vmul.f32 %v841, %v3376
        %v3431 = vmul.f32 %v846, %v3376
        %v3432 = vmul.f32 %v851, %v3376
        %v3433 = vmul.f32 %v856, %v3376
        %v3434 = vmul.f32 %v861, %v3376
        %v3435 = vmul.f32 %v866, %v3376
        %v3436 = vmul.f32 %v871, %v3376
        %v3437 = vmul.f32 %v876, %v3376
        %v3438 = vmul.f32 %v881, %v3376
        %v3439 = vmul.f32 %v886, %v3376
        %v3440 = vmul.f32 %v891, %v3376
        %v3441 = vmul.f32 %v896, %v3376
        %v3442 = vmul.f32 %v901, %v3376
        %v3443 = vmul.f32 %v2186, %v3376
        %v3444 = vmul.f32 %v2191, %v3376
        %v3445 = vmul.f32 %v2196, %v3376
        %v3446 = vmul.f32 %v3364, %v3376
        %v3447 = vmul.f32 %v3369, %v3376
        %v3448 = vmul.f32 %v3374, %v3376
        %v3449 = vadd.f32 %v3288, %v3377
        %v3450 = vadd.f32 %v3289, %v3378
        %v3451 = vadd.f32 %v3290, %v3379
        %v3452 = vadd.f32 %v3291, %v3380
        %v3453 = vadd.f32 %v3292, %v3381
        %v3454 = vadd.f32 %v3293, %v3382
        %v3455 = vadd.f32 %v3294, %v3383
        %v3456 = vadd.f32 %v3295, %v3384
        %v3457 = vadd.f32 %v3296, %v3385
        %v3458 = vadd.f32 %v3297, %v3386
        %v3459 = vadd.f32 %v3298, %v3387
        %v3460 = vadd.f32 %v3299, %v3388
        %v3461 = vadd.f32 %v3300, %v3389
        %v3462 = vadd.f32 %v3301, %v3390
        %v3463 = vadd.f32 %v3302, %v3391
        %v3464 = vadd.f32 %v3303, %v3392
        %v3465 = vadd.f32 %v3304, %v3393
        %v3466 = vadd.f32 %v3305, %v3394
        %v3467 = vadd.f32 %v3306, %v3395
        %v3468 = vadd.f32 %v3307, %v3396
        %v3469 = vadd.f32 %v3308, %v3397
        %v3470 = vadd.f32 %v3309, %v3398
        %v3471 = vadd.f32 %v3310, %v3399
        %v3472 = vadd.f32 %v3311, %v3400
        %v3473 = vadd.f32 %v3312, %v3401
        %v3474 = vadd.f32 %v3313, %v3402
        %v3475 = vadd.f32 %v3314, %v3403
        %v3476 = vadd.f32 %v3315, %v3404
        %v3477 = vadd.f32 %v3316, %v3405
        %v3478 = vadd.f32 %v3317, %v3406
        %v3479 = vadd.f32 %v3318, %v3407
        %v3480 = vadd.f32 %v3319, %v3408
        %v3481 = vadd.f32 %v3320, %v3409
        %v3482 = vadd.f32 %v3321, %v3410
        %v3483 = vadd.f32 %v3322, %v3411
        %v3484 = vadd.f32 %v3323, %v3412
        %v3485 = vadd.f32 %v3324, %v3413
        %v3486 = vadd.f32 %v3325, %v3414
        %v3487 = vadd.f32 %v3326, %v3415
        %v3488 = vadd.f32 %v3327, %v3416
        %v3489 = vadd.f32 %v3328, %v3417
        %v3490 = vadd.f32 %v3329, %v3418
        %v3491 = vadd.f32 %v3330, %v3419
        %v3492 = vadd.f32 %v3331, %v3420
        %v3493 = vadd.f32 %v3332, %v3421
        %v3494 = vadd.f32 %v3333, %v3422
        %v3495 = vadd.f32 %v3334, %v3423
        %v3496 = vadd.f32 %v3335, %v3424
        %v3497 = vadd.f32 %v3336, %v3425
        %v3498 = vadd.f32 %v3337, %v3426
        %v3499 = vadd.f32 %v3338, %v3427
        %v3500 = vadd.f32 %v3339, %v3428
        %v3501 = vadd.f32 %v3340, %v3429
        %v3502 = vadd.f32 %v3341, %v3430
        %v3503 = vadd.f32 %v3342, %v3431
        %v3504 = vadd.f32 %v3343, %v3432
        %v3505 = vadd.f32 %v3344, %v3433
        %v3506 = vadd.f32 %v3345, %v3434
        %v3507 = vadd.f32 %v3346, %v3435
        %v3508 = vadd.f32 %v3347, %v3436
        %v3509 = vadd.f32 %v3348, %v3437
        %v3510 = vadd.f32 %v3349, %v3438
        %v3511 = vadd.f32 %v3350, %v3439
        %v3512 = vadd.f32 %v3351, %v3440
        %v3513 = vadd.f32 %v3352, %v3441
        %v3514 = vadd.f32 %v3353, %v3442
        %v3515 = vadd.f32 %v3354, %v3443
        %v3516 = vadd.f32 %v3355, %v3444
        %v3517 = vadd.f32 %v3356, %v3445
        %v3518 = vadd.f32 %v3357, %v3446
        %v3519 = vadd.f32 %v3358, %v3447
        %v3520 = vadd.f32 %v3359, %v3448
        %v3521 = vld [vmem:[%s1 + $0x7] sm:$0x1]
        %3523 = vset.pattern.permute.xlu0 0
        %3524 = vperm.xlu0 %3523, %v541
        %v3525 = vpop.permute.xlu0 %3524
        %v3527 = vperm.slane %v3521, 0
        %v3528 = vmul.f32 %v576, %v3527
        %v3529 = vmul.f32 %v581, %v3527
        %v3530 = vmul.f32 %v586, %v3527
        %v3531 = vmul.f32 %v1062, %v3527
        %v3532 = vmul.f32 %v591, %v3527
        %v3533 = vmul.f32 %v596, %v3527
        %v3534 = vmul.f32 %v601, %v3527
        %v3535 = vmul.f32 %v1067, %v3527
        %v3536 = vmul.f32 %v606, %v3527
        %v3537 = vmul.f32 %v611, %v3527
        %v3538 = vmul.f32 %v616, %v3527
        %v3539 = vmul.f32 %v1072, %v3527
        %v3540 = vmul.f32 %v621, %v3527
        %v3541 = vmul.f32 %v626, %v3527
        %v3542 = vmul.f32 %v631, %v3527
        %v3543 = vmul.f32 %v1077, %v3527
        %v3544 = vmul.f32 %v636, %v3527
        %v3545 = vmul.f32 %v641, %v3527
        %v3546 = vmul.f32 %v646, %v3527
        %v3547 = vmul.f32 %v1082, %v3527
        %v3548 = vmul.f32 %v651, %v3527
        %v3549 = vmul.f32 %v656, %v3527
        %v3550 = vmul.f32 %v661, %v3527
        %v3551 = vmul.f32 %v1087, %v3527
        %v3552 = vmul.f32 %v666, %v3527
        %v3553 = vmul.f32 %v671, %v3527
        %v3554 = vmul.f32 %v676, %v3527
        %v3555 = vmul.f32 %v1092, %v3527
        %v3556 = vmul.f32 %v681, %v3527
        %v3557 = vmul.f32 %v686, %v3527
        %v3558 = vmul.f32 %v691, %v3527
        %v3559 = vmul.f32 %v1097, %v3527
        %v3560 = vmul.f32 %v696, %v3527
        %v3561 = vmul.f32 %v701, %v3527
        %v3562 = vmul.f32 %v706, %v3527
        %v3563 = vmul.f32 %v1102, %v3527
        %v3564 = vmul.f32 %v711, %v3527
        %v3565 = vmul.f32 %v716, %v3527
        %v3566 = vmul.f32 %v721, %v3527
        %v3567 = vmul.f32 %v1107, %v3527
        %v3568 = vmul.f32 %v726, %v3527
        %v3569 = vmul.f32 %v731, %v3527
        %v3570 = vmul.f32 %v736, %v3527
        %v3571 = vmul.f32 %v1112, %v3527
        %v3572 = vmul.f32 %v741, %v3527
        %v3573 = vmul.f32 %v746, %v3527
        %v3574 = vmul.f32 %v751, %v3527
        %v3575 = vmul.f32 %v1117, %v3527
        %v3576 = vmul.f32 %v756, %v3527
        %v3577 = vmul.f32 %v761, %v3527
        %v3578 = vmul.f32 %v766, %v3527
        %v3579 = vmul.f32 %v1122, %v3527
        %v3580 = vmul.f32 %v771, %v3527
        %v3581 = vmul.f32 %v776, %v3527
        %v3582 = vmul.f32 %v781, %v3527
        %v3583 = vmul.f32 %v1127, %v3527
        %v3584 = vmul.f32 %v786, %v3527
        %v3585 = vmul.f32 %v791, %v3527
        %v3586 = vmul.f32 %v796, %v3527
        %v3587 = vmul.f32 %v1132, %v3527
        %v3588 = vmul.f32 %v801, %v3527
        %v3589 = vmul.f32 %v806, %v3527
        %v3590 = vmul.f32 %v811, %v3527
        %v3591 = vmul.f32 %v1137, %v3527
        %v3592 = vmul.f32 %v816, %v3527
        %v3593 = vmul.f32 %v821, %v3527
        %v3594 = vmul.f32 %v826, %v3527
        %v3595 = vmul.f32 %v1142, %v3527
        %v3596 = vmul.f32 %v831, %v3527
        %v3597 = vmul.f32 %v836, %v3527
        %v3598 = vmul.f32 %v841, %v3527
        %v3599 = vmul.f32 %v1147, %v3527
        %v3600 = vmul.f32 %v846, %v3527
        %v3601 = vmul.f32 %v851, %v3527
        %v3602 = vmul.f32 %v856, %v3527
        %v3603 = vmul.f32 %v1152, %v3527
        %v3604 = vmul.f32 %v861, %v3527
        %v3605 = vmul.f32 %v866, %v3527
        %v3606 = vmul.f32 %v871, %v3527
        %v3607 = vmul.f32 %v1157, %v3527
        %v3608 = vmul.f32 %v876, %v3527
        %v3609 = vmul.f32 %v881, %v3527
        %v3610 = vmul.f32 %v886, %v3527
        %v3611 = vmul.f32 %v1162, %v3527
        %v3612 = vmul.f32 %v891, %v3527
        %v3613 = vmul.f32 %v896, %v3527
        %v3614 = vmul.f32 %v901, %v3527
        %v3615 = vmul.f32 %v1167, %v3527
        %v3616 = vmul.f32 %v2186, %v3527
        %v3617 = vmul.f32 %v2191, %v3527
        %v3618 = vmul.f32 %v2196, %v3527
        %v3619 = vmul.f32 %v2347, %v3527
        %v3620 = vmul.f32 %v3364, %v3527
        %v3621 = vmul.f32 %v3369, %v3527
        %v3622 = vmul.f32 %v3374, %v3527
        %v3623 = vmul.f32 %v3525, %v3527
        %v3720 = vrot.slane %v3528, 1
        %v3721 = vrot.slane %v3529, 1
        %v3722 = vsel %vm1362, %v3720, %v3721
        %v3723 = vrot.slane %v3530, 1
        %v3724 = vsel %vm1362, %v3721, %v3723
        %v3725 = vrot.slane %v3531, 1
        %v3726 = vsel %vm1362, %v3723, %v3725
        %v3727 = vrot.slane %v3532, 1
        %v3728 = vrot.slane %v3533, 1
        %v3729 = vsel %vm1362, %v3727, %v3728
        %v3730 = vrot.slane %v3534, 1
        %v3731 = vsel %vm1362, %v3728, %v3730
        %v3732 = vrot.slane %v3535, 1
        %v3733 = vsel %vm1362, %v3730, %v3732
        %v3734 = vrot.slane %v3536, 1
        %v3735 = vrot.slane %v3537, 1
        %v3736 = vsel %vm1362, %v3734, %v3735
        %v3737 = vrot.slane %v3538, 1
        %v3738 = vsel %vm1362, %v3735, %v3737
        %v3739 = vrot.slane %v3539, 1
        %v3740 = vsel %vm1362, %v3737, %v3739
        %v3741 = vrot.slane %v3540, 1
        %v3742 = vrot.slane %v3541, 1
        %v3743 = vsel %vm1362, %v3741, %v3742
        %v3744 = vrot.slane %v3542, 1
        %v3745 = vsel %vm1362, %v3742, %v3744
        %v3746 = vrot.slane %v3543, 1
        %v3747 = vsel %vm1362, %v3744, %v3746
        %v3748 = vrot.slane %v3544, 1
        %v3749 = vrot.slane %v3545, 1
        %v3750 = vsel %vm1362, %v3748, %v3749
        %v3751 = vrot.slane %v3546, 1
        %v3752 = vsel %vm1362, %v3749, %v3751
        %v3753 = vrot.slane %v3547, 1
        %v3754 = vsel %vm1362, %v3751, %v3753
        %v3755 = vrot.slane %v3548, 1
        %v3756 = vrot.slane %v3549, 1
        %v3757 = vsel %vm1362, %v3755, %v3756
        %v3758 = vrot.slane %v3550, 1
        %v3759 = vsel %vm1362, %v3756, %v3758
        %v3760 = vrot.slane %v3551, 1
        %v3761 = vsel %vm1362, %v3758, %v3760
        %v3762 = vrot.slane %v3552, 1
        %v3763 = vrot.slane %v3553, 1
        %v3764 = vsel %vm1362, %v3762, %v3763
        %v3765 = vrot.slane %v3554, 1
        %v3766 = vsel %vm1362, %v3763, %v3765
        %v3767 = vrot.slane %v3555, 1
        %v3768 = vsel %vm1362, %v3765, %v3767
        %v3769 = vrot.slane %v3556, 1
        %v3770 = vrot.slane %v3557, 1
        %v3771 = vsel %vm1362, %v3769, %v3770
        %v3772 = vrot.slane %v3558, 1
        %v3773 = vsel %vm1362, %v3770, %v3772
        %v3774 = vrot.slane %v3559, 1
        %v3775 = vsel %vm1362, %v3772, %v3774
        %v3776 = vrot.slane %v3560, 1
        %v3777 = vrot.slane %v3561, 1
        %v3778 = vsel %vm1362, %v3776, %v3777
        %v3779 = vrot.slane %v3562, 1
        %v3780 = vsel %vm1362, %v3777, %v3779
        %v3781 = vrot.slane %v3563, 1
        %v3782 = vsel %vm1362, %v3779, %v3781
        %v3783 = vrot.slane %v3564, 1
        %v3784 = vrot.slane %v3565, 1
        %v3785 = vsel %vm1362, %v3783, %v3784
        %v3786 = vrot.slane %v3566, 1
        %v3787 = vsel %vm1362, %v3784, %v3786
        %v3788 = vrot.slane %v3567, 1
        %v3789 = vsel %vm1362, %v3786, %v3788
        %v3790 = vrot.slane %v3568, 1
        %v3791 = vrot.slane %v3569, 1
        %v3792 = vsel %vm1362, %v3790, %v3791
        %v3793 = vrot.slane %v3570, 1
        %v3794 = vsel %vm1362, %v3791, %v3793
        %v3795 = vrot.slane %v3571, 1
        %v3796 = vsel %vm1362, %v3793, %v3795
        %v3797 = vrot.slane %v3572, 1
        %v3798 = vrot.slane %v3573, 1
        %v3799 = vsel %vm1362, %v3797, %v3798
        %v3800 = vrot.slane %v3574, 1
        %v3801 = vsel %vm1362, %v3798, %v3800
        %v3802 = vrot.slane %v3575, 1
        %v3803 = vsel %vm1362, %v3800, %v3802
        %v3804 = vrot.slane %v3576, 1
        %v3805 = vrot.slane %v3577, 1
        %v3806 = vsel %vm1362, %v3804, %v3805
        %v3807 = vrot.slane %v3578, 1
        %v3808 = vsel %vm1362, %v3805, %v3807
        %v3809 = vrot.slane %v3579, 1
        %v3810 = vsel %vm1362, %v3807, %v3809
        %v3811 = vrot.slane %v3580, 1
        %v3812 = vrot.slane %v3581, 1
        %v3813 = vsel %vm1362, %v3811, %v3812
        %v3814 = vrot.slane %v3582, 1
        %v3815 = vsel %vm1362, %v3812, %v3814
        %v3816 = vrot.slane %v3583, 1
        %v3817 = vsel %vm1362, %v3814, %v3816
        %v3818 = vrot.slane %v3584, 1
        %v3819 = vrot.slane %v3585, 1
        %v3820 = vsel %vm1362, %v3818, %v3819
        %v3821 = vrot.slane %v3586, 1
        %v3822 = vsel %vm1362, %v3819, %v3821
        %v3823 = vrot.slane %v3587, 1
        %v3824 = vsel %vm1362, %v3821, %v3823
        %v3825 = vrot.slane %v3588, 1
        %v3826 = vrot.slane %v3589, 1
        %v3827 = vsel %vm1362, %v3825, %v3826
        %v3828 = vrot.slane %v3590, 1
        %v3829 = vsel %vm1362, %v3826, %v3828
        %v3830 = vrot.slane %v3591, 1
        %v3831 = vsel %vm1362, %v3828, %v3830
        %v3832 = vrot.slane %v3592, 1
        %v3833 = vrot.slane %v3593, 1
        %v3834 = vsel %vm1362, %v3832, %v3833
        %v3835 = vrot.slane %v3594, 1
        %v3836 = vsel %vm1362, %v3833, %v3835
        %v3837 = vrot.slane %v3595, 1
        %v3838 = vsel %vm1362, %v3835, %v3837
        %v3839 = vrot.slane %v3596, 1
        %v3840 = vrot.slane %v3597, 1
        %v3841 = vsel %vm1362, %v3839, %v3840
        %v3842 = vrot.slane %v3598, 1
        %v3843 = vsel %vm1362, %v3840, %v3842
        %v3844 = vrot.slane %v3599, 1
        %v3845 = vsel %vm1362, %v3842, %v3844
        %v3846 = vrot.slane %v3600, 1
        %v3847 = vrot.slane %v3601, 1
        %v3848 = vsel %vm1362, %v3846, %v3847
        %v3849 = vrot.slane %v3602, 1
        %v3850 = vsel %vm1362, %v3847, %v3849
        %v3851 = vrot.slane %v3603, 1
        %v3852 = vsel %vm1362, %v3849, %v3851
        %v3853 = vrot.slane %v3604, 1
        %v3854 = vrot.slane %v3605, 1
        %v3855 = vsel %vm1362, %v3853, %v3854
        %v3856 = vrot.slane %v3606, 1
        %v3857 = vsel %vm1362, %v3854, %v3856
        %v3858 = vrot.slane %v3607, 1
        %v3859 = vsel %vm1362, %v3856, %v3858
        %v3860 = vrot.slane %v3608, 1
        %v3861 = vrot.slane %v3609, 1
        %v3862 = vsel %vm1362, %v3860, %v3861
        %v3863 = vrot.slane %v3610, 1
        %v3864 = vsel %vm1362, %v3861, %v3863
        %v3865 = vrot.slane %v3611, 1
        %v3866 = vsel %vm1362, %v3863, %v3865
        %v3867 = vrot.slane %v3612, 1
        %v3868 = vrot.slane %v3613, 1
        %v3869 = vsel %vm1362, %v3867, %v3868
        %v3870 = vrot.slane %v3614, 1
        %v3871 = vsel %vm1362, %v3868, %v3870
        %v3872 = vrot.slane %v3615, 1
        %v3873 = vsel %vm1362, %v3870, %v3872
        %v3874 = vrot.slane %v3616, 1
        %v3875 = vrot.slane %v3617, 1
        %v3876 = vsel %vm1362, %v3874, %v3875
        %v3877 = vrot.slane %v3618, 1
        %v3878 = vsel %vm1362, %v3875, %v3877
        %v3879 = vrot.slane %v3619, 1
        %v3880 = vsel %vm1362, %v3877, %v3879
        %v3881 = vrot.slane %v3620, 1
        %v3882 = vrot.slane %v3621, 1
        %v3883 = vsel %vm1362, %v3881, %v3882
        %v3884 = vrot.slane %v3622, 1
        %v3885 = vsel %vm1362, %v3882, %v3884
        %v3886 = vrot.slane %v3623, 1
        %v3887 = vsel %vm1362, %v3884, %v3886
        %v3960 = vadd.f32 %v3449, %v3722
        %v3961 = vadd.f32 %v3450, %v3724
        %v3962 = vadd.f32 %v3451, %v3726
        %v3963 = vadd.f32 %v3452, %v3729
        %v3964 = vadd.f32 %v3453, %v3731
        %v3965 = vadd.f32 %v3454, %v3733
        %v3966 = vadd.f32 %v3455, %v3736
        %v3967 = vadd.f32 %v3456, %v3738
        %v3968 = vadd.f32 %v3457, %v3740
        %v3969 = vadd.f32 %v3458, %v3743
        %v3970 = vadd.f32 %v3459, %v3745
        %v3971 = vadd.f32 %v3460, %v3747
        %v3972 = vadd.f32 %v3461, %v3750
        %v3973 = vadd.f32 %v3462, %v3752
        %v3974 = vadd.f32 %v3463, %v3754
        %v3975 = vadd.f32 %v3464, %v3757
        %v3976 = vadd.f32 %v3465, %v3759
        %v3977 = vadd.f32 %v3466, %v3761
        %v3978 = vadd.f32 %v3467, %v3764
        %v3979 = vadd.f32 %v3468, %v3766
        %v3980 = vadd.f32 %v3469, %v3768
        %v3981 = vadd.f32 %v3470, %v3771
        %v3982 = vadd.f32 %v3471, %v3773
        %v3983 = vadd.f32 %v3472, %v3775
        %v3984 = vadd.f32 %v3473, %v3778
        %v3985 = vadd.f32 %v3474, %v3780
        %v3986 = vadd.f32 %v3475, %v3782
        %v3987 = vadd.f32 %v3476, %v3785
        %v3988 = vadd.f32 %v3477, %v3787
        %v3989 = vadd.f32 %v3478, %v3789
        %v3990 = vadd.f32 %v3479, %v3792
        %v3991 = vadd.f32 %v3480, %v3794
        %v3992 = vadd.f32 %v3481, %v3796
        %v3993 = vadd.f32 %v3482, %v3799
        %v3994 = vadd.f32 %v3483, %v3801
        %v3995 = vadd.f32 %v3484, %v3803
        %v3996 = vadd.f32 %v3485, %v3806
        %v3997 = vadd.f32 %v3486, %v3808
        %v3998 = vadd.f32 %v3487, %v3810
        %v3999 = vadd.f32 %v3488, %v3813
        %v4000 = vadd.f32 %v3489, %v3815
        %v4001 = vadd.f32 %v3490, %v3817
        %v4002 = vadd.f32 %v3491, %v3820
        %v4003 = vadd.f32 %v3492, %v3822
        %v4004 = vadd.f32 %v3493, %v3824
        %v4005 = vadd.f32 %v3494, %v3827
        %v4006 = vadd.f32 %v3495, %v3829
        %v4007 = vadd.f32 %v3496, %v3831
        %v4008 = vadd.f32 %v3497, %v3834
        %v4009 = vadd.f32 %v3498, %v3836
        %v4010 = vadd.f32 %v3499, %v3838
        %v4011 = vadd.f32 %v3500, %v3841
        %v4012 = vadd.f32 %v3501, %v3843
        %v4013 = vadd.f32 %v3502, %v3845
        %v4014 = vadd.f32 %v3503, %v3848
        %v4015 = vadd.f32 %v3504, %v3850
        %v4016 = vadd.f32 %v3505, %v3852
        %v4017 = vadd.f32 %v3506, %v3855
        %v4018 = vadd.f32 %v3507, %v3857
        %v4019 = vadd.f32 %v3508, %v3859
        %v4020 = vadd.f32 %v3509, %v3862
        %v4021 = vadd.f32 %v3510, %v3864
        %v4022 = vadd.f32 %v3511, %v3866
        %v4023 = vadd.f32 %v3512, %v3869
        %v4024 = vadd.f32 %v3513, %v3871
        %v4025 = vadd.f32 %v3514, %v3873
        %v4026 = vadd.f32 %v3515, %v3876
        %v4027 = vadd.f32 %v3516, %v3878
        %v4028 = vadd.f32 %v3517, %v3880
        %v4029 = vadd.f32 %v3518, %v3883
        %v4030 = vadd.f32 %v3519, %v3885
        %v4031 = vadd.f32 %v3520, %v3887
        %v4032 = vld [vmem:[%s1 + $0x8] sm:$0x1]
        %v4033 = vperm.slane %v4032, 0
        %v4034 = vmul.f32 %v576, %v4033
        %v4035 = vmul.f32 %v581, %v4033
        %v4036 = vmul.f32 %v586, %v4033
        %v4037 = vmul.f32 %v1062, %v4033
        %v4038 = vmul.f32 %v591, %v4033
        %v4039 = vmul.f32 %v596, %v4033
        %v4040 = vmul.f32 %v601, %v4033
        %v4041 = vmul.f32 %v1067, %v4033
        %v4042 = vmul.f32 %v606, %v4033
        %v4043 = vmul.f32 %v611, %v4033
        %v4044 = vmul.f32 %v616, %v4033
        %v4045 = vmul.f32 %v1072, %v4033
        %v4046 = vmul.f32 %v621, %v4033
        %v4047 = vmul.f32 %v626, %v4033
        %v4048 = vmul.f32 %v631, %v4033
        %v4049 = vmul.f32 %v1077, %v4033
        %v4050 = vmul.f32 %v636, %v4033
        %v4051 = vmul.f32 %v641, %v4033
        %v4052 = vmul.f32 %v646, %v4033
        %v4053 = vmul.f32 %v1082, %v4033
        %v4054 = vmul.f32 %v651, %v4033
        %v4055 = vmul.f32 %v656, %v4033
        %v4056 = vmul.f32 %v661, %v4033
        %v4057 = vmul.f32 %v1087, %v4033
        %v4058 = vmul.f32 %v666, %v4033
        %v4059 = vmul.f32 %v671, %v4033
        %v4060 = vmul.f32 %v676, %v4033
        %v4061 = vmul.f32 %v1092, %v4033
        %v4062 = vmul.f32 %v681, %v4033
        %v4063 = vmul.f32 %v686, %v4033
        %v4064 = vmul.f32 %v691, %v4033
        %v4065 = vmul.f32 %v1097, %v4033
        %v4066 = vmul.f32 %v696, %v4033
        %v4067 = vmul.f32 %v701, %v4033
        %v4068 = vmul.f32 %v706, %v4033
        %v4069 = vmul.f32 %v1102, %v4033
        %v4070 = vmul.f32 %v711, %v4033
        %v4071 = vmul.f32 %v716, %v4033
        %v4072 = vmul.f32 %v721, %v4033
        %v4073 = vmul.f32 %v1107, %v4033
        %v4074 = vmul.f32 %v726, %v4033
        %v4075 = vmul.f32 %v731, %v4033
        %v4076 = vmul.f32 %v736, %v4033
        %v4077 = vmul.f32 %v1112, %v4033
        %v4078 = vmul.f32 %v741, %v4033
        %v4079 = vmul.f32 %v746, %v4033
        %v4080 = vmul.f32 %v751, %v4033
        %v4081 = vmul.f32 %v1117, %v4033
        %v4082 = vmul.f32 %v756, %v4033
        %v4083 = vmul.f32 %v761, %v4033
        %v4084 = vmul.f32 %v766, %v4033
        %v4085 = vmul.f32 %v1122, %v4033
        %v4086 = vmul.f32 %v771, %v4033
        %v4087 = vmul.f32 %v776, %v4033
        %v4088 = vmul.f32 %v781, %v4033
        %v4089 = vmul.f32 %v1127, %v4033
        %v4090 = vmul.f32 %v786, %v4033
        %v4091 = vmul.f32 %v791, %v4033
        %v4092 = vmul.f32 %v796, %v4033
        %v4093 = vmul.f32 %v1132, %v4033
        %v4094 = vmul.f32 %v801, %v4033
        %v4095 = vmul.f32 %v806, %v4033
        %v4096 = vmul.f32 %v811, %v4033
        %v4097 = vmul.f32 %v1137, %v4033
        %v4098 = vmul.f32 %v816, %v4033
        %v4099 = vmul.f32 %v821, %v4033
        %v4100 = vmul.f32 %v826, %v4033
        %v4101 = vmul.f32 %v1142, %v4033
        %v4102 = vmul.f32 %v831, %v4033
        %v4103 = vmul.f32 %v836, %v4033
        %v4104 = vmul.f32 %v841, %v4033
        %v4105 = vmul.f32 %v1147, %v4033
        %v4106 = vmul.f32 %v846, %v4033
        %v4107 = vmul.f32 %v851, %v4033
        %v4108 = vmul.f32 %v856, %v4033
        %v4109 = vmul.f32 %v1152, %v4033
        %v4110 = vmul.f32 %v861, %v4033
        %v4111 = vmul.f32 %v866, %v4033
        %v4112 = vmul.f32 %v871, %v4033
        %v4113 = vmul.f32 %v1157, %v4033
        %v4114 = vmul.f32 %v876, %v4033
        %v4115 = vmul.f32 %v881, %v4033
        %v4116 = vmul.f32 %v886, %v4033
        %v4117 = vmul.f32 %v1162, %v4033
        %v4118 = vmul.f32 %v891, %v4033
        %v4119 = vmul.f32 %v896, %v4033
        %v4120 = vmul.f32 %v901, %v4033
        %v4121 = vmul.f32 %v1167, %v4033
        %v4122 = vmul.f32 %v2186, %v4033
        %v4123 = vmul.f32 %v2191, %v4033
        %v4124 = vmul.f32 %v2196, %v4033
        %v4125 = vmul.f32 %v2347, %v4033
        %v4126 = vmul.f32 %v3364, %v4033
        %v4127 = vmul.f32 %v3369, %v4033
        %v4128 = vmul.f32 %v3374, %v4033
        %v4129 = vmul.f32 %v3525, %v4033
        %v4226 = vrot.slane %v4034, 2
        %v4227 = vrot.slane %v4035, 2
        %v4228 = vsel %vm1869, %v4226, %v4227
        %v4229 = vrot.slane %v4036, 2
        %v4230 = vsel %vm1869, %v4227, %v4229
        %v4231 = vrot.slane %v4037, 2
        %v4232 = vsel %vm1869, %v4229, %v4231
        %v4233 = vrot.slane %v4038, 2
        %v4234 = vrot.slane %v4039, 2
        %v4235 = vsel %vm1869, %v4233, %v4234
        %v4236 = vrot.slane %v4040, 2
        %v4237 = vsel %vm1869, %v4234, %v4236
        %v4238 = vrot.slane %v4041, 2
        %v4239 = vsel %vm1869, %v4236, %v4238
        %v4240 = vrot.slane %v4042, 2
        %v4241 = vrot.slane %v4043, 2
        %v4242 = vsel %vm1869, %v4240, %v4241
        %v4243 = vrot.slane %v4044, 2
        %v4244 = vsel %vm1869, %v4241, %v4243
        %v4245 = vrot.slane %v4045, 2
        %v4246 = vsel %vm1869, %v4243, %v4245
        %v4247 = vrot.slane %v4046, 2
        %v4248 = vrot.slane %v4047, 2
        %v4249 = vsel %vm1869, %v4247, %v4248
        %v4250 = vrot.slane %v4048, 2
        %v4251 = vsel %vm1869, %v4248, %v4250
        %v4252 = vrot.slane %v4049, 2
        %v4253 = vsel %vm1869, %v4250, %v4252
        %v4254 = vrot.slane %v4050, 2
        %v4255 = vrot.slane %v4051, 2
        %v4256 = vsel %vm1869, %v4254, %v4255
        %v4257 = vrot.slane %v4052, 2
        %v4258 = vsel %vm1869, %v4255, %v4257
        %v4259 = vrot.slane %v4053, 2
        %v4260 = vsel %vm1869, %v4257, %v4259
        %v4261 = vrot.slane %v4054, 2
        %v4262 = vrot.slane %v4055, 2
        %v4263 = vsel %vm1869, %v4261, %v4262
        %v4264 = vrot.slane %v4056, 2
        %v4265 = vsel %vm1869, %v4262, %v4264
        %v4266 = vrot.slane %v4057, 2
        %v4267 = vsel %vm1869, %v4264, %v4266
        %v4268 = vrot.slane %v4058, 2
        %v4269 = vrot.slane %v4059, 2
        %v4270 = vsel %vm1869, %v4268, %v4269
        %v4271 = vrot.slane %v4060, 2
        %v4272 = vsel %vm1869, %v4269, %v4271
        %v4273 = vrot.slane %v4061, 2
        %v4274 = vsel %vm1869, %v4271, %v4273
        %v4275 = vrot.slane %v4062, 2
        %v4276 = vrot.slane %v4063, 2
        %v4277 = vsel %vm1869, %v4275, %v4276
        %v4278 = vrot.slane %v4064, 2
        %v4279 = vsel %vm1869, %v4276, %v4278
        %v4280 = vrot.slane %v4065, 2
        %v4281 = vsel %vm1869, %v4278, %v4280
        %v4282 = vrot.slane %v4066, 2
        %v4283 = vrot.slane %v4067, 2
        %v4284 = vsel %vm1869, %v4282, %v4283
        %v4285 = vrot.slane %v4068, 2
        %v4286 = vsel %vm1869, %v4283, %v4285
        %v4287 = vrot.slane %v4069, 2
        %v4288 = vsel %vm1869, %v4285, %v4287
        %v4289 = vrot.slane %v4070, 2
        %v4290 = vrot.slane %v4071, 2
        %v4291 = vsel %vm1869, %v4289, %v4290
        %v4292 = vrot.slane %v4072, 2
        %v4293 = vsel %vm1869, %v4290, %v4292
        %v4294 = vrot.slane %v4073, 2
        %v4295 = vsel %vm1869, %v4292, %v4294
        %v4296 = vrot.slane %v4074, 2
        %v4297 = vrot.slane %v4075, 2
        %v4298 = vsel %vm1869, %v4296, %v4297
        %v4299 = vrot.slane %v4076, 2
        %v4300 = vsel %vm1869, %v4297, %v4299
        %v4301 = vrot.slane %v4077, 2
        %v4302 = vsel %vm1869, %v4299, %v4301
        %v4303 = vrot.slane %v4078, 2
        %v4304 = vrot.slane %v4079, 2
        %v4305 = vsel %vm1869, %v4303, %v4304
        %v4306 = vrot.slane %v4080, 2
        %v4307 = vsel %vm1869, %v4304, %v4306
        %v4308 = vrot.slane %v4081, 2
        %v4309 = vsel %vm1869, %v4306, %v4308
        %v4310 = vrot.slane %v4082, 2
        %v4311 = vrot.slane %v4083, 2
        %v4312 = vsel %vm1869, %v4310, %v4311
        %v4313 = vrot.slane %v4084, 2
        %v4314 = vsel %vm1869, %v4311, %v4313
        %v4315 = vrot.slane %v4085, 2
        %v4316 = vsel %vm1869, %v4313, %v4315
        %v4317 = vrot.slane %v4086, 2
        %v4318 = vrot.slane %v4087, 2
        %v4319 = vsel %vm1869, %v4317, %v4318
        %v4320 = vrot.slane %v4088, 2
        %v4321 = vsel %vm1869, %v4318, %v4320
        %v4322 = vrot.slane %v4089, 2
        %v4323 = vsel %vm1869, %v4320, %v4322
        %v4324 = vrot.slane %v4090, 2
        %v4325 = vrot.slane %v4091, 2
        %v4326 = vsel %vm1869, %v4324, %v4325
        %v4327 = vrot.slane %v4092, 2
        %v4328 = vsel %vm1869, %v4325, %v4327
        %v4329 = vrot.slane %v4093, 2
        %v4330 = vsel %vm1869, %v4327, %v4329
        %v4331 = vrot.slane %v4094, 2
        %v4332 = vrot.slane %v4095, 2
        %v4333 = vsel %vm1869, %v4331, %v4332
        %v4334 = vrot.slane %v4096, 2
        %v4335 = vsel %vm1869, %v4332, %v4334
        %v4336 = vrot.slane %v4097, 2
        %v4337 = vsel %vm1869, %v4334, %v4336
        %v4338 = vrot.slane %v4098, 2
        %v4339 = vrot.slane %v4099, 2
        %v4340 = vsel %vm1869, %v4338, %v4339
        %v4341 = vrot.slane %v4100, 2
        %v4342 = vsel %vm1869, %v4339, %v4341
        %v4343 = vrot.slane %v4101, 2
        %v4344 = vsel %vm1869, %v4341, %v4343
        %v4345 = vrot.slane %v4102, 2
        %v4346 = vrot.slane %v4103, 2
        %v4347 = vsel %vm1869, %v4345, %v4346
        %v4348 = vrot.slane %v4104, 2
        %v4349 = vsel %vm1869, %v4346, %v4348
        %v4350 = vrot.slane %v4105, 2
        %v4351 = vsel %vm1869, %v4348, %v4350
        %v4352 = vrot.slane %v4106, 2
        %v4353 = vrot.slane %v4107, 2
        %v4354 = vsel %vm1869, %v4352, %v4353
        %v4355 = vrot.slane %v4108, 2
        %v4356 = vsel %vm1869, %v4353, %v4355
        %v4357 = vrot.slane %v4109, 2
        %v4358 = vsel %vm1869, %v4355, %v4357
        %v4359 = vrot.slane %v4110, 2
        %v4360 = vrot.slane %v4111, 2
        %v4361 = vsel %vm1869, %v4359, %v4360
        %v4362 = vrot.slane %v4112, 2
        %v4363 = vsel %vm1869, %v4360, %v4362
        %v4364 = vrot.slane %v4113, 2
        %v4365 = vsel %vm1869, %v4362, %v4364
        %v4366 = vrot.slane %v4114, 2
        %v4367 = vrot.slane %v4115, 2
        %v4368 = vsel %vm1869, %v4366, %v4367
        %v4369 = vrot.slane %v4116, 2
        %v4370 = vsel %vm1869, %v4367, %v4369
        %v4371 = vrot.slane %v4117, 2
        %v4372 = vsel %vm1869, %v4369, %v4371
        %v4373 = vrot.slane %v4118, 2
        %v4374 = vrot.slane %v4119, 2
        %v4375 = vsel %vm1869, %v4373, %v4374
        %v4376 = vrot.slane %v4120, 2
        %v4377 = vsel %vm1869, %v4374, %v4376
        %v4378 = vrot.slane %v4121, 2
        %v4379 = vsel %vm1869, %v4376, %v4378
        %v4380 = vrot.slane %v4122, 2
        %v4381 = vrot.slane %v4123, 2
        %v4382 = vsel %vm1869, %v4380, %v4381
        %v4383 = vrot.slane %v4124, 2
        %v4384 = vsel %vm1869, %v4381, %v4383
        %v4385 = vrot.slane %v4125, 2
        %v4386 = vsel %vm1869, %v4383, %v4385
        %v4387 = vrot.slane %v4126, 2
        %v4388 = vrot.slane %v4127, 2
        %v4389 = vsel %vm1869, %v4387, %v4388
        %v4390 = vrot.slane %v4128, 2
        %v4391 = vsel %vm1869, %v4388, %v4390
        %v4392 = vrot.slane %v4129, 2
        %v4393 = vsel %vm1869, %v4390, %v4392
        %v4466 = vadd.f32 %v3960, %v4228
        %v4467 = vadd.f32 %v3961, %v4230
        %v4468 = vadd.f32 %v3962, %v4232
        %v4469 = vadd.f32 %v3963, %v4235
        %v4470 = vadd.f32 %v3964, %v4237
        %v4471 = vadd.f32 %v3965, %v4239
        %v4472 = vadd.f32 %v3966, %v4242
        %v4473 = vadd.f32 %v3967, %v4244
        %v4474 = vadd.f32 %v3968, %v4246
        %v4475 = vadd.f32 %v3969, %v4249
        %v4476 = vadd.f32 %v3970, %v4251
        %v4477 = vadd.f32 %v3971, %v4253
        %v4478 = vadd.f32 %v3972, %v4256
        %v4479 = vadd.f32 %v3973, %v4258
        %v4480 = vadd.f32 %v3974, %v4260
        %v4481 = vadd.f32 %v3975, %v4263
        %v4482 = vadd.f32 %v3976, %v4265
        %v4483 = vadd.f32 %v3977, %v4267
        %v4484 = vadd.f32 %v3978, %v4270
        %v4485 = vadd.f32 %v3979, %v4272
        %v4486 = vadd.f32 %v3980, %v4274
        %v4487 = vadd.f32 %v3981, %v4277
        %v4488 = vadd.f32 %v3982, %v4279
        %v4489 = vadd.f32 %v3983, %v4281
        %v4490 = vadd.f32 %v3984, %v4284
        %v4491 = vadd.f32 %v3985, %v4286
        %v4492 = vadd.f32 %v3986, %v4288
        %v4493 = vadd.f32 %v3987, %v4291
        %v4494 = vadd.f32 %v3988, %v4293
        %v4495 = vadd.f32 %v3989, %v4295
        %v4496 = vadd.f32 %v3990, %v4298
        %v4497 = vadd.f32 %v3991, %v4300
        %v4498 = vadd.f32 %v3992, %v4302
        %v4499 = vadd.f32 %v3993, %v4305
        %v4500 = vadd.f32 %v3994, %v4307
        %v4501 = vadd.f32 %v3995, %v4309
        %v4502 = vadd.f32 %v3996, %v4312
        %v4503 = vadd.f32 %v3997, %v4314
        %v4504 = vadd.f32 %v3998, %v4316
        %v4505 = vadd.f32 %v3999, %v4319
        %v4506 = vadd.f32 %v4000, %v4321
        %v4507 = vadd.f32 %v4001, %v4323
        %v4508 = vadd.f32 %v4002, %v4326
        %v4509 = vadd.f32 %v4003, %v4328
        %v4510 = vadd.f32 %v4004, %v4330
        %v4511 = vadd.f32 %v4005, %v4333
        %v4512 = vadd.f32 %v4006, %v4335
        %v4513 = vadd.f32 %v4007, %v4337
        %v4514 = vadd.f32 %v4008, %v4340
        %v4515 = vadd.f32 %v4009, %v4342
        %v4516 = vadd.f32 %v4010, %v4344
        %v4517 = vadd.f32 %v4011, %v4347
        %v4518 = vadd.f32 %v4012, %v4349
        %v4519 = vadd.f32 %v4013, %v4351
        %v4520 = vadd.f32 %v4014, %v4354
        %v4521 = vadd.f32 %v4015, %v4356
        %v4522 = vadd.f32 %v4016, %v4358
        %v4523 = vadd.f32 %v4017, %v4361
        %v4524 = vadd.f32 %v4018, %v4363
        %v4525 = vadd.f32 %v4019, %v4365
        %v4526 = vadd.f32 %v4020, %v4368
        %v4527 = vadd.f32 %v4021, %v4370
        %v4528 = vadd.f32 %v4022, %v4372
        %v4529 = vadd.f32 %v4023, %v4375
        %v4530 = vadd.f32 %v4024, %v4377
        %v4531 = vadd.f32 %v4025, %v4379
        %v4532 = vadd.f32 %v4026, %v4382
        %v4533 = vadd.f32 %v4027, %v4384
        %v4534 = vadd.f32 %v4028, %v4386
        %v4535 = vadd.f32 %v4029, %v4389
        %v4536 = vadd.f32 %v4030, %v4391
        %v4537 = vadd.f32 %v4031, %v4393
        %v4538 = vld [vmem:[%s2] sm:$0x1]
        %v4540 = vperm.slane %v4538, 0
        %v4542 = vadd.f32 %v4466, %v4540
        %v4543 = vadd.f32 %v4467, %v4540
        %v4544 = vadd.f32 %v4468, %v4540
        %v4545 = vadd.f32 %v4469, %v4540
        %v4546 = vadd.f32 %v4470, %v4540
        %v4547 = vadd.f32 %v4471, %v4540
        %v4548 = vadd.f32 %v4472, %v4540
        %v4549 = vadd.f32 %v4473, %v4540
        %v4550 = vadd.f32 %v4474, %v4540
        %v4551 = vadd.f32 %v4475, %v4540
        %v4552 = vadd.f32 %v4476, %v4540
        %v4553 = vadd.f32 %v4477, %v4540
        %v4554 = vadd.f32 %v4478, %v4540
        %v4555 = vadd.f32 %v4479, %v4540
        %v4556 = vadd.f32 %v4480, %v4540
        %v4557 = vadd.f32 %v4481, %v4540
        %v4558 = vadd.f32 %v4482, %v4540
        %v4559 = vadd.f32 %v4483, %v4540
        %v4560 = vadd.f32 %v4484, %v4540
        %v4561 = vadd.f32 %v4485, %v4540
        %v4562 = vadd.f32 %v4486, %v4540
        %v4563 = vadd.f32 %v4487, %v4540
        %v4564 = vadd.f32 %v4488, %v4540
        %v4565 = vadd.f32 %v4489, %v4540
        %v4566 = vadd.f32 %v4490, %v4540
        %v4567 = vadd.f32 %v4491, %v4540
        %v4568 = vadd.f32 %v4492, %v4540
        %v4569 = vadd.f32 %v4493, %v4540
        %v4570 = vadd.f32 %v4494, %v4540
        %v4571 = vadd.f32 %v4495, %v4540
        %v4572 = vadd.f32 %v4496, %v4540
        %v4573 = vadd.f32 %v4497, %v4540
        %v4574 = vadd.f32 %v4498, %v4540
        %v4575 = vadd.f32 %v4499, %v4540
        %v4576 = vadd.f32 %v4500, %v4540
        %v4577 = vadd.f32 %v4501, %v4540
        %v4578 = vadd.f32 %v4502, %v4540
        %v4579 = vadd.f32 %v4503, %v4540
        %v4580 = vadd.f32 %v4504, %v4540
        %v4581 = vadd.f32 %v4505, %v4540
        %v4582 = vadd.f32 %v4506, %v4540
        %v4583 = vadd.f32 %v4507, %v4540
        %v4584 = vadd.f32 %v4508, %v4540
        %v4585 = vadd.f32 %v4509, %v4540
        %v4586 = vadd.f32 %v4510, %v4540
        %v4587 = vadd.f32 %v4511, %v4540
        %v4588 = vadd.f32 %v4512, %v4540
        %v4589 = vadd.f32 %v4513, %v4540
        %v4590 = vadd.f32 %v4514, %v4540
        %v4591 = vadd.f32 %v4515, %v4540
        %v4592 = vadd.f32 %v4516, %v4540
        %v4593 = vadd.f32 %v4517, %v4540
        %v4594 = vadd.f32 %v4518, %v4540
        %v4595 = vadd.f32 %v4519, %v4540
        %v4596 = vadd.f32 %v4520, %v4540
        %v4597 = vadd.f32 %v4521, %v4540
        %v4598 = vadd.f32 %v4522, %v4540
        %v4599 = vadd.f32 %v4523, %v4540
        %v4600 = vadd.f32 %v4524, %v4540
        %v4601 = vadd.f32 %v4525, %v4540
        %v4602 = vadd.f32 %v4526, %v4540
        %v4603 = vadd.f32 %v4527, %v4540
        %v4604 = vadd.f32 %v4528, %v4540
        %v4605 = vadd.f32 %v4529, %v4540
        %v4606 = vadd.f32 %v4530, %v4540
        %v4607 = vadd.f32 %v4531, %v4540
        %v4608 = vadd.f32 %v4532, %v4540
        %v4609 = vadd.f32 %v4533, %v4540
        %v4610 = vadd.f32 %v4534, %v4540
        %v4611 = vadd.f32 %v4535, %v4540
        %v4612 = vadd.f32 %v4536, %v4540
        %v4613 = vadd.f32 %v4537, %v4540
        %v4614 = vmax.f32 %v4542, 0.0
        %v4615 = vmax.f32 %v4543, 0.0
        %v4616 = vmax.f32 %v4544, 0.0
        %v4617 = vmax.f32 %v4545, 0.0
        %v4618 = vmax.f32 %v4546, 0.0
        %v4619 = vmax.f32 %v4547, 0.0
        %v4620 = vmax.f32 %v4548, 0.0
        %v4621 = vmax.f32 %v4549, 0.0
        %v4622 = vmax.f32 %v4550, 0.0
        %v4623 = vmax.f32 %v4551, 0.0
        %v4624 = vmax.f32 %v4552, 0.0
        %v4625 = vmax.f32 %v4553, 0.0
        %v4626 = vmax.f32 %v4554, 0.0
        %v4627 = vmax.f32 %v4555, 0.0
        %v4628 = vmax.f32 %v4556, 0.0
        %v4629 = vmax.f32 %v4557, 0.0
        %v4630 = vmax.f32 %v4558, 0.0
        %v4631 = vmax.f32 %v4559, 0.0
        %v4632 = vmax.f32 %v4560, 0.0
        %v4633 = vmax.f32 %v4561, 0.0
        %v4634 = vmax.f32 %v4562, 0.0
        %v4635 = vmax.f32 %v4563, 0.0
        %v4636 = vmax.f32 %v4564, 0.0
        %v4637 = vmax.f32 %v4565, 0.0
        %v4638 = vmax.f32 %v4566, 0.0
        %v4639 = vmax.f32 %v4567, 0.0
        %v4640 = vmax.f32 %v4568, 0.0
        %v4641 = vmax.f32 %v4569, 0.0
        %v4642 = vmax.f32 %v4570, 0.0
        %v4643 = vmax.f32 %v4571, 0.0
        %v4644 = vmax.f32 %v4572, 0.0
        %v4645 = vmax.f32 %v4573, 0.0
        %v4646 = vmax.f32 %v4574, 0.0
        %v4647 = vmax.f32 %v4575, 0.0
        %v4648 = vmax.f32 %v4576, 0.0
        %v4649 = vmax.f32 %v4577, 0.0
        %v4650 = vmax.f32 %v4578, 0.0
        %v4651 = vmax.f32 %v4579, 0.0
        %v4652 = vmax.f32 %v4580, 0.0
        %v4653 = vmax.f32 %v4581, 0.0
        %v4654 = vmax.f32 %v4582, 0.0
        %v4655 = vmax.f32 %v4583, 0.0
        %v4656 = vmax.f32 %v4584, 0.0
        %v4657 = vmax.f32 %v4585, 0.0
        %v4658 = vmax.f32 %v4586, 0.0
        %v4659 = vmax.f32 %v4587, 0.0
        %v4660 = vmax.f32 %v4588, 0.0
        %v4661 = vmax.f32 %v4589, 0.0
        %v4662 = vmax.f32 %v4590, 0.0
        %v4663 = vmax.f32 %v4591, 0.0
        %v4664 = vmax.f32 %v4592, 0.0
        %v4665 = vmax.f32 %v4593, 0.0
        %v4666 = vmax.f32 %v4594, 0.0
        %v4667 = vmax.f32 %v4595, 0.0
        %v4668 = vmax.f32 %v4596, 0.0
        %v4669 = vmax.f32 %v4597, 0.0
        %v4670 = vmax.f32 %v4598, 0.0
        %v4671 = vmax.f32 %v4599, 0.0
        %v4672 = vmax.f32 %v4600, 0.0
        %v4673 = vmax.f32 %v4601, 0.0
        %v4674 = vmax.f32 %v4602, 0.0
        %v4675 = vmax.f32 %v4603, 0.0
        %v4676 = vmax.f32 %v4604, 0.0
        %v4677 = vmax.f32 %v4605, 0.0
        %v4678 = vmax.f32 %v4606, 0.0
        %v4679 = vmax.f32 %v4607, 0.0
        %v4680 = vmax.f32 %v4608, 0.0
        %v4681 = vmax.f32 %v4609, 0.0
        %v4682 = vmax.f32 %v4610, 0.0
        %v4683 = vmax.f32 %v4611, 0.0
        %v4684 = vmax.f32 %v4612, 0.0
        %v4685 = vmax.f32 %v4613, 0.0
        %v4686 = vmax.f32 %v4614, %v4617
        %v4687 = vmax.f32 %v4615, %v4618
        %v4688 = vmax.f32 %v4616, %v4619
        %v4689 = vmax.f32 %v4620, %v4623
        %v4690 = vmax.f32 %v4621, %v4624
        %v4691 = vmax.f32 %v4622, %v4625
        %v4692 = vmax.f32 %v4626, %v4629
        %v4693 = vmax.f32 %v4627, %v4630
        %v4694 = vmax.f32 %v4628, %v4631
        %v4695 = vmax.f32 %v4632, %v4635
        %v4696 = vmax.f32 %v4633, %v4636
        %v4697 = vmax.f32 %v4634, %v4637
        %v4698 = vmax.f32 %v4638, %v4641
        %v4699 = vmax.f32 %v4639, %v4642
        %v4700 = vmax.f32 %v4640, %v4643
        %v4701 = vmax.f32 %v4644, %v4647
        %v4702 = vmax.f32 %v4645, %v4648
        %v4703 = vmax.f32 %v4646, %v4649
        %v4704 = vmax.f32 %v4650, %v4653
        %v4705 = vmax.f32 %v4651, %v4654
        %v4706 = vmax.f32 %v4652, %v4655
        %v4707 = vmax.f32 %v4656, %v4659
        %v4708 = vmax.f32 %v4657, %v4660
        %v4709 = vmax.f32 %v4658, %v4661
        %v4710 = vmax.f32 %v4662, %v4665
        %v4711 = vmax.f32 %v4663, %v4666
        %v4712 = vmax.f32 %v4664, %v4667
        %v4713 = vmax.f32 %v4668, %v4671
        %v4714 = vmax.f32 %v4669, %v4672
        %v4715 = vmax.f32 %v4670, %v4673
        %v4716 = vmax.f32 %v4674, %v4677
        %v4717 = vmax.f32 %v4675, %v4678
        %v4718 = vmax.f32 %v4676, %v4679
        %v4719 = vmax.f32 %v4680, %v4683
        %v4720 = vmax.f32 %v4681, %v4684
        %v4721 = vmax.f32 %v4682, %v4685
        %v4758 = vrot.slane %v4686, 1
        %v4759 = vrot.slane %v4687, 1
        %v4760 = vsel %vm1362, %v4758, %v4759
        %v4761 = vrot.slane %v4688, 1
        %v4762 = vsel %vm1362, %v4759, %v4761
        %v4763 = vrot.slane %v4689, 1
        %v4764 = vrot.slane %v4690, 1
        %v4765 = vsel %vm1362, %v4763, %v4764
        %v4766 = vrot.slane %v4691, 1
        %v4767 = vsel %vm1362, %v4764, %v4766
        %v4768 = vrot.slane %v4692, 1
        %v4769 = vrot.slane %v4693, 1
        %v4770 = vsel %vm1362, %v4768, %v4769
        %v4771 = vrot.slane %v4694, 1
        %v4772 = vsel %vm1362, %v4769, %v4771
        %v4773 = vrot.slane %v4695, 1
        %v4774 = vrot.slane %v4696, 1
        %v4775 = vsel %vm1362, %v4773, %v4774
        %v4776 = vrot.slane %v4697, 1
        %v4777 = vsel %vm1362, %v4774, %v4776
        %v4778 = vrot.slane %v4698, 1
        %v4779 = vrot.slane %v4699, 1
        %v4780 = vsel %vm1362, %v4778, %v4779
        %v4781 = vrot.slane %v4700, 1
        %v4782 = vsel %vm1362, %v4779, %v4781
        %v4783 = vrot.slane %v4701, 1
        %v4784 = vrot.slane %v4702, 1
        %v4785 = vsel %vm1362, %v4783, %v4784
        %v4786 = vrot.slane %v4703, 1
        %v4787 = vsel %vm1362, %v4784, %v4786
        %v4788 = vrot.slane %v4704, 1
        %v4789 = vrot.slane %v4705, 1
        %v4790 = vsel %vm1362, %v4788, %v4789
        %v4791 = vrot.slane %v4706, 1
        %v4792 = vsel %vm1362, %v4789, %v4791
        %v4793 = vrot.slane %v4707, 1
        %v4794 = vrot.slane %v4708, 1
        %v4795 = vsel %vm1362, %v4793, %v4794
        %v4796 = vrot.slane %v4709, 1
        %v4797 = vsel %vm1362, %v4794, %v4796
        %v4798 = vrot.slane %v4710, 1
        %v4799 = vrot.slane %v4711, 1
        %v4800 = vsel %vm1362, %v4798, %v4799
        %v4801 = vrot.slane %v4712, 1
        %v4802 = vsel %vm1362, %v4799, %v4801
        %v4803 = vrot.slane %v4713, 1
        %v4804 = vrot.slane %v4714, 1
        %v4805 = vsel %vm1362, %v4803, %v4804
        %v4806 = vrot.slane %v4715, 1
        %v4807 = vsel %vm1362, %v4804, %v4806
        %v4808 = vrot.slane %v4716, 1
        %v4809 = vrot.slane %v4717, 1
        %v4810 = vsel %vm1362, %v4808, %v4809
        %v4811 = vrot.slane %v4718, 1
        %v4812 = vsel %vm1362, %v4809, %v4811
        %v4813 = vrot.slane %v4719, 1
        %v4814 = vrot.slane %v4720, 1
        %v4815 = vsel %vm1362, %v4813, %v4814
        %v4816 = vrot.slane %v4721, 1
        %v4817 = vsel %vm1362, %v4814, %v4816
        %v4854 = vmax.f32 %v4686, %v4760
        %v4855 = vmax.f32 %v4687, %v4762
        %v4856 = vmax.f32 %v4688, %v4761
        %v4857 = vmax.f32 %v4689, %v4765
        %v4858 = vmax.f32 %v4690, %v4767
        %v4859 = vmax.f32 %v4691, %v4766
        %v4860 = vmax.f32 %v4692, %v4770
        %v4861 = vmax.f32 %v4693, %v4772
        %v4862 = vmax.f32 %v4694, %v4771
        %v4863 = vmax.f32 %v4695, %v4775
        %v4864 = vmax.f32 %v4696, %v4777
        %v4865 = vmax.f32 %v4697, %v4776
        %v4866 = vmax.f32 %v4698, %v4780
        %v4867 = vmax.f32 %v4699, %v4782
        %v4868 = vmax.f32 %v4700, %v4781
        %v4869 = vmax.f32 %v4701, %v4785
        %v4870 = vmax.f32 %v4702, %v4787
        %v4871 = vmax.f32 %v4703, %v4786
        %v4872 = vmax.f32 %v4704, %v4790
        %v4873 = vmax.f32 %v4705, %v4792
        %v4874 = vmax.f32 %v4706, %v4791
        %v4875 = vmax.f32 %v4707, %v4795
        %v4876 = vmax.f32 %v4708, %v4797
        %v4877 = vmax.f32 %v4709, %v4796
        %v4878 = vmax.f32 %v4710, %v4800
        %v4879 = vmax.f32 %v4711, %v4802
        %v4880 = vmax.f32 %v4712, %v4801
        %v4881 = vmax.f32 %v4713, %v4805
        %v4882 = vmax.f32 %v4714, %v4807
        %v4883 = vmax.f32 %v4715, %v4806
        %v4884 = vmax.f32 %v4716, %v4810
        %v4885 = vmax.f32 %v4717, %v4812
        %v4886 = vmax.f32 %v4718, %v4811
        %v4887 = vmax.f32 %v4719, %v4815
        %v4888 = vmax.f32 %v4720, %v4817
        %v4889 = vmax.f32 %v4721, %v4816
        %v4890 = vld [vmem:[%s5] sm:$0xff]
        %v4891 = vld [vmem:[%s5 + $0x8] sm:$0xf]
        %vm4892 = vcmask 187392
        %v4894 = vsel %vm4892, %v4890, 0
        %v4897 = vsel %vm4892, %v4891, 0
        %v4900 = vsel %vm1362, %v4856, 0
        %4902 = vmatpush.msra.mxu0 0.0
        %4903 = vmatpush.msra.mxu0 0.0
        %4904 = vmatpush.msra.mxu0 0.0
        %4905 = vmatpush.msra.mxu0 0.0
        %4906 = vmatpush.msra.mxu0 0.0
        %4907 = vmatpush.msra.mxu0 0.0
        %4908 = vmatpush.msra.mxu0 0.0
        %4909 = vmatpush.msra.mxu0 0.0
        %4910 = vmatpush.msra.mxu0 0.0
        %4911 = vmatpush.msra.mxu0 0.0
        %4912 = vmatpush.msra.mxu0 0.0
        %4913 = vmatpush.msra.mxu0 0.0
        %4914 = vmatpush.msra.mxu0 0.0
        %4915 = vmatpush.msra.mxu0 %v4900
        %4916 = vmatpush.msra.mxu0 %v4855
        %4917 = vmatpush.msra.mxu0 %v4854
        %4918 = vmatmul.f32.gmra.mxu0 %v4894
        %v4919 = vpop.f32.mrf.mxu0
        %v4920 = vadd.f32 0.0, %v4919
        %4921 = vmatmul.f32.gmra.mxu0 %v4897
        %v4922 = vpop.f32.mrf.mxu0
        %v4923 = vadd.f32 0.0, %v4922
        %4924 = vdwg.mxu0
        %v4926 = vsel %vm1362, %v4859, 0
        %4928 = vmatpush.msra.mxu0 0.0
        %4929 = vmatpush.msra.mxu0 0.0
        %4930 = vmatpush.msra.mxu0 0.0
        %4931 = vmatpush.msra.mxu0 0.0
        %4932 = vmatpush.msra.mxu0 0.0
        %4933 = vmatpush.msra.mxu0 0.0
        %4934 = vmatpush.msra.mxu0 0.0
        %4935 = vmatpush.msra.mxu0 0.0
        %4936 = vmatpush.msra.mxu0 0.0
        %4937 = vmatpush.msra.mxu0 0.0
        %4938 = vmatpush.msra.mxu0 0.0
        %4939 = vmatpush.msra.mxu0 0.0
        %4940 = vmatpush.msra.mxu0 0.0
        %4941 = vmatpush.msra.mxu0 %v4926
        %4942 = vmatpush.msra.mxu0 %v4858
        %4943 = vmatpush.msra.mxu0 %v4857
        %4944 = vmatmul.f32.gmra.mxu0 %v4894
        %v4945 = vpop.f32.mrf.mxu0
        %v4946 = vadd.f32 0.0, %v4945
        %4947 = vmatmul.f32.gmra.mxu0 %v4897
        %v4948 = vpop.f32.mrf.mxu0
        %v4949 = vadd.f32 0.0, %v4948
        %4950 = vdwg.mxu0
        %v4952 = vsel %vm1362, %v4862, 0
        %4954 = vmatpush.msra.mxu0 0.0
        %4955 = vmatpush.msra.mxu0 0.0
        %4956 = vmatpush.msra.mxu0 0.0
        %4957 = vmatpush.msra.mxu0 0.0
        %4958 = vmatpush.msra.mxu0 0.0
        %4959 = vmatpush.msra.mxu0 0.0
        %4960 = vmatpush.msra.mxu0 0.0
        %4961 = vmatpush.msra.mxu0 0.0
        %4962 = vmatpush.msra.mxu0 0.0
        %4963 = vmatpush.msra.mxu0 0.0
        %4964 = vmatpush.msra.mxu0 0.0
        %4965 = vmatpush.msra.mxu0 0.0
        %4966 = vmatpush.msra.mxu0 0.0
        %4967 = vmatpush.msra.mxu0 %v4952
        %4968 = vmatpush.msra.mxu0 %v4861
        %4969 = vmatpush.msra.mxu0 %v4860
        %4970 = vmatmul.f32.gmra.mxu0 %v4894
        %v4971 = vpop.f32.mrf.mxu0
        %v4972 = vadd.f32 0.0, %v4971
        %4973 = vmatmul.f32.gmra.mxu0 %v4897
        %v4974 = vpop.f32.mrf.mxu0
        %v4975 = vadd.f32 0.0, %v4974
        %4976 = vdwg.mxu0
        %v4978 = vsel %vm1362, %v4865, 0
        %4980 = vmatpush.msra.mxu0 0.0
        %4981 = vmatpush.msra.mxu0 0.0
        %4982 = vmatpush.msra.mxu0 0.0
        %4983 = vmatpush.msra.mxu0 0.0
        %4984 = vmatpush.msra.mxu0 0.0
        %4985 = vmatpush.msra.mxu0 0.0
        %4986 = vmatpush.msra.mxu0 0.0
        %4987 = vmatpush.msra.mxu0 0.0
        %4988 = vmatpush.msra.mxu0 0.0
        %4989 = vmatpush.msra.mxu0 0.0
        %4990 = vmatpush.msra.mxu0 0.0
        %4991 = vmatpush.msra.mxu0 0.0
        %4992 = vmatpush.msra.mxu0 0.0
        %4993 = vmatpush.msra.mxu0 %v4978
        %4994 = vmatpush.msra.mxu0 %v4864
        %4995 = vmatpush.msra.mxu0 %v4863
        %4996 = vmatmul.f32.gmra.mxu0 %v4894
        %v4997 = vpop.f32.mrf.mxu0
        %v4998 = vadd.f32 0.0, %v4997
        %4999 = vmatmul.f32.gmra.mxu0 %v4897
        %v5000 = vpop.f32.mrf.mxu0
        %v5001 = vadd.f32 0.0, %v5000
        %5002 = vdwg.mxu0
        %v5004 = vsel %vm1362, %v4868, 0
        %5006 = vmatpush.msra.mxu0 0.0
        %5007 = vmatpush.msra.mxu0 0.0
        %5008 = vmatpush.msra.mxu0 0.0
        %5009 = vmatpush.msra.mxu0 0.0
        %5010 = vmatpush.msra.mxu0 0.0
        %5011 = vmatpush.msra.mxu0 0.0
        %5012 = vmatpush.msra.mxu0 0.0
        %5013 = vmatpush.msra.mxu0 0.0
        %5014 = vmatpush.msra.mxu0 0.0
        %5015 = vmatpush.msra.mxu0 0.0
        %5016 = vmatpush.msra.mxu0 0.0
        %5017 = vmatpush.msra.mxu0 0.0
        %5018 = vmatpush.msra.mxu0 0.0
        %5019 = vmatpush.msra.mxu0 %v5004
        %5020 = vmatpush.msra.mxu0 %v4867
        %5021 = vmatpush.msra.mxu0 %v4866
        %5022 = vmatmul.f32.gmra.mxu0 %v4894
        %v5023 = vpop.f32.mrf.mxu0
        %v5024 = vadd.f32 0.0, %v5023
        %5025 = vmatmul.f32.gmra.mxu0 %v4897
        %v5026 = vpop.f32.mrf.mxu0
        %v5027 = vadd.f32 0.0, %v5026
        %5028 = vdwg.mxu0
        %v5030 = vsel %vm1362, %v4871, 0
        %5032 = vmatpush.msra.mxu0 0.0
        %5033 = vmatpush.msra.mxu0 0.0
        %5034 = vmatpush.msra.mxu0 0.0
        %5035 = vmatpush.msra.mxu0 0.0
        %5036 = vmatpush.msra.mxu0 0.0
        %5037 = vmatpush.msra.mxu0 0.0
        %5038 = vmatpush.msra.mxu0 0.0
        %5039 = vmatpush.msra.mxu0 0.0
        %5040 = vmatpush.msra.mxu0 0.0
        %5041 = vmatpush.msra.mxu0 0.0
        %5042 = vmatpush.msra.mxu0 0.0
        %5043 = vmatpush.msra.mxu0 0.0
        %5044 = vmatpush.msra.mxu0 0.0
        %5045 = vmatpush.msra.mxu0 %v5030
        %5046 = vmatpush.msra.mxu0 %v4870
        %5047 = vmatpush.msra.mxu0 %v4869
        %5048 = vmatmul.f32.gmra.mxu0 %v4894
        %v5049 = vpop.f32.mrf.mxu0
        %v5050 = vadd.f32 0.0, %v5049
        %5051 = vmatmul.f32.gmra.mxu0 %v4897
        %v5052 = vpop.f32.mrf.mxu0
        %v5053 = vadd.f32 0.0, %v5052
        %5054 = vdwg.mxu0
        %v5056 = vsel %vm1362, %v4874, 0
        %5058 = vmatpush.msra.mxu0 0.0
        %5059 = vmatpush.msra.mxu0 0.0
        %5060 = vmatpush.msra.mxu0 0.0
        %5061 = vmatpush.msra.mxu0 0.0
        %5062 = vmatpush.msra.mxu0 0.0
        %5063 = vmatpush.msra.mxu0 0.0
        %5064 = vmatpush.msra.mxu0 0.0
        %5065 = vmatpush.msra.mxu0 0.0
        %5066 = vmatpush.msra.mxu0 0.0
        %5067 = vmatpush.msra.mxu0 0.0
        %5068 = vmatpush.msra.mxu0 0.0
        %5069 = vmatpush.msra.mxu0 0.0
        %5070 = vmatpush.msra.mxu0 0.0
        %5071 = vmatpush.msra.mxu0 %v5056
        %5072 = vmatpush.msra.mxu0 %v4873
        %5073 = vmatpush.msra.mxu0 %v4872
        %5074 = vmatmul.f32.gmra.mxu0 %v4894
        %v5075 = vpop.f32.mrf.mxu0
        %v5076 = vadd.f32 0.0, %v5075
        %5077 = vmatmul.f32.gmra.mxu0 %v4897
        %v5078 = vpop.f32.mrf.mxu0
        %v5079 = vadd.f32 0.0, %v5078
        %5080 = vdwg.mxu0
        %v5082 = vsel %vm1362, %v4877, 0
        %5084 = vmatpush.msra.mxu0 0.0
        %5085 = vmatpush.msra.mxu0 0.0
        %5086 = vmatpush.msra.mxu0 0.0
        %5087 = vmatpush.msra.mxu0 0.0
        %5088 = vmatpush.msra.mxu0 0.0
        %5089 = vmatpush.msra.mxu0 0.0
        %5090 = vmatpush.msra.mxu0 0.0
        %5091 = vmatpush.msra.mxu0 0.0
        %5092 = vmatpush.msra.mxu0 0.0
        %5093 = vmatpush.msra.mxu0 0.0
        %5094 = vmatpush.msra.mxu0 0.0
        %5095 = vmatpush.msra.mxu0 0.0
        %5096 = vmatpush.msra.mxu0 0.0
        %5097 = vmatpush.msra.mxu0 %v5082
        %5098 = vmatpush.msra.mxu0 %v4876
        %5099 = vmatpush.msra.mxu0 %v4875
        %5100 = vmatmul.f32.gmra.mxu0 %v4894
        %v5101 = vpop.f32.mrf.mxu0
        %v5102 = vadd.f32 0.0, %v5101
        %5103 = vmatmul.f32.gmra.mxu0 %v4897
        %v5104 = vpop.f32.mrf.mxu0
        %v5105 = vadd.f32 0.0, %v5104
        %5106 = vdwg.mxu0
        %v5108 = vsel %vm1362, %v4880, 0
        %5110 = vmatpush.msra.mxu0 0.0
        %5111 = vmatpush.msra.mxu0 0.0
        %5112 = vmatpush.msra.mxu0 0.0
        %5113 = vmatpush.msra.mxu0 0.0
        %5114 = vmatpush.msra.mxu0 0.0
        %5115 = vmatpush.msra.mxu0 0.0
        %5116 = vmatpush.msra.mxu0 0.0
        %5117 = vmatpush.msra.mxu0 0.0
        %5118 = vmatpush.msra.mxu0 0.0
        %5119 = vmatpush.msra.mxu0 0.0
        %5120 = vmatpush.msra.mxu0 0.0
        %5121 = vmatpush.msra.mxu0 0.0
        %5122 = vmatpush.msra.mxu0 0.0
        %5123 = vmatpush.msra.mxu0 %v5108
        %5124 = vmatpush.msra.mxu0 %v4879
        %5125 = vmatpush.msra.mxu0 %v4878
        %5126 = vmatmul.f32.gmra.mxu0 %v4894
        %v5127 = vpop.f32.mrf.mxu0
        %v5128 = vadd.f32 0.0, %v5127
        %5129 = vmatmul.f32.gmra.mxu0 %v4897
        %v5130 = vpop.f32.mrf.mxu0
        %v5131 = vadd.f32 0.0, %v5130
        %5132 = vdwg.mxu0
        %v5134 = vsel %vm1362, %v4883, 0
        %5136 = vmatpush.msra.mxu0 0.0
        %5137 = vmatpush.msra.mxu0 0.0
        %5138 = vmatpush.msra.mxu0 0.0
        %5139 = vmatpush.msra.mxu0 0.0
        %5140 = vmatpush.msra.mxu0 0.0
        %5141 = vmatpush.msra.mxu0 0.0
        %5142 = vmatpush.msra.mxu0 0.0
        %5143 = vmatpush.msra.mxu0 0.0
        %5144 = vmatpush.msra.mxu0 0.0
        %5145 = vmatpush.msra.mxu0 0.0
        %5146 = vmatpush.msra.mxu0 0.0
        %5147 = vmatpush.msra.mxu0 0.0
        %5148 = vmatpush.msra.mxu0 0.0
        %5149 = vmatpush.msra.mxu0 %v5134
        %5150 = vmatpush.msra.mxu0 %v4882
        %5151 = vmatpush.msra.mxu0 %v4881
        %5152 = vmatmul.f32.gmra.mxu0 %v4894
        %v5153 = vpop.f32.mrf.mxu0
        %v5154 = vadd.f32 0.0, %v5153
        %5155 = vmatmul.f32.gmra.mxu0 %v4897
        %v5156 = vpop.f32.mrf.mxu0
        %v5157 = vadd.f32 0.0, %v5156
        %5158 = vdwg.mxu0
        %v5160 = vsel %vm1362, %v4886, 0
        %5162 = vmatpush.msra.mxu0 0.0
        %5163 = vmatpush.msra.mxu0 0.0
        %5164 = vmatpush.msra.mxu0 0.0
        %5165 = vmatpush.msra.mxu0 0.0
        %5166 = vmatpush.msra.mxu0 0.0
        %5167 = vmatpush.msra.mxu0 0.0
        %5168 = vmatpush.msra.mxu0 0.0
        %5169 = vmatpush.msra.mxu0 0.0
        %5170 = vmatpush.msra.mxu0 0.0
        %5171 = vmatpush.msra.mxu0 0.0
        %5172 = vmatpush.msra.mxu0 0.0
        %5173 = vmatpush.msra.mxu0 0.0
        %5174 = vmatpush.msra.mxu0 0.0
        %5175 = vmatpush.msra.mxu0 %v5160
        %5176 = vmatpush.msra.mxu0 %v4885
        %5177 = vmatpush.msra.mxu0 %v4884
        %5178 = vmatmul.f32.gmra.mxu0 %v4894
        %v5179 = vpop.f32.mrf.mxu0
        %v5180 = vadd.f32 0.0, %v5179
        %5181 = vmatmul.f32.gmra.mxu0 %v4897
        %v5182 = vpop.f32.mrf.mxu0
        %v5183 = vadd.f32 0.0, %v5182
        %5184 = vdwg.mxu0
        %v5186 = vsel %vm1362, %v4889, 0
        %5188 = vmatpush.msra.mxu0 0.0
        %5189 = vmatpush.msra.mxu0 0.0
        %5190 = vmatpush.msra.mxu0 0.0
        %5191 = vmatpush.msra.mxu0 0.0
        %5192 = vmatpush.msra.mxu0 0.0
        %5193 = vmatpush.msra.mxu0 0.0
        %5194 = vmatpush.msra.mxu0 0.0
        %5195 = vmatpush.msra.mxu0 0.0
        %5196 = vmatpush.msra.mxu0 0.0
        %5197 = vmatpush.msra.mxu0 0.0
        %5198 = vmatpush.msra.mxu0 0.0
        %5199 = vmatpush.msra.mxu0 0.0
        %5200 = vmatpush.msra.mxu0 0.0
        %5201 = vmatpush.msra.mxu0 %v5186
        %5202 = vmatpush.msra.mxu0 %v4888
        %5203 = vmatpush.msra.mxu0 %v4887
        %5204 = vmatmul.f32.gmra.mxu0 %v4894
        %v5205 = vpop.f32.mrf.mxu0
        %v5206 = vadd.f32 0.0, %v5205
        %5207 = vmatmul.f32.gmra.mxu0 %v4897
        %v5208 = vpop.f32.mrf.mxu0
        %v5209 = vadd.f32 0.0, %v5208
        %5210 = vdwg.mxu0
        %v5211 = vld [vmem:[%s3] sm:$0x1]
        %5213 = vset.pattern.permute.xlu0 0
        %5214 = vperm.xlu0 %5213, %v4920
        %v5215 = vpop.permute.xlu0 %5214
        %5218 = vset.pattern.permute.xlu0 0
        %5219 = vperm.xlu0 %5218, %v4923
        %v5220 = vpop.permute.xlu0 %5219
        %5223 = vset.pattern.permute.xlu0 0
        %5224 = vperm.xlu0 %5223, %v4946
        %v5225 = vpop.permute.xlu0 %5224
        %5228 = vset.pattern.permute.xlu0 0
        %5229 = vperm.xlu0 %5228, %v4949
        %v5230 = vpop.permute.xlu0 %5229
        %5233 = vset.pattern.permute.xlu0 0
        %5234 = vperm.xlu0 %5233, %v4972
        %v5235 = vpop.permute.xlu0 %5234
        %5238 = vset.pattern.permute.xlu0 0
        %5239 = vperm.xlu0 %5238, %v4975
        %v5240 = vpop.permute.xlu0 %5239
        %5243 = vset.pattern.permute.xlu0 0
        %5244 = vperm.xlu0 %5243, %v4998
        %v5245 = vpop.permute.xlu0 %5244
        %5248 = vset.pattern.permute.xlu0 0
        %5249 = vperm.xlu0 %5248, %v5001
        %v5250 = vpop.permute.xlu0 %5249
        %5253 = vset.pattern.permute.xlu0 0
        %5254 = vperm.xlu0 %5253, %v5024
        %v5255 = vpop.permute.xlu0 %5254
        %5258 = vset.pattern.permute.xlu0 0
        %5259 = vperm.xlu0 %5258, %v5027
        %v5260 = vpop.permute.xlu0 %5259
        %5263 = vset.pattern.permute.xlu0 0
        %5264 = vperm.xlu0 %5263, %v5050
        %v5265 = vpop.permute.xlu0 %5264
        %5268 = vset.pattern.permute.xlu0 0
        %5269 = vperm.xlu0 %5268, %v5053
        %v5270 = vpop.permute.xlu0 %5269
        %5273 = vset.pattern.permute.xlu0 0
        %5274 = vperm.xlu0 %5273, %v5076
        %v5275 = vpop.permute.xlu0 %5274
        %5278 = vset.pattern.permute.xlu0 0
        %5279 = vperm.xlu0 %5278, %v5079
        %v5280 = vpop.permute.xlu0 %5279
        %5283 = vset.pattern.permute.xlu0 0
        %5284 = vperm.xlu0 %5283, %v5102
        %v5285 = vpop.permute.xlu0 %5284
        %5288 = vset.pattern.permute.xlu0 0
        %5289 = vperm.xlu0 %5288, %v5105
        %v5290 = vpop.permute.xlu0 %5289
        %5293 = vset.pattern.permute.xlu0 0
        %5294 = vperm.xlu0 %5293, %v5128
        %v5295 = vpop.permute.xlu0 %5294
        %5298 = vset.pattern.permute.xlu0 0
        %5299 = vperm.xlu0 %5298, %v5131
        %v5300 = vpop.permute.xlu0 %5299
        %5303 = vset.pattern.permute.xlu0 0
        %5304 = vperm.xlu0 %5303, %v5154
        %v5305 = vpop.permute.xlu0 %5304
        %5308 = vset.pattern.permute.xlu0 0
        %5309 = vperm.xlu0 %5308, %v5157
        %v5310 = vpop.permute.xlu0 %5309
        %v5312 = vperm.slane %v5211, 0
        %v5313 = vmul.f32 %v5215, %v5312
        %v5314 = vmul.f32 %v5220, %v5312
        %v5315 = vmul.f32 %v5225, %v5312
        %v5316 = vmul.f32 %v5230, %v5312
        %v5317 = vmul.f32 %v5235, %v5312
        %v5318 = vmul.f32 %v5240, %v5312
        %v5319 = vmul.f32 %v5245, %v5312
        %v5320 = vmul.f32 %v5250, %v5312
        %v5321 = vmul.f32 %v5255, %v5312
        %v5322 = vmul.f32 %v5260, %v5312
        %v5323 = vmul.f32 %v5265, %v5312
        %v5324 = vmul.f32 %v5270, %v5312
        %v5325 = vmul.f32 %v5275, %v5312
        %v5326 = vmul.f32 %v5280, %v5312
        %v5327 = vmul.f32 %v5285, %v5312
        %v5328 = vmul.f32 %v5290, %v5312
        %v5329 = vmul.f32 %v5295, %v5312
        %v5330 = vmul.f32 %v5300, %v5312
        %v5331 = vmul.f32 %v5305, %v5312
        %v5332 = vmul.f32 %v5310, %v5312
        %v5333 = vadd.f32 %v5313, 0.0
        %v5334 = vadd.f32 %v5314, 0.0
        %v5335 = vadd.f32 %v5315, 0.0
        %v5336 = vadd.f32 %v5316, 0.0
        %v5337 = vadd.f32 %v5317, 0.0
        %v5338 = vadd.f32 %v5318, 0.0
        %v5339 = vadd.f32 %v5319, 0.0
        %v5340 = vadd.f32 %v5320, 0.0
        %v5341 = vadd.f32 %v5321, 0.0
        %v5342 = vadd.f32 %v5322, 0.0
        %v5343 = vadd.f32 %v5323, 0.0
        %v5344 = vadd.f32 %v5324, 0.0
        %v5345 = vadd.f32 %v5325, 0.0
        %v5346 = vadd.f32 %v5326, 0.0
        %v5347 = vadd.f32 %v5327, 0.0
        %v5348 = vadd.f32 %v5328, 0.0
        %v5349 = vadd.f32 %v5329, 0.0
        %v5350 = vadd.f32 %v5330, 0.0
        %v5351 = vadd.f32 %v5331, 0.0
        %v5352 = vadd.f32 %v5332, 0.0
        %v5353 = vld [vmem:[%s3 + $0x1] sm:$0x1]
        %5354 = vset.pattern.permute.xlu0 1
        %5355 = vperm.xlu0 %5354, %v4920
        %v5356 = vpop.permute.xlu0 %5355
        %5358 = vset.pattern.permute.xlu0 1
        %5359 = vperm.xlu0 %5358, %v4923
        %v5360 = vpop.permute.xlu0 %5359
        %5362 = vset.pattern.permute.xlu0 1
        %5363 = vperm.xlu0 %5362, %v4946
        %v5364 = vpop.permute.xlu0 %5363
        %5366 = vset.pattern.permute.xlu0 1
        %5367 = vperm.xlu0 %5366, %v4949
        %v5368 = vpop.permute.xlu0 %5367
        %5370 = vset.pattern.permute.xlu0 1
        %5371 = vperm.xlu0 %5370, %v4972
        %v5372 = vpop.permute.xlu0 %5371
        %5374 = vset.pattern.permute.xlu0 1
        %5375 = vperm.xlu0 %5374, %v4975
        %v5376 = vpop.permute.xlu0 %5375
        %5378 = vset.pattern.permute.xlu0 1
        %5379 = vperm.xlu0 %5378, %v4998
        %v5380 = vpop.permute.xlu0 %5379
        %5382 = vset.pattern.permute.xlu0 1
        %5383 = vperm.xlu0 %5382, %v5001
        %v5384 = vpop.permute.xlu0 %5383
        %5386 = vset.pattern.permute.xlu0 1
        %5387 = vperm.xlu0 %5386, %v5024
        %v5388 = vpop.permute.xlu0 %5387
        %5390 = vset.pattern.permute.xlu0 1
        %5391 = vperm.xlu0 %5390, %v5027
        %v5392 = vpop.permute.xlu0 %5391
        %5394 = vset.pattern.permute.xlu0 1
        %5395 = vperm.xlu0 %5394, %v5050
        %v5396 = vpop.permute.xlu0 %5395
        %5398 = vset.pattern.permute.xlu0 1
        %5399 = vperm.xlu0 %5398, %v5053
        %v5400 = vpop.permute.xlu0 %5399
        %5402 = vset.pattern.permute.xlu0 1
        %5403 = vperm.xlu0 %5402, %v5076
        %v5404 = vpop.permute.xlu0 %5403
        %5406 = vset.pattern.permute.xlu0 1
        %5407 = vperm.xlu0 %5406, %v5079
        %v5408 = vpop.permute.xlu0 %5407
        %5410 = vset.pattern.permute.xlu0 1
        %5411 = vperm.xlu0 %5410, %v5102
        %v5412 = vpop.permute.xlu0 %5411
        %5414 = vset.pattern.permute.xlu0 1
        %5415 = vperm.xlu0 %5414, %v5105
        %v5416 = vpop.permute.xlu0 %5415
        %5418 = vset.pattern.permute.xlu0 1
        %5419 = vperm.xlu0 %5418, %v5128
        %v5420 = vpop.permute.xlu0 %5419
        %5422 = vset.pattern.permute.xlu0 1
        %5423 = vperm.xlu0 %5422, %v5131
        %v5424 = vpop.permute.xlu0 %5423
        %5426 = vset.pattern.permute.xlu0 1
        %5427 = vperm.xlu0 %5426, %v5154
        %v5428 = vpop.permute.xlu0 %5427
        %5430 = vset.pattern.permute.xlu0 1
        %5431 = vperm.xlu0 %5430, %v5157
        %v5432 = vpop.permute.xlu0 %5431
        %v5434 = vperm.slane %v5353, 0
        %v5435 = vmul.f32 %v5356, %v5434
        %v5436 = vmul.f32 %v5360, %v5434
        %v5437 = vmul.f32 %v5364, %v5434
        %v5438 = vmul.f32 %v5368, %v5434
        %v5439 = vmul.f32 %v5372, %v5434
        %v5440 = vmul.f32 %v5376, %v5434
        %v5441 = vmul.f32 %v5380, %v5434
        %v5442 = vmul.f32 %v5384, %v5434
        %v5443 = vmul.f32 %v5388, %v5434
        %v5444 = vmul.f32 %v5392, %v5434
        %v5445 = vmul.f32 %v5396, %v5434
        %v5446 = vmul.f32 %v5400, %v5434
        %v5447 = vmul.f32 %v5404, %v5434
        %v5448 = vmul.f32 %v5408, %v5434
        %v5449 = vmul.f32 %v5412, %v5434
        %v5450 = vmul.f32 %v5416, %v5434
        %v5451 = vmul.f32 %v5420, %v5434
        %v5452 = vmul.f32 %v5424, %v5434
        %v5453 = vmul.f32 %v5428, %v5434
        %v5454 = vmul.f32 %v5432, %v5434
        %v5455 = vadd.f32 %v5333, %v5435
        %v5456 = vadd.f32 %v5334, %v5436
        %v5457 = vadd.f32 %v5335, %v5437
        %v5458 = vadd.f32 %v5336, %v5438
        %v5459 = vadd.f32 %v5337, %v5439
        %v5460 = vadd.f32 %v5338, %v5440
        %v5461 = vadd.f32 %v5339, %v5441
        %v5462 = vadd.f32 %v5340, %v5442
        %v5463 = vadd.f32 %v5341, %v5443
        %v5464 = vadd.f32 %v5342, %v5444
        %v5465 = vadd.f32 %v5343, %v5445
        %v5466 = vadd.f32 %v5344, %v5446
        %v5467 = vadd.f32 %v5345, %v5447
        %v5468 = vadd.f32 %v5346, %v5448
        %v5469 = vadd.f32 %v5347, %v5449
        %v5470 = vadd.f32 %v5348, %v5450
        %v5471 = vadd.f32 %v5349, %v5451
        %v5472 = vadd.f32 %v5350, %v5452
        %v5473 = vadd.f32 %v5351, %v5453
        %v5474 = vadd.f32 %v5352, %v5454
        %v5475 = vld [vmem:[%s3 + $0x2] sm:$0x1]
        %5476 = vset.pattern.permute.xlu0 2
        %5477 = vperm.xlu0 %5476, %v4920
        %v5478 = vpop.permute.xlu0 %5477
        %5480 = vset.pattern.permute.xlu0 2
        %5481 = vperm.xlu0 %5480, %v4923
        %v5482 = vpop.permute.xlu0 %5481
        %5484 = vset.pattern.permute.xlu0 2
        %5485 = vperm.xlu0 %5484, %v4946
        %v5486 = vpop.permute.xlu0 %5485
        %5488 = vset.pattern.permute.xlu0 2
        %5489 = vperm.xlu0 %5488, %v4949
        %v5490 = vpop.permute.xlu0 %5489
        %5492 = vset.pattern.permute.xlu0 2
        %5493 = vperm.xlu0 %5492, %v4972
        %v5494 = vpop.permute.xlu0 %5493
        %5496 = vset.pattern.permute.xlu0 2
        %5497 = vperm.xlu0 %5496, %v4975
        %v5498 = vpop.permute.xlu0 %5497
        %5500 = vset.pattern.permute.xlu0 2
        %5501 = vperm.xlu0 %5500, %v4998
        %v5502 = vpop.permute.xlu0 %5501
        %5504 = vset.pattern.permute.xlu0 2
        %5505 = vperm.xlu0 %5504, %v5001
        %v5506 = vpop.permute.xlu0 %5505
        %5508 = vset.pattern.permute.xlu0 2
        %5509 = vperm.xlu0 %5508, %v5024
        %v5510 = vpop.permute.xlu0 %5509
        %5512 = vset.pattern.permute.xlu0 2
        %5513 = vperm.xlu0 %5512, %v5027
        %v5514 = vpop.permute.xlu0 %5513
        %5516 = vset.pattern.permute.xlu0 2
        %5517 = vperm.xlu0 %5516, %v5050
        %v5518 = vpop.permute.xlu0 %5517
        %5520 = vset.pattern.permute.xlu0 2
        %5521 = vperm.xlu0 %5520, %v5053
        %v5522 = vpop.permute.xlu0 %5521
        %5524 = vset.pattern.permute.xlu0 2
        %5525 = vperm.xlu0 %5524, %v5076
        %v5526 = vpop.permute.xlu0 %5525
        %5528 = vset.pattern.permute.xlu0 2
        %5529 = vperm.xlu0 %5528, %v5079
        %v5530 = vpop.permute.xlu0 %5529
        %5532 = vset.pattern.permute.xlu0 2
        %5533 = vperm.xlu0 %5532, %v5102
        %v5534 = vpop.permute.xlu0 %5533
        %5536 = vset.pattern.permute.xlu0 2
        %5537 = vperm.xlu0 %5536, %v5105
        %v5538 = vpop.permute.xlu0 %5537
        %5540 = vset.pattern.permute.xlu0 2
        %5541 = vperm.xlu0 %5540, %v5128
        %v5542 = vpop.permute.xlu0 %5541
        %5544 = vset.pattern.permute.xlu0 2
        %5545 = vperm.xlu0 %5544, %v5131
        %v5546 = vpop.permute.xlu0 %5545
        %5548 = vset.pattern.permute.xlu0 2
        %5549 = vperm.xlu0 %5548, %v5154
        %v5550 = vpop.permute.xlu0 %5549
        %5552 = vset.pattern.permute.xlu0 2
        %5553 = vperm.xlu0 %5552, %v5157
        %v5554 = vpop.permute.xlu0 %5553
        %v5556 = vperm.slane %v5475, 0
        %v5557 = vmul.f32 %v5478, %v5556
        %v5558 = vmul.f32 %v5482, %v5556
        %v5559 = vmul.f32 %v5486, %v5556
        %v5560 = vmul.f32 %v5490, %v5556
        %v5561 = vmul.f32 %v5494, %v5556
        %v5562 = vmul.f32 %v5498, %v5556
        %v5563 = vmul.f32 %v5502, %v5556
        %v5564 = vmul.f32 %v5506, %v5556
        %v5565 = vmul.f32 %v5510, %v5556
        %v5566 = vmul.f32 %v5514, %v5556
        %v5567 = vmul.f32 %v5518, %v5556
        %v5568 = vmul.f32 %v5522, %v5556
        %v5569 = vmul.f32 %v5526, %v5556
        %v5570 = vmul.f32 %v5530, %v5556
        %v5571 = vmul.f32 %v5534, %v5556
        %v5572 = vmul.f32 %v5538, %v5556
        %v5573 = vmul.f32 %v5542, %v5556
        %v5574 = vmul.f32 %v5546, %v5556
        %v5575 = vmul.f32 %v5550, %v5556
        %v5576 = vmul.f32 %v5554, %v5556
        %v5577 = vadd.f32 %v5455, %v5557
        %v5578 = vadd.f32 %v5456, %v5558
        %v5579 = vadd.f32 %v5457, %v5559
        %v5580 = vadd.f32 %v5458, %v5560
        %v5581 = vadd.f32 %v5459, %v5561
        %v5582 = vadd.f32 %v5460, %v5562
        %v5583 = vadd.f32 %v5461, %v5563
        %v5584 = vadd.f32 %v5462, %v5564
        %v5585 = vadd.f32 %v5463, %v5565
        %v5586 = vadd.f32 %v5464, %v5566
        %v5587 = vadd.f32 %v5465, %v5567
        %v5588 = vadd.f32 %v5466, %v5568
        %v5589 = vadd.f32 %v5467, %v5569
        %v5590 = vadd.f32 %v5468, %v5570
        %v5591 = vadd.f32 %v5469, %v5571
        %v5592 = vadd.f32 %v5470, %v5572
        %v5593 = vadd.f32 %v5471, %v5573
        %v5594 = vadd.f32 %v5472, %v5574
        %v5595 = vadd.f32 %v5473, %v5575
        %v5596 = vadd.f32 %v5474, %v5576
        %v5597 = vld [vmem:[%s3 + $0x3] sm:$0x1]
        %5598 = vset.pattern.permute.xlu0 3
        %5599 = vperm.xlu0 %5598, %v4920
        %v5600 = vpop.permute.xlu0 %5599
        %5602 = vset.pattern.permute.xlu0 3
        %5603 = vperm.xlu0 %5602, %v4923
        %v5604 = vpop.permute.xlu0 %5603
        %5606 = vset.pattern.permute.xlu0 3
        %5607 = vperm.xlu0 %5606, %v4946
        %v5608 = vpop.permute.xlu0 %5607
        %5610 = vset.pattern.permute.xlu0 3
        %5611 = vperm.xlu0 %5610, %v4949
        %v5612 = vpop.permute.xlu0 %5611
        %5614 = vset.pattern.permute.xlu0 3
        %5615 = vperm.xlu0 %5614, %v4972
        %v5616 = vpop.permute.xlu0 %5615
        %5618 = vset.pattern.permute.xlu0 3
        %5619 = vperm.xlu0 %5618, %v4975
        %v5620 = vpop.permute.xlu0 %5619
        %5622 = vset.pattern.permute.xlu0 3
        %5623 = vperm.xlu0 %5622, %v4998
        %v5624 = vpop.permute.xlu0 %5623
        %5626 = vset.pattern.permute.xlu0 3
        %5627 = vperm.xlu0 %5626, %v5001
        %v5628 = vpop.permute.xlu0 %5627
        %5630 = vset.pattern.permute.xlu0 3
        %5631 = vperm.xlu0 %5630, %v5024
        %v5632 = vpop.permute.xlu0 %5631
        %5634 = vset.pattern.permute.xlu0 3
        %5635 = vperm.xlu0 %5634, %v5027
        %v5636 = vpop.permute.xlu0 %5635
        %5638 = vset.pattern.permute.xlu0 3
        %5639 = vperm.xlu0 %5638, %v5050
        %v5640 = vpop.permute.xlu0 %5639
        %5642 = vset.pattern.permute.xlu0 3
        %5643 = vperm.xlu0 %5642, %v5053
        %v5644 = vpop.permute.xlu0 %5643
        %5646 = vset.pattern.permute.xlu0 3
        %5647 = vperm.xlu0 %5646, %v5076
        %v5648 = vpop.permute.xlu0 %5647
        %5650 = vset.pattern.permute.xlu0 3
        %5651 = vperm.xlu0 %5650, %v5079
        %v5652 = vpop.permute.xlu0 %5651
        %5654 = vset.pattern.permute.xlu0 3
        %5655 = vperm.xlu0 %5654, %v5102
        %v5656 = vpop.permute.xlu0 %5655
        %5658 = vset.pattern.permute.xlu0 3
        %5659 = vperm.xlu0 %5658, %v5105
        %v5660 = vpop.permute.xlu0 %5659
        %5662 = vset.pattern.permute.xlu0 3
        %5663 = vperm.xlu0 %5662, %v5128
        %v5664 = vpop.permute.xlu0 %5663
        %5666 = vset.pattern.permute.xlu0 3
        %5667 = vperm.xlu0 %5666, %v5131
        %v5668 = vpop.permute.xlu0 %5667
        %5670 = vset.pattern.permute.xlu0 3
        %5671 = vperm.xlu0 %5670, %v5154
        %v5672 = vpop.permute.xlu0 %5671
        %5674 = vset.pattern.permute.xlu0 3
        %5675 = vperm.xlu0 %5674, %v5157
        %v5676 = vpop.permute.xlu0 %5675
        %v5678 = vperm.slane %v5597, 0
        %v5679 = vmul.f32 %v5600, %v5678
        %v5680 = vmul.f32 %v5604, %v5678
        %v5681 = vmul.f32 %v5608, %v5678
        %v5682 = vmul.f32 %v5612, %v5678
        %v5683 = vmul.f32 %v5616, %v5678
        %v5684 = vmul.f32 %v5620, %v5678
        %v5685 = vmul.f32 %v5624, %v5678
        %v5686 = vmul.f32 %v5628, %v5678
        %v5687 = vmul.f32 %v5632, %v5678
        %v5688 = vmul.f32 %v5636, %v5678
        %v5689 = vmul.f32 %v5640, %v5678
        %v5690 = vmul.f32 %v5644, %v5678
        %v5691 = vmul.f32 %v5648, %v5678
        %v5692 = vmul.f32 %v5652, %v5678
        %v5693 = vmul.f32 %v5656, %v5678
        %v5694 = vmul.f32 %v5660, %v5678
        %v5695 = vmul.f32 %v5664, %v5678
        %v5696 = vmul.f32 %v5668, %v5678
        %v5697 = vmul.f32 %v5672, %v5678
        %v5698 = vmul.f32 %v5676, %v5678
        %v5699 = vadd.f32 %v5577, %v5679
        %v5700 = vadd.f32 %v5578, %v5680
        %v5701 = vadd.f32 %v5579, %v5681
        %v5702 = vadd.f32 %v5580, %v5682
        %v5703 = vadd.f32 %v5581, %v5683
        %v5704 = vadd.f32 %v5582, %v5684
        %v5705 = vadd.f32 %v5583, %v5685
        %v5706 = vadd.f32 %v5584, %v5686
        %v5707 = vadd.f32 %v5585, %v5687
        %v5708 = vadd.f32 %v5586, %v5688
        %v5709 = vadd.f32 %v5587, %v5689
        %v5710 = vadd.f32 %v5588, %v5690
        %v5711 = vadd.f32 %v5589, %v5691
        %v5712 = vadd.f32 %v5590, %v5692
        %v5713 = vadd.f32 %v5591, %v5693
        %v5714 = vadd.f32 %v5592, %v5694
        %v5715 = vadd.f32 %v5593, %v5695
        %v5716 = vadd.f32 %v5594, %v5696
        %v5717 = vadd.f32 %v5595, %v5697
        %v5718 = vadd.f32 %v5596, %v5698
        %v5719 = vld [vmem:[%s3 + $0x4] sm:$0x1]
        %5720 = vset.pattern.permute.xlu0 4
        %5721 = vperm.xlu0 %5720, %v4920
        %v5722 = vpop.permute.xlu0 %5721
        %5724 = vset.pattern.permute.xlu0 4
        %5725 = vperm.xlu0 %5724, %v4923
        %v5726 = vpop.permute.xlu0 %5725
        %5728 = vset.pattern.permute.xlu0 4
        %5729 = vperm.xlu0 %5728, %v4946
        %v5730 = vpop.permute.xlu0 %5729
        %5732 = vset.pattern.permute.xlu0 4
        %5733 = vperm.xlu0 %5732, %v4949
        %v5734 = vpop.permute.xlu0 %5733
        %5736 = vset.pattern.permute.xlu0 4
        %5737 = vperm.xlu0 %5736, %v4972
        %v5738 = vpop.permute.xlu0 %5737
        %5740 = vset.pattern.permute.xlu0 4
        %5741 = vperm.xlu0 %5740, %v4975
        %v5742 = vpop.permute.xlu0 %5741
        %5744 = vset.pattern.permute.xlu0 4
        %5745 = vperm.xlu0 %5744, %v4998
        %v5746 = vpop.permute.xlu0 %5745
        %5748 = vset.pattern.permute.xlu0 4
        %5749 = vperm.xlu0 %5748, %v5001
        %v5750 = vpop.permute.xlu0 %5749
        %5752 = vset.pattern.permute.xlu0 4
        %5753 = vperm.xlu0 %5752, %v5024
        %v5754 = vpop.permute.xlu0 %5753
        %5756 = vset.pattern.permute.xlu0 4
        %5757 = vperm.xlu0 %5756, %v5027
        %v5758 = vpop.permute.xlu0 %5757
        %5760 = vset.pattern.permute.xlu0 4
        %5761 = vperm.xlu0 %5760, %v5050
        %v5762 = vpop.permute.xlu0 %5761
        %5764 = vset.pattern.permute.xlu0 4
        %5765 = vperm.xlu0 %5764, %v5053
        %v5766 = vpop.permute.xlu0 %5765
        %5768 = vset.pattern.permute.xlu0 4
        %5769 = vperm.xlu0 %5768, %v5076
        %v5770 = vpop.permute.xlu0 %5769
        %5772 = vset.pattern.permute.xlu0 4
        %5773 = vperm.xlu0 %5772, %v5079
        %v5774 = vpop.permute.xlu0 %5773
        %5776 = vset.pattern.permute.xlu0 4
        %5777 = vperm.xlu0 %5776, %v5102
        %v5778 = vpop.permute.xlu0 %5777
        %5780 = vset.pattern.permute.xlu0 4
        %5781 = vperm.xlu0 %5780, %v5105
        %v5782 = vpop.permute.xlu0 %5781
        %5784 = vset.pattern.permute.xlu0 4
        %5785 = vperm.xlu0 %5784, %v5128
        %v5786 = vpop.permute.xlu0 %5785
        %5788 = vset.pattern.permute.xlu0 4
        %5789 = vperm.xlu0 %5788, %v5131
        %v5790 = vpop.permute.xlu0 %5789
        %5792 = vset.pattern.permute.xlu0 4
        %5793 = vperm.xlu0 %5792, %v5154
        %v5794 = vpop.permute.xlu0 %5793
        %5796 = vset.pattern.permute.xlu0 4
        %5797 = vperm.xlu0 %5796, %v5157
        %v5798 = vpop.permute.xlu0 %5797
        %v5800 = vperm.slane %v5719, 0
        %v5801 = vmul.f32 %v5722, %v5800
        %v5802 = vmul.f32 %v5726, %v5800
        %v5803 = vmul.f32 %v5730, %v5800
        %v5804 = vmul.f32 %v5734, %v5800
        %v5805 = vmul.f32 %v5738, %v5800
        %v5806 = vmul.f32 %v5742, %v5800
        %v5807 = vmul.f32 %v5746, %v5800
        %v5808 = vmul.f32 %v5750, %v5800
        %v5809 = vmul.f32 %v5754, %v5800
        %v5810 = vmul.f32 %v5758, %v5800
        %v5811 = vmul.f32 %v5762, %v5800
        %v5812 = vmul.f32 %v5766, %v5800
        %v5813 = vmul.f32 %v5770, %v5800
        %v5814 = vmul.f32 %v5774, %v5800
        %v5815 = vmul.f32 %v5778, %v5800
        %v5816 = vmul.f32 %v5782, %v5800
        %v5817 = vmul.f32 %v5786, %v5800
        %v5818 = vmul.f32 %v5790, %v5800
        %v5819 = vmul.f32 %v5794, %v5800
        %v5820 = vmul.f32 %v5798, %v5800
        %v5821 = vadd.f32 %v5699, %v5801
        %v5822 = vadd.f32 %v5700, %v5802
        %v5823 = vadd.f32 %v5701, %v5803
        %v5824 = vadd.f32 %v5702, %v5804
        %v5825 = vadd.f32 %v5703, %v5805
        %v5826 = vadd.f32 %v5704, %v5806
        %v5827 = vadd.f32 %v5705, %v5807
        %v5828 = vadd.f32 %v5706, %v5808
        %v5829 = vadd.f32 %v5707, %v5809
        %v5830 = vadd.f32 %v5708, %v5810
        %v5831 = vadd.f32 %v5709, %v5811
        %v5832 = vadd.f32 %v5710, %v5812
        %v5833 = vadd.f32 %v5711, %v5813
        %v5834 = vadd.f32 %v5712, %v5814
        %v5835 = vadd.f32 %v5713, %v5815
        %v5836 = vadd.f32 %v5714, %v5816
        %v5837 = vadd.f32 %v5715, %v5817
        %v5838 = vadd.f32 %v5716, %v5818
        %v5839 = vadd.f32 %v5717, %v5819
        %v5840 = vadd.f32 %v5718, %v5820
        %v5841 = vld [vmem:[%s3 + $0x5] sm:$0x1]
        %5842 = vset.pattern.permute.xlu0 5
        %5843 = vperm.xlu0 %5842, %v4920
        %v5844 = vpop.permute.xlu0 %5843
        %5846 = vset.pattern.permute.xlu0 5
        %5847 = vperm.xlu0 %5846, %v4923
        %v5848 = vpop.permute.xlu0 %5847
        %5850 = vset.pattern.permute.xlu0 5
        %5851 = vperm.xlu0 %5850, %v4946
        %v5852 = vpop.permute.xlu0 %5851
        %5854 = vset.pattern.permute.xlu0 5
        %5855 = vperm.xlu0 %5854, %v4949
        %v5856 = vpop.permute.xlu0 %5855
        %5858 = vset.pattern.permute.xlu0 5
        %5859 = vperm.xlu0 %5858, %v4972
        %v5860 = vpop.permute.xlu0 %5859
        %5862 = vset.pattern.permute.xlu0 5
        %5863 = vperm.xlu0 %5862, %v4975
        %v5864 = vpop.permute.xlu0 %5863
        %5866 = vset.pattern.permute.xlu0 5
        %5867 = vperm.xlu0 %5866, %v4998
        %v5868 = vpop.permute.xlu0 %5867
        %5870 = vset.pattern.permute.xlu0 5
        %5871 = vperm.xlu0 %5870, %v5001
        %v5872 = vpop.permute.xlu0 %5871
        %5874 = vset.pattern.permute.xlu0 5
        %5875 = vperm.xlu0 %5874, %v5024
        %v5876 = vpop.permute.xlu0 %5875
        %5878 = vset.pattern.permute.xlu0 5
        %5879 = vperm.xlu0 %5878, %v5027
        %v5880 = vpop.permute.xlu0 %5879
        %5882 = vset.pattern.permute.xlu0 5
        %5883 = vperm.xlu0 %5882, %v5050
        %v5884 = vpop.permute.xlu0 %5883
        %5886 = vset.pattern.permute.xlu0 5
        %5887 = vperm.xlu0 %5886, %v5053
        %v5888 = vpop.permute.xlu0 %5887
        %5890 = vset.pattern.permute.xlu0 5
        %5891 = vperm.xlu0 %5890, %v5076
        %v5892 = vpop.permute.xlu0 %5891
        %5894 = vset.pattern.permute.xlu0 5
        %5895 = vperm.xlu0 %5894, %v5079
        %v5896 = vpop.permute.xlu0 %5895
        %5898 = vset.pattern.permute.xlu0 5
        %5899 = vperm.xlu0 %5898, %v5102
        %v5900 = vpop.permute.xlu0 %5899
        %5902 = vset.pattern.permute.xlu0 5
        %5903 = vperm.xlu0 %5902, %v5105
        %v5904 = vpop.permute.xlu0 %5903
        %5906 = vset.pattern.permute.xlu0 5
        %5907 = vperm.xlu0 %5906, %v5128
        %v5908 = vpop.permute.xlu0 %5907
        %5910 = vset.pattern.permute.xlu0 5
        %5911 = vperm.xlu0 %5910, %v5131
        %v5912 = vpop.permute.xlu0 %5911
        %5914 = vset.pattern.permute.xlu0 5
        %5915 = vperm.xlu0 %5914, %v5154
        %v5916 = vpop.permute.xlu0 %5915
        %5918 = vset.pattern.permute.xlu0 5
        %5919 = vperm.xlu0 %5918, %v5157
        %v5920 = vpop.permute.xlu0 %5919
        %v5922 = vperm.slane %v5841, 0
        %v5923 = vmul.f32 %v5844, %v5922
        %v5924 = vmul.f32 %v5848, %v5922
        %v5925 = vmul.f32 %v5852, %v5922
        %v5926 = vmul.f32 %v5856, %v5922
        %v5927 = vmul.f32 %v5860, %v5922
        %v5928 = vmul.f32 %v5864, %v5922
        %v5929 = vmul.f32 %v5868, %v5922
        %v5930 = vmul.f32 %v5872, %v5922
        %v5931 = vmul.f32 %v5876, %v5922
        %v5932 = vmul.f32 %v5880, %v5922
        %v5933 = vmul.f32 %v5884, %v5922
        %v5934 = vmul.f32 %v5888, %v5922
        %v5935 = vmul.f32 %v5892, %v5922
        %v5936 = vmul.f32 %v5896, %v5922
        %v5937 = vmul.f32 %v5900, %v5922
        %v5938 = vmul.f32 %v5904, %v5922
        %v5939 = vmul.f32 %v5908, %v5922
        %v5940 = vmul.f32 %v5912, %v5922
        %v5941 = vmul.f32 %v5916, %v5922
        %v5942 = vmul.f32 %v5920, %v5922
        %v5943 = vadd.f32 %v5821, %v5923
        %v5944 = vadd.f32 %v5822, %v5924
        %v5945 = vadd.f32 %v5823, %v5925
        %v5946 = vadd.f32 %v5824, %v5926
        %v5947 = vadd.f32 %v5825, %v5927
        %v5948 = vadd.f32 %v5826, %v5928
        %v5949 = vadd.f32 %v5827, %v5929
        %v5950 = vadd.f32 %v5828, %v5930
        %v5951 = vadd.f32 %v5829, %v5931
        %v5952 = vadd.f32 %v5830, %v5932
        %v5953 = vadd.f32 %v5831, %v5933
        %v5954 = vadd.f32 %v5832, %v5934
        %v5955 = vadd.f32 %v5833, %v5935
        %v5956 = vadd.f32 %v5834, %v5936
        %v5957 = vadd.f32 %v5835, %v5937
        %v5958 = vadd.f32 %v5836, %v5938
        %v5959 = vadd.f32 %v5837, %v5939
        %v5960 = vadd.f32 %v5838, %v5940
        %v5961 = vadd.f32 %v5839, %v5941
        %v5962 = vadd.f32 %v5840, %v5942
        %v5963 = vld [vmem:[%s3 + $0x6] sm:$0x1]
        %v5964 = vperm.slane %v5963, 0
        %v5965 = vmul.f32 %v5215, %v5964
        %v5966 = vmul.f32 %v5220, %v5964
        %v5967 = vmul.f32 %v5225, %v5964
        %v5968 = vmul.f32 %v5230, %v5964
        %v5969 = vmul.f32 %v5235, %v5964
        %v5970 = vmul.f32 %v5240, %v5964
        %v5971 = vmul.f32 %v5245, %v5964
        %v5972 = vmul.f32 %v5250, %v5964
        %v5973 = vmul.f32 %v5255, %v5964
        %v5974 = vmul.f32 %v5260, %v5964
        %v5975 = vmul.f32 %v5265, %v5964
        %v5976 = vmul.f32 %v5270, %v5964
        %v5977 = vmul.f32 %v5275, %v5964
        %v5978 = vmul.f32 %v5280, %v5964
        %v5979 = vmul.f32 %v5285, %v5964
        %v5980 = vmul.f32 %v5290, %v5964
        %v5981 = vmul.f32 %v5295, %v5964
        %v5982 = vmul.f32 %v5300, %v5964
        %v5983 = vmul.f32 %v5305, %v5964
        %v5984 = vmul.f32 %v5310, %v5964
        %v6005 = vrot.slane %v5965, 1
        %v6006 = vrot.slane %v5966, 1
        %v6007 = vsel %vm1362, %v6005, %v6006
        %v6008 = vrot.slane %v5967, 1
        %v6009 = vrot.slane %v5968, 1
        %v6010 = vsel %vm1362, %v6008, %v6009
        %v6011 = vrot.slane %v5969, 1
        %v6012 = vrot.slane %v5970, 1
        %v6013 = vsel %vm1362, %v6011, %v6012
        %v6014 = vrot.slane %v5971, 1
        %v6015 = vrot.slane %v5972, 1
        %v6016 = vsel %vm1362, %v6014, %v6015
        %v6017 = vrot.slane %v5973, 1
        %v6018 = vrot.slane %v5974, 1
        %v6019 = vsel %vm1362, %v6017, %v6018
        %v6020 = vrot.slane %v5975, 1
        %v6021 = vrot.slane %v5976, 1
        %v6022 = vsel %vm1362, %v6020, %v6021
        %v6023 = vrot.slane %v5977, 1
        %v6024 = vrot.slane %v5978, 1
        %v6025 = vsel %vm1362, %v6023, %v6024
        %v6026 = vrot.slane %v5979, 1
        %v6027 = vrot.slane %v5980, 1
        %v6028 = vsel %vm1362, %v6026, %v6027
        %v6029 = vrot.slane %v5981, 1
        %v6030 = vrot.slane %v5982, 1
        %v6031 = vsel %vm1362, %v6029, %v6030
        %v6032 = vrot.slane %v5983, 1
        %v6033 = vrot.slane %v5984, 1
        %v6034 = vsel %vm1362, %v6032, %v6033
        %v6055 = vadd.f32 %v5943, %v6007
        %v6056 = vadd.f32 %v5944, %v6006
        %v6057 = vadd.f32 %v5945, %v6010
        %v6058 = vadd.f32 %v5946, %v6009
        %v6059 = vadd.f32 %v5947, %v6013
        %v6060 = vadd.f32 %v5948, %v6012
        %v6061 = vadd.f32 %v5949, %v6016
        %v6062 = vadd.f32 %v5950, %v6015
        %v6063 = vadd.f32 %v5951, %v6019
        %v6064 = vadd.f32 %v5952, %v6018
        %v6065 = vadd.f32 %v5953, %v6022
        %v6066 = vadd.f32 %v5954, %v6021
        %v6067 = vadd.f32 %v5955, %v6025
        %v6068 = vadd.f32 %v5956, %v6024
        %v6069 = vadd.f32 %v5957, %v6028
        %v6070 = vadd.f32 %v5958, %v6027
        %v6071 = vadd.f32 %v5959, %v6031
        %v6072 = vadd.f32 %v5960, %v6030
        %v6073 = vadd.f32 %v5961, %v6034
        %v6074 = vadd.f32 %v5962, %v6033
        %v6075 = vld [vmem:[%s3 + $0x7] sm:$0x1]
        %v6076 = vperm.slane %v6075, 0
        %v6077 = vmul.f32 %v5356, %v6076
        %v6078 = vmul.f32 %v5360, %v6076
        %v6079 = vmul.f32 %v5364, %v6076
        %v6080 = vmul.f32 %v5368, %v6076
        %v6081 = vmul.f32 %v5372, %v6076
        %v6082 = vmul.f32 %v5376, %v6076
        %v6083 = vmul.f32 %v5380, %v6076
        %v6084 = vmul.f32 %v5384, %v6076
        %v6085 = vmul.f32 %v5388, %v6076
        %v6086 = vmul.f32 %v5392, %v6076
        %v6087 = vmul.f32 %v5396, %v6076
        %v6088 = vmul.f32 %v5400, %v6076
        %v6089 = vmul.f32 %v5404, %v6076
        %v6090 = vmul.f32 %v5408, %v6076
        %v6091 = vmul.f32 %v5412, %v6076
        %v6092 = vmul.f32 %v5416, %v6076
        %v6093 = vmul.f32 %v5420, %v6076
        %v6094 = vmul.f32 %v5424, %v6076
        %v6095 = vmul.f32 %v5428, %v6076
        %v6096 = vmul.f32 %v5432, %v6076
        %v6117 = vrot.slane %v6077, 1
        %v6118 = vrot.slane %v6078, 1
        %v6119 = vsel %vm1362, %v6117, %v6118
        %v6120 = vrot.slane %v6079, 1
        %v6121 = vrot.slane %v6080, 1
        %v6122 = vsel %vm1362, %v6120, %v6121
        %v6123 = vrot.slane %v6081, 1
        %v6124 = vrot.slane %v6082, 1
        %v6125 = vsel %vm1362, %v6123, %v6124
        %v6126 = vrot.slane %v6083, 1
        %v6127 = vrot.slane %v6084, 1
        %v6128 = vsel %vm1362, %v6126, %v6127
        %v6129 = vrot.slane %v6085, 1
        %v6130 = vrot.slane %v6086, 1
        %v6131 = vsel %vm1362, %v6129, %v6130
        %v6132 = vrot.slane %v6087, 1
        %v6133 = vrot.slane %v6088, 1
        %v6134 = vsel %vm1362, %v6132, %v6133
        %v6135 = vrot.slane %v6089, 1
        %v6136 = vrot.slane %v6090, 1
        %v6137 = vsel %vm1362, %v6135, %v6136
        %v6138 = vrot.slane %v6091, 1
        %v6139 = vrot.slane %v6092, 1
        %v6140 = vsel %vm1362, %v6138, %v6139
        %v6141 = vrot.slane %v6093, 1
        %v6142 = vrot.slane %v6094, 1
        %v6143 = vsel %vm1362, %v6141, %v6142
        %v6144 = vrot.slane %v6095, 1
        %v6145 = vrot.slane %v6096, 1
        %v6146 = vsel %vm1362, %v6144, %v6145
        %v6167 = vadd.f32 %v6055, %v6119
        %v6168 = vadd.f32 %v6056, %v6118
        %v6169 = vadd.f32 %v6057, %v6122
        %v6170 = vadd.f32 %v6058, %v6121
        %v6171 = vadd.f32 %v6059, %v6125
        %v6172 = vadd.f32 %v6060, %v6124
        %v6173 = vadd.f32 %v6061, %v6128
        %v6174 = vadd.f32 %v6062, %v6127
        %v6175 = vadd.f32 %v6063, %v6131
        %v6176 = vadd.f32 %v6064, %v6130
        %v6177 = vadd.f32 %v6065, %v6134
        %v6178 = vadd.f32 %v6066, %v6133
        %v6179 = vadd.f32 %v6067, %v6137
        %v6180 = vadd.f32 %v6068, %v6136
        %v6181 = vadd.f32 %v6069, %v6140
        %v6182 = vadd.f32 %v6070, %v6139
        %v6183 = vadd.f32 %v6071, %v6143
        %v6184 = vadd.f32 %v6072, %v6142
        %v6185 = vadd.f32 %v6073, %v6146
        %v6186 = vadd.f32 %v6074, %v6145
        %v6187 = vld [vmem:[%s3 + $0x8] sm:$0x1]
        %v6188 = vperm.slane %v6187, 0
        %v6189 = vmul.f32 %v5478, %v6188
        %v6190 = vmul.f32 %v5482, %v6188
        %v6191 = vmul.f32 %v5486, %v6188
        %v6192 = vmul.f32 %v5490, %v6188
        %v6193 = vmul.f32 %v5494, %v6188
        %v6194 = vmul.f32 %v5498, %v6188
        %v6195 = vmul.f32 %v5502, %v6188
        %v6196 = vmul.f32 %v5506, %v6188
        %v6197 = vmul.f32 %v5510, %v6188
        %v6198 = vmul.f32 %v5514, %v6188
        %v6199 = vmul.f32 %v5518, %v6188
        %v6200 = vmul.f32 %v5522, %v6188
        %v6201 = vmul.f32 %v5526, %v6188
        %v6202 = vmul.f32 %v5530, %v6188
        %v6203 = vmul.f32 %v5534, %v6188
        %v6204 = vmul.f32 %v5538, %v6188
        %v6205 = vmul.f32 %v5542, %v6188
        %v6206 = vmul.f32 %v5546, %v6188
        %v6207 = vmul.f32 %v5550, %v6188
        %v6208 = vmul.f32 %v5554, %v6188
        %v6229 = vrot.slane %v6189, 1
        %v6230 = vrot.slane %v6190, 1
        %v6231 = vsel %vm1362, %v6229, %v6230
        %v6232 = vrot.slane %v6191, 1
        %v6233 = vrot.slane %v6192, 1
        %v6234 = vsel %vm1362, %v6232, %v6233
        %v6235 = vrot.slane %v6193, 1
        %v6236 = vrot.slane %v6194, 1
        %v6237 = vsel %vm1362, %v6235, %v6236
        %v6238 = vrot.slane %v6195, 1
        %v6239 = vrot.slane %v6196, 1
        %v6240 = vsel %vm1362, %v6238, %v6239
        %v6241 = vrot.slane %v6197, 1
        %v6242 = vrot.slane %v6198, 1
        %v6243 = vsel %vm1362, %v6241, %v6242
        %v6244 = vrot.slane %v6199, 1
        %v6245 = vrot.slane %v6200, 1
        %v6246 = vsel %vm1362, %v6244, %v6245
        %v6247 = vrot.slane %v6201, 1
        %v6248 = vrot.slane %v6202, 1
        %v6249 = vsel %vm1362, %v6247, %v6248
        %v6250 = vrot.slane %v6203, 1
        %v6251 = vrot.slane %v6204, 1
        %v6252 = vsel %vm1362, %v6250, %v6251
        %v6253 = vrot.slane %v6205, 1
        %v6254 = vrot.slane %v6206, 1
        %v6255 = vsel %vm1362, %v6253, %v6254
        %v6256 = vrot.slane %v6207, 1
        %v6257 = vrot.slane %v6208, 1
        %v6258 = vsel %vm1362, %v6256, %v6257
        %v6279 = vadd.f32 %v6167, %v6231
        %v6280 = vadd.f32 %v6168, %v6230
        %v6281 = vadd.f32 %v6169, %v6234
        %v6282 = vadd.f32 %v6170, %v6233
        %v6283 = vadd.f32 %v6171, %v6237
        %v6284 = vadd.f32 %v6172, %v6236
        %v6285 = vadd.f32 %v6173, %v6240
        %v6286 = vadd.f32 %v6174, %v6239
        %v6287 = vadd.f32 %v6175, %v6243
        %v6288 = vadd.f32 %v6176, %v6242
        %v6289 = vadd.f32 %v6177, %v6246
        %v6290 = vadd.f32 %v6178, %v6245
        %v6291 = vadd.f32 %v6179, %v6249
        %v6292 = vadd.f32 %v6180, %v6248
        %v6293 = vadd.f32 %v6181, %v6252
        %v6294 = vadd.f32 %v6182, %v6251
        %v6295 = vadd.f32 %v6183, %v6255
        %v6296 = vadd.f32 %v6184, %v6254
        %v6297 = vadd.f32 %v6185, %v6258
        %v6298 = vadd.f32 %v6186, %v6257
        %v6299 = vld [vmem:[%s3 + $0x9] sm:$0x1]
        %v6300 = vperm.slane %v6299, 0
        %v6301 = vmul.f32 %v5600, %v6300
        %v6302 = vmul.f32 %v5604, %v6300
        %v6303 = vmul.f32 %v5608, %v6300
        %v6304 = vmul.f32 %v5612, %v6300
        %v6305 = vmul.f32 %v5616, %v6300
        %v6306 = vmul.f32 %v5620, %v6300
        %v6307 = vmul.f32 %v5624, %v6300
        %v6308 = vmul.f32 %v5628, %v6300
        %v6309 = vmul.f32 %v5632, %v6300
        %v6310 = vmul.f32 %v5636, %v6300
        %v6311 = vmul.f32 %v5640, %v6300
        %v6312 = vmul.f32 %v5644, %v6300
        %v6313 = vmul.f32 %v5648, %v6300
        %v6314 = vmul.f32 %v5652, %v6300
        %v6315 = vmul.f32 %v5656, %v6300
        %v6316 = vmul.f32 %v5660, %v6300
        %v6317 = vmul.f32 %v5664, %v6300
        %v6318 = vmul.f32 %v5668, %v6300
        %v6319 = vmul.f32 %v5672, %v6300
        %v6320 = vmul.f32 %v5676, %v6300
        %v6341 = vrot.slane %v6301, 1
        %v6342 = vrot.slane %v6302, 1
        %v6343 = vsel %vm1362, %v6341, %v6342
        %v6344 = vrot.slane %v6303, 1
        %v6345 = vrot.slane %v6304, 1
        %v6346 = vsel %vm1362, %v6344, %v6345
        %v6347 = vrot.slane %v6305, 1
        %v6348 = vrot.slane %v6306, 1
        %v6349 = vsel %vm1362, %v6347, %v6348
        %v6350 = vrot.slane %v6307, 1
        %v6351 = vrot.slane %v6308, 1
        %v6352 = vsel %vm1362, %v6350, %v6351
        %v6353 = vrot.slane %v6309, 1
        %v6354 = vrot.slane %v6310, 1
        %v6355 = vsel %vm1362, %v6353, %v6354
        %v6356 = vrot.slane %v6311, 1
        %v6357 = vrot.slane %v6312, 1
        %v6358 = vsel %vm1362, %v6356, %v6357
        %v6359 = vrot.slane %v6313, 1
        %v6360 = vrot.slane %v6314, 1
        %v6361 = vsel %vm1362, %v6359, %v6360
        %v6362 = vrot.slane %v6315, 1
        %v6363 = vrot.slane %v6316, 1
        %v6364 = vsel %vm1362, %v6362, %v6363
        %v6365 = vrot.slane %v6317, 1
        %v6366 = vrot.slane %v6318, 1
        %v6367 = vsel %vm1362, %v6365, %v6366
        %v6368 = vrot.slane %v6319, 1
        %v6369 = vrot.slane %v6320, 1
        %v6370 = vsel %vm1362, %v6368, %v6369
        %v6391 = vadd.f32 %v6279, %v6343
        %v6392 = vadd.f32 %v6280, %v6342
        %v6393 = vadd.f32 %v6281, %v6346
        %v6394 = vadd.f32 %v6282, %v6345
        %v6395 = vadd.f32 %v6283, %v6349
        %v6396 = vadd.f32 %v6284, %v6348
        %v6397 = vadd.f32 %v6285, %v6352
        %v6398 = vadd.f32 %v6286, %v6351
        %v6399 = vadd.f32 %v6287, %v6355
        %v6400 = vadd.f32 %v6288, %v6354
        %v6401 = vadd.f32 %v6289, %v6358
        %v6402 = vadd.f32 %v6290, %v6357
        %v6403 = vadd.f32 %v6291, %v6361
        %v6404 = vadd.f32 %v6292, %v6360
        %v6405 = vadd.f32 %v6293, %v6364
        %v6406 = vadd.f32 %v6294, %v6363
        %v6407 = vadd.f32 %v6295, %v6367
        %v6408 = vadd.f32 %v6296, %v6366
        %v6409 = vadd.f32 %v6297, %v6370
        %v6410 = vadd.f32 %v6298, %v6369
        %v6411 = vld [vmem:[%s3 + $0xa] sm:$0x1]
        %v6412 = vperm.slane %v6411, 0
        %v6413 = vmul.f32 %v5722, %v6412
        %v6414 = vmul.f32 %v5726, %v6412
        %v6415 = vmul.f32 %v5730, %v6412
        %v6416 = vmul.f32 %v5734, %v6412
        %v6417 = vmul.f32 %v5738, %v6412
        %v6418 = vmul.f32 %v5742, %v6412
        %v6419 = vmul.f32 %v5746, %v6412
        %v6420 = vmul.f32 %v5750, %v6412
        %v6421 = vmul.f32 %v5754, %v6412
        %v6422 = vmul.f32 %v5758, %v6412
        %v6423 = vmul.f32 %v5762, %v6412
        %v6424 = vmul.f32 %v5766, %v6412
        %v6425 = vmul.f32 %v5770, %v6412
        %v6426 = vmul.f32 %v5774, %v6412
        %v6427 = vmul.f32 %v5778, %v6412
        %v6428 = vmul.f32 %v5782, %v6412
        %v6429 = vmul.f32 %v5786, %v6412
        %v6430 = vmul.f32 %v5790, %v6412
        %v6431 = vmul.f32 %v5794, %v6412
        %v6432 = vmul.f32 %v5798, %v6412
        %v6453 = vrot.slane %v6413, 1
        %v6454 = vrot.slane %v6414, 1
        %v6455 = vsel %vm1362, %v6453, %v6454
        %v6456 = vrot.slane %v6415, 1
        %v6457 = vrot.slane %v6416, 1
        %v6458 = vsel %vm1362, %v6456, %v6457
        %v6459 = vrot.slane %v6417, 1
        %v6460 = vrot.slane %v6418, 1
        %v6461 = vsel %vm1362, %v6459, %v6460
        %v6462 = vrot.slane %v6419, 1
        %v6463 = vrot.slane %v6420, 1
        %v6464 = vsel %vm1362, %v6462, %v6463
        %v6465 = vrot.slane %v6421, 1
        %v6466 = vrot.slane %v6422, 1
        %v6467 = vsel %vm1362, %v6465, %v6466
        %v6468 = vrot.slane %v6423, 1
        %v6469 = vrot.slane %v6424, 1
        %v6470 = vsel %vm1362, %v6468, %v6469
        %v6471 = vrot.slane %v6425, 1
        %v6472 = vrot.slane %v6426, 1
        %v6473 = vsel %vm1362, %v6471, %v6472
        %v6474 = vrot.slane %v6427, 1
        %v6475 = vrot.slane %v6428, 1
        %v6476 = vsel %vm1362, %v6474, %v6475
        %v6477 = vrot.slane %v6429, 1
        %v6478 = vrot.slane %v6430, 1
        %v6479 = vsel %vm1362, %v6477, %v6478
        %v6480 = vrot.slane %v6431, 1
        %v6481 = vrot.slane %v6432, 1
        %v6482 = vsel %vm1362, %v6480, %v6481
        %v6503 = vadd.f32 %v6391, %v6455
        %v6504 = vadd.f32 %v6392, %v6454
        %v6505 = vadd.f32 %v6393, %v6458
        %v6506 = vadd.f32 %v6394, %v6457
        %v6507 = vadd.f32 %v6395, %v6461
        %v6508 = vadd.f32 %v6396, %v6460
        %v6509 = vadd.f32 %v6397, %v6464
        %v6510 = vadd.f32 %v6398, %v6463
        %v6511 = vadd.f32 %v6399, %v6467
        %v6512 = vadd.f32 %v6400, %v6466
        %v6513 = vadd.f32 %v6401, %v6470
        %v6514 = vadd.f32 %v6402, %v6469
        %v6515 = vadd.f32 %v6403, %v6473
        %v6516 = vadd.f32 %v6404, %v6472
        %v6517 = vadd.f32 %v6405, %v6476
        %v6518 = vadd.f32 %v6406, %v6475
        %v6519 = vadd.f32 %v6407, %v6479
        %v6520 = vadd.f32 %v6408, %v6478
        %v6521 = vadd.f32 %v6409, %v6482
        %v6522 = vadd.f32 %v6410, %v6481
        %v6523 = vld [vmem:[%s3 + $0xb] sm:$0x1]
        %v6524 = vperm.slane %v6523, 0
        %v6525 = vmul.f32 %v5844, %v6524
        %v6526 = vmul.f32 %v5848, %v6524
        %v6527 = vmul.f32 %v5852, %v6524
        %v6528 = vmul.f32 %v5856, %v6524
        %v6529 = vmul.f32 %v5860, %v6524
        %v6530 = vmul.f32 %v5864, %v6524
        %v6531 = vmul.f32 %v5868, %v6524
        %v6532 = vmul.f32 %v5872, %v6524
        %v6533 = vmul.f32 %v5876, %v6524
        %v6534 = vmul.f32 %v5880, %v6524
        %v6535 = vmul.f32 %v5884, %v6524
        %v6536 = vmul.f32 %v5888, %v6524
        %v6537 = vmul.f32 %v5892, %v6524
        %v6538 = vmul.f32 %v5896, %v6524
        %v6539 = vmul.f32 %v5900, %v6524
        %v6540 = vmul.f32 %v5904, %v6524
        %v6541 = vmul.f32 %v5908, %v6524
        %v6542 = vmul.f32 %v5912, %v6524
        %v6543 = vmul.f32 %v5916, %v6524
        %v6544 = vmul.f32 %v5920, %v6524
        %v6565 = vrot.slane %v6525, 1
        %v6566 = vrot.slane %v6526, 1
        %v6567 = vsel %vm1362, %v6565, %v6566
        %v6568 = vrot.slane %v6527, 1
        %v6569 = vrot.slane %v6528, 1
        %v6570 = vsel %vm1362, %v6568, %v6569
        %v6571 = vrot.slane %v6529, 1
        %v6572 = vrot.slane %v6530, 1
        %v6573 = vsel %vm1362, %v6571, %v6572
        %v6574 = vrot.slane %v6531, 1
        %v6575 = vrot.slane %v6532, 1
        %v6576 = vsel %vm1362, %v6574, %v6575
        %v6577 = vrot.slane %v6533, 1
        %v6578 = vrot.slane %v6534, 1
        %v6579 = vsel %vm1362, %v6577, %v6578
        %v6580 = vrot.slane %v6535, 1
        %v6581 = vrot.slane %v6536, 1
        %v6582 = vsel %vm1362, %v6580, %v6581
        %v6583 = vrot.slane %v6537, 1
        %v6584 = vrot.slane %v6538, 1
        %v6585 = vsel %vm1362, %v6583, %v6584
        %v6586 = vrot.slane %v6539, 1
        %v6587 = vrot.slane %v6540, 1
        %v6588 = vsel %vm1362, %v6586, %v6587
        %v6589 = vrot.slane %v6541, 1
        %v6590 = vrot.slane %v6542, 1
        %v6591 = vsel %vm1362, %v6589, %v6590
        %v6592 = vrot.slane %v6543, 1
        %v6593 = vrot.slane %v6544, 1
        %v6594 = vsel %vm1362, %v6592, %v6593
        %v6615 = vadd.f32 %v6503, %v6567
        %v6616 = vadd.f32 %v6504, %v6566
        %v6617 = vadd.f32 %v6505, %v6570
        %v6618 = vadd.f32 %v6506, %v6569
        %v6619 = vadd.f32 %v6507, %v6573
        %v6620 = vadd.f32 %v6508, %v6572
        %v6621 = vadd.f32 %v6509, %v6576
        %v6622 = vadd.f32 %v6510, %v6575
        %v6623 = vadd.f32 %v6511, %v6579
        %v6624 = vadd.f32 %v6512, %v6578
        %v6625 = vadd.f32 %v6513, %v6582
        %v6626 = vadd.f32 %v6514, %v6581
        %v6627 = vadd.f32 %v6515, %v6585
        %v6628 = vadd.f32 %v6516, %v6584
        %v6629 = vadd.f32 %v6517, %v6588
        %v6630 = vadd.f32 %v6518, %v6587
        %v6631 = vadd.f32 %v6519, %v6591
        %v6632 = vadd.f32 %v6520, %v6590
        %v6633 = vadd.f32 %v6521, %v6594
        %v6634 = vadd.f32 %v6522, %v6593
        %v6635 = vld [vmem:[%s3 + $0xc] sm:$0x1]
        %v6636 = vperm.slane %v6635, 0
        %v6637 = vmul.f32 %v5215, %v6636
        %v6638 = vmul.f32 %v5220, %v6636
        %v6639 = vmul.f32 %v5225, %v6636
        %v6640 = vmul.f32 %v5230, %v6636
        %v6641 = vmul.f32 %v5235, %v6636
        %v6642 = vmul.f32 %v5240, %v6636
        %v6643 = vmul.f32 %v5245, %v6636
        %v6644 = vmul.f32 %v5250, %v6636
        %v6645 = vmul.f32 %v5255, %v6636
        %v6646 = vmul.f32 %v5260, %v6636
        %v6647 = vmul.f32 %v5265, %v6636
        %v6648 = vmul.f32 %v5270, %v6636
        %v6649 = vmul.f32 %v5275, %v6636
        %v6650 = vmul.f32 %v5280, %v6636
        %v6651 = vmul.f32 %v5285, %v6636
        %v6652 = vmul.f32 %v5290, %v6636
        %v6653 = vmul.f32 %v5295, %v6636
        %v6654 = vmul.f32 %v5300, %v6636
        %v6655 = vmul.f32 %v5305, %v6636
        %v6656 = vmul.f32 %v5310, %v6636
        %v6677 = vrot.slane %v6637, 2
        %v6678 = vrot.slane %v6638, 2
        %v6679 = vsel %vm1869, %v6677, %v6678
        %v6680 = vrot.slane %v6639, 2
        %v6681 = vrot.slane %v6640, 2
        %v6682 = vsel %vm1869, %v6680, %v6681
        %v6683 = vrot.slane %v6641, 2
        %v6684 = vrot.slane %v6642, 2
        %v6685 = vsel %vm1869, %v6683, %v6684
        %v6686 = vrot.slane %v6643, 2
        %v6687 = vrot.slane %v6644, 2
        %v6688 = vsel %vm1869, %v6686, %v6687
        %v6689 = vrot.slane %v6645, 2
        %v6690 = vrot.slane %v6646, 2
        %v6691 = vsel %vm1869, %v6689, %v6690
        %v6692 = vrot.slane %v6647, 2
        %v6693 = vrot.slane %v6648, 2
        %v6694 = vsel %vm1869, %v6692, %v6693
        %v6695 = vrot.slane %v6649, 2
        %v6696 = vrot.slane %v6650, 2
        %v6697 = vsel %vm1869, %v6695, %v6696
        %v6698 = vrot.slane %v6651, 2
        %v6699 = vrot.slane %v6652, 2
        %v6700 = vsel %vm1869, %v6698, %v6699
        %v6701 = vrot.slane %v6653, 2
        %v6702 = vrot.slane %v6654, 2
        %v6703 = vsel %vm1869, %v6701, %v6702
        %v6704 = vrot.slane %v6655, 2
        %v6705 = vrot.slane %v6656, 2
        %v6706 = vsel %vm1869, %v6704, %v6705
        %v6727 = vadd.f32 %v6615, %v6679
        %v6728 = vadd.f32 %v6616, %v6678
        %v6729 = vadd.f32 %v6617, %v6682
        %v6730 = vadd.f32 %v6618, %v6681
        %v6731 = vadd.f32 %v6619, %v6685
        %v6732 = vadd.f32 %v6620, %v6684
        %v6733 = vadd.f32 %v6621, %v6688
        %v6734 = vadd.f32 %v6622, %v6687
        %v6735 = vadd.f32 %v6623, %v6691
        %v6736 = vadd.f32 %v6624, %v6690
        %v6737 = vadd.f32 %v6625, %v6694
        %v6738 = vadd.f32 %v6626, %v6693
        %v6739 = vadd.f32 %v6627, %v6697
        %v6740 = vadd.f32 %v6628, %v6696
        %v6741 = vadd.f32 %v6629, %v6700
        %v6742 = vadd.f32 %v6630, %v6699
        %v6743 = vadd.f32 %v6631, %v6703
        %v6744 = vadd.f32 %v6632, %v6702
        %v6745 = vadd.f32 %v6633, %v6706
        %v6746 = vadd.f32 %v6634, %v6705
        %v6747 = vld [vmem:[%s3 + $0xd] sm:$0x1]
        %v6748 = vperm.slane %v6747, 0
        %v6749 = vmul.f32 %v5356, %v6748
        %v6750 = vmul.f32 %v5360, %v6748
        %v6751 = vmul.f32 %v5364, %v6748
        %v6752 = vmul.f32 %v5368, %v6748
        %v6753 = vmul.f32 %v5372, %v6748
        %v6754 = vmul.f32 %v5376, %v6748
        %v6755 = vmul.f32 %v5380, %v6748
        %v6756 = vmul.f32 %v5384, %v6748
        %v6757 = vmul.f32 %v5388, %v6748
        %v6758 = vmul.f32 %v5392, %v6748
        %v6759 = vmul.f32 %v5396, %v6748
        %v6760 = vmul.f32 %v5400, %v6748
        %v6761 = vmul.f32 %v5404, %v6748
        %v6762 = vmul.f32 %v5408, %v6748
        %v6763 = vmul.f32 %v5412, %v6748
        %v6764 = vmul.f32 %v5416, %v6748
        %v6765 = vmul.f32 %v5420, %v6748
        %v6766 = vmul.f32 %v5424, %v6748
        %v6767 = vmul.f32 %v5428, %v6748
        %v6768 = vmul.f32 %v5432, %v6748
        %v6789 = vrot.slane %v6749, 2
        %v6790 = vrot.slane %v6750, 2
        %v6791 = vsel %vm1869, %v6789, %v6790
        %v6792 = vrot.slane %v6751, 2
        %v6793 = vrot.slane %v6752, 2
        %v6794 = vsel %vm1869, %v6792, %v6793
        %v6795 = vrot.slane %v6753, 2
        %v6796 = vrot.slane %v6754, 2
        %v6797 = vsel %vm1869, %v6795, %v6796
        %v6798 = vrot.slane %v6755, 2
        %v6799 = vrot.slane %v6756, 2
        %v6800 = vsel %vm1869, %v6798, %v6799
        %v6801 = vrot.slane %v6757, 2
        %v6802 = vrot.slane %v6758, 2
        %v6803 = vsel %vm1869, %v6801, %v6802
        %v6804 = vrot.slane %v6759, 2
        %v6805 = vrot.slane %v6760, 2
        %v6806 = vsel %vm1869, %v6804, %v6805
        %v6807 = vrot.slane %v6761, 2
        %v6808 = vrot.slane %v6762, 2
        %v6809 = vsel %vm1869, %v6807, %v6808
        %v6810 = vrot.slane %v6763, 2
        %v6811 = vrot.slane %v6764, 2
        %v6812 = vsel %vm1869, %v6810, %v6811
        %v6813 = vrot.slane %v6765, 2
        %v6814 = vrot.slane %v6766, 2
        %v6815 = vsel %vm1869, %v6813, %v6814
        %v6816 = vrot.slane %v6767, 2
        %v6817 = vrot.slane %v6768, 2
        %v6818 = vsel %vm1869, %v6816, %v6817
        %v6839 = vadd.f32 %v6727, %v6791
        %v6840 = vadd.f32 %v6728, %v6790
        %v6841 = vadd.f32 %v6729, %v6794
        %v6842 = vadd.f32 %v6730, %v6793
        %v6843 = vadd.f32 %v6731, %v6797
        %v6844 = vadd.f32 %v6732, %v6796
        %v6845 = vadd.f32 %v6733, %v6800
        %v6846 = vadd.f32 %v6734, %v6799
        %v6847 = vadd.f32 %v6735, %v6803
        %v6848 = vadd.f32 %v6736, %v6802
        %v6849 = vadd.f32 %v6737, %v6806
        %v6850 = vadd.f32 %v6738, %v6805
        %v6851 = vadd.f32 %v6739, %v6809
        %v6852 = vadd.f32 %v6740, %v6808
        %v6853 = vadd.f32 %v6741, %v6812
        %v6854 = vadd.f32 %v6742, %v6811
        %v6855 = vadd.f32 %v6743, %v6815
        %v6856 = vadd.f32 %v6744, %v6814
        %v6857 = vadd.f32 %v6745, %v6818
        %v6858 = vadd.f32 %v6746, %v6817
        %v6859 = vld [vmem:[%s3 + $0xe] sm:$0x1]
        %v6860 = vperm.slane %v6859, 0
        %v6861 = vmul.f32 %v5478, %v6860
        %v6862 = vmul.f32 %v5482, %v6860
        %v6863 = vmul.f32 %v5486, %v6860
        %v6864 = vmul.f32 %v5490, %v6860
        %v6865 = vmul.f32 %v5494, %v6860
        %v6866 = vmul.f32 %v5498, %v6860
        %v6867 = vmul.f32 %v5502, %v6860
        %v6868 = vmul.f32 %v5506, %v6860
        %v6869 = vmul.f32 %v5510, %v6860
        %v6870 = vmul.f32 %v5514, %v6860
        %v6871 = vmul.f32 %v5518, %v6860
        %v6872 = vmul.f32 %v5522, %v6860
        %v6873 = vmul.f32 %v5526, %v6860
        %v6874 = vmul.f32 %v5530, %v6860
        %v6875 = vmul.f32 %v5534, %v6860
        %v6876 = vmul.f32 %v5538, %v6860
        %v6877 = vmul.f32 %v5542, %v6860
        %v6878 = vmul.f32 %v5546, %v6860
        %v6879 = vmul.f32 %v5550, %v6860
        %v6880 = vmul.f32 %v5554, %v6860
        %v6901 = vrot.slane %v6861, 2
        %v6902 = vrot.slane %v6862, 2
        %v6903 = vsel %vm1869, %v6901, %v6902
        %v6904 = vrot.slane %v6863, 2
        %v6905 = vrot.slane %v6864, 2
        %v6906 = vsel %vm1869, %v6904, %v6905
        %v6907 = vrot.slane %v6865, 2
        %v6908 = vrot.slane %v6866, 2
        %v6909 = vsel %vm1869, %v6907, %v6908
        %v6910 = vrot.slane %v6867, 2
        %v6911 = vrot.slane %v6868, 2
        %v6912 = vsel %vm1869, %v6910, %v6911
        %v6913 = vrot.slane %v6869, 2
        %v6914 = vrot.slane %v6870, 2
        %v6915 = vsel %vm1869, %v6913, %v6914
        %v6916 = vrot.slane %v6871, 2
        %v6917 = vrot.slane %v6872, 2
        %v6918 = vsel %vm1869, %v6916, %v6917
        %v6919 = vrot.slane %v6873, 2
        %v6920 = vrot.slane %v6874, 2
        %v6921 = vsel %vm1869, %v6919, %v6920
        %v6922 = vrot.slane %v6875, 2
        %v6923 = vrot.slane %v6876, 2
        %v6924 = vsel %vm1869, %v6922, %v6923
        %v6925 = vrot.slane %v6877, 2
        %v6926 = vrot.slane %v6878, 2
        %v6927 = vsel %vm1869, %v6925, %v6926
        %v6928 = vrot.slane %v6879, 2
        %v6929 = vrot.slane %v6880, 2
        %v6930 = vsel %vm1869, %v6928, %v6929
        %v6951 = vadd.f32 %v6839, %v6903
        %v6952 = vadd.f32 %v6840, %v6902
        %v6953 = vadd.f32 %v6841, %v6906
        %v6954 = vadd.f32 %v6842, %v6905
        %v6955 = vadd.f32 %v6843, %v6909
        %v6956 = vadd.f32 %v6844, %v6908
        %v6957 = vadd.f32 %v6845, %v6912
        %v6958 = vadd.f32 %v6846, %v6911
        %v6959 = vadd.f32 %v6847, %v6915
        %v6960 = vadd.f32 %v6848, %v6914
        %v6961 = vadd.f32 %v6849, %v6918
        %v6962 = vadd.f32 %v6850, %v6917
        %v6963 = vadd.f32 %v6851, %v6921
        %v6964 = vadd.f32 %v6852, %v6920
        %v6965 = vadd.f32 %v6853, %v6924
        %v6966 = vadd.f32 %v6854, %v6923
        %v6967 = vadd.f32 %v6855, %v6927
        %v6968 = vadd.f32 %v6856, %v6926
        %v6969 = vadd.f32 %v6857, %v6930
        %v6970 = vadd.f32 %v6858, %v6929
        %v6971 = vld [vmem:[%s3 + $0xf] sm:$0x1]
        %v6972 = vperm.slane %v6971, 0
        %v6973 = vmul.f32 %v5600, %v6972
        %v6974 = vmul.f32 %v5604, %v6972
        %v6975 = vmul.f32 %v5608, %v6972
        %v6976 = vmul.f32 %v5612, %v6972
        %v6977 = vmul.f32 %v5616, %v6972
        %v6978 = vmul.f32 %v5620, %v6972
        %v6979 = vmul.f32 %v5624, %v6972
        %v6980 = vmul.f32 %v5628, %v6972
        %v6981 = vmul.f32 %v5632, %v6972
        %v6982 = vmul.f32 %v5636, %v6972
        %v6983 = vmul.f32 %v5640, %v6972
        %v6984 = vmul.f32 %v5644, %v6972
        %v6985 = vmul.f32 %v5648, %v6972
        %v6986 = vmul.f32 %v5652, %v6972
        %v6987 = vmul.f32 %v5656, %v6972
        %v6988 = vmul.f32 %v5660, %v6972
        %v6989 = vmul.f32 %v5664, %v6972
        %v6990 = vmul.f32 %v5668, %v6972
        %v6991 = vmul.f32 %v5672, %v6972
        %v6992 = vmul.f32 %v5676, %v6972
        %v7013 = vrot.slane %v6973, 2
        %v7014 = vrot.slane %v6974, 2
        %v7015 = vsel %vm1869, %v7013, %v7014
        %v7016 = vrot.slane %v6975, 2
        %v7017 = vrot.slane %v6976, 2
        %v7018 = vsel %vm1869, %v7016, %v7017
        %v7019 = vrot.slane %v6977, 2
        %v7020 = vrot.slane %v6978, 2
        %v7021 = vsel %vm1869, %v7019, %v7020
        %v7022 = vrot.slane %v6979, 2
        %v7023 = vrot.slane %v6980, 2
        %v7024 = vsel %vm1869, %v7022, %v7023
        %v7025 = vrot.slane %v6981, 2
        %v7026 = vrot.slane %v6982, 2
        %v7027 = vsel %vm1869, %v7025, %v7026
        %v7028 = vrot.slane %v6983, 2
        %v7029 = vrot.slane %v6984, 2
        %v7030 = vsel %vm1869, %v7028, %v7029
        %v7031 = vrot.slane %v6985, 2
        %v7032 = vrot.slane %v6986, 2
        %v7033 = vsel %vm1869, %v7031, %v7032
        %v7034 = vrot.slane %v6987, 2
        %v7035 = vrot.slane %v6988, 2
        %v7036 = vsel %vm1869, %v7034, %v7035
        %v7037 = vrot.slane %v6989, 2
        %v7038 = vrot.slane %v6990, 2
        %v7039 = vsel %vm1869, %v7037, %v7038
        %v7040 = vrot.slane %v6991, 2
        %v7041 = vrot.slane %v6992, 2
        %v7042 = vsel %vm1869, %v7040, %v7041
        %v7063 = vadd.f32 %v6951, %v7015
        %v7064 = vadd.f32 %v6952, %v7014
        %v7065 = vadd.f32 %v6953, %v7018
        %v7066 = vadd.f32 %v6954, %v7017
        %v7067 = vadd.f32 %v6955, %v7021
        %v7068 = vadd.f32 %v6956, %v7020
        %v7069 = vadd.f32 %v6957, %v7024
        %v7070 = vadd.f32 %v6958, %v7023
        %v7071 = vadd.f32 %v6959, %v7027
        %v7072 = vadd.f32 %v6960, %v7026
        %v7073 = vadd.f32 %v6961, %v7030
        %v7074 = vadd.f32 %v6962, %v7029
        %v7075 = vadd.f32 %v6963, %v7033
        %v7076 = vadd.f32 %v6964, %v7032
        %v7077 = vadd.f32 %v6965, %v7036
        %v7078 = vadd.f32 %v6966, %v7035
        %v7079 = vadd.f32 %v6967, %v7039
        %v7080 = vadd.f32 %v6968, %v7038
        %v7081 = vadd.f32 %v6969, %v7042
        %v7082 = vadd.f32 %v6970, %v7041
        %v7083 = vld [vmem:[%s3 + $0x10] sm:$0x1]
        %v7084 = vperm.slane %v7083, 0
        %v7085 = vmul.f32 %v5722, %v7084
        %v7086 = vmul.f32 %v5726, %v7084
        %v7087 = vmul.f32 %v5730, %v7084
        %v7088 = vmul.f32 %v5734, %v7084
        %v7089 = vmul.f32 %v5738, %v7084
        %v7090 = vmul.f32 %v5742, %v7084
        %v7091 = vmul.f32 %v5746, %v7084
        %v7092 = vmul.f32 %v5750, %v7084
        %v7093 = vmul.f32 %v5754, %v7084
        %v7094 = vmul.f32 %v5758, %v7084
        %v7095 = vmul.f32 %v5762, %v7084
        %v7096 = vmul.f32 %v5766, %v7084
        %v7097 = vmul.f32 %v5770, %v7084
        %v7098 = vmul.f32 %v5774, %v7084
        %v7099 = vmul.f32 %v5778, %v7084
        %v7100 = vmul.f32 %v5782, %v7084
        %v7101 = vmul.f32 %v5786, %v7084
        %v7102 = vmul.f32 %v5790, %v7084
        %v7103 = vmul.f32 %v5794, %v7084
        %v7104 = vmul.f32 %v5798, %v7084
        %v7125 = vrot.slane %v7085, 2
        %v7126 = vrot.slane %v7086, 2
        %v7127 = vsel %vm1869, %v7125, %v7126
        %v7128 = vrot.slane %v7087, 2
        %v7129 = vrot.slane %v7088, 2
        %v7130 = vsel %vm1869, %v7128, %v7129
        %v7131 = vrot.slane %v7089, 2
        %v7132 = vrot.slane %v7090, 2
        %v7133 = vsel %vm1869, %v7131, %v7132
        %v7134 = vrot.slane %v7091, 2
        %v7135 = vrot.slane %v7092, 2
        %v7136 = vsel %vm1869, %v7134, %v7135
        %v7137 = vrot.slane %v7093, 2
        %v7138 = vrot.slane %v7094, 2
        %v7139 = vsel %vm1869, %v7137, %v7138
        %v7140 = vrot.slane %v7095, 2
        %v7141 = vrot.slane %v7096, 2
        %v7142 = vsel %vm1869, %v7140, %v7141
        %v7143 = vrot.slane %v7097, 2
        %v7144 = vrot.slane %v7098, 2
        %v7145 = vsel %vm1869, %v7143, %v7144
        %v7146 = vrot.slane %v7099, 2
        %v7147 = vrot.slane %v7100, 2
        %v7148 = vsel %vm1869, %v7146, %v7147
        %v7149 = vrot.slane %v7101, 2
        %v7150 = vrot.slane %v7102, 2
        %v7151 = vsel %vm1869, %v7149, %v7150
        %v7152 = vrot.slane %v7103, 2
        %v7153 = vrot.slane %v7104, 2
        %v7154 = vsel %vm1869, %v7152, %v7153
        %v7175 = vadd.f32 %v7063, %v7127
        %v7176 = vadd.f32 %v7064, %v7126
        %v7177 = vadd.f32 %v7065, %v7130
        %v7178 = vadd.f32 %v7066, %v7129
        %v7179 = vadd.f32 %v7067, %v7133
        %v7180 = vadd.f32 %v7068, %v7132
        %v7181 = vadd.f32 %v7069, %v7136
        %v7182 = vadd.f32 %v7070, %v7135
        %v7183 = vadd.f32 %v7071, %v7139
        %v7184 = vadd.f32 %v7072, %v7138
        %v7185 = vadd.f32 %v7073, %v7142
        %v7186 = vadd.f32 %v7074, %v7141
        %v7187 = vadd.f32 %v7075, %v7145
        %v7188 = vadd.f32 %v7076, %v7144
        %v7189 = vadd.f32 %v7077, %v7148
        %v7190 = vadd.f32 %v7078, %v7147
        %v7191 = vadd.f32 %v7079, %v7151
        %v7192 = vadd.f32 %v7080, %v7150
        %v7193 = vadd.f32 %v7081, %v7154
        %v7194 = vadd.f32 %v7082, %v7153
        %v7195 = vld [vmem:[%s3 + $0x11] sm:$0x1]
        %v7196 = vperm.slane %v7195, 0
        %v7197 = vmul.f32 %v5844, %v7196
        %v7198 = vmul.f32 %v5848, %v7196
        %v7199 = vmul.f32 %v5852, %v7196
        %v7200 = vmul.f32 %v5856, %v7196
        %v7201 = vmul.f32 %v5860, %v7196
        %v7202 = vmul.f32 %v5864, %v7196
        %v7203 = vmul.f32 %v5868, %v7196
        %v7204 = vmul.f32 %v5872, %v7196
        %v7205 = vmul.f32 %v5876, %v7196
        %v7206 = vmul.f32 %v5880, %v7196
        %v7207 = vmul.f32 %v5884, %v7196
        %v7208 = vmul.f32 %v5888, %v7196
        %v7209 = vmul.f32 %v5892, %v7196
        %v7210 = vmul.f32 %v5896, %v7196
        %v7211 = vmul.f32 %v5900, %v7196
        %v7212 = vmul.f32 %v5904, %v7196
        %v7213 = vmul.f32 %v5908, %v7196
        %v7214 = vmul.f32 %v5912, %v7196
        %v7215 = vmul.f32 %v5916, %v7196
        %v7216 = vmul.f32 %v5920, %v7196
        %v7237 = vrot.slane %v7197, 2
        %v7238 = vrot.slane %v7198, 2
        %v7239 = vsel %vm1869, %v7237, %v7238
        %v7240 = vrot.slane %v7199, 2
        %v7241 = vrot.slane %v7200, 2
        %v7242 = vsel %vm1869, %v7240, %v7241
        %v7243 = vrot.slane %v7201, 2
        %v7244 = vrot.slane %v7202, 2
        %v7245 = vsel %vm1869, %v7243, %v7244
        %v7246 = vrot.slane %v7203, 2
        %v7247 = vrot.slane %v7204, 2
        %v7248 = vsel %vm1869, %v7246, %v7247
        %v7249 = vrot.slane %v7205, 2
        %v7250 = vrot.slane %v7206, 2
        %v7251 = vsel %vm1869, %v7249, %v7250
        %v7252 = vrot.slane %v7207, 2
        %v7253 = vrot.slane %v7208, 2
        %v7254 = vsel %vm1869, %v7252, %v7253
        %v7255 = vrot.slane %v7209, 2
        %v7256 = vrot.slane %v7210, 2
        %v7257 = vsel %vm1869, %v7255, %v7256
        %v7258 = vrot.slane %v7211, 2
        %v7259 = vrot.slane %v7212, 2
        %v7260 = vsel %vm1869, %v7258, %v7259
        %v7261 = vrot.slane %v7213, 2
        %v7262 = vrot.slane %v7214, 2
        %v7263 = vsel %vm1869, %v7261, %v7262
        %v7264 = vrot.slane %v7215, 2
        %v7265 = vrot.slane %v7216, 2
        %v7266 = vsel %vm1869, %v7264, %v7265
        %v7287 = vadd.f32 %v7175, %v7239
        %v7288 = vadd.f32 %v7176, %v7238
        %v7289 = vadd.f32 %v7177, %v7242
        %v7290 = vadd.f32 %v7178, %v7241
        %v7291 = vadd.f32 %v7179, %v7245
        %v7292 = vadd.f32 %v7180, %v7244
        %v7293 = vadd.f32 %v7181, %v7248
        %v7294 = vadd.f32 %v7182, %v7247
        %v7295 = vadd.f32 %v7183, %v7251
        %v7296 = vadd.f32 %v7184, %v7250
        %v7297 = vadd.f32 %v7185, %v7254
        %v7298 = vadd.f32 %v7186, %v7253
        %v7299 = vadd.f32 %v7187, %v7257
        %v7300 = vadd.f32 %v7188, %v7256
        %v7301 = vadd.f32 %v7189, %v7260
        %v7302 = vadd.f32 %v7190, %v7259
        %v7303 = vadd.f32 %v7191, %v7263
        %v7304 = vadd.f32 %v7192, %v7262
        %v7305 = vadd.f32 %v7193, %v7266
        %v7306 = vadd.f32 %v7194, %v7265
        %v7307 = vld [vmem:[%s3 + $0x12] sm:$0x1]
        %7309 = vset.pattern.permute.xlu0 0
        %7310 = vperm.xlu0 %7309, %v5180
        %v7311 = vpop.permute.xlu0 %7310
        %7314 = vset.pattern.permute.xlu0 0
        %7315 = vperm.xlu0 %7314, %v5183
        %v7316 = vpop.permute.xlu0 %7315
        %v7318 = vperm.slane %v7307, 0
        %v7319 = vmul.f32 %v5225, %v7318
        %v7320 = vmul.f32 %v5230, %v7318
        %v7321 = vmul.f32 %v5235, %v7318
        %v7322 = vmul.f32 %v5240, %v7318
        %v7323 = vmul.f32 %v5245, %v7318
        %v7324 = vmul.f32 %v5250, %v7318
        %v7325 = vmul.f32 %v5255, %v7318
        %v7326 = vmul.f32 %v5260, %v7318
        %v7327 = vmul.f32 %v5265, %v7318
        %v7328 = vmul.f32 %v5270, %v7318
        %v7329 = vmul.f32 %v5275, %v7318
        %v7330 = vmul.f32 %v5280, %v7318
        %v7331 = vmul.f32 %v5285, %v7318
        %v7332 = vmul.f32 %v5290, %v7318
        %v7333 = vmul.f32 %v5295, %v7318
        %v7334 = vmul.f32 %v5300, %v7318
        %v7335 = vmul.f32 %v5305, %v7318
        %v7336 = vmul.f32 %v5310, %v7318
        %v7337 = vmul.f32 %v7311, %v7318
        %v7338 = vmul.f32 %v7316, %v7318
        %v7339 = vadd.f32 %v7287, %v7319
        %v7340 = vadd.f32 %v7288, %v7320
        %v7341 = vadd.f32 %v7289, %v7321
        %v7342 = vadd.f32 %v7290, %v7322
        %v7343 = vadd.f32 %v7291, %v7323
        %v7344 = vadd.f32 %v7292, %v7324
        %v7345 = vadd.f32 %v7293, %v7325
        %v7346 = vadd.f32 %v7294, %v7326
        %v7347 = vadd.f32 %v7295, %v7327
        %v7348 = vadd.f32 %v7296, %v7328
        %v7349 = vadd.f32 %v7297, %v7329
        %v7350 = vadd.f32 %v7298, %v7330
        %v7351 = vadd.f32 %v7299, %v7331
        %v7352 = vadd.f32 %v7300, %v7332
        %v7353 = vadd.f32 %v7301, %v7333
        %v7354 = vadd.f32 %v7302, %v7334
        %v7355 = vadd.f32 %v7303, %v7335
        %v7356 = vadd.f32 %v7304, %v7336
        %v7357 = vadd.f32 %v7305, %v7337
        %v7358 = vadd.f32 %v7306, %v7338
        %v7359 = vld [vmem:[%s3 + $0x13] sm:$0x1]
        %7360 = vset.pattern.permute.xlu0 1
        %7361 = vperm.xlu0 %7360, %v5180
        %v7362 = vpop.permute.xlu0 %7361
        %7364 = vset.pattern.permute.xlu0 1
        %7365 = vperm.xlu0 %7364, %v5183
        %v7366 = vpop.permute.xlu0 %7365
        %v7368 = vperm.slane %v7359, 0
        %v7369 = vmul.f32 %v5364, %v7368
        %v7370 = vmul.f32 %v5368, %v7368
        %v7371 = vmul.f32 %v5372, %v7368
        %v7372 = vmul.f32 %v5376, %v7368
        %v7373 = vmul.f32 %v5380, %v7368
        %v7374 = vmul.f32 %v5384, %v7368
        %v7375 = vmul.f32 %v5388, %v7368
        %v7376 = vmul.f32 %v5392, %v7368
        %v7377 = vmul.f32 %v5396, %v7368
        %v7378 = vmul.f32 %v5400, %v7368
        %v7379 = vmul.f32 %v5404, %v7368
        %v7380 = vmul.f32 %v5408, %v7368
        %v7381 = vmul.f32 %v5412, %v7368
        %v7382 = vmul.f32 %v5416, %v7368
        %v7383 = vmul.f32 %v5420, %v7368
        %v7384 = vmul.f32 %v5424, %v7368
        %v7385 = vmul.f32 %v5428, %v7368
        %v7386 = vmul.f32 %v5432, %v7368
        %v7387 = vmul.f32 %v7362, %v7368
        %v7388 = vmul.f32 %v7366, %v7368
        %v7389 = vadd.f32 %v7339, %v7369
        %v7390 = vadd.f32 %v7340, %v7370
        %v7391 = vadd.f32 %v7341, %v7371
        %v7392 = vadd.f32 %v7342, %v7372
        %v7393 = vadd.f32 %v7343, %v7373
        %v7394 = vadd.f32 %v7344, %v7374
        %v7395 = vadd.f32 %v7345, %v7375
        %v7396 = vadd.f32 %v7346, %v7376
        %v7397 = vadd.f32 %v7347, %v7377
        %v7398 = vadd.f32 %v7348, %v7378
        %v7399 = vadd.f32 %v7349, %v7379
        %v7400 = vadd.f32 %v7350, %v7380
        %v7401 = vadd.f32 %v7351, %v7381
        %v7402 = vadd.f32 %v7352, %v7382
        %v7403 = vadd.f32 %v7353, %v7383
        %v7404 = vadd.f32 %v7354, %v7384
        %v7405 = vadd.f32 %v7355, %v7385
        %v7406 = vadd.f32 %v7356, %v7386
        %v7407 = vadd.f32 %v7357, %v7387
        %v7408 = vadd.f32 %v7358, %v7388
        %v7409 = vld [vmem:[%s3 + $0x14] sm:$0x1]
        %7410 = vset.pattern.permute.xlu0 2
        %7411 = vperm.xlu0 %7410, %v5180
        %v7412 = vpop.permute.xlu0 %7411
        %7414 = vset.pattern.permute.xlu0 2
        %7415 = vperm.xlu0 %7414, %v5183
        %v7416 = vpop.permute.xlu0 %7415
        %v7418 = vperm.slane %v7409, 0
        %v7419 = vmul.f32 %v5486, %v7418
        %v7420 = vmul.f32 %v5490, %v7418
        %v7421 = vmul.f32 %v5494, %v7418
        %v7422 = vmul.f32 %v5498, %v7418
        %v7423 = vmul.f32 %v5502, %v7418
        %v7424 = vmul.f32 %v5506, %v7418
        %v7425 = vmul.f32 %v5510, %v7418
        %v7426 = vmul.f32 %v5514, %v7418
        %v7427 = vmul.f32 %v5518, %v7418
        %v7428 = vmul.f32 %v5522, %v7418
        %v7429 = vmul.f32 %v5526, %v7418
        %v7430 = vmul.f32 %v5530, %v7418
        %v7431 = vmul.f32 %v5534, %v7418
        %v7432 = vmul.f32 %v5538, %v7418
        %v7433 = vmul.f32 %v5542, %v7418
        %v7434 = vmul.f32 %v5546, %v7418
        %v7435 = vmul.f32 %v5550, %v7418
        %v7436 = vmul.f32 %v5554, %v7418
        %v7437 = vmul.f32 %v7412, %v7418
        %v7438 = vmul.f32 %v7416, %v7418
        %v7439 = vadd.f32 %v7389, %v7419
        %v7440 = vadd.f32 %v7390, %v7420
        %v7441 = vadd.f32 %v7391, %v7421
        %v7442 = vadd.f32 %v7392, %v7422
        %v7443 = vadd.f32 %v7393, %v7423
        %v7444 = vadd.f32 %v7394, %v7424
        %v7445 = vadd.f32 %v7395, %v7425
        %v7446 = vadd.f32 %v7396, %v7426
        %v7447 = vadd.f32 %v7397, %v7427
        %v7448 = vadd.f32 %v7398, %v7428
        %v7449 = vadd.f32 %v7399, %v7429
        %v7450 = vadd.f32 %v7400, %v7430
        %v7451 = vadd.f32 %v7401, %v7431
        %v7452 = vadd.f32 %v7402, %v7432
        %v7453 = vadd.f32 %v7403, %v7433
        %v7454 = vadd.f32 %v7404, %v7434
        %v7455 = vadd.f32 %v7405, %v7435
        %v7456 = vadd.f32 %v7406, %v7436
        %v7457 = vadd.f32 %v7407, %v7437
        %v7458 = vadd.f32 %v7408, %v7438
        %v7459 = vld [vmem:[%s3 + $0x15] sm:$0x1]
        %7460 = vset.pattern.permute.xlu0 3
        %7461 = vperm.xlu0 %7460, %v5180
        %v7462 = vpop.permute.xlu0 %7461
        %7464 = vset.pattern.permute.xlu0 3
        %7465 = vperm.xlu0 %7464, %v5183
        %v7466 = vpop.permute.xlu0 %7465
        %v7468 = vperm.slane %v7459, 0
        %v7469 = vmul.f32 %v5608, %v7468
        %v7470 = vmul.f32 %v5612, %v7468
        %v7471 = vmul.f32 %v5616, %v7468
        %v7472 = vmul.f32 %v5620, %v7468
        %v7473 = vmul.f32 %v5624, %v7468
        %v7474 = vmul.f32 %v5628, %v7468
        %v7475 = vmul.f32 %v5632, %v7468
        %v7476 = vmul.f32 %v5636, %v7468
        %v7477 = vmul.f32 %v5640, %v7468
        %v7478 = vmul.f32 %v5644, %v7468
        %v7479 = vmul.f32 %v5648, %v7468
        %v7480 = vmul.f32 %v5652, %v7468
        %v7481 = vmul.f32 %v5656, %v7468
        %v7482 = vmul.f32 %v5660, %v7468
        %v7483 = vmul.f32 %v5664, %v7468
        %v7484 = vmul.f32 %v5668, %v7468
        %v7485 = vmul.f32 %v5672, %v7468
        %v7486 = vmul.f32 %v5676, %v7468
        %v7487 = vmul.f32 %v7462, %v7468
        %v7488 = vmul.f32 %v7466, %v7468
        %v7489 = vadd.f32 %v7439, %v7469
        %v7490 = vadd.f32 %v7440, %v7470
        %v7491 = vadd.f32 %v7441, %v7471
        %v7492 = vadd.f32 %v7442, %v7472
        %v7493 = vadd.f32 %v7443, %v7473
        %v7494 = vadd.f32 %v7444, %v7474
        %v7495 = vadd.f32 %v7445, %v7475
        %v7496 = vadd.f32 %v7446, %v7476
        %v7497 = vadd.f32 %v7447, %v7477
        %v7498 = vadd.f32 %v7448, %v7478
        %v7499 = vadd.f32 %v7449, %v7479
        %v7500 = vadd.f32 %v7450, %v7480
        %v7501 = vadd.f32 %v7451, %v7481
        %v7502 = vadd.f32 %v7452, %v7482
        %v7503 = vadd.f32 %v7453, %v7483
        %v7504 = vadd.f32 %v7454, %v7484
        %v7505 = vadd.f32 %v7455, %v7485
        %v7506 = vadd.f32 %v7456, %v7486
        %v7507 = vadd.f32 %v7457, %v7487
        %v7508 = vadd.f32 %v7458, %v7488
        %v7509 = vld [vmem:[%s3 + $0x16] sm:$0x1]
        %7510 = vset.pattern.permute.xlu0 4
        %7511 = vperm.xlu0 %7510, %v5180
        %v7512 = vpop.permute.xlu0 %7511
        %7514 = vset.pattern.permute.xlu0 4
        %7515 = vperm.xlu0 %7514, %v5183
        %v7516 = vpop.permute.xlu0 %7515
        %v7518 = vperm.slane %v7509, 0
        %v7519 = vmul.f32 %v5730, %v7518
        %v7520 = vmul.f32 %v5734, %v7518
        %v7521 = vmul.f32 %v5738, %v7518
        %v7522 = vmul.f32 %v5742, %v7518
        %v7523 = vmul.f32 %v5746, %v7518
        %v7524 = vmul.f32 %v5750, %v7518
        %v7525 = vmul.f32 %v5754, %v7518
        %v7526 = vmul.f32 %v5758, %v7518
        %v7527 = vmul.f32 %v5762, %v7518
        %v7528 = vmul.f32 %v5766, %v7518
        %v7529 = vmul.f32 %v5770, %v7518
        %v7530 = vmul.f32 %v5774, %v7518
        %v7531 = vmul.f32 %v5778, %v7518
        %v7532 = vmul.f32 %v5782, %v7518
        %v7533 = vmul.f32 %v5786, %v7518
        %v7534 = vmul.f32 %v5790, %v7518
        %v7535 = vmul.f32 %v5794, %v7518
        %v7536 = vmul.f32 %v5798, %v7518
        %v7537 = vmul.f32 %v7512, %v7518
        %v7538 = vmul.f32 %v7516, %v7518
        %v7539 = vadd.f32 %v7489, %v7519
        %v7540 = vadd.f32 %v7490, %v7520
        %v7541 = vadd.f32 %v7491, %v7521
        %v7542 = vadd.f32 %v7492, %v7522
        %v7543 = vadd.f32 %v7493, %v7523
        %v7544 = vadd.f32 %v7494, %v7524
        %v7545 = vadd.f32 %v7495, %v7525
        %v7546 = vadd.f32 %v7496, %v7526
        %v7547 = vadd.f32 %v7497, %v7527
        %v7548 = vadd.f32 %v7498, %v7528
        %v7549 = vadd.f32 %v7499, %v7529
        %v7550 = vadd.f32 %v7500, %v7530
        %v7551 = vadd.f32 %v7501, %v7531
        %v7552 = vadd.f32 %v7502, %v7532
        %v7553 = vadd.f32 %v7503, %v7533
        %v7554 = vadd.f32 %v7504, %v7534
        %v7555 = vadd.f32 %v7505, %v7535
        %v7556 = vadd.f32 %v7506, %v7536
        %v7557 = vadd.f32 %v7507, %v7537
        %v7558 = vadd.f32 %v7508, %v7538
        %v7559 = vld [vmem:[%s3 + $0x17] sm:$0x1]
        %7560 = vset.pattern.permute.xlu0 5
        %7561 = vperm.xlu0 %7560, %v5180
        %v7562 = vpop.permute.xlu0 %7561
        %7564 = vset.pattern.permute.xlu0 5
        %7565 = vperm.xlu0 %7564, %v5183
        %v7566 = vpop.permute.xlu0 %7565
        %v7568 = vperm.slane %v7559, 0
        %v7569 = vmul.f32 %v5852, %v7568
        %v7570 = vmul.f32 %v5856, %v7568
        %v7571 = vmul.f32 %v5860, %v7568
        %v7572 = vmul.f32 %v5864, %v7568
        %v7573 = vmul.f32 %v5868, %v7568
        %v7574 = vmul.f32 %v5872, %v7568
        %v7575 = vmul.f32 %v5876, %v7568
        %v7576 = vmul.f32 %v5880, %v7568
        %v7577 = vmul.f32 %v5884, %v7568
        %v7578 = vmul.f32 %v5888, %v7568
        %v7579 = vmul.f32 %v5892, %v7568
        %v7580 = vmul.f32 %v5896, %v7568
        %v7581 = vmul.f32 %v5900, %v7568
        %v7582 = vmul.f32 %v5904, %v7568
        %v7583 = vmul.f32 %v5908, %v7568
        %v7584 = vmul.f32 %v5912, %v7568
        %v7585 = vmul.f32 %v5916, %v7568
        %v7586 = vmul.f32 %v5920, %v7568
        %v7587 = vmul.f32 %v7562, %v7568
        %v7588 = vmul.f32 %v7566, %v7568
        %v7589 = vadd.f32 %v7539, %v7569
        %v7590 = vadd.f32 %v7540, %v7570
        %v7591 = vadd.f32 %v7541, %v7571
        %v7592 = vadd.f32 %v7542, %v7572
        %v7593 = vadd.f32 %v7543, %v7573
        %v7594 = vadd.f32 %v7544, %v7574
        %v7595 = vadd.f32 %v7545, %v7575
        %v7596 = vadd.f32 %v7546, %v7576
        %v7597 = vadd.f32 %v7547, %v7577
        %v7598 = vadd.f32 %v7548, %v7578
        %v7599 = vadd.f32 %v7549, %v7579
        %v7600 = vadd.f32 %v7550, %v7580
        %v7601 = vadd.f32 %v7551, %v7581
        %v7602 = vadd.f32 %v7552, %v7582
        %v7603 = vadd.f32 %v7553, %v7583
        %v7604 = vadd.f32 %v7554, %v7584
        %v7605 = vadd.f32 %v7555, %v7585
        %v7606 = vadd.f32 %v7556, %v7586
        %v7607 = vadd.f32 %v7557, %v7587
        %v7608 = vadd.f32 %v7558, %v7588
        %v7609 = vld [vmem:[%s3 + $0x18] sm:$0x1]
        %v7610 = vperm.slane %v7609, 0
        %v7611 = vmul.f32 %v5225, %v7610
        %v7612 = vmul.f32 %v5230, %v7610
        %v7613 = vmul.f32 %v5235, %v7610
        %v7614 = vmul.f32 %v5240, %v7610
        %v7615 = vmul.f32 %v5245, %v7610
        %v7616 = vmul.f32 %v5250, %v7610
        %v7617 = vmul.f32 %v5255, %v7610
        %v7618 = vmul.f32 %v5260, %v7610
        %v7619 = vmul.f32 %v5265, %v7610
        %v7620 = vmul.f32 %v5270, %v7610
        %v7621 = vmul.f32 %v5275, %v7610
        %v7622 = vmul.f32 %v5280, %v7610
        %v7623 = vmul.f32 %v5285, %v7610
        %v7624 = vmul.f32 %v5290, %v7610
        %v7625 = vmul.f32 %v5295, %v7610
        %v7626 = vmul.f32 %v5300, %v7610
        %v7627 = vmul.f32 %v5305, %v7610
        %v7628 = vmul.f32 %v5310, %v7610
        %v7629 = vmul.f32 %v7311, %v7610
        %v7630 = vmul.f32 %v7316, %v7610
        %v7651 = vrot.slane %v7611, 1
        %v7652 = vrot.slane %v7612, 1
        %v7653 = vsel %vm1362, %v7651, %v7652
        %v7654 = vrot.slane %v7613, 1
        %v7655 = vrot.slane %v7614, 1
        %v7656 = vsel %vm1362, %v7654, %v7655
        %v7657 = vrot.slane %v7615, 1
        %v7658 = vrot.slane %v7616, 1
        %v7659 = vsel %vm1362, %v7657, %v7658
        %v7660 = vrot.slane %v7617, 1
        %v7661 = vrot.slane %v7618, 1
        %v7662 = vsel %vm1362, %v7660, %v7661
        %v7663 = vrot.slane %v7619, 1
        %v7664 = vrot.slane %v7620, 1
        %v7665 = vsel %vm1362, %v7663, %v7664
        %v7666 = vrot.slane %v7621, 1
        %v7667 = vrot.slane %v7622, 1
        %v7668 = vsel %vm1362, %v7666, %v7667
        %v7669 = vrot.slane %v7623, 1
        %v7670 = vrot.slane %v7624, 1
        %v7671 = vsel %vm1362, %v7669, %v7670
        %v7672 = vrot.slane %v7625, 1
        %v7673 = vrot.slane %v7626, 1
        %v7674 = vsel %vm1362, %v7672, %v7673
        %v7675 = vrot.slane %v7627, 1
        %v7676 = vrot.slane %v7628, 1
        %v7677 = vsel %vm1362, %v7675, %v7676
        %v7678 = vrot.slane %v7629, 1
        %v7679 = vrot.slane %v7630, 1
        %v7680 = vsel %vm1362, %v7678, %v7679
        %v7701 = vadd.f32 %v7589, %v7653
        %v7702 = vadd.f32 %v7590, %v7652
        %v7703 = vadd.f32 %v7591, %v7656
        %v7704 = vadd.f32 %v7592, %v7655
        %v7705 = vadd.f32 %v7593, %v7659
        %v7706 = vadd.f32 %v7594, %v7658
        %v7707 = vadd.f32 %v7595, %v7662
        %v7708 = vadd.f32 %v7596, %v7661
        %v7709 = vadd.f32 %v7597, %v7665
        %v7710 = vadd.f32 %v7598, %v7664
        %v7711 = vadd.f32 %v7599, %v7668
        %v7712 = vadd.f32 %v7600, %v7667
        %v7713 = vadd.f32 %v7601, %v7671
        %v7714 = vadd.f32 %v7602, %v7670
        %v7715 = vadd.f32 %v7603, %v7674
        %v7716 = vadd.f32 %v7604, %v7673
        %v7717 = vadd.f32 %v7605, %v7677
        %v7718 = vadd.f32 %v7606, %v7676
        %v7719 = vadd.f32 %v7607, %v7680
        %v7720 = vadd.f32 %v7608, %v7679
        %v7721 = vld [vmem:[%s3 + $0x19] sm:$0x1]
        %v7722 = vperm.slane %v7721, 0
        %v7723 = vmul.f32 %v5364, %v7722
        %v7724 = vmul.f32 %v5368, %v7722
        %v7725 = vmul.f32 %v5372, %v7722
        %v7726 = vmul.f32 %v5376, %v7722
        %v7727 = vmul.f32 %v5380, %v7722
        %v7728 = vmul.f32 %v5384, %v7722
        %v7729 = vmul.f32 %v5388, %v7722
        %v7730 = vmul.f32 %v5392, %v7722
        %v7731 = vmul.f32 %v5396, %v7722
        %v7732 = vmul.f32 %v5400, %v7722
        %v7733 = vmul.f32 %v5404, %v7722
        %v7734 = vmul.f32 %v5408, %v7722
        %v7735 = vmul.f32 %v5412, %v7722
        %v7736 = vmul.f32 %v5416, %v7722
        %v7737 = vmul.f32 %v5420, %v7722
        %v7738 = vmul.f32 %v5424, %v7722
        %v7739 = vmul.f32 %v5428, %v7722
        %v7740 = vmul.f32 %v5432, %v7722
        %v7741 = vmul.f32 %v7362, %v7722
        %v7742 = vmul.f32 %v7366, %v7722
        %v7763 = vrot.slane %v7723, 1
        %v7764 = vrot.slane %v7724, 1
        %v7765 = vsel %vm1362, %v7763, %v7764
        %v7766 = vrot.slane %v7725, 1
        %v7767 = vrot.slane %v7726, 1
        %v7768 = vsel %vm1362, %v7766, %v7767
        %v7769 = vrot.slane %v7727, 1
        %v7770 = vrot.slane %v7728, 1
        %v7771 = vsel %vm1362, %v7769, %v7770
        %v7772 = vrot.slane %v7729, 1
        %v7773 = vrot.slane %v7730, 1
        %v7774 = vsel %vm1362, %v7772, %v7773
        %v7775 = vrot.slane %v7731, 1
        %v7776 = vrot.slane %v7732, 1
        %v7777 = vsel %vm1362, %v7775, %v7776
        %v7778 = vrot.slane %v7733, 1
        %v7779 = vrot.slane %v7734, 1
        %v7780 = vsel %vm1362, %v7778, %v7779
        %v7781 = vrot.slane %v7735, 1
        %v7782 = vrot.slane %v7736, 1
        %v7783 = vsel %vm1362, %v7781, %v7782
        %v7784 = vrot.slane %v7737, 1
        %v7785 = vrot.slane %v7738, 1
        %v7786 = vsel %vm1362, %v7784, %v7785
        %v7787 = vrot.slane %v7739, 1
        %v7788 = vrot.slane %v7740, 1
        %v7789 = vsel %vm1362, %v7787, %v7788
        %v7790 = vrot.slane %v7741, 1
        %v7791 = vrot.slane %v7742, 1
        %v7792 = vsel %vm1362, %v7790, %v7791
        %v7813 = vadd.f32 %v7701, %v7765
        %v7814 = vadd.f32 %v7702, %v7764
        %v7815 = vadd.f32 %v7703, %v7768
        %v7816 = vadd.f32 %v7704, %v7767
        %v7817 = vadd.f32 %v7705, %v7771
        %v7818 = vadd.f32 %v7706, %v7770
        %v7819 = vadd.f32 %v7707, %v7774
        %v7820 = vadd.f32 %v7708, %v7773
        %v7821 = vadd.f32 %v7709, %v7777
        %v7822 = vadd.f32 %v7710, %v7776
        %v7823 = vadd.f32 %v7711, %v7780
        %v7824 = vadd.f32 %v7712, %v7779
        %v7825 = vadd.f32 %v7713, %v7783
        %v7826 = vadd.f32 %v7714, %v7782
        %v7827 = vadd.f32 %v7715, %v7786
        %v7828 = vadd.f32 %v7716, %v7785
        %v7829 = vadd.f32 %v7717, %v7789
        %v7830 = vadd.f32 %v7718, %v7788
        %v7831 = vadd.f32 %v7719, %v7792
        %v7832 = vadd.f32 %v7720, %v7791
        %v7833 = vld [vmem:[%s3 + $0x1a] sm:$0x1]
        %v7834 = vperm.slane %v7833, 0
        %v7835 = vmul.f32 %v5486, %v7834
        %v7836 = vmul.f32 %v5490, %v7834
        %v7837 = vmul.f32 %v5494, %v7834
        %v7838 = vmul.f32 %v5498, %v7834
        %v7839 = vmul.f32 %v5502, %v7834
        %v7840 = vmul.f32 %v5506, %v7834
        %v7841 = vmul.f32 %v5510, %v7834
        %v7842 = vmul.f32 %v5514, %v7834
        %v7843 = vmul.f32 %v5518, %v7834
        %v7844 = vmul.f32 %v5522, %v7834
        %v7845 = vmul.f32 %v5526, %v7834
        %v7846 = vmul.f32 %v5530, %v7834
        %v7847 = vmul.f32 %v5534, %v7834
        %v7848 = vmul.f32 %v5538, %v7834
        %v7849 = vmul.f32 %v5542, %v7834
        %v7850 = vmul.f32 %v5546, %v7834
        %v7851 = vmul.f32 %v5550, %v7834
        %v7852 = vmul.f32 %v5554, %v7834
        %v7853 = vmul.f32 %v7412, %v7834
        %v7854 = vmul.f32 %v7416, %v7834
        %v7875 = vrot.slane %v7835, 1
        %v7876 = vrot.slane %v7836, 1
        %v7877 = vsel %vm1362, %v7875, %v7876
        %v7878 = vrot.slane %v7837, 1
        %v7879 = vrot.slane %v7838, 1
        %v7880 = vsel %vm1362, %v7878, %v7879
        %v7881 = vrot.slane %v7839, 1
        %v7882 = vrot.slane %v7840, 1
        %v7883 = vsel %vm1362, %v7881, %v7882
        %v7884 = vrot.slane %v7841, 1
        %v7885 = vrot.slane %v7842, 1
        %v7886 = vsel %vm1362, %v7884, %v7885
        %v7887 = vrot.slane %v7843, 1
        %v7888 = vrot.slane %v7844, 1
        %v7889 = vsel %vm1362, %v7887, %v7888
        %v7890 = vrot.slane %v7845, 1
        %v7891 = vrot.slane %v7846, 1
        %v7892 = vsel %vm1362, %v7890, %v7891
        %v7893 = vrot.slane %v7847, 1
        %v7894 = vrot.slane %v7848, 1
        %v7895 = vsel %vm1362, %v7893, %v7894
        %v7896 = vrot.slane %v7849, 1
        %v7897 = vrot.slane %v7850, 1
        %v7898 = vsel %vm1362, %v7896, %v7897
        %v7899 = vrot.slane %v7851, 1
        %v7900 = vrot.slane %v7852, 1
        %v7901 = vsel %vm1362, %v7899, %v7900
        %v7902 = vrot.slane %v7853, 1
        %v7903 = vrot.slane %v7854, 1
        %v7904 = vsel %vm1362, %v7902, %v7903
        %v7925 = vadd.f32 %v7813, %v7877
        %v7926 = vadd.f32 %v7814, %v7876
        %v7927 = vadd.f32 %v7815, %v7880
        %v7928 = vadd.f32 %v7816, %v7879
        %v7929 = vadd.f32 %v7817, %v7883
        %v7930 = vadd.f32 %v7818, %v7882
        %v7931 = vadd.f32 %v7819, %v7886
        %v7932 = vadd.f32 %v7820, %v7885
        %v7933 = vadd.f32 %v7821, %v7889
        %v7934 = vadd.f32 %v7822, %v7888
        %v7935 = vadd.f32 %v7823, %v7892
        %v7936 = vadd.f32 %v7824, %v7891
        %v7937 = vadd.f32 %v7825, %v7895
        %v7938 = vadd.f32 %v7826, %v7894
        %v7939 = vadd.f32 %v7827, %v7898
        %v7940 = vadd.f32 %v7828, %v7897
        %v7941 = vadd.f32 %v7829, %v7901
        %v7942 = vadd.f32 %v7830, %v7900
        %v7943 = vadd.f32 %v7831, %v7904
        %v7944 = vadd.f32 %v7832, %v7903
        %v7945 = vld [vmem:[%s3 + $0x1b] sm:$0x1]
        %v7946 = vperm.slane %v7945, 0
        %v7947 = vmul.f32 %v5608, %v7946
        %v7948 = vmul.f32 %v5612, %v7946
        %v7949 = vmul.f32 %v5616, %v7946
        %v7950 = vmul.f32 %v5620, %v7946
        %v7951 = vmul.f32 %v5624, %v7946
        %v7952 = vmul.f32 %v5628, %v7946
        %v7953 = vmul.f32 %v5632, %v7946
        %v7954 = vmul.f32 %v5636, %v7946
        %v7955 = vmul.f32 %v5640, %v7946
        %v7956 = vmul.f32 %v5644, %v7946
        %v7957 = vmul.f32 %v5648, %v7946
        %v7958 = vmul.f32 %v5652, %v7946
        %v7959 = vmul.f32 %v5656, %v7946
        %v7960 = vmul.f32 %v5660, %v7946
        %v7961 = vmul.f32 %v5664, %v7946
        %v7962 = vmul.f32 %v5668, %v7946
        %v7963 = vmul.f32 %v5672, %v7946
        %v7964 = vmul.f32 %v5676, %v7946
        %v7965 = vmul.f32 %v7462, %v7946
        %v7966 = vmul.f32 %v7466, %v7946
        %v7987 = vrot.slane %v7947, 1
        %v7988 = vrot.slane %v7948, 1
        %v7989 = vsel %vm1362, %v7987, %v7988
        %v7990 = vrot.slane %v7949, 1
        %v7991 = vrot.slane %v7950, 1
        %v7992 = vsel %vm1362, %v7990, %v7991
        %v7993 = vrot.slane %v7951, 1
        %v7994 = vrot.slane %v7952, 1
        %v7995 = vsel %vm1362, %v7993, %v7994
        %v7996 = vrot.slane %v7953, 1
        %v7997 = vrot.slane %v7954, 1
        %v7998 = vsel %vm1362, %v7996, %v7997
        %v7999 = vrot.slane %v7955, 1
        %v8000 = vrot.slane %v7956, 1
        %v8001 = vsel %vm1362, %v7999, %v8000
        %v8002 = vrot.slane %v7957, 1
        %v8003 = vrot.slane %v7958, 1
        %v8004 = vsel %vm1362, %v8002, %v8003
        %v8005 = vrot.slane %v7959, 1
        %v8006 = vrot.slane %v7960, 1
        %v8007 = vsel %vm1362, %v8005, %v8006
        %v8008 = vrot.slane %v7961, 1
        %v8009 = vrot.slane %v7962, 1
        %v8010 = vsel %vm1362, %v8008, %v8009
        %v8011 = vrot.slane %v7963, 1
        %v8012 = vrot.slane %v7964, 1
        %v8013 = vsel %vm1362, %v8011, %v8012
        %v8014 = vrot.slane %v7965, 1
        %v8015 = vrot.slane %v7966, 1
        %v8016 = vsel %vm1362, %v8014, %v8015
        %v8037 = vadd.f32 %v7925, %v7989
        %v8038 = vadd.f32 %v7926, %v7988
        %v8039 = vadd.f32 %v7927, %v7992
        %v8040 = vadd.f32 %v7928, %v7991
        %v8041 = vadd.f32 %v7929, %v7995
        %v8042 = vadd.f32 %v7930, %v7994
        %v8043 = vadd.f32 %v7931, %v7998
        %v8044 = vadd.f32 %v7932, %v7997
        %v8045 = vadd.f32 %v7933, %v8001
        %v8046 = vadd.f32 %v7934, %v8000
        %v8047 = vadd.f32 %v7935, %v8004
        %v8048 = vadd.f32 %v7936, %v8003
        %v8049 = vadd.f32 %v7937, %v8007
        %v8050 = vadd.f32 %v7938, %v8006
        %v8051 = vadd.f32 %v7939, %v8010
        %v8052 = vadd.f32 %v7940, %v8009
        %v8053 = vadd.f32 %v7941, %v8013
        %v8054 = vadd.f32 %v7942, %v8012
        %v8055 = vadd.f32 %v7943, %v8016
        %v8056 = vadd.f32 %v7944, %v8015
        %v8057 = vld [vmem:[%s3 + $0x1c] sm:$0x1]
        %v8058 = vperm.slane %v8057, 0
        %v8059 = vmul.f32 %v5730, %v8058
        %v8060 = vmul.f32 %v5734, %v8058
        %v8061 = vmul.f32 %v5738, %v8058
        %v8062 = vmul.f32 %v5742, %v8058
        %v8063 = vmul.f32 %v5746, %v8058
        %v8064 = vmul.f32 %v5750, %v8058
        %v8065 = vmul.f32 %v5754, %v8058
        %v8066 = vmul.f32 %v5758, %v8058
        %v8067 = vmul.f32 %v5762, %v8058
        %v8068 = vmul.f32 %v5766, %v8058
        %v8069 = vmul.f32 %v5770, %v8058
        %v8070 = vmul.f32 %v5774, %v8058
        %v8071 = vmul.f32 %v5778, %v8058
        %v8072 = vmul.f32 %v5782, %v8058
        %v8073 = vmul.f32 %v5786, %v8058
        %v8074 = vmul.f32 %v5790, %v8058
        %v8075 = vmul.f32 %v5794, %v8058
        %v8076 = vmul.f32 %v5798, %v8058
        %v8077 = vmul.f32 %v7512, %v8058
        %v8078 = vmul.f32 %v7516, %v8058
        %v8099 = vrot.slane %v8059, 1
        %v8100 = vrot.slane %v8060, 1
        %v8101 = vsel %vm1362, %v8099, %v8100
        %v8102 = vrot.slane %v8061, 1
        %v8103 = vrot.slane %v8062, 1
        %v8104 = vsel %vm1362, %v8102, %v8103
        %v8105 = vrot.slane %v8063, 1
        %v8106 = vrot.slane %v8064, 1
        %v8107 = vsel %vm1362, %v8105, %v8106
        %v8108 = vrot.slane %v8065, 1
        %v8109 = vrot.slane %v8066, 1
        %v8110 = vsel %vm1362, %v8108, %v8109
        %v8111 = vrot.slane %v8067, 1
        %v8112 = vrot.slane %v8068, 1
        %v8113 = vsel %vm1362, %v8111, %v8112
        %v8114 = vrot.slane %v8069, 1
        %v8115 = vrot.slane %v8070, 1
        %v8116 = vsel %vm1362, %v8114, %v8115
        %v8117 = vrot.slane %v8071, 1
        %v8118 = vrot.slane %v8072, 1
        %v8119 = vsel %vm1362, %v8117, %v8118
        %v8120 = vrot.slane %v8073, 1
        %v8121 = vrot.slane %v8074, 1
        %v8122 = vsel %vm1362, %v8120, %v8121
        %v8123 = vrot.slane %v8075, 1
        %v8124 = vrot.slane %v8076, 1
        %v8125 = vsel %vm1362, %v8123, %v8124
        %v8126 = vrot.slane %v8077, 1
        %v8127 = vrot.slane %v8078, 1
        %v8128 = vsel %vm1362, %v8126, %v8127
        %v8149 = vadd.f32 %v8037, %v8101
        %v8150 = vadd.f32 %v8038, %v8100
        %v8151 = vadd.f32 %v8039, %v8104
        %v8152 = vadd.f32 %v8040, %v8103
        %v8153 = vadd.f32 %v8041, %v8107
        %v8154 = vadd.f32 %v8042, %v8106
        %v8155 = vadd.f32 %v8043, %v8110
        %v8156 = vadd.f32 %v8044, %v8109
        %v8157 = vadd.f32 %v8045, %v8113
        %v8158 = vadd.f32 %v8046, %v8112
        %v8159 = vadd.f32 %v8047, %v8116
        %v8160 = vadd.f32 %v8048, %v8115
        %v8161 = vadd.f32 %v8049, %v8119
        %v8162 = vadd.f32 %v8050, %v8118
        %v8163 = vadd.f32 %v8051, %v8122
        %v8164 = vadd.f32 %v8052, %v8121
        %v8165 = vadd.f32 %v8053, %v8125
        %v8166 = vadd.f32 %v8054, %v8124
        %v8167 = vadd.f32 %v8055, %v8128
        %v8168 = vadd.f32 %v8056, %v8127
        %v8169 = vld [vmem:[%s3 + $0x1d] sm:$0x1]
        %v8170 = vperm.slane %v8169, 0
        %v8171 = vmul.f32 %v5852, %v8170
        %v8172 = vmul.f32 %v5856, %v8170
        %v8173 = vmul.f32 %v5860, %v8170
        %v8174 = vmul.f32 %v5864, %v8170
        %v8175 = vmul.f32 %v5868, %v8170
        %v8176 = vmul.f32 %v5872, %v8170
        %v8177 = vmul.f32 %v5876, %v8170
        %v8178 = vmul.f32 %v5880, %v8170
        %v8179 = vmul.f32 %v5884, %v8170
        %v8180 = vmul.f32 %v5888, %v8170
        %v8181 = vmul.f32 %v5892, %v8170
        %v8182 = vmul.f32 %v5896, %v8170
        %v8183 = vmul.f32 %v5900, %v8170
        %v8184 = vmul.f32 %v5904, %v8170
        %v8185 = vmul.f32 %v5908, %v8170
        %v8186 = vmul.f32 %v5912, %v8170
        %v8187 = vmul.f32 %v5916, %v8170
        %v8188 = vmul.f32 %v5920, %v8170
        %v8189 = vmul.f32 %v7562, %v8170
        %v8190 = vmul.f32 %v7566, %v8170
        %v8211 = vrot.slane %v8171, 1
        %v8212 = vrot.slane %v8172, 1
        %v8213 = vsel %vm1362, %v8211, %v8212
        %v8214 = vrot.slane %v8173, 1
        %v8215 = vrot.slane %v8174, 1
        %v8216 = vsel %vm1362, %v8214, %v8215
        %v8217 = vrot.slane %v8175, 1
        %v8218 = vrot.slane %v8176, 1
        %v8219 = vsel %vm1362, %v8217, %v8218
        %v8220 = vrot.slane %v8177, 1
        %v8221 = vrot.slane %v8178, 1
        %v8222 = vsel %vm1362, %v8220, %v8221
        %v8223 = vrot.slane %v8179, 1
        %v8224 = vrot.slane %v8180, 1
        %v8225 = vsel %vm1362, %v8223, %v8224
        %v8226 = vrot.slane %v8181, 1
        %v8227 = vrot.slane %v8182, 1
        %v8228 = vsel %vm1362, %v8226, %v8227
        %v8229 = vrot.slane %v8183, 1
        %v8230 = vrot.slane %v8184, 1
        %v8231 = vsel %vm1362, %v8229, %v8230
        %v8232 = vrot.slane %v8185, 1
        %v8233 = vrot.slane %v8186, 1
        %v8234 = vsel %vm1362, %v8232, %v8233
        %v8235 = vrot.slane %v8187, 1
        %v8236 = vrot.slane %v8188, 1
        %v8237 = vsel %vm1362, %v8235, %v8236
        %v8238 = vrot.slane %v8189, 1
        %v8239 = vrot.slane %v8190, 1
        %v8240 = vsel %vm1362, %v8238, %v8239
        %v8261 = vadd.f32 %v8149, %v8213
        %v8262 = vadd.f32 %v8150, %v8212
        %v8263 = vadd.f32 %v8151, %v8216
        %v8264 = vadd.f32 %v8152, %v8215
        %v8265 = vadd.f32 %v8153, %v8219
        %v8266 = vadd.f32 %v8154, %v8218
        %v8267 = vadd.f32 %v8155, %v8222
        %v8268 = vadd.f32 %v8156, %v8221
        %v8269 = vadd.f32 %v8157, %v8225
        %v8270 = vadd.f32 %v8158, %v8224
        %v8271 = vadd.f32 %v8159, %v8228
        %v8272 = vadd.f32 %v8160, %v8227
        %v8273 = vadd.f32 %v8161, %v8231
        %v8274 = vadd.f32 %v8162, %v8230
        %v8275 = vadd.f32 %v8163, %v8234
        %v8276 = vadd.f32 %v8164, %v8233
        %v8277 = vadd.f32 %v8165, %v8237
        %v8278 = vadd.f32 %v8166, %v8236
        %v8279 = vadd.f32 %v8167, %v8240
        %v8280 = vadd.f32 %v8168, %v8239
        %v8281 = vld [vmem:[%s3 + $0x1e] sm:$0x1]
        %v8282 = vperm.slane %v8281, 0
        %v8283 = vmul.f32 %v5225, %v8282
        %v8284 = vmul.f32 %v5230, %v8282
        %v8285 = vmul.f32 %v5235, %v8282
        %v8286 = vmul.f32 %v5240, %v8282
        %v8287 = vmul.f32 %v5245, %v8282
        %v8288 = vmul.f32 %v5250, %v8282
        %v8289 = vmul.f32 %v5255, %v8282
        %v8290 = vmul.f32 %v5260, %v8282
        %v8291 = vmul.f32 %v5265, %v8282
        %v8292 = vmul.f32 %v5270, %v8282
        %v8293 = vmul.f32 %v5275, %v8282
        %v8294 = vmul.f32 %v5280, %v8282
        %v8295 = vmul.f32 %v5285, %v8282
        %v8296 = vmul.f32 %v5290, %v8282
        %v8297 = vmul.f32 %v5295, %v8282
        %v8298 = vmul.f32 %v5300, %v8282
        %v8299 = vmul.f32 %v5305, %v8282
        %v8300 = vmul.f32 %v5310, %v8282
        %v8301 = vmul.f32 %v7311, %v8282
        %v8302 = vmul.f32 %v7316, %v8282
        %v8323 = vrot.slane %v8283, 2
        %v8324 = vrot.slane %v8284, 2
        %v8325 = vsel %vm1869, %v8323, %v8324
        %v8326 = vrot.slane %v8285, 2
        %v8327 = vrot.slane %v8286, 2
        %v8328 = vsel %vm1869, %v8326, %v8327
        %v8329 = vrot.slane %v8287, 2
        %v8330 = vrot.slane %v8288, 2
        %v8331 = vsel %vm1869, %v8329, %v8330
        %v8332 = vrot.slane %v8289, 2
        %v8333 = vrot.slane %v8290, 2
        %v8334 = vsel %vm1869, %v8332, %v8333
        %v8335 = vrot.slane %v8291, 2
        %v8336 = vrot.slane %v8292, 2
        %v8337 = vsel %vm1869, %v8335, %v8336
        %v8338 = vrot.slane %v8293, 2
        %v8339 = vrot.slane %v8294, 2
        %v8340 = vsel %vm1869, %v8338, %v8339
        %v8341 = vrot.slane %v8295, 2
        %v8342 = vrot.slane %v8296, 2
        %v8343 = vsel %vm1869, %v8341, %v8342
        %v8344 = vrot.slane %v8297, 2
        %v8345 = vrot.slane %v8298, 2
        %v8346 = vsel %vm1869, %v8344, %v8345
        %v8347 = vrot.slane %v8299, 2
        %v8348 = vrot.slane %v8300, 2
        %v8349 = vsel %vm1869, %v8347, %v8348
        %v8350 = vrot.slane %v8301, 2
        %v8351 = vrot.slane %v8302, 2
        %v8352 = vsel %vm1869, %v8350, %v8351
        %v8373 = vadd.f32 %v8261, %v8325
        %v8374 = vadd.f32 %v8262, %v8324
        %v8375 = vadd.f32 %v8263, %v8328
        %v8376 = vadd.f32 %v8264, %v8327
        %v8377 = vadd.f32 %v8265, %v8331
        %v8378 = vadd.f32 %v8266, %v8330
        %v8379 = vadd.f32 %v8267, %v8334
        %v8380 = vadd.f32 %v8268, %v8333
        %v8381 = vadd.f32 %v8269, %v8337
        %v8382 = vadd.f32 %v8270, %v8336
        %v8383 = vadd.f32 %v8271, %v8340
        %v8384 = vadd.f32 %v8272, %v8339
        %v8385 = vadd.f32 %v8273, %v8343
        %v8386 = vadd.f32 %v8274, %v8342
        %v8387 = vadd.f32 %v8275, %v8346
        %v8388 = vadd.f32 %v8276, %v8345
        %v8389 = vadd.f32 %v8277, %v8349
        %v8390 = vadd.f32 %v8278, %v8348
        %v8391 = vadd.f32 %v8279, %v8352
        %v8392 = vadd.f32 %v8280, %v8351
        %v8393 = vld [vmem:[%s3 + $0x1f] sm:$0x1]
        %v8394 = vperm.slane %v8393, 0
        %v8395 = vmul.f32 %v5364, %v8394
        %v8396 = vmul.f32 %v5368, %v8394
        %v8397 = vmul.f32 %v5372, %v8394
        %v8398 = vmul.f32 %v5376, %v8394
        %v8399 = vmul.f32 %v5380, %v8394
        %v8400 = vmul.f32 %v5384, %v8394
        %v8401 = vmul.f32 %v5388, %v8394
        %v8402 = vmul.f32 %v5392, %v8394
        %v8403 = vmul.f32 %v5396, %v8394
        %v8404 = vmul.f32 %v5400, %v8394
        %v8405 = vmul.f32 %v5404, %v8394
        %v8406 = vmul.f32 %v5408, %v8394
        %v8407 = vmul.f32 %v5412, %v8394
        %v8408 = vmul.f32 %v5416, %v8394
        %v8409 = vmul.f32 %v5420, %v8394
        %v8410 = vmul.f32 %v5424, %v8394
        %v8411 = vmul.f32 %v5428, %v8394
        %v8412 = vmul.f32 %v5432, %v8394
        %v8413 = vmul.f32 %v7362, %v8394
        %v8414 = vmul.f32 %v7366, %v8394
        %v8435 = vrot.slane %v8395, 2
        %v8436 = vrot.slane %v8396, 2
        %v8437 = vsel %vm1869, %v8435, %v8436
        %v8438 = vrot.slane %v8397, 2
        %v8439 = vrot.slane %v8398, 2
        %v8440 = vsel %vm1869, %v8438, %v8439
        %v8441 = vrot.slane %v8399, 2
        %v8442 = vrot.slane %v8400, 2
        %v8443 = vsel %vm1869, %v8441, %v8442
        %v8444 = vrot.slane %v8401, 2
        %v8445 = vrot.slane %v8402, 2
        %v8446 = vsel %vm1869, %v8444, %v8445
        %v8447 = vrot.slane %v8403, 2
        %v8448 = vrot.slane %v8404, 2
        %v8449 = vsel %vm1869, %v8447, %v8448
        %v8450 = vrot.slane %v8405, 2
        %v8451 = vrot.slane %v8406, 2
        %v8452 = vsel %vm1869, %v8450, %v8451
        %v8453 = vrot.slane %v8407, 2
        %v8454 = vrot.slane %v8408, 2
        %v8455 = vsel %vm1869, %v8453, %v8454
        %v8456 = vrot.slane %v8409, 2
        %v8457 = vrot.slane %v8410, 2
        %v8458 = vsel %vm1869, %v8456, %v8457
        %v8459 = vrot.slane %v8411, 2
        %v8460 = vrot.slane %v8412, 2
        %v8461 = vsel %vm1869, %v8459, %v8460
        %v8462 = vrot.slane %v8413, 2
        %v8463 = vrot.slane %v8414, 2
        %v8464 = vsel %vm1869, %v8462, %v8463
        %v8485 = vadd.f32 %v8373, %v8437
        %v8486 = vadd.f32 %v8374, %v8436
        %v8487 = vadd.f32 %v8375, %v8440
        %v8488 = vadd.f32 %v8376, %v8439
        %v8489 = vadd.f32 %v8377, %v8443
        %v8490 = vadd.f32 %v8378, %v8442
        %v8491 = vadd.f32 %v8379, %v8446
        %v8492 = vadd.f32 %v8380, %v8445
        %v8493 = vadd.f32 %v8381, %v8449
        %v8494 = vadd.f32 %v8382, %v8448
        %v8495 = vadd.f32 %v8383, %v8452
        %v8496 = vadd.f32 %v8384, %v8451
        %v8497 = vadd.f32 %v8385, %v8455
        %v8498 = vadd.f32 %v8386, %v8454
        %v8499 = vadd.f32 %v8387, %v8458
        %v8500 = vadd.f32 %v8388, %v8457
        %v8501 = vadd.f32 %v8389, %v8461
        %v8502 = vadd.f32 %v8390, %v8460
        %v8503 = vadd.f32 %v8391, %v8464
        %v8504 = vadd.f32 %v8392, %v8463
        %v8505 = vld [vmem:[%s3 + $0x20] sm:$0x1]
        %v8506 = vperm.slane %v8505, 0
        %v8507 = vmul.f32 %v5486, %v8506
        %v8508 = vmul.f32 %v5490, %v8506
        %v8509 = vmul.f32 %v5494, %v8506
        %v8510 = vmul.f32 %v5498, %v8506
        %v8511 = vmul.f32 %v5502, %v8506
        %v8512 = vmul.f32 %v5506, %v8506
        %v8513 = vmul.f32 %v5510, %v8506
        %v8514 = vmul.f32 %v5514, %v8506
        %v8515 = vmul.f32 %v5518, %v8506
        %v8516 = vmul.f32 %v5522, %v8506
        %v8517 = vmul.f32 %v5526, %v8506
        %v8518 = vmul.f32 %v5530, %v8506
        %v8519 = vmul.f32 %v5534, %v8506
        %v8520 = vmul.f32 %v5538, %v8506
        %v8521 = vmul.f32 %v5542, %v8506
        %v8522 = vmul.f32 %v5546, %v8506
        %v8523 = vmul.f32 %v5550, %v8506
        %v8524 = vmul.f32 %v5554, %v8506
        %v8525 = vmul.f32 %v7412, %v8506
        %v8526 = vmul.f32 %v7416, %v8506
        %v8547 = vrot.slane %v8507, 2
        %v8548 = vrot.slane %v8508, 2
        %v8549 = vsel %vm1869, %v8547, %v8548
        %v8550 = vrot.slane %v8509, 2
        %v8551 = vrot.slane %v8510, 2
        %v8552 = vsel %vm1869, %v8550, %v8551
        %v8553 = vrot.slane %v8511, 2
        %v8554 = vrot.slane %v8512, 2
        %v8555 = vsel %vm1869, %v8553, %v8554
        %v8556 = vrot.slane %v8513, 2
        %v8557 = vrot.slane %v8514, 2
        %v8558 = vsel %vm1869, %v8556, %v8557
        %v8559 = vrot.slane %v8515, 2
        %v8560 = vrot.slane %v8516, 2
        %v8561 = vsel %vm1869, %v8559, %v8560
        %v8562 = vrot.slane %v8517, 2
        %v8563 = vrot.slane %v8518, 2
        %v8564 = vsel %vm1869, %v8562, %v8563
        %v8565 = vrot.slane %v8519, 2
        %v8566 = vrot.slane %v8520, 2
        %v8567 = vsel %vm1869, %v8565, %v8566
        %v8568 = vrot.slane %v8521, 2
        %v8569 = vrot.slane %v8522, 2
        %v8570 = vsel %vm1869, %v8568, %v8569
        %v8571 = vrot.slane %v8523, 2
        %v8572 = vrot.slane %v8524, 2
        %v8573 = vsel %vm1869, %v8571, %v8572
        %v8574 = vrot.slane %v8525, 2
        %v8575 = vrot.slane %v8526, 2
        %v8576 = vsel %vm1869, %v8574, %v8575
        %v8597 = vadd.f32 %v8485, %v8549
        %v8598 = vadd.f32 %v8486, %v8548
        %v8599 = vadd.f32 %v8487, %v8552
        %v8600 = vadd.f32 %v8488, %v8551
        %v8601 = vadd.f32 %v8489, %v8555
        %v8602 = vadd.f32 %v8490, %v8554
        %v8603 = vadd.f32 %v8491, %v8558
        %v8604 = vadd.f32 %v8492, %v8557
        %v8605 = vadd.f32 %v8493, %v8561
        %v8606 = vadd.f32 %v8494, %v8560
        %v8607 = vadd.f32 %v8495, %v8564
        %v8608 = vadd.f32 %v8496, %v8563
        %v8609 = vadd.f32 %v8497, %v8567
        %v8610 = vadd.f32 %v8498, %v8566
        %v8611 = vadd.f32 %v8499, %v8570
        %v8612 = vadd.f32 %v8500, %v8569
        %v8613 = vadd.f32 %v8501, %v8573
        %v8614 = vadd.f32 %v8502, %v8572
        %v8615 = vadd.f32 %v8503, %v8576
        %v8616 = vadd.f32 %v8504, %v8575
        %v8617 = vld [vmem:[%s3 + $0x21] sm:$0x1]
        %v8618 = vperm.slane %v8617, 0
        %v8619 = vmul.f32 %v5608, %v8618
        %v8620 = vmul.f32 %v5612, %v8618
        %v8621 = vmul.f32 %v5616, %v8618
        %v8622 = vmul.f32 %v5620, %v8618
        %v8623 = vmul.f32 %v5624, %v8618
        %v8624 = vmul.f32 %v5628, %v8618
        %v8625 = vmul.f32 %v5632, %v8618
        %v8626 = vmul.f32 %v5636, %v8618
        %v8627 = vmul.f32 %v5640, %v8618
        %v8628 = vmul.f32 %v5644, %v8618
        %v8629 = vmul.f32 %v5648, %v8618
        %v8630 = vmul.f32 %v5652, %v8618
        %v8631 = vmul.f32 %v5656, %v8618
        %v8632 = vmul.f32 %v5660, %v8618
        %v8633 = vmul.f32 %v5664, %v8618
        %v8634 = vmul.f32 %v5668, %v8618
        %v8635 = vmul.f32 %v5672, %v8618
        %v8636 = vmul.f32 %v5676, %v8618
        %v8637 = vmul.f32 %v7462, %v8618
        %v8638 = vmul.f32 %v7466, %v8618
        %v8659 = vrot.slane %v8619, 2
        %v8660 = vrot.slane %v8620, 2
        %v8661 = vsel %vm1869, %v8659, %v8660
        %v8662 = vrot.slane %v8621, 2
        %v8663 = vrot.slane %v8622, 2
        %v8664 = vsel %vm1869, %v8662, %v8663
        %v8665 = vrot.slane %v8623, 2
        %v8666 = vrot.slane %v8624, 2
        %v8667 = vsel %vm1869, %v8665, %v8666
        %v8668 = vrot.slane %v8625, 2
        %v8669 = vrot.slane %v8626, 2
        %v8670 = vsel %vm1869, %v8668, %v8669
        %v8671 = vrot.slane %v8627, 2
        %v8672 = vrot.slane %v8628, 2
        %v8673 = vsel %vm1869, %v8671, %v8672
        %v8674 = vrot.slane %v8629, 2
        %v8675 = vrot.slane %v8630, 2
        %v8676 = vsel %vm1869, %v8674, %v8675
        %v8677 = vrot.slane %v8631, 2
        %v8678 = vrot.slane %v8632, 2
        %v8679 = vsel %vm1869, %v8677, %v8678
        %v8680 = vrot.slane %v8633, 2
        %v8681 = vrot.slane %v8634, 2
        %v8682 = vsel %vm1869, %v8680, %v8681
        %v8683 = vrot.slane %v8635, 2
        %v8684 = vrot.slane %v8636, 2
        %v8685 = vsel %vm1869, %v8683, %v8684
        %v8686 = vrot.slane %v8637, 2
        %v8687 = vrot.slane %v8638, 2
        %v8688 = vsel %vm1869, %v8686, %v8687
        %v8709 = vadd.f32 %v8597, %v8661
        %v8710 = vadd.f32 %v8598, %v8660
        %v8711 = vadd.f32 %v8599, %v8664
        %v8712 = vadd.f32 %v8600, %v8663
        %v8713 = vadd.f32 %v8601, %v8667
        %v8714 = vadd.f32 %v8602, %v8666
        %v8715 = vadd.f32 %v8603, %v8670
        %v8716 = vadd.f32 %v8604, %v8669
        %v8717 = vadd.f32 %v8605, %v8673
        %v8718 = vadd.f32 %v8606, %v8672
        %v8719 = vadd.f32 %v8607, %v8676
        %v8720 = vadd.f32 %v8608, %v8675
        %v8721 = vadd.f32 %v8609, %v8679
        %v8722 = vadd.f32 %v8610, %v8678
        %v8723 = vadd.f32 %v8611, %v8682
        %v8724 = vadd.f32 %v8612, %v8681
        %v8725 = vadd.f32 %v8613, %v8685
        %v8726 = vadd.f32 %v8614, %v8684
        %v8727 = vadd.f32 %v8615, %v8688
        %v8728 = vadd.f32 %v8616, %v8687
        %v8729 = vld [vmem:[%s3 + $0x22] sm:$0x1]
        %v8730 = vperm.slane %v8729, 0
        %v8731 = vmul.f32 %v5730, %v8730
        %v8732 = vmul.f32 %v5734, %v8730
        %v8733 = vmul.f32 %v5738, %v8730
        %v8734 = vmul.f32 %v5742, %v8730
        %v8735 = vmul.f32 %v5746, %v8730
        %v8736 = vmul.f32 %v5750, %v8730
        %v8737 = vmul.f32 %v5754, %v8730
        %v8738 = vmul.f32 %v5758, %v8730
        %v8739 = vmul.f32 %v5762, %v8730
        %v8740 = vmul.f32 %v5766, %v8730
        %v8741 = vmul.f32 %v5770, %v8730
        %v8742 = vmul.f32 %v5774, %v8730
        %v8743 = vmul.f32 %v5778, %v8730
        %v8744 = vmul.f32 %v5782, %v8730
        %v8745 = vmul.f32 %v5786, %v8730
        %v8746 = vmul.f32 %v5790, %v8730
        %v8747 = vmul.f32 %v5794, %v8730
        %v8748 = vmul.f32 %v5798, %v8730
        %v8749 = vmul.f32 %v7512, %v8730
        %v8750 = vmul.f32 %v7516, %v8730
        %v8771 = vrot.slane %v8731, 2
        %v8772 = vrot.slane %v8732, 2
        %v8773 = vsel %vm1869, %v8771, %v8772
        %v8774 = vrot.slane %v8733, 2
        %v8775 = vrot.slane %v8734, 2
        %v8776 = vsel %vm1869, %v8774, %v8775
        %v8777 = vrot.slane %v8735, 2
        %v8778 = vrot.slane %v8736, 2
        %v8779 = vsel %vm1869, %v8777, %v8778
        %v8780 = vrot.slane %v8737, 2
        %v8781 = vrot.slane %v8738, 2
        %v8782 = vsel %vm1869, %v8780, %v8781
        %v8783 = vrot.slane %v8739, 2
        %v8784 = vrot.slane %v8740, 2
        %v8785 = vsel %vm1869, %v8783, %v8784
        %v8786 = vrot.slane %v8741, 2
        %v8787 = vrot.slane %v8742, 2
        %v8788 = vsel %vm1869, %v8786, %v8787
        %v8789 = vrot.slane %v8743, 2
        %v8790 = vrot.slane %v8744, 2
        %v8791 = vsel %vm1869, %v8789, %v8790
        %v8792 = vrot.slane %v8745, 2
        %v8793 = vrot.slane %v8746, 2
        %v8794 = vsel %vm1869, %v8792, %v8793
        %v8795 = vrot.slane %v8747, 2
        %v8796 = vrot.slane %v8748, 2
        %v8797 = vsel %vm1869, %v8795, %v8796
        %v8798 = vrot.slane %v8749, 2
        %v8799 = vrot.slane %v8750, 2
        %v8800 = vsel %vm1869, %v8798, %v8799
        %v8821 = vadd.f32 %v8709, %v8773
        %v8822 = vadd.f32 %v8710, %v8772
        %v8823 = vadd.f32 %v8711, %v8776
        %v8824 = vadd.f32 %v8712, %v8775
        %v8825 = vadd.f32 %v8713, %v8779
        %v8826 = vadd.f32 %v8714, %v8778
        %v8827 = vadd.f32 %v8715, %v8782
        %v8828 = vadd.f32 %v8716, %v8781
        %v8829 = vadd.f32 %v8717, %v8785
        %v8830 = vadd.f32 %v8718, %v8784
        %v8831 = vadd.f32 %v8719, %v8788
        %v8832 = vadd.f32 %v8720, %v8787
        %v8833 = vadd.f32 %v8721, %v8791
        %v8834 = vadd.f32 %v8722, %v8790
        %v8835 = vadd.f32 %v8723, %v8794
        %v8836 = vadd.f32 %v8724, %v8793
        %v8837 = vadd.f32 %v8725, %v8797
        %v8838 = vadd.f32 %v8726, %v8796
        %v8839 = vadd.f32 %v8727, %v8800
        %v8840 = vadd.f32 %v8728, %v8799
        %v8841 = vld [vmem:[%s3 + $0x23] sm:$0x1]
        %v8842 = vperm.slane %v8841, 0
        %v8843 = vmul.f32 %v5852, %v8842
        %v8844 = vmul.f32 %v5856, %v8842
        %v8845 = vmul.f32 %v5860, %v8842
        %v8846 = vmul.f32 %v5864, %v8842
        %v8847 = vmul.f32 %v5868, %v8842
        %v8848 = vmul.f32 %v5872, %v8842
        %v8849 = vmul.f32 %v5876, %v8842
        %v8850 = vmul.f32 %v5880, %v8842
        %v8851 = vmul.f32 %v5884, %v8842
        %v8852 = vmul.f32 %v5888, %v8842
        %v8853 = vmul.f32 %v5892, %v8842
        %v8854 = vmul.f32 %v5896, %v8842
        %v8855 = vmul.f32 %v5900, %v8842
        %v8856 = vmul.f32 %v5904, %v8842
        %v8857 = vmul.f32 %v5908, %v8842
        %v8858 = vmul.f32 %v5912, %v8842
        %v8859 = vmul.f32 %v5916, %v8842
        %v8860 = vmul.f32 %v5920, %v8842
        %v8861 = vmul.f32 %v7562, %v8842
        %v8862 = vmul.f32 %v7566, %v8842
        %v8883 = vrot.slane %v8843, 2
        %v8884 = vrot.slane %v8844, 2
        %v8885 = vsel %vm1869, %v8883, %v8884
        %v8886 = vrot.slane %v8845, 2
        %v8887 = vrot.slane %v8846, 2
        %v8888 = vsel %vm1869, %v8886, %v8887
        %v8889 = vrot.slane %v8847, 2
        %v8890 = vrot.slane %v8848, 2
        %v8891 = vsel %vm1869, %v8889, %v8890
        %v8892 = vrot.slane %v8849, 2
        %v8893 = vrot.slane %v8850, 2
        %v8894 = vsel %vm1869, %v8892, %v8893
        %v8895 = vrot.slane %v8851, 2
        %v8896 = vrot.slane %v8852, 2
        %v8897 = vsel %vm1869, %v8895, %v8896
        %v8898 = vrot.slane %v8853, 2
        %v8899 = vrot.slane %v8854, 2
        %v8900 = vsel %vm1869, %v8898, %v8899
        %v8901 = vrot.slane %v8855, 2
        %v8902 = vrot.slane %v8856, 2
        %v8903 = vsel %vm1869, %v8901, %v8902
        %v8904 = vrot.slane %v8857, 2
        %v8905 = vrot.slane %v8858, 2
        %v8906 = vsel %vm1869, %v8904, %v8905
        %v8907 = vrot.slane %v8859, 2
        %v8908 = vrot.slane %v8860, 2
        %v8909 = vsel %vm1869, %v8907, %v8908
        %v8910 = vrot.slane %v8861, 2
        %v8911 = vrot.slane %v8862, 2
        %v8912 = vsel %vm1869, %v8910, %v8911
        %v8933 = vadd.f32 %v8821, %v8885
        %v8934 = vadd.f32 %v8822, %v8884
        %v8935 = vadd.f32 %v8823, %v8888
        %v8936 = vadd.f32 %v8824, %v8887
        %v8937 = vadd.f32 %v8825, %v8891
        %v8938 = vadd.f32 %v8826, %v8890
        %v8939 = vadd.f32 %v8827, %v8894
        %v8940 = vadd.f32 %v8828, %v8893
        %v8941 = vadd.f32 %v8829, %v8897
        %v8942 = vadd.f32 %v8830, %v8896
        %v8943 = vadd.f32 %v8831, %v8900
        %v8944 = vadd.f32 %v8832, %v8899
        %v8945 = vadd.f32 %v8833, %v8903
        %v8946 = vadd.f32 %v8834, %v8902
        %v8947 = vadd.f32 %v8835, %v8906
        %v8948 = vadd.f32 %v8836, %v8905
        %v8949 = vadd.f32 %v8837, %v8909
        %v8950 = vadd.f32 %v8838, %v8908
        %v8951 = vadd.f32 %v8839, %v8912
        %v8952 = vadd.f32 %v8840, %v8911
        %v8953 = vld [vmem:[%s3 + $0x24] sm:$0x1]
        %8955 = vset.pattern.permute.xlu0 0
        %8956 = vperm.xlu0 %8955, %v5206
        %v8957 = vpop.permute.xlu0 %8956
        %8960 = vset.pattern.permute.xlu0 0
        %8961 = vperm.xlu0 %8960, %v5209
        %v8962 = vpop.permute.xlu0 %8961
        %v8964 = vperm.slane %v8953, 0
        %v8965 = vmul.f32 %v5235, %v8964
        %v8966 = vmul.f32 %v5240, %v8964
        %v8967 = vmul.f32 %v5245, %v8964
        %v8968 = vmul.f32 %v5250, %v8964
        %v8969 = vmul.f32 %v5255, %v8964
        %v8970 = vmul.f32 %v5260, %v8964
        %v8971 = vmul.f32 %v5265, %v8964
        %v8972 = vmul.f32 %v5270, %v8964
        %v8973 = vmul.f32 %v5275, %v8964
        %v8974 = vmul.f32 %v5280, %v8964
        %v8975 = vmul.f32 %v5285, %v8964
        %v8976 = vmul.f32 %v5290, %v8964
        %v8977 = vmul.f32 %v5295, %v8964
        %v8978 = vmul.f32 %v5300, %v8964
        %v8979 = vmul.f32 %v5305, %v8964
        %v8980 = vmul.f32 %v5310, %v8964
        %v8981 = vmul.f32 %v7311, %v8964
        %v8982 = vmul.f32 %v7316, %v8964
        %v8983 = vmul.f32 %v8957, %v8964
        %v8984 = vmul.f32 %v8962, %v8964
        %v8985 = vadd.f32 %v8933, %v8965
        %v8986 = vadd.f32 %v8934, %v8966
        %v8987 = vadd.f32 %v8935, %v8967
        %v8988 = vadd.f32 %v8936, %v8968
        %v8989 = vadd.f32 %v8937, %v8969
        %v8990 = vadd.f32 %v8938, %v8970
        %v8991 = vadd.f32 %v8939, %v8971
        %v8992 = vadd.f32 %v8940, %v8972
        %v8993 = vadd.f32 %v8941, %v8973
        %v8994 = vadd.f32 %v8942, %v8974
        %v8995 = vadd.f32 %v8943, %v8975
        %v8996 = vadd.f32 %v8944, %v8976
        %v8997 = vadd.f32 %v8945, %v8977
        %v8998 = vadd.f32 %v8946, %v8978
        %v8999 = vadd.f32 %v8947, %v8979
        %v9000 = vadd.f32 %v8948, %v8980
        %v9001 = vadd.f32 %v8949, %v8981
        %v9002 = vadd.f32 %v8950, %v8982
        %v9003 = vadd.f32 %v8951, %v8983
        %v9004 = vadd.f32 %v8952, %v8984
        %v9005 = vld [vmem:[%s3 + $0x25] sm:$0x1]
        %9006 = vset.pattern.permute.xlu0 1
        %9007 = vperm.xlu0 %9006, %v5206
        %v9008 = vpop.permute.xlu0 %9007
        %9010 = vset.pattern.permute.xlu0 1
        %9011 = vperm.xlu0 %9010, %v5209
        %v9012 = vpop.permute.xlu0 %9011
        %v9014 = vperm.slane %v9005, 0
        %v9015 = vmul.f32 %v5372, %v9014
        %v9016 = vmul.f32 %v5376, %v9014
        %v9017 = vmul.f32 %v5380, %v9014
        %v9018 = vmul.f32 %v5384, %v9014
        %v9019 = vmul.f32 %v5388, %v9014
        %v9020 = vmul.f32 %v5392, %v9014
        %v9021 = vmul.f32 %v5396, %v9014
        %v9022 = vmul.f32 %v5400, %v9014
        %v9023 = vmul.f32 %v5404, %v9014
        %v9024 = vmul.f32 %v5408, %v9014
        %v9025 = vmul.f32 %v5412, %v9014
        %v9026 = vmul.f32 %v5416, %v9014
        %v9027 = vmul.f32 %v5420, %v9014
        %v9028 = vmul.f32 %v5424, %v9014
        %v9029 = vmul.f32 %v5428, %v9014
        %v9030 = vmul.f32 %v5432, %v9014
        %v9031 = vmul.f32 %v7362, %v9014
        %v9032 = vmul.f32 %v7366, %v9014
        %v9033 = vmul.f32 %v9008, %v9014
        %v9034 = vmul.f32 %v9012, %v9014
        %v9035 = vadd.f32 %v8985, %v9015
        %v9036 = vadd.f32 %v8986, %v9016
        %v9037 = vadd.f32 %v8987, %v9017
        %v9038 = vadd.f32 %v8988, %v9018
        %v9039 = vadd.f32 %v8989, %v9019
        %v9040 = vadd.f32 %v8990, %v9020
        %v9041 = vadd.f32 %v8991, %v9021
        %v9042 = vadd.f32 %v8992, %v9022
        %v9043 = vadd.f32 %v8993, %v9023
        %v9044 = vadd.f32 %v8994, %v9024
        %v9045 = vadd.f32 %v8995, %v9025
        %v9046 = vadd.f32 %v8996, %v9026
        %v9047 = vadd.f32 %v8997, %v9027
        %v9048 = vadd.f32 %v8998, %v9028
        %v9049 = vadd.f32 %v8999, %v9029
        %v9050 = vadd.f32 %v9000, %v9030
        %v9051 = vadd.f32 %v9001, %v9031
        %v9052 = vadd.f32 %v9002, %v9032
        %v9053 = vadd.f32 %v9003, %v9033
        %v9054 = vadd.f32 %v9004, %v9034
        %v9055 = vld [vmem:[%s3 + $0x26] sm:$0x1]
        %9056 = vset.pattern.permute.xlu0 2
        %9057 = vperm.xlu0 %9056, %v5206
        %v9058 = vpop.permute.xlu0 %9057
        %9060 = vset.pattern.permute.xlu0 2
        %9061 = vperm.xlu0 %9060, %v5209
        %v9062 = vpop.permute.xlu0 %9061
        %v9064 = vperm.slane %v9055, 0
        %v9065 = vmul.f32 %v5494, %v9064
        %v9066 = vmul.f32 %v5498, %v9064
        %v9067 = vmul.f32 %v5502, %v9064
        %v9068 = vmul.f32 %v5506, %v9064
        %v9069 = vmul.f32 %v5510, %v9064
        %v9070 = vmul.f32 %v5514, %v9064
        %v9071 = vmul.f32 %v5518, %v9064
        %v9072 = vmul.f32 %v5522, %v9064
        %v9073 = vmul.f32 %v5526, %v9064
        %v9074 = vmul.f32 %v5530, %v9064
        %v9075 = vmul.f32 %v5534, %v9064
        %v9076 = vmul.f32 %v5538, %v9064
        %v9077 = vmul.f32 %v5542, %v9064
        %v9078 = vmul.f32 %v5546, %v9064
        %v9079 = vmul.f32 %v5550, %v9064
        %v9080 = vmul.f32 %v5554, %v9064
        %v9081 = vmul.f32 %v7412, %v9064
        %v9082 = vmul.f32 %v7416, %v9064
        %v9083 = vmul.f32 %v9058, %v9064
        %v9084 = vmul.f32 %v9062, %v9064
        %v9085 = vadd.f32 %v9035, %v9065
        %v9086 = vadd.f32 %v9036, %v9066
        %v9087 = vadd.f32 %v9037, %v9067
        %v9088 = vadd.f32 %v9038, %v9068
        %v9089 = vadd.f32 %v9039, %v9069
        %v9090 = vadd.f32 %v9040, %v9070
        %v9091 = vadd.f32 %v9041, %v9071
        %v9092 = vadd.f32 %v9042, %v9072
        %v9093 = vadd.f32 %v9043, %v9073
        %v9094 = vadd.f32 %v9044, %v9074
        %v9095 = vadd.f32 %v9045, %v9075
        %v9096 = vadd.f32 %v9046, %v9076
        %v9097 = vadd.f32 %v9047, %v9077
        %v9098 = vadd.f32 %v9048, %v9078
        %v9099 = vadd.f32 %v9049, %v9079
        %v9100 = vadd.f32 %v9050, %v9080
        %v9101 = vadd.f32 %v9051, %v9081
        %v9102 = vadd.f32 %v9052, %v9082
        %v9103 = vadd.f32 %v9053, %v9083
        %v9104 = vadd.f32 %v9054, %v9084
        %v9105 = vld [vmem:[%s3 + $0x27] sm:$0x1]
        %9106 = vset.pattern.permute.xlu0 3
        %9107 = vperm.xlu0 %9106, %v5206
        %v9108 = vpop.permute.xlu0 %9107
        %9110 = vset.pattern.permute.xlu0 3
        %9111 = vperm.xlu0 %9110, %v5209
        %v9112 = vpop.permute.xlu0 %9111
        %v9114 = vperm.slane %v9105, 0
        %v9115 = vmul.f32 %v5616, %v9114
        %v9116 = vmul.f32 %v5620, %v9114
        %v9117 = vmul.f32 %v5624, %v9114
        %v9118 = vmul.f32 %v5628, %v9114
        %v9119 = vmul.f32 %v5632, %v9114
        %v9120 = vmul.f32 %v5636, %v9114
        %v9121 = vmul.f32 %v5640, %v9114
        %v9122 = vmul.f32 %v5644, %v9114
        %v9123 = vmul.f32 %v5648, %v9114
        %v9124 = vmul.f32 %v5652, %v9114
        %v9125 = vmul.f32 %v5656, %v9114
        %v9126 = vmul.f32 %v5660, %v9114
        %v9127 = vmul.f32 %v5664, %v9114
        %v9128 = vmul.f32 %v5668, %v9114
        %v9129 = vmul.f32 %v5672, %v9114
        %v9130 = vmul.f32 %v5676, %v9114
        %v9131 = vmul.f32 %v7462, %v9114
        %v9132 = vmul.f32 %v7466, %v9114
        %v9133 = vmul.f32 %v9108, %v9114
        %v9134 = vmul.f32 %v9112, %v9114
        %v9135 = vadd.f32 %v9085, %v9115
        %v9136 = vadd.f32 %v9086, %v9116
        %v9137 = vadd.f32 %v9087, %v9117
        %v9138 = vadd.f32 %v9088, %v9118
        %v9139 = vadd.f32 %v9089, %v9119
        %v9140 = vadd.f32 %v9090, %v9120
        %v9141 = vadd.f32 %v9091, %v9121
        %v9142 = vadd.f32 %v9092, %v9122
        %v9143 = vadd.f32 %v9093, %v9123
        %v9144 = vadd.f32 %v9094, %v9124
        %v9145 = vadd.f32 %v9095, %v9125
        %v9146 = vadd.f32 %v9096, %v9126
        %v9147 = vadd.f32 %v9097, %v9127
        %v9148 = vadd.f32 %v9098, %v9128
        %v9149 = vadd.f32 %v9099, %v9129
        %v9150 = vadd.f32 %v9100, %v9130
        %v9151 = vadd.f32 %v9101, %v9131
        %v9152 = vadd.f32 %v9102, %v9132
        %v9153 = vadd.f32 %v9103, %v9133
        %v9154 = vadd.f32 %v9104, %v9134
        %v9155 = vld [vmem:[%s3 + $0x28] sm:$0x1]
        %9156 = vset.pattern.permute.xlu0 4
        %9157 = vperm.xlu0 %9156, %v5206
        %v9158 = vpop.permute.xlu0 %9157
        %9160 = vset.pattern.permute.xlu0 4
        %9161 = vperm.xlu0 %9160, %v5209
        %v9162 = vpop.permute.xlu0 %9161
        %v9164 = vperm.slane %v9155, 0
        %v9165 = vmul.f32 %v5738, %v9164
        %v9166 = vmul.f32 %v5742, %v9164
        %v9167 = vmul.f32 %v5746, %v9164
        %v9168 = vmul.f32 %v5750, %v9164
        %v9169 = vmul.f32 %v5754, %v9164
        %v9170 = vmul.f32 %v5758, %v9164
        %v9171 = vmul.f32 %v5762, %v9164
        %v9172 = vmul.f32 %v5766, %v9164
        %v9173 = vmul.f32 %v5770, %v9164
        %v9174 = vmul.f32 %v5774, %v9164
        %v9175 = vmul.f32 %v5778, %v9164
        %v9176 = vmul.f32 %v5782, %v9164
        %v9177 = vmul.f32 %v5786, %v9164
        %v9178 = vmul.f32 %v5790, %v9164
        %v9179 = vmul.f32 %v5794, %v9164
        %v9180 = vmul.f32 %v5798, %v9164
        %v9181 = vmul.f32 %v7512, %v9164
        %v9182 = vmul.f32 %v7516, %v9164
        %v9183 = vmul.f32 %v9158, %v9164
        %v9184 = vmul.f32 %v9162, %v9164
        %v9185 = vadd.f32 %v9135, %v9165
        %v9186 = vadd.f32 %v9136, %v9166
        %v9187 = vadd.f32 %v9137, %v9167
        %v9188 = vadd.f32 %v9138, %v9168
        %v9189 = vadd.f32 %v9139, %v9169
        %v9190 = vadd.f32 %v9140, %v9170
        %v9191 = vadd.f32 %v9141, %v9171
        %v9192 = vadd.f32 %v9142, %v9172
        %v9193 = vadd.f32 %v9143, %v9173
        %v9194 = vadd.f32 %v9144, %v9174
        %v9195 = vadd.f32 %v9145, %v9175
        %v9196 = vadd.f32 %v9146, %v9176
        %v9197 = vadd.f32 %v9147, %v9177
        %v9198 = vadd.f32 %v9148, %v9178
        %v9199 = vadd.f32 %v9149, %v9179
        %v9200 = vadd.f32 %v9150, %v9180
        %v9201 = vadd.f32 %v9151, %v9181
        %v9202 = vadd.f32 %v9152, %v9182
        %v9203 = vadd.f32 %v9153, %v9183
        %v9204 = vadd.f32 %v9154, %v9184
        %v9205 = vld [vmem:[%s3 + $0x29] sm:$0x1]
        %9206 = vset.pattern.permute.xlu0 5
        %9207 = vperm.xlu0 %9206, %v5206
        %v9208 = vpop.permute.xlu0 %9207
        %9210 = vset.pattern.permute.xlu0 5
        %9211 = vperm.xlu0 %9210, %v5209
        %v9212 = vpop.permute.xlu0 %9211
        %v9214 = vperm.slane %v9205, 0
        %v9215 = vmul.f32 %v5860, %v9214
        %v9216 = vmul.f32 %v5864, %v9214
        %v9217 = vmul.f32 %v5868, %v9214
        %v9218 = vmul.f32 %v5872, %v9214
        %v9219 = vmul.f32 %v5876, %v9214
        %v9220 = vmul.f32 %v5880, %v9214
        %v9221 = vmul.f32 %v5884, %v9214
        %v9222 = vmul.f32 %v5888, %v9214
        %v9223 = vmul.f32 %v5892, %v9214
        %v9224 = vmul.f32 %v5896, %v9214
        %v9225 = vmul.f32 %v5900, %v9214
        %v9226 = vmul.f32 %v5904, %v9214
        %v9227 = vmul.f32 %v5908, %v9214
        %v9228 = vmul.f32 %v5912, %v9214
        %v9229 = vmul.f32 %v5916, %v9214
        %v9230 = vmul.f32 %v5920, %v9214
        %v9231 = vmul.f32 %v7562, %v9214
        %v9232 = vmul.f32 %v7566, %v9214
        %v9233 = vmul.f32 %v9208, %v9214
        %v9234 = vmul.f32 %v9212, %v9214
        %v9235 = vadd.f32 %v9185, %v9215
        %v9236 = vadd.f32 %v9186, %v9216
        %v9237 = vadd.f32 %v9187, %v9217
        %v9238 = vadd.f32 %v9188, %v9218
        %v9239 = vadd.f32 %v9189, %v9219
        %v9240 = vadd.f32 %v9190, %v9220
        %v9241 = vadd.f32 %v9191, %v9221
        %v9242 = vadd.f32 %v9192, %v9222
        %v9243 = vadd.f32 %v9193, %v9223
        %v9244 = vadd.f32 %v9194, %v9224
        %v9245 = vadd.f32 %v9195, %v9225
        %v9246 = vadd.f32 %v9196, %v9226
        %v9247 = vadd.f32 %v9197, %v9227
        %v9248 = vadd.f32 %v9198, %v9228
        %v9249 = vadd.f32 %v9199, %v9229
        %v9250 = vadd.f32 %v9200, %v9230
        %v9251 = vadd.f32 %v9201, %v9231
        %v9252 = vadd.f32 %v9202, %v9232
        %v9253 = vadd.f32 %v9203, %v9233
        %v9254 = vadd.f32 %v9204, %v9234
        %v9255 = vld [vmem:[%s3 + $0x2a] sm:$0x1]
        %v9256 = vperm.slane %v9255, 0
        %v9257 = vmul.f32 %v5235, %v9256
        %v9258 = vmul.f32 %v5240, %v9256
        %v9259 = vmul.f32 %v5245, %v9256
        %v9260 = vmul.f32 %v5250, %v9256
        %v9261 = vmul.f32 %v5255, %v9256
        %v9262 = vmul.f32 %v5260, %v9256
        %v9263 = vmul.f32 %v5265, %v9256
        %v9264 = vmul.f32 %v5270, %v9256
        %v9265 = vmul.f32 %v5275, %v9256
        %v9266 = vmul.f32 %v5280, %v9256
        %v9267 = vmul.f32 %v5285, %v9256
        %v9268 = vmul.f32 %v5290, %v9256
        %v9269 = vmul.f32 %v5295, %v9256
        %v9270 = vmul.f32 %v5300, %v9256
        %v9271 = vmul.f32 %v5305, %v9256
        %v9272 = vmul.f32 %v5310, %v9256
        %v9273 = vmul.f32 %v7311, %v9256
        %v9274 = vmul.f32 %v7316, %v9256
        %v9275 = vmul.f32 %v8957, %v9256
        %v9276 = vmul.f32 %v8962, %v9256
        %v9297 = vrot.slane %v9257, 1
        %v9298 = vrot.slane %v9258, 1
        %v9299 = vsel %vm1362, %v9297, %v9298
        %v9300 = vrot.slane %v9259, 1
        %v9301 = vrot.slane %v9260, 1
        %v9302 = vsel %vm1362, %v9300, %v9301
        %v9303 = vrot.slane %v9261, 1
        %v9304 = vrot.slane %v9262, 1
        %v9305 = vsel %vm1362, %v9303, %v9304
        %v9306 = vrot.slane %v9263, 1
        %v9307 = vrot.slane %v9264, 1
        %v9308 = vsel %vm1362, %v9306, %v9307
        %v9309 = vrot.slane %v9265, 1
        %v9310 = vrot.slane %v9266, 1
        %v9311 = vsel %vm1362, %v9309, %v9310
        %v9312 = vrot.slane %v9267, 1
        %v9313 = vrot.slane %v9268, 1
        %v9314 = vsel %vm1362, %v9312, %v9313
        %v9315 = vrot.slane %v9269, 1
        %v9316 = vrot.slane %v9270, 1
        %v9317 = vsel %vm1362, %v9315, %v9316
        %v9318 = vrot.slane %v9271, 1
        %v9319 = vrot.slane %v9272, 1
        %v9320 = vsel %vm1362, %v9318, %v9319
        %v9321 = vrot.slane %v9273, 1
        %v9322 = vrot.slane %v9274, 1
        %v9323 = vsel %vm1362, %v9321, %v9322
        %v9324 = vrot.slane %v9275, 1
        %v9325 = vrot.slane %v9276, 1
        %v9326 = vsel %vm1362, %v9324, %v9325
        %v9347 = vadd.f32 %v9235, %v9299
        %v9348 = vadd.f32 %v9236, %v9298
        %v9349 = vadd.f32 %v9237, %v9302
        %v9350 = vadd.f32 %v9238, %v9301
        %v9351 = vadd.f32 %v9239, %v9305
        %v9352 = vadd.f32 %v9240, %v9304
        %v9353 = vadd.f32 %v9241, %v9308
        %v9354 = vadd.f32 %v9242, %v9307
        %v9355 = vadd.f32 %v9243, %v9311
        %v9356 = vadd.f32 %v9244, %v9310
        %v9357 = vadd.f32 %v9245, %v9314
        %v9358 = vadd.f32 %v9246, %v9313
        %v9359 = vadd.f32 %v9247, %v9317
        %v9360 = vadd.f32 %v9248, %v9316
        %v9361 = vadd.f32 %v9249, %v9320
        %v9362 = vadd.f32 %v9250, %v9319
        %v9363 = vadd.f32 %v9251, %v9323
        %v9364 = vadd.f32 %v9252, %v9322
        %v9365 = vadd.f32 %v9253, %v9326
        %v9366 = vadd.f32 %v9254, %v9325
        %v9367 = vld [vmem:[%s3 + $0x2b] sm:$0x1]
        %v9368 = vperm.slane %v9367, 0
        %v9369 = vmul.f32 %v5372, %v9368
        %v9370 = vmul.f32 %v5376, %v9368
        %v9371 = vmul.f32 %v5380, %v9368
        %v9372 = vmul.f32 %v5384, %v9368
        %v9373 = vmul.f32 %v5388, %v9368
        %v9374 = vmul.f32 %v5392, %v9368
        %v9375 = vmul.f32 %v5396, %v9368
        %v9376 = vmul.f32 %v5400, %v9368
        %v9377 = vmul.f32 %v5404, %v9368
        %v9378 = vmul.f32 %v5408, %v9368
        %v9379 = vmul.f32 %v5412, %v9368
        %v9380 = vmul.f32 %v5416, %v9368
        %v9381 = vmul.f32 %v5420, %v9368
        %v9382 = vmul.f32 %v5424, %v9368
        %v9383 = vmul.f32 %v5428, %v9368
        %v9384 = vmul.f32 %v5432, %v9368
        %v9385 = vmul.f32 %v7362, %v9368
        %v9386 = vmul.f32 %v7366, %v9368
        %v9387 = vmul.f32 %v9008, %v9368
        %v9388 = vmul.f32 %v9012, %v9368
        %v9409 = vrot.slane %v9369, 1
        %v9410 = vrot.slane %v9370, 1
        %v9411 = vsel %vm1362, %v9409, %v9410
        %v9412 = vrot.slane %v9371, 1
        %v9413 = vrot.slane %v9372, 1
        %v9414 = vsel %vm1362, %v9412, %v9413
        %v9415 = vrot.slane %v9373, 1
        %v9416 = vrot.slane %v9374, 1
        %v9417 = vsel %vm1362, %v9415, %v9416
        %v9418 = vrot.slane %v9375, 1
        %v9419 = vrot.slane %v9376, 1
        %v9420 = vsel %vm1362, %v9418, %v9419
        %v9421 = vrot.slane %v9377, 1
        %v9422 = vrot.slane %v9378, 1
        %v9423 = vsel %vm1362, %v9421, %v9422
        %v9424 = vrot.slane %v9379, 1
        %v9425 = vrot.slane %v9380, 1
        %v9426 = vsel %vm1362, %v9424, %v9425
        %v9427 = vrot.slane %v9381, 1
        %v9428 = vrot.slane %v9382, 1
        %v9429 = vsel %vm1362, %v9427, %v9428
        %v9430 = vrot.slane %v9383, 1
        %v9431 = vrot.slane %v9384, 1
        %v9432 = vsel %vm1362, %v9430, %v9431
        %v9433 = vrot.slane %v9385, 1
        %v9434 = vrot.slane %v9386, 1
        %v9435 = vsel %vm1362, %v9433, %v9434
        %v9436 = vrot.slane %v9387, 1
        %v9437 = vrot.slane %v9388, 1
        %v9438 = vsel %vm1362, %v9436, %v9437
        %v9459 = vadd.f32 %v9347, %v9411
        %v9460 = vadd.f32 %v9348, %v9410
        %v9461 = vadd.f32 %v9349, %v9414
        %v9462 = vadd.f32 %v9350, %v9413
        %v9463 = vadd.f32 %v9351, %v9417
        %v9464 = vadd.f32 %v9352, %v9416
        %v9465 = vadd.f32 %v9353, %v9420
        %v9466 = vadd.f32 %v9354, %v9419
        %v9467 = vadd.f32 %v9355, %v9423
        %v9468 = vadd.f32 %v9356, %v9422
        %v9469 = vadd.f32 %v9357, %v9426
        %v9470 = vadd.f32 %v9358, %v9425
        %v9471 = vadd.f32 %v9359, %v9429
        %v9472 = vadd.f32 %v9360, %v9428
        %v9473 = vadd.f32 %v9361, %v9432
        %v9474 = vadd.f32 %v9362, %v9431
        %v9475 = vadd.f32 %v9363, %v9435
        %v9476 = vadd.f32 %v9364, %v9434
        %v9477 = vadd.f32 %v9365, %v9438
        %v9478 = vadd.f32 %v9366, %v9437
        %v9479 = vld [vmem:[%s3 + $0x2c] sm:$0x1]
        %v9480 = vperm.slane %v9479, 0
        %v9481 = vmul.f32 %v5494, %v9480
        %v9482 = vmul.f32 %v5498, %v9480
        %v9483 = vmul.f32 %v5502, %v9480
        %v9484 = vmul.f32 %v5506, %v9480
        %v9485 = vmul.f32 %v5510, %v9480
        %v9486 = vmul.f32 %v5514, %v9480
        %v9487 = vmul.f32 %v5518, %v9480
        %v9488 = vmul.f32 %v5522, %v9480
        %v9489 = vmul.f32 %v5526, %v9480
        %v9490 = vmul.f32 %v5530, %v9480
        %v9491 = vmul.f32 %v5534, %v9480
        %v9492 = vmul.f32 %v5538, %v9480
        %v9493 = vmul.f32 %v5542, %v9480
        %v9494 = vmul.f32 %v5546, %v9480
        %v9495 = vmul.f32 %v5550, %v9480
        %v9496 = vmul.f32 %v5554, %v9480
        %v9497 = vmul.f32 %v7412, %v9480
        %v9498 = vmul.f32 %v7416, %v9480
        %v9499 = vmul.f32 %v9058, %v9480
        %v9500 = vmul.f32 %v9062, %v9480
        %v9521 = vrot.slane %v9481, 1
        %v9522 = vrot.slane %v9482, 1
        %v9523 = vsel %vm1362, %v9521, %v9522
        %v9524 = vrot.slane %v9483, 1
        %v9525 = vrot.slane %v9484, 1
        %v9526 = vsel %vm1362, %v9524, %v9525
        %v9527 = vrot.slane %v9485, 1
        %v9528 = vrot.slane %v9486, 1
        %v9529 = vsel %vm1362, %v9527, %v9528
        %v9530 = vrot.slane %v9487, 1
        %v9531 = vrot.slane %v9488, 1
        %v9532 = vsel %vm1362, %v9530, %v9531
        %v9533 = vrot.slane %v9489, 1
        %v9534 = vrot.slane %v9490, 1
        %v9535 = vsel %vm1362, %v9533, %v9534
        %v9536 = vrot.slane %v9491, 1
        %v9537 = vrot.slane %v9492, 1
        %v9538 = vsel %vm1362, %v9536, %v9537
        %v9539 = vrot.slane %v9493, 1
        %v9540 = vrot.slane %v9494, 1
        %v9541 = vsel %vm1362, %v9539, %v9540
        %v9542 = vrot.slane %v9495, 1
        %v9543 = vrot.slane %v9496, 1
        %v9544 = vsel %vm1362, %v9542, %v9543
        %v9545 = vrot.slane %v9497, 1
        %v9546 = vrot.slane %v9498, 1
        %v9547 = vsel %vm1362, %v9545, %v9546
        %v9548 = vrot.slane %v9499, 1
        %v9549 = vrot.slane %v9500, 1
        %v9550 = vsel %vm1362, %v9548, %v9549
        %v9571 = vadd.f32 %v9459, %v9523
        %v9572 = vadd.f32 %v9460, %v9522
        %v9573 = vadd.f32 %v9461, %v9526
        %v9574 = vadd.f32 %v9462, %v9525
        %v9575 = vadd.f32 %v9463, %v9529
        %v9576 = vadd.f32 %v9464, %v9528
        %v9577 = vadd.f32 %v9465, %v9532
        %v9578 = vadd.f32 %v9466, %v9531
        %v9579 = vadd.f32 %v9467, %v9535
        %v9580 = vadd.f32 %v9468, %v9534
        %v9581 = vadd.f32 %v9469, %v9538
        %v9582 = vadd.f32 %v9470, %v9537
        %v9583 = vadd.f32 %v9471, %v9541
        %v9584 = vadd.f32 %v9472, %v9540
        %v9585 = vadd.f32 %v9473, %v9544
        %v9586 = vadd.f32 %v9474, %v9543
        %v9587 = vadd.f32 %v9475, %v9547
        %v9588 = vadd.f32 %v9476, %v9546
        %v9589 = vadd.f32 %v9477, %v9550
        %v9590 = vadd.f32 %v9478, %v9549
        %v9591 = vld [vmem:[%s3 + $0x2d] sm:$0x1]
        %v9592 = vperm.slane %v9591, 0
        %v9593 = vmul.f32 %v5616, %v9592
        %v9594 = vmul.f32 %v5620, %v9592
        %v9595 = vmul.f32 %v5624, %v9592
        %v9596 = vmul.f32 %v5628, %v9592
        %v9597 = vmul.f32 %v5632, %v9592
        %v9598 = vmul.f32 %v5636, %v9592
        %v9599 = vmul.f32 %v5640, %v9592
        %v9600 = vmul.f32 %v5644, %v9592
        %v9601 = vmul.f32 %v5648, %v9592
        %v9602 = vmul.f32 %v5652, %v9592
        %v9603 = vmul.f32 %v5656, %v9592
        %v9604 = vmul.f32 %v5660, %v9592
        %v9605 = vmul.f32 %v5664, %v9592
        %v9606 = vmul.f32 %v5668, %v9592
        %v9607 = vmul.f32 %v5672, %v9592
        %v9608 = vmul.f32 %v5676, %v9592
        %v9609 = vmul.f32 %v7462, %v9592
        %v9610 = vmul.f32 %v7466, %v9592
        %v9611 = vmul.f32 %v9108, %v9592
        %v9612 = vmul.f32 %v9112, %v9592
        %v9633 = vrot.slane %v9593, 1
        %v9634 = vrot.slane %v9594, 1
        %v9635 = vsel %vm1362, %v9633, %v9634
        %v9636 = vrot.slane %v9595, 1
        %v9637 = vrot.slane %v9596, 1
        %v9638 = vsel %vm1362, %v9636, %v9637
        %v9639 = vrot.slane %v9597, 1
        %v9640 = vrot.slane %v9598, 1
        %v9641 = vsel %vm1362, %v9639, %v9640
        %v9642 = vrot.slane %v9599, 1
        %v9643 = vrot.slane %v9600, 1
        %v9644 = vsel %vm1362, %v9642, %v9643
        %v9645 = vrot.slane %v9601, 1
        %v9646 = vrot.slane %v9602, 1
        %v9647 = vsel %vm1362, %v9645, %v9646
        %v9648 = vrot.slane %v9603, 1
        %v9649 = vrot.slane %v9604, 1
        %v9650 = vsel %vm1362, %v9648, %v9649
        %v9651 = vrot.slane %v9605, 1
        %v9652 = vrot.slane %v9606, 1
        %v9653 = vsel %vm1362, %v9651, %v9652
        %v9654 = vrot.slane %v9607, 1
        %v9655 = vrot.slane %v9608, 1
        %v9656 = vsel %vm1362, %v9654, %v9655
        %v9657 = vrot.slane %v9609, 1
        %v9658 = vrot.slane %v9610, 1
        %v9659 = vsel %vm1362, %v9657, %v9658
        %v9660 = vrot.slane %v9611, 1
        %v9661 = vrot.slane %v9612, 1
        %v9662 = vsel %vm1362, %v9660, %v9661
        %v9683 = vadd.f32 %v9571, %v9635
        %v9684 = vadd.f32 %v9572, %v9634
        %v9685 = vadd.f32 %v9573, %v9638
        %v9686 = vadd.f32 %v9574, %v9637
        %v9687 = vadd.f32 %v9575, %v9641
        %v9688 = vadd.f32 %v9576, %v9640
        %v9689 = vadd.f32 %v9577, %v9644
        %v9690 = vadd.f32 %v9578, %v9643
        %v9691 = vadd.f32 %v9579, %v9647
        %v9692 = vadd.f32 %v9580, %v9646
        %v9693 = vadd.f32 %v9581, %v9650
        %v9694 = vadd.f32 %v9582, %v9649
        %v9695 = vadd.f32 %v9583, %v9653
        %v9696 = vadd.f32 %v9584, %v9652
        %v9697 = vadd.f32 %v9585, %v9656
        %v9698 = vadd.f32 %v9586, %v9655
        %v9699 = vadd.f32 %v9587, %v9659
        %v9700 = vadd.f32 %v9588, %v9658
        %v9701 = vadd.f32 %v9589, %v9662
        %v9702 = vadd.f32 %v9590, %v9661
        %v9703 = vld [vmem:[%s3 + $0x2e] sm:$0x1]
        %v9704 = vperm.slane %v9703, 0
        %v9705 = vmul.f32 %v5738, %v9704
        %v9706 = vmul.f32 %v5742, %v9704
        %v9707 = vmul.f32 %v5746, %v9704
        %v9708 = vmul.f32 %v5750, %v9704
        %v9709 = vmul.f32 %v5754, %v9704
        %v9710 = vmul.f32 %v5758, %v9704
        %v9711 = vmul.f32 %v5762, %v9704
        %v9712 = vmul.f32 %v5766, %v9704
        %v9713 = vmul.f32 %v5770, %v9704
        %v9714 = vmul.f32 %v5774, %v9704
        %v9715 = vmul.f32 %v5778, %v9704
        %v9716 = vmul.f32 %v5782, %v9704
        %v9717 = vmul.f32 %v5786, %v9704
        %v9718 = vmul.f32 %v5790, %v9704
        %v9719 = vmul.f32 %v5794, %v9704
        %v9720 = vmul.f32 %v5798, %v9704
        %v9721 = vmul.f32 %v7512, %v9704
        %v9722 = vmul.f32 %v7516, %v9704
        %v9723 = vmul.f32 %v9158, %v9704
        %v9724 = vmul.f32 %v9162, %v9704
        %v9745 = vrot.slane %v9705, 1
        %v9746 = vrot.slane %v9706, 1
        %v9747 = vsel %vm1362, %v9745, %v9746
        %v9748 = vrot.slane %v9707, 1
        %v9749 = vrot.slane %v9708, 1
        %v9750 = vsel %vm1362, %v9748, %v9749
        %v9751 = vrot.slane %v9709, 1
        %v9752 = vrot.slane %v9710, 1
        %v9753 = vsel %vm1362, %v9751, %v9752
        %v9754 = vrot.slane %v9711, 1
        %v9755 = vrot.slane %v9712, 1
        %v9756 = vsel %vm1362, %v9754, %v9755
        %v9757 = vrot.slane %v9713, 1
        %v9758 = vrot.slane %v9714, 1
        %v9759 = vsel %vm1362, %v9757, %v9758
        %v9760 = vrot.slane %v9715, 1
        %v9761 = vrot.slane %v9716, 1
        %v9762 = vsel %vm1362, %v9760, %v9761
        %v9763 = vrot.slane %v9717, 1
        %v9764 = vrot.slane %v9718, 1
        %v9765 = vsel %vm1362, %v9763, %v9764
        %v9766 = vrot.slane %v9719, 1
        %v9767 = vrot.slane %v9720, 1
        %v9768 = vsel %vm1362, %v9766, %v9767
        %v9769 = vrot.slane %v9721, 1
        %v9770 = vrot.slane %v9722, 1
        %v9771 = vsel %vm1362, %v9769, %v9770
        %v9772 = vrot.slane %v9723, 1
        %v9773 = vrot.slane %v9724, 1
        %v9774 = vsel %vm1362, %v9772, %v9773
        %v9795 = vadd.f32 %v9683, %v9747
        %v9796 = vadd.f32 %v9684, %v9746
        %v9797 = vadd.f32 %v9685, %v9750
        %v9798 = vadd.f32 %v9686, %v9749
        %v9799 = vadd.f32 %v9687, %v9753
        %v9800 = vadd.f32 %v9688, %v9752
        %v9801 = vadd.f32 %v9689, %v9756
        %v9802 = vadd.f32 %v9690, %v9755
        %v9803 = vadd.f32 %v9691, %v9759
        %v9804 = vadd.f32 %v9692, %v9758
        %v9805 = vadd.f32 %v9693, %v9762
        %v9806 = vadd.f32 %v9694, %v9761
        %v9807 = vadd.f32 %v9695, %v9765
        %v9808 = vadd.f32 %v9696, %v9764
        %v9809 = vadd.f32 %v9697, %v9768
        %v9810 = vadd.f32 %v9698, %v9767
        %v9811 = vadd.f32 %v9699, %v9771
        %v9812 = vadd.f32 %v9700, %v9770
        %v9813 = vadd.f32 %v9701, %v9774
        %v9814 = vadd.f32 %v9702, %v9773
        %v9815 = vld [vmem:[%s3 + $0x2f] sm:$0x1]
        %v9816 = vperm.slane %v9815, 0
        %v9817 = vmul.f32 %v5860, %v9816
        %v9818 = vmul.f32 %v5864, %v9816
        %v9819 = vmul.f32 %v5868, %v9816
        %v9820 = vmul.f32 %v5872, %v9816
        %v9821 = vmul.f32 %v5876, %v9816
        %v9822 = vmul.f32 %v5880, %v9816
        %v9823 = vmul.f32 %v5884, %v9816
        %v9824 = vmul.f32 %v5888, %v9816
        %v9825 = vmul.f32 %v5892, %v9816
        %v9826 = vmul.f32 %v5896, %v9816
        %v9827 = vmul.f32 %v5900, %v9816
        %v9828 = vmul.f32 %v5904, %v9816
        %v9829 = vmul.f32 %v5908, %v9816
        %v9830 = vmul.f32 %v5912, %v9816
        %v9831 = vmul.f32 %v5916, %v9816
        %v9832 = vmul.f32 %v5920, %v9816
        %v9833 = vmul.f32 %v7562, %v9816
        %v9834 = vmul.f32 %v7566, %v9816
        %v9835 = vmul.f32 %v9208, %v9816
        %v9836 = vmul.f32 %v9212, %v9816
        %v9857 = vrot.slane %v9817, 1
        %v9858 = vrot.slane %v9818, 1
        %v9859 = vsel %vm1362, %v9857, %v9858
        %v9860 = vrot.slane %v9819, 1
        %v9861 = vrot.slane %v9820, 1
        %v9862 = vsel %vm1362, %v9860, %v9861
        %v9863 = vrot.slane %v9821, 1
        %v9864 = vrot.slane %v9822, 1
        %v9865 = vsel %vm1362, %v9863, %v9864
        %v9866 = vrot.slane %v9823, 1
        %v9867 = vrot.slane %v9824, 1
        %v9868 = vsel %vm1362, %v9866, %v9867
        %v9869 = vrot.slane %v9825, 1
        %v9870 = vrot.slane %v9826, 1
        %v9871 = vsel %vm1362, %v9869, %v9870
        %v9872 = vrot.slane %v9827, 1
        %v9873 = vrot.slane %v9828, 1
        %v9874 = vsel %vm1362, %v9872, %v9873
        %v9875 = vrot.slane %v9829, 1
        %v9876 = vrot.slane %v9830, 1
        %v9877 = vsel %vm1362, %v9875, %v9876
        %v9878 = vrot.slane %v9831, 1
        %v9879 = vrot.slane %v9832, 1
        %v9880 = vsel %vm1362, %v9878, %v9879
        %v9881 = vrot.slane %v9833, 1
        %v9882 = vrot.slane %v9834, 1
        %v9883 = vsel %vm1362, %v9881, %v9882
        %v9884 = vrot.slane %v9835, 1
        %v9885 = vrot.slane %v9836, 1
        %v9886 = vsel %vm1362, %v9884, %v9885
        %v9907 = vadd.f32 %v9795, %v9859
        %v9908 = vadd.f32 %v9796, %v9858
        %v9909 = vadd.f32 %v9797, %v9862
        %v9910 = vadd.f32 %v9798, %v9861
        %v9911 = vadd.f32 %v9799, %v9865
        %v9912 = vadd.f32 %v9800, %v9864
        %v9913 = vadd.f32 %v9801, %v9868
        %v9914 = vadd.f32 %v9802, %v9867
        %v9915 = vadd.f32 %v9803, %v9871
        %v9916 = vadd.f32 %v9804, %v9870
        %v9917 = vadd.f32 %v9805, %v9874
        %v9918 = vadd.f32 %v9806, %v9873
        %v9919 = vadd.f32 %v9807, %v9877
        %v9920 = vadd.f32 %v9808, %v9876
        %v9921 = vadd.f32 %v9809, %v9880
        %v9922 = vadd.f32 %v9810, %v9879
        %v9923 = vadd.f32 %v9811, %v9883
        %v9924 = vadd.f32 %v9812, %v9882
        %v9925 = vadd.f32 %v9813, %v9886
        %v9926 = vadd.f32 %v9814, %v9885
        %v9927 = vld [vmem:[%s3 + $0x30] sm:$0x1]
        %v9928 = vperm.slane %v9927, 0
        %v9929 = vmul.f32 %v5235, %v9928
        %v9930 = vmul.f32 %v5240, %v9928
        %v9931 = vmul.f32 %v5245, %v9928
        %v9932 = vmul.f32 %v5250, %v9928
        %v9933 = vmul.f32 %v5255, %v9928
        %v9934 = vmul.f32 %v5260, %v9928
        %v9935 = vmul.f32 %v5265, %v9928
        %v9936 = vmul.f32 %v5270, %v9928
        %v9937 = vmul.f32 %v5275, %v9928
        %v9938 = vmul.f32 %v5280, %v9928
        %v9939 = vmul.f32 %v5285, %v9928
        %v9940 = vmul.f32 %v5290, %v9928
        %v9941 = vmul.f32 %v5295, %v9928
        %v9942 = vmul.f32 %v5300, %v9928
        %v9943 = vmul.f32 %v5305, %v9928
        %v9944 = vmul.f32 %v5310, %v9928
        %v9945 = vmul.f32 %v7311, %v9928
        %v9946 = vmul.f32 %v7316, %v9928
        %v9947 = vmul.f32 %v8957, %v9928
        %v9948 = vmul.f32 %v8962, %v9928
        %v9969 = vrot.slane %v9929, 2
        %v9970 = vrot.slane %v9930, 2
        %v9971 = vsel %vm1869, %v9969, %v9970
        %v9972 = vrot.slane %v9931, 2
        %v9973 = vrot.slane %v9932, 2
        %v9974 = vsel %vm1869, %v9972, %v9973
        %v9975 = vrot.slane %v9933, 2
        %v9976 = vrot.slane %v9934, 2
        %v9977 = vsel %vm1869, %v9975, %v9976
        %v9978 = vrot.slane %v9935, 2
        %v9979 = vrot.slane %v9936, 2
        %v9980 = vsel %vm1869, %v9978, %v9979
        %v9981 = vrot.slane %v9937, 2
        %v9982 = vrot.slane %v9938, 2
        %v9983 = vsel %vm1869, %v9981, %v9982
        %v9984 = vrot.slane %v9939, 2
        %v9985 = vrot.slane %v9940, 2
        %v9986 = vsel %vm1869, %v9984, %v9985
        %v9987 = vrot.slane %v9941, 2
        %v9988 = vrot.slane %v9942, 2
        %v9989 = vsel %vm1869, %v9987, %v9988
        %v9990 = vrot.slane %v9943, 2
        %v9991 = vrot.slane %v9944, 2
        %v9992 = vsel %vm1869, %v9990, %v9991
        %v9993 = vrot.slane %v9945, 2
        %v9994 = vrot.slane %v9946, 2
        %v9995 = vsel %vm1869, %v9993, %v9994
        %v9996 = vrot.slane %v9947, 2
        %v9997 = vrot.slane %v9948, 2
        %v9998 = vsel %vm1869, %v9996, %v9997
        %v10019 = vadd.f32 %v9907, %v9971
        %v10020 = vadd.f32 %v9908, %v9970
        %v10021 = vadd.f32 %v9909, %v9974
        %v10022 = vadd.f32 %v9910, %v9973
        %v10023 = vadd.f32 %v9911, %v9977
        %v10024 = vadd.f32 %v9912, %v9976
        %v10025 = vadd.f32 %v9913, %v9980
        %v10026 = vadd.f32 %v9914, %v9979
        %v10027 = vadd.f32 %v9915, %v9983
        %v10028 = vadd.f32 %v9916, %v9982
        %v10029 = vadd.f32 %v9917, %v9986
        %v10030 = vadd.f32 %v9918, %v9985
        %v10031 = vadd.f32 %v9919, %v9989
        %v10032 = vadd.f32 %v9920, %v9988
        %v10033 = vadd.f32 %v9921, %v9992
        %v10034 = vadd.f32 %v9922, %v9991
        %v10035 = vadd.f32 %v9923, %v9995
        %v10036 = vadd.f32 %v9924, %v9994
        %v10037 = vadd.f32 %v9925, %v9998
        %v10038 = vadd.f32 %v9926, %v9997
        %v10039 = vld [vmem:[%s3 + $0x31] sm:$0x1]
        %v10040 = vperm.slane %v10039, 0
        %v10041 = vmul.f32 %v5372, %v10040
        %v10042 = vmul.f32 %v5376, %v10040
        %v10043 = vmul.f32 %v5380, %v10040
        %v10044 = vmul.f32 %v5384, %v10040
        %v10045 = vmul.f32 %v5388, %v10040
        %v10046 = vmul.f32 %v5392, %v10040
        %v10047 = vmul.f32 %v5396, %v10040
        %v10048 = vmul.f32 %v5400, %v10040
        %v10049 = vmul.f32 %v5404, %v10040
        %v10050 = vmul.f32 %v5408, %v10040
        %v10051 = vmul.f32 %v5412, %v10040
        %v10052 = vmul.f32 %v5416, %v10040
        %v10053 = vmul.f32 %v5420, %v10040
        %v10054 = vmul.f32 %v5424, %v10040
        %v10055 = vmul.f32 %v5428, %v10040
        %v10056 = vmul.f32 %v5432, %v10040
        %v10057 = vmul.f32 %v7362, %v10040
        %v10058 = vmul.f32 %v7366, %v10040
        %v10059 = vmul.f32 %v9008, %v10040
        %v10060 = vmul.f32 %v9012, %v10040
        %v10081 = vrot.slane %v10041, 2
        %v10082 = vrot.slane %v10042, 2
        %v10083 = vsel %vm1869, %v10081, %v10082
        %v10084 = vrot.slane %v10043, 2
        %v10085 = vrot.slane %v10044, 2
        %v10086 = vsel %vm1869, %v10084, %v10085
        %v10087 = vrot.slane %v10045, 2
        %v10088 = vrot.slane %v10046, 2
        %v10089 = vsel %vm1869, %v10087, %v10088
        %v10090 = vrot.slane %v10047, 2
        %v10091 = vrot.slane %v10048, 2
        %v10092 = vsel %vm1869, %v10090, %v10091
        %v10093 = vrot.slane %v10049, 2
        %v10094 = vrot.slane %v10050, 2
        %v10095 = vsel %vm1869, %v10093, %v10094
        %v10096 = vrot.slane %v10051, 2
        %v10097 = vrot.slane %v10052, 2
        %v10098 = vsel %vm1869, %v10096, %v10097
        %v10099 = vrot.slane %v10053, 2
        %v10100 = vrot.slane %v10054, 2
        %v10101 = vsel %vm1869, %v10099, %v10100
        %v10102 = vrot.slane %v10055, 2
        %v10103 = vrot.slane %v10056, 2
        %v10104 = vsel %vm1869, %v10102, %v10103
        %v10105 = vrot.slane %v10057, 2
        %v10106 = vrot.slane %v10058, 2
        %v10107 = vsel %vm1869, %v10105, %v10106
        %v10108 = vrot.slane %v10059, 2
        %v10109 = vrot.slane %v10060, 2
        %v10110 = vsel %vm1869, %v10108, %v10109
        %v10131 = vadd.f32 %v10019, %v10083
        %v10132 = vadd.f32 %v10020, %v10082
        %v10133 = vadd.f32 %v10021, %v10086
        %v10134 = vadd.f32 %v10022, %v10085
        %v10135 = vadd.f32 %v10023, %v10089
        %v10136 = vadd.f32 %v10024, %v10088
        %v10137 = vadd.f32 %v10025, %v10092
        %v10138 = vadd.f32 %v10026, %v10091
        %v10139 = vadd.f32 %v10027, %v10095
        %v10140 = vadd.f32 %v10028, %v10094
        %v10141 = vadd.f32 %v10029, %v10098
        %v10142 = vadd.f32 %v10030, %v10097
        %v10143 = vadd.f32 %v10031, %v10101
        %v10144 = vadd.f32 %v10032, %v10100
        %v10145 = vadd.f32 %v10033, %v10104
        %v10146 = vadd.f32 %v10034, %v10103
        %v10147 = vadd.f32 %v10035, %v10107
        %v10148 = vadd.f32 %v10036, %v10106
        %v10149 = vadd.f32 %v10037, %v10110
        %v10150 = vadd.f32 %v10038, %v10109
        %v10151 = vld [vmem:[%s3 + $0x32] sm:$0x1]
        %v10152 = vperm.slane %v10151, 0
        %v10153 = vmul.f32 %v5494, %v10152
        %v10154 = vmul.f32 %v5498, %v10152
        %v10155 = vmul.f32 %v5502, %v10152
        %v10156 = vmul.f32 %v5506, %v10152
        %v10157 = vmul.f32 %v5510, %v10152
        %v10158 = vmul.f32 %v5514, %v10152
        %v10159 = vmul.f32 %v5518, %v10152
        %v10160 = vmul.f32 %v5522, %v10152
        %v10161 = vmul.f32 %v5526, %v10152
        %v10162 = vmul.f32 %v5530, %v10152
        %v10163 = vmul.f32 %v5534, %v10152
        %v10164 = vmul.f32 %v5538, %v10152
        %v10165 = vmul.f32 %v5542, %v10152
        %v10166 = vmul.f32 %v5546, %v10152
        %v10167 = vmul.f32 %v5550, %v10152
        %v10168 = vmul.f32 %v5554, %v10152
        %v10169 = vmul.f32 %v7412, %v10152
        %v10170 = vmul.f32 %v7416, %v10152
        %v10171 = vmul.f32 %v9058, %v10152
        %v10172 = vmul.f32 %v9062, %v10152
        %v10193 = vrot.slane %v10153, 2
        %v10194 = vrot.slane %v10154, 2
        %v10195 = vsel %vm1869, %v10193, %v10194
        %v10196 = vrot.slane %v10155, 2
        %v10197 = vrot.slane %v10156, 2
        %v10198 = vsel %vm1869, %v10196, %v10197
        %v10199 = vrot.slane %v10157, 2
        %v10200 = vrot.slane %v10158, 2
        %v10201 = vsel %vm1869, %v10199, %v10200
        %v10202 = vrot.slane %v10159, 2
        %v10203 = vrot.slane %v10160, 2
        %v10204 = vsel %vm1869, %v10202, %v10203
        %v10205 = vrot.slane %v10161, 2
        %v10206 = vrot.slane %v10162, 2
        %v10207 = vsel %vm1869, %v10205, %v10206
        %v10208 = vrot.slane %v10163, 2
        %v10209 = vrot.slane %v10164, 2
        %v10210 = vsel %vm1869, %v10208, %v10209
        %v10211 = vrot.slane %v10165, 2
        %v10212 = vrot.slane %v10166, 2
        %v10213 = vsel %vm1869, %v10211, %v10212
        %v10214 = vrot.slane %v10167, 2
        %v10215 = vrot.slane %v10168, 2
        %v10216 = vsel %vm1869, %v10214, %v10215
        %v10217 = vrot.slane %v10169, 2
        %v10218 = vrot.slane %v10170, 2
        %v10219 = vsel %vm1869, %v10217, %v10218
        %v10220 = vrot.slane %v10171, 2
        %v10221 = vrot.slane %v10172, 2
        %v10222 = vsel %vm1869, %v10220, %v10221
        %v10243 = vadd.f32 %v10131, %v10195
        %v10244 = vadd.f32 %v10132, %v10194
        %v10245 = vadd.f32 %v10133, %v10198
        %v10246 = vadd.f32 %v10134, %v10197
        %v10247 = vadd.f32 %v10135, %v10201
        %v10248 = vadd.f32 %v10136, %v10200
        %v10249 = vadd.f32 %v10137, %v10204
        %v10250 = vadd.f32 %v10138, %v10203
        %v10251 = vadd.f32 %v10139, %v10207
        %v10252 = vadd.f32 %v10140, %v10206
        %v10253 = vadd.f32 %v10141, %v10210
        %v10254 = vadd.f32 %v10142, %v10209
        %v10255 = vadd.f32 %v10143, %v10213
        %v10256 = vadd.f32 %v10144, %v10212
        %v10257 = vadd.f32 %v10145, %v10216
        %v10258 = vadd.f32 %v10146, %v10215
        %v10259 = vadd.f32 %v10147, %v10219
        %v10260 = vadd.f32 %v10148, %v10218
        %v10261 = vadd.f32 %v10149, %v10222
        %v10262 = vadd.f32 %v10150, %v10221
        %v10263 = vld [vmem:[%s3 + $0x33] sm:$0x1]
        %v10264 = vperm.slane %v10263, 0
        %v10265 = vmul.f32 %v5616, %v10264
        %v10266 = vmul.f32 %v5620, %v10264
        %v10267 = vmul.f32 %v5624, %v10264
        %v10268 = vmul.f32 %v5628, %v10264
        %v10269 = vmul.f32 %v5632, %v10264
        %v10270 = vmul.f32 %v5636, %v10264
        %v10271 = vmul.f32 %v5640, %v10264
        %v10272 = vmul.f32 %v5644, %v10264
        %v10273 = vmul.f32 %v5648, %v10264
        %v10274 = vmul.f32 %v5652, %v10264
        %v10275 = vmul.f32 %v5656, %v10264
        %v10276 = vmul.f32 %v5660, %v10264
        %v10277 = vmul.f32 %v5664, %v10264
        %v10278 = vmul.f32 %v5668, %v10264
        %v10279 = vmul.f32 %v5672, %v10264
        %v10280 = vmul.f32 %v5676, %v10264
        %v10281 = vmul.f32 %v7462, %v10264
        %v10282 = vmul.f32 %v7466, %v10264
        %v10283 = vmul.f32 %v9108, %v10264
        %v10284 = vmul.f32 %v9112, %v10264
        %v10305 = vrot.slane %v10265, 2
        %v10306 = vrot.slane %v10266, 2
        %v10307 = vsel %vm1869, %v10305, %v10306
        %v10308 = vrot.slane %v10267, 2
        %v10309 = vrot.slane %v10268, 2
        %v10310 = vsel %vm1869, %v10308, %v10309
        %v10311 = vrot.slane %v10269, 2
        %v10312 = vrot.slane %v10270, 2
        %v10313 = vsel %vm1869, %v10311, %v10312
        %v10314 = vrot.slane %v10271, 2
        %v10315 = vrot.slane %v10272, 2
        %v10316 = vsel %vm1869, %v10314, %v10315
        %v10317 = vrot.slane %v10273, 2
        %v10318 = vrot.slane %v10274, 2
        %v10319 = vsel %vm1869, %v10317, %v10318
        %v10320 = vrot.slane %v10275, 2
        %v10321 = vrot.slane %v10276, 2
        %v10322 = vsel %vm1869, %v10320, %v10321
        %v10323 = vrot.slane %v10277, 2
        %v10324 = vrot.slane %v10278, 2
        %v10325 = vsel %vm1869, %v10323, %v10324
        %v10326 = vrot.slane %v10279, 2
        %v10327 = vrot.slane %v10280, 2
        %v10328 = vsel %vm1869, %v10326, %v10327
        %v10329 = vrot.slane %v10281, 2
        %v10330 = vrot.slane %v10282, 2
        %v10331 = vsel %vm1869, %v10329, %v10330
        %v10332 = vrot.slane %v10283, 2
        %v10333 = vrot.slane %v10284, 2
        %v10334 = vsel %vm1869, %v10332, %v10333
        %v10355 = vadd.f32 %v10243, %v10307
        %v10356 = vadd.f32 %v10244, %v10306
        %v10357 = vadd.f32 %v10245, %v10310
        %v10358 = vadd.f32 %v10246, %v10309
        %v10359 = vadd.f32 %v10247, %v10313
        %v10360 = vadd.f32 %v10248, %v10312
        %v10361 = vadd.f32 %v10249, %v10316
        %v10362 = vadd.f32 %v10250, %v10315
        %v10363 = vadd.f32 %v10251, %v10319
        %v10364 = vadd.f32 %v10252, %v10318
        %v10365 = vadd.f32 %v10253, %v10322
        %v10366 = vadd.f32 %v10254, %v10321
        %v10367 = vadd.f32 %v10255, %v10325
        %v10368 = vadd.f32 %v10256, %v10324
        %v10369 = vadd.f32 %v10257, %v10328
        %v10370 = vadd.f32 %v10258, %v10327
        %v10371 = vadd.f32 %v10259, %v10331
        %v10372 = vadd.f32 %v10260, %v10330
        %v10373 = vadd.f32 %v10261, %v10334
        %v10374 = vadd.f32 %v10262, %v10333
        %v10375 = vld [vmem:[%s3 + $0x34] sm:$0x1]
        %v10376 = vperm.slane %v10375, 0
        %v10377 = vmul.f32 %v5738, %v10376
        %v10378 = vmul.f32 %v5742, %v10376
        %v10379 = vmul.f32 %v5746, %v10376
        %v10380 = vmul.f32 %v5750, %v10376
        %v10381 = vmul.f32 %v5754, %v10376
        %v10382 = vmul.f32 %v5758, %v10376
        %v10383 = vmul.f32 %v5762, %v10376
        %v10384 = vmul.f32 %v5766, %v10376
        %v10385 = vmul.f32 %v5770, %v10376
        %v10386 = vmul.f32 %v5774, %v10376
        %v10387 = vmul.f32 %v5778, %v10376
        %v10388 = vmul.f32 %v5782, %v10376
        %v10389 = vmul.f32 %v5786, %v10376
        %v10390 = vmul.f32 %v5790, %v10376
        %v10391 = vmul.f32 %v5794, %v10376
        %v10392 = vmul.f32 %v5798, %v10376
        %v10393 = vmul.f32 %v7512, %v10376
        %v10394 = vmul.f32 %v7516, %v10376
        %v10395 = vmul.f32 %v9158, %v10376
        %v10396 = vmul.f32 %v9162, %v10376
        %v10417 = vrot.slane %v10377, 2
        %v10418 = vrot.slane %v10378, 2
        %v10419 = vsel %vm1869, %v10417, %v10418
        %v10420 = vrot.slane %v10379, 2
        %v10421 = vrot.slane %v10380, 2
        %v10422 = vsel %vm1869, %v10420, %v10421
        %v10423 = vrot.slane %v10381, 2
        %v10424 = vrot.slane %v10382, 2
        %v10425 = vsel %vm1869, %v10423, %v10424
        %v10426 = vrot.slane %v10383, 2
        %v10427 = vrot.slane %v10384, 2
        %v10428 = vsel %vm1869, %v10426, %v10427
        %v10429 = vrot.slane %v10385, 2
        %v10430 = vrot.slane %v10386, 2
        %v10431 = vsel %vm1869, %v10429, %v10430
        %v10432 = vrot.slane %v10387, 2
        %v10433 = vrot.slane %v10388, 2
        %v10434 = vsel %vm1869, %v10432, %v10433
        %v10435 = vrot.slane %v10389, 2
        %v10436 = vrot.slane %v10390, 2
        %v10437 = vsel %vm1869, %v10435, %v10436
        %v10438 = vrot.slane %v10391, 2
        %v10439 = vrot.slane %v10392, 2
        %v10440 = vsel %vm1869, %v10438, %v10439
        %v10441 = vrot.slane %v10393, 2
        %v10442 = vrot.slane %v10394, 2
        %v10443 = vsel %vm1869, %v10441, %v10442
        %v10444 = vrot.slane %v10395, 2
        %v10445 = vrot.slane %v10396, 2
        %v10446 = vsel %vm1869, %v10444, %v10445
        %v10467 = vadd.f32 %v10355, %v10419
        %v10468 = vadd.f32 %v10356, %v10418
        %v10469 = vadd.f32 %v10357, %v10422
        %v10470 = vadd.f32 %v10358, %v10421
        %v10471 = vadd.f32 %v10359, %v10425
        %v10472 = vadd.f32 %v10360, %v10424
        %v10473 = vadd.f32 %v10361, %v10428
        %v10474 = vadd.f32 %v10362, %v10427
        %v10475 = vadd.f32 %v10363, %v10431
        %v10476 = vadd.f32 %v10364, %v10430
        %v10477 = vadd.f32 %v10365, %v10434
        %v10478 = vadd.f32 %v10366, %v10433
        %v10479 = vadd.f32 %v10367, %v10437
        %v10480 = vadd.f32 %v10368, %v10436
        %v10481 = vadd.f32 %v10369, %v10440
        %v10482 = vadd.f32 %v10370, %v10439
        %v10483 = vadd.f32 %v10371, %v10443
        %v10484 = vadd.f32 %v10372, %v10442
        %v10485 = vadd.f32 %v10373, %v10446
        %v10486 = vadd.f32 %v10374, %v10445
        %v10487 = vld [vmem:[%s3 + $0x35] sm:$0x1]
        %v10488 = vperm.slane %v10487, 0
        %v10489 = vmul.f32 %v5860, %v10488
        %v10490 = vmul.f32 %v5864, %v10488
        %v10491 = vmul.f32 %v5868, %v10488
        %v10492 = vmul.f32 %v5872, %v10488
        %v10493 = vmul.f32 %v5876, %v10488
        %v10494 = vmul.f32 %v5880, %v10488
        %v10495 = vmul.f32 %v5884, %v10488
        %v10496 = vmul.f32 %v5888, %v10488
        %v10497 = vmul.f32 %v5892, %v10488
        %v10498 = vmul.f32 %v5896, %v10488
        %v10499 = vmul.f32 %v5900, %v10488
        %v10500 = vmul.f32 %v5904, %v10488
        %v10501 = vmul.f32 %v5908, %v10488
        %v10502 = vmul.f32 %v5912, %v10488
        %v10503 = vmul.f32 %v5916, %v10488
        %v10504 = vmul.f32 %v5920, %v10488
        %v10505 = vmul.f32 %v7562, %v10488
        %v10506 = vmul.f32 %v7566, %v10488
        %v10507 = vmul.f32 %v9208, %v10488
        %v10508 = vmul.f32 %v9212, %v10488
        %v10529 = vrot.slane %v10489, 2
        %v10530 = vrot.slane %v10490, 2
        %v10531 = vsel %vm1869, %v10529, %v10530
        %v10532 = vrot.slane %v10491, 2
        %v10533 = vrot.slane %v10492, 2
        %v10534 = vsel %vm1869, %v10532, %v10533
        %v10535 = vrot.slane %v10493, 2
        %v10536 = vrot.slane %v10494, 2
        %v10537 = vsel %vm1869, %v10535, %v10536
        %v10538 = vrot.slane %v10495, 2
        %v10539 = vrot.slane %v10496, 2
        %v10540 = vsel %vm1869, %v10538, %v10539
        %v10541 = vrot.slane %v10497, 2
        %v10542 = vrot.slane %v10498, 2
        %v10543 = vsel %vm1869, %v10541, %v10542
        %v10544 = vrot.slane %v10499, 2
        %v10545 = vrot.slane %v10500, 2
        %v10546 = vsel %vm1869, %v10544, %v10545
        %v10547 = vrot.slane %v10501, 2
        %v10548 = vrot.slane %v10502, 2
        %v10549 = vsel %vm1869, %v10547, %v10548
        %v10550 = vrot.slane %v10503, 2
        %v10551 = vrot.slane %v10504, 2
        %v10552 = vsel %vm1869, %v10550, %v10551
        %v10553 = vrot.slane %v10505, 2
        %v10554 = vrot.slane %v10506, 2
        %v10555 = vsel %vm1869, %v10553, %v10554
        %v10556 = vrot.slane %v10507, 2
        %v10557 = vrot.slane %v10508, 2
        %v10558 = vsel %vm1869, %v10556, %v10557
        %v10579 = vadd.f32 %v10467, %v10531
        %v10580 = vadd.f32 %v10468, %v10530
        %v10581 = vadd.f32 %v10469, %v10534
        %v10582 = vadd.f32 %v10470, %v10533
        %v10583 = vadd.f32 %v10471, %v10537
        %v10584 = vadd.f32 %v10472, %v10536
        %v10585 = vadd.f32 %v10473, %v10540
        %v10586 = vadd.f32 %v10474, %v10539
        %v10587 = vadd.f32 %v10475, %v10543
        %v10588 = vadd.f32 %v10476, %v10542
        %v10589 = vadd.f32 %v10477, %v10546
        %v10590 = vadd.f32 %v10478, %v10545
        %v10591 = vadd.f32 %v10479, %v10549
        %v10592 = vadd.f32 %v10480, %v10548
        %v10593 = vadd.f32 %v10481, %v10552
        %v10594 = vadd.f32 %v10482, %v10551
        %v10595 = vadd.f32 %v10483, %v10555
        %v10596 = vadd.f32 %v10484, %v10554
        %v10597 = vadd.f32 %v10485, %v10558
        %v10598 = vadd.f32 %v10486, %v10557
        %v10599 = vld [vmem:[%s4] sm:$0x1]
        %v10601 = vperm.slane %v10599, 0
        %v10603 = vadd.f32 %v10579, %v10601
        %v10604 = vadd.f32 %v10580, %v10601
        %v10605 = vadd.f32 %v10581, %v10601
        %v10606 = vadd.f32 %v10582, %v10601
        %v10607 = vadd.f32 %v10583, %v10601
        %v10608 = vadd.f32 %v10584, %v10601
        %v10609 = vadd.f32 %v10585, %v10601
        %v10610 = vadd.f32 %v10586, %v10601
        %v10611 = vadd.f32 %v10587, %v10601
        %v10612 = vadd.f32 %v10588, %v10601
        %v10613 = vadd.f32 %v10589, %v10601
        %v10614 = vadd.f32 %v10590, %v10601
        %v10615 = vadd.f32 %v10591, %v10601
        %v10616 = vadd.f32 %v10592, %v10601
        %v10617 = vadd.f32 %v10593, %v10601
        %v10618 = vadd.f32 %v10594, %v10601
        %v10619 = vadd.f32 %v10595, %v10601
        %v10620 = vadd.f32 %v10596, %v10601
        %v10621 = vadd.f32 %v10597, %v10601
        %v10622 = vadd.f32 %v10598, %v10601
        %v10623 = vmax.f32 %v10603, 0.0
        %v10624 = vmax.f32 %v10604, 0.0
        %v10625 = vmax.f32 %v10605, 0.0
        %v10626 = vmax.f32 %v10606, 0.0
        %v10627 = vmax.f32 %v10607, 0.0
        %v10628 = vmax.f32 %v10608, 0.0
        %v10629 = vmax.f32 %v10609, 0.0
        %v10630 = vmax.f32 %v10610, 0.0
        %v10631 = vmax.f32 %v10611, 0.0
        %v10632 = vmax.f32 %v10612, 0.0
        %v10633 = vmax.f32 %v10613, 0.0
        %v10634 = vmax.f32 %v10614, 0.0
        %v10635 = vmax.f32 %v10615, 0.0
        %v10636 = vmax.f32 %v10616, 0.0
        %v10637 = vmax.f32 %v10617, 0.0
        %v10638 = vmax.f32 %v10618, 0.0
        %v10639 = vmax.f32 %v10619, 0.0
        %v10640 = vmax.f32 %v10620, 0.0
        %v10641 = vmax.f32 %v10621, 0.0
        %v10642 = vmax.f32 %v10622, 0.0
        %v10643 = vmax.f32 %v10623, %v10625
        %v10644 = vmax.f32 %v10624, %v10626
        %v10645 = vmax.f32 %v10627, %v10629
        %v10646 = vmax.f32 %v10628, %v10630
        %v10647 = vmax.f32 %v10631, %v10633
        %v10648 = vmax.f32 %v10632, %v10634
        %v10649 = vmax.f32 %v10635, %v10637
        %v10650 = vmax.f32 %v10636, %v10638
        %v10651 = vmax.f32 %v10639, %v10641
        %v10652 = vmax.f32 %v10640, %v10642
        %v10663 = vrot.slane %v10643, 1
        %v10664 = vrot.slane %v10644, 1
        %v10665 = vsel %vm1362, %v10663, %v10664
        %v10666 = vrot.slane %v10645, 1
        %v10667 = vrot.slane %v10646, 1
        %v10668 = vsel %vm1362, %v10666, %v10667
        %v10669 = vrot.slane %v10647, 1
        %v10670 = vrot.slane %v10648, 1
        %v10671 = vsel %vm1362, %v10669, %v10670
        %v10672 = vrot.slane %v10649, 1
        %v10673 = vrot.slane %v10650, 1
        %v10674 = vsel %vm1362, %v10672, %v10673
        %v10675 = vrot.slane %v10651, 1
        %v10676 = vrot.slane %v10652, 1
        %v10677 = vsel %vm1362, %v10675, %v10676
        %v10688 = vmax.f32 %v10643, %v10665
        %v10689 = vmax.f32 %v10644, %v10664
        %v10690 = vmax.f32 %v10645, %v10668
        %v10691 = vmax.f32 %v10646, %v10667
        %v10692 = vmax.f32 %v10647, %v10671
        %v10693 = vmax.f32 %v10648, %v10670
        %v10694 = vmax.f32 %v10649, %v10674
        %v10695 = vmax.f32 %v10650, %v10673
        %v10696 = vmax.f32 %v10651, %v10677
        %v10697 = vmax.f32 %v10652, %v10676
        %v10698 = vld [vmem:[%s6] sm:$0x1f]
        %vm10699 = vcmask 72704
        %v10701 = vsel %vm10699, %v10698, 0
        %vm10703 = vcmask 1040384
        %v10705 = vsel %vm10703, %v10689, 0
        %10707 = vmatpush.msra.mxu0 0.0
        %10708 = vmatpush.msra.mxu0 0.0
        %10709 = vmatpush.msra.mxu0 0.0
        %10710 = vmatpush.msra.mxu0 0.0
        %10711 = vmatpush.msra.mxu0 0.0
        %10712 = vmatpush.msra.mxu0 0.0
        %10713 = vmatpush.msra.mxu0 0.0
        %10714 = vmatpush.msra.mxu0 0.0
        %10715 = vmatpush.msra.mxu0 0.0
        %10716 = vmatpush.msra.mxu0 0.0
        %10717 = vmatpush.msra.mxu0 0.0
        %10718 = vmatpush.msra.mxu0 0.0
        %10719 = vmatpush.msra.mxu0 0.0
        %10720 = vmatpush.msra.mxu0 0.0
        %10721 = vmatpush.msra.mxu0 %v10705
        %10722 = vmatpush.msra.mxu0 %v10688
        %10723 = vmatmul.f32.gmra.mxu0 %v10701
        %v10724 = vpop.f32.mrf.mxu0
        %v10725 = vadd.f32 0.0, %v10724
        %10726 = vdwg.mxu0
        %v10728 = vsel %vm10703, %v10691, 0
        %10730 = vmatpush.msra.mxu0 0.0
        %10731 = vmatpush.msra.mxu0 0.0
        %10732 = vmatpush.msra.mxu0 0.0
        %10733 = vmatpush.msra.mxu0 0.0
        %10734 = vmatpush.msra.mxu0 0.0
        %10735 = vmatpush.msra.mxu0 0.0
        %10736 = vmatpush.msra.mxu0 0.0
        %10737 = vmatpush.msra.mxu0 0.0
        %10738 = vmatpush.msra.mxu0 0.0
        %10739 = vmatpush.msra.mxu0 0.0
        %10740 = vmatpush.msra.mxu0 0.0
        %10741 = vmatpush.msra.mxu0 0.0
        %10742 = vmatpush.msra.mxu0 0.0
        %10743 = vmatpush.msra.mxu0 0.0
        %10744 = vmatpush.msra.mxu0 %v10728
        %10745 = vmatpush.msra.mxu0 %v10690
        %10746 = vmatmul.f32.gmra.mxu0 %v10701
        %v10747 = vpop.f32.mrf.mxu0
        %v10748 = vadd.f32 0.0, %v10747
        %10749 = vdwg.mxu0
        %v10751 = vsel %vm10703, %v10693, 0
        %10753 = vmatpush.msra.mxu0 0.0
        %10754 = vmatpush.msra.mxu0 0.0
        %10755 = vmatpush.msra.mxu0 0.0
        %10756 = vmatpush.msra.mxu0 0.0
        %10757 = vmatpush.msra.mxu0 0.0
        %10758 = vmatpush.msra.mxu0 0.0
        %10759 = vmatpush.msra.mxu0 0.0
        %10760 = vmatpush.msra.mxu0 0.0
        %10761 = vmatpush.msra.mxu0 0.0
        %10762 = vmatpush.msra.mxu0 0.0
        %10763 = vmatpush.msra.mxu0 0.0
        %10764 = vmatpush.msra.mxu0 0.0
        %10765 = vmatpush.msra.mxu0 0.0
        %10766 = vmatpush.msra.mxu0 0.0
        %10767 = vmatpush.msra.mxu0 %v10751
        %10768 = vmatpush.msra.mxu0 %v10692
        %10769 = vmatmul.f32.gmra.mxu0 %v10701
        %v10770 = vpop.f32.mrf.mxu0
        %v10771 = vadd.f32 0.0, %v10770
        %10772 = vdwg.mxu0
        %v10774 = vsel %vm10703, %v10695, 0
        %10776 = vmatpush.msra.mxu0 0.0
        %10777 = vmatpush.msra.mxu0 0.0
        %10778 = vmatpush.msra.mxu0 0.0
        %10779 = vmatpush.msra.mxu0 0.0
        %10780 = vmatpush.msra.mxu0 0.0
        %10781 = vmatpush.msra.mxu0 0.0
        %10782 = vmatpush.msra.mxu0 0.0
        %10783 = vmatpush.msra.mxu0 0.0
        %10784 = vmatpush.msra.mxu0 0.0
        %10785 = vmatpush.msra.mxu0 0.0
        %10786 = vmatpush.msra.mxu0 0.0
        %10787 = vmatpush.msra.mxu0 0.0
        %10788 = vmatpush.msra.mxu0 0.0
        %10789 = vmatpush.msra.mxu0 0.0
        %10790 = vmatpush.msra.mxu0 %v10774
        %10791 = vmatpush.msra.mxu0 %v10694
        %10792 = vmatmul.f32.gmra.mxu0 %v10701
        %v10793 = vpop.f32.mrf.mxu0
        %v10794 = vadd.f32 0.0, %v10793
        %10795 = vdwg.mxu0
        %v10797 = vsel %vm10703, %v10697, 0
        %10799 = vmatpush.msra.mxu0 0.0
        %10800 = vmatpush.msra.mxu0 0.0
        %10801 = vmatpush.msra.mxu0 0.0
        %10802 = vmatpush.msra.mxu0 0.0
        %10803 = vmatpush.msra.mxu0 0.0
        %10804 = vmatpush.msra.mxu0 0.0
        %10805 = vmatpush.msra.mxu0 0.0
        %10806 = vmatpush.msra.mxu0 0.0
        %10807 = vmatpush.msra.mxu0 0.0
        %10808 = vmatpush.msra.mxu0 0.0
        %10809 = vmatpush.msra.mxu0 0.0
        %10810 = vmatpush.msra.mxu0 0.0
        %10811 = vmatpush.msra.mxu0 0.0
        %10812 = vmatpush.msra.mxu0 0.0
        %10813 = vmatpush.msra.mxu0 %v10797
        %10814 = vmatpush.msra.mxu0 %v10696
        %10815 = vmatmul.f32.gmra.mxu0 %v10701
        %v10816 = vpop.f32.mrf.mxu0
        %v10817 = vadd.f32 0.0, %v10816
        %10818 = vdwg.mxu0
        %v10819 = vld [vmem:[%s8] sm:$0x1]
        %v10820 = vld [vmem:[%s7] sm:$0xff]
        %v10821 = vld [vmem:[%s7 + $0x8] sm:$0xf]
        %vm10822 = vcmask 97280
        %v10824 = vsel %vm10822, %v10725, 0
        %vm10826 = vcmask 1043456
        %v10828 = vsel %vm10826, %v10821, 0
        %10830 = vmatpush.msra.mxu0 0.0
        %10831 = vmatpush.msra.mxu0 0.0
        %10832 = vmatpush.msra.mxu0 0.0
        %10833 = vmatpush.msra.mxu0 0.0
        %10834 = vmatpush.msra.mxu0 0.0
        %10835 = vmatpush.msra.mxu0 0.0
        %10836 = vmatpush.msra.mxu0 0.0
        %10837 = vmatpush.msra.mxu0 0.0
        %10838 = vmatpush.msra.mxu0 0.0
        %10839 = vmatpush.msra.mxu0 0.0
        %10840 = vmatpush.msra.mxu0 0.0
        %10841 = vmatpush.msra.mxu0 0.0
        %10842 = vmatpush.msra.mxu0 0.0
        %10843 = vmatpush.msra.mxu0 0.0
        %10844 = vmatpush.msra.mxu0 %v10828
        %10845 = vmatpush.msra.mxu0 %v10820
        %10846 = vmatmul.f32.gmra.mxu0 %v10824
        %v10847 = vpop.f32.mrf.mxu0
        %v10848 = vadd.f32 0.0, %v10847
        %10849 = vdwg.mxu0
        %v10850 = vadd.f32 %v10819, %v10848
        %s10851 = scalar_lea.vmem %s7, 16
        %v10852 = vld [vmem:[%s10851] sm:$0xff]
        %v10853 = vld [vmem:[%s10851 + $0x8] sm:$0xf]
        %v10854 = vrot.slane %v10725, 1
        %v10855 = vsel %vm10822, %v10854, 0
        %v10858 = vsel %vm10826, %v10853, 0
        %10860 = vmatpush.msra.mxu0 0.0
        %10861 = vmatpush.msra.mxu0 0.0
        %10862 = vmatpush.msra.mxu0 0.0
        %10863 = vmatpush.msra.mxu0 0.0
        %10864 = vmatpush.msra.mxu0 0.0
        %10865 = vmatpush.msra.mxu0 0.0
        %10866 = vmatpush.msra.mxu0 0.0
        %10867 = vmatpush.msra.mxu0 0.0
        %10868 = vmatpush.msra.mxu0 0.0
        %10869 = vmatpush.msra.mxu0 0.0
        %10870 = vmatpush.msra.mxu0 0.0
        %10871 = vmatpush.msra.mxu0 0.0
        %10872 = vmatpush.msra.mxu0 0.0
        %10873 = vmatpush.msra.mxu0 0.0
        %10874 = vmatpush.msra.mxu0 %v10858
        %10875 = vmatpush.msra.mxu0 %v10852
        %10876 = vmatmul.f32.gmra.mxu0 %v10855
        %v10877 = vpop.f32.mrf.mxu0
        %v10878 = vadd.f32 0.0, %v10877
        %10879 = vdwg.mxu0
        %v10880 = vadd.f32 %v10850, %v10878
        %s10881 = scalar_lea.vmem %s7, 32
        %v10882 = vld [vmem:[%s10881] sm:$0xff]
        %v10883 = vld [vmem:[%s10881 + $0x8] sm:$0xf]
        %v10884 = vrot.slane %v10725, 2
        %v10885 = vsel %vm10822, %v10884, 0
        %v10888 = vsel %vm10826, %v10883, 0
        %10890 = vmatpush.msra.mxu0 0.0
        %10891 = vmatpush.msra.mxu0 0.0
        %10892 = vmatpush.msra.mxu0 0.0
        %10893 = vmatpush.msra.mxu0 0.0
        %10894 = vmatpush.msra.mxu0 0.0
        %10895 = vmatpush.msra.mxu0 0.0
        %10896 = vmatpush.msra.mxu0 0.0
        %10897 = vmatpush.msra.mxu0 0.0
        %10898 = vmatpush.msra.mxu0 0.0
        %10899 = vmatpush.msra.mxu0 0.0
        %10900 = vmatpush.msra.mxu0 0.0
        %10901 = vmatpush.msra.mxu0 0.0
        %10902 = vmatpush.msra.mxu0 0.0
        %10903 = vmatpush.msra.mxu0 0.0
        %10904 = vmatpush.msra.mxu0 %v10888
        %10905 = vmatpush.msra.mxu0 %v10882
        %10906 = vmatmul.f32.gmra.mxu0 %v10885
        %v10907 = vpop.f32.mrf.mxu0
        %v10908 = vadd.f32 0.0, %v10907
        %10909 = vdwg.mxu0
        %v10910 = vadd.f32 %v10880, %v10908
        %s10911 = scalar_lea.vmem %s7, 48
        %v10912 = vld [vmem:[%s10911] sm:$0xff]
        %v10913 = vld [vmem:[%s10911 + $0x8] sm:$0xf]
        %v10914 = vrot.slane %v10725, 3
        %v10915 = vsel %vm10822, %v10914, 0
        %v10918 = vsel %vm10826, %v10913, 0
        %10920 = vmatpush.msra.mxu0 0.0
        %10921 = vmatpush.msra.mxu0 0.0
        %10922 = vmatpush.msra.mxu0 0.0
        %10923 = vmatpush.msra.mxu0 0.0
        %10924 = vmatpush.msra.mxu0 0.0
        %10925 = vmatpush.msra.mxu0 0.0
        %10926 = vmatpush.msra.mxu0 0.0
        %10927 = vmatpush.msra.mxu0 0.0
        %10928 = vmatpush.msra.mxu0 0.0
        %10929 = vmatpush.msra.mxu0 0.0
        %10930 = vmatpush.msra.mxu0 0.0
        %10931 = vmatpush.msra.mxu0 0.0
        %10932 = vmatpush.msra.mxu0 0.0
        %10933 = vmatpush.msra.mxu0 0.0
        %10934 = vmatpush.msra.mxu0 %v10918
        %10935 = vmatpush.msra.mxu0 %v10912
        %10936 = vmatmul.f32.gmra.mxu0 %v10915
        %v10937 = vpop.f32.mrf.mxu0
        %v10938 = vadd.f32 0.0, %v10937
        %10939 = vdwg.mxu0
        %v10940 = vadd.f32 %v10910, %v10938
        %s10941 = scalar_lea.vmem %s7, 64
        %v10942 = vld [vmem:[%s10941] sm:$0xff]
        %v10943 = vld [vmem:[%s10941 + $0x8] sm:$0xf]
        %v10944 = vrot.slane %v10725, 4
        %v10945 = vsel %vm10822, %v10944, 0
        %v10948 = vsel %vm10826, %v10943, 0
        %10950 = vmatpush.msra.mxu0 0.0
        %10951 = vmatpush.msra.mxu0 0.0
        %10952 = vmatpush.msra.mxu0 0.0
        %10953 = vmatpush.msra.mxu0 0.0
        %10954 = vmatpush.msra.mxu0 0.0
        %10955 = vmatpush.msra.mxu0 0.0
        %10956 = vmatpush.msra.mxu0 0.0
        %10957 = vmatpush.msra.mxu0 0.0
        %10958 = vmatpush.msra.mxu0 0.0
        %10959 = vmatpush.msra.mxu0 0.0
        %10960 = vmatpush.msra.mxu0 0.0
        %10961 = vmatpush.msra.mxu0 0.0
        %10962 = vmatpush.msra.mxu0 0.0
        %10963 = vmatpush.msra.mxu0 0.0
        %10964 = vmatpush.msra.mxu0 %v10948
        %10965 = vmatpush.msra.mxu0 %v10942
        %10966 = vmatmul.f32.gmra.mxu0 %v10945
        %v10967 = vpop.f32.mrf.mxu0
        %v10968 = vadd.f32 0.0, %v10967
        %10969 = vdwg.mxu0
        %v10970 = vadd.f32 %v10940, %v10968
        %s10971 = scalar_lea.vmem %s7, 80
        %v10972 = vld [vmem:[%s10971] sm:$0xff]
        %v10973 = vld [vmem:[%s10971 + $0x8] sm:$0xf]
        %v10975 = vsel %vm10822, %v10748, 0
        %v10978 = vsel %vm10826, %v10973, 0
        %10980 = vmatpush.msra.mxu0 0.0
        %10981 = vmatpush.msra.mxu0 0.0
        %10982 = vmatpush.msra.mxu0 0.0
        %10983 = vmatpush.msra.mxu0 0.0
        %10984 = vmatpush.msra.mxu0 0.0
        %10985 = vmatpush.msra.mxu0 0.0
        %10986 = vmatpush.msra.mxu0 0.0
        %10987 = vmatpush.msra.mxu0 0.0
        %10988 = vmatpush.msra.mxu0 0.0
        %10989 = vmatpush.msra.mxu0 0.0
        %10990 = vmatpush.msra.mxu0 0.0
        %10991 = vmatpush.msra.mxu0 0.0
        %10992 = vmatpush.msra.mxu0 0.0
        %10993 = vmatpush.msra.mxu0 0.0
        %10994 = vmatpush.msra.mxu0 %v10978
        %10995 = vmatpush.msra.mxu0 %v10972
        %10996 = vmatmul.f32.gmra.mxu0 %v10975
        %v10997 = vpop.f32.mrf.mxu0
        %v10998 = vadd.f32 0.0, %v10997
        %10999 = vdwg.mxu0
        %v11000 = vadd.f32 %v10970, %v10998
        %s11001 = scalar_lea.vmem %s7, 96
        %v11002 = vld [vmem:[%s11001] sm:$0xff]
        %v11003 = vld [vmem:[%s11001 + $0x8] sm:$0xf]
        %v11004 = vrot.slane %v10748, 1
        %v11005 = vsel %vm10822, %v11004, 0
        %v11008 = vsel %vm10826, %v11003, 0
        %11010 = vmatpush.msra.mxu0 0.0
        %11011 = vmatpush.msra.mxu0 0.0
        %11012 = vmatpush.msra.mxu0 0.0
        %11013 = vmatpush.msra.mxu0 0.0
        %11014 = vmatpush.msra.mxu0 0.0
        %11015 = vmatpush.msra.mxu0 0.0
        %11016 = vmatpush.msra.mxu0 0.0
        %11017 = vmatpush.msra.mxu0 0.0
        %11018 = vmatpush.msra.mxu0 0.0
        %11019 = vmatpush.msra.mxu0 0.0
        %11020 = vmatpush.msra.mxu0 0.0
        %11021 = vmatpush.msra.mxu0 0.0
        %11022 = vmatpush.msra.mxu0 0.0
        %11023 = vmatpush.msra.mxu0 0.0
        %11024 = vmatpush.msra.mxu0 %v11008
        %11025 = vmatpush.msra.mxu0 %v11002
        %11026 = vmatmul.f32.gmra.mxu0 %v11005
        %v11027 = vpop.f32.mrf.mxu0
        %v11028 = vadd.f32 0.0, %v11027
        %11029 = vdwg.mxu0
        %v11030 = vadd.f32 %v11000, %v11028
        %s11031 = scalar_lea.vmem %s7, 112
        %v11032 = vld [vmem:[%s11031] sm:$0xff]
        %v11033 = vld [vmem:[%s11031 + $0x8] sm:$0xf]
        %v11034 = vrot.slane %v10748, 2
        %v11035 = vsel %vm10822, %v11034, 0
        %v11038 = vsel %vm10826, %v11033, 0
        %11040 = vmatpush.msra.mxu0 0.0
        %11041 = vmatpush.msra.mxu0 0.0
        %11042 = vmatpush.msra.mxu0 0.0
        %11043 = vmatpush.msra.mxu0 0.0
        %11044 = vmatpush.msra.mxu0 0.0
        %11045 = vmatpush.msra.mxu0 0.0
        %11046 = vmatpush.msra.mxu0 0.0
        %11047 = vmatpush.msra.mxu0 0.0
        %11048 = vmatpush.msra.mxu0 0.0
        %11049 = vmatpush.msra.mxu0 0.0
        %11050 = vmatpush.msra.mxu0 0.0
        %11051 = vmatpush.msra.mxu0 0.0
        %11052 = vmatpush.msra.mxu0 0.0
        %11053 = vmatpush.msra.mxu0 0.0
        %11054 = vmatpush.msra.mxu0 %v11038
        %11055 = vmatpush.msra.mxu0 %v11032
        %11056 = vmatmul.f32.gmra.mxu0 %v11035
        %v11057 = vpop.f32.mrf.mxu0
        %v11058 = vadd.f32 0.0, %v11057
        %11059 = vdwg.mxu0
        %v11060 = vadd.f32 %v11030, %v11058
        %s11061 = scalar_lea.vmem %s7, 128
        %v11062 = vld [vmem:[%s11061] sm:$0xff]
        %v11063 = vld [vmem:[%s11061 + $0x8] sm:$0xf]
        %v11064 = vrot.slane %v10748, 3
        %v11065 = vsel %vm10822, %v11064, 0
        %v11068 = vsel %vm10826, %v11063, 0
        %11070 = vmatpush.msra.mxu0 0.0
        %11071 = vmatpush.msra.mxu0 0.0
        %11072 = vmatpush.msra.mxu0 0.0
        %11073 = vmatpush.msra.mxu0 0.0
        %11074 = vmatpush.msra.mxu0 0.0
        %11075 = vmatpush.msra.mxu0 0.0
        %11076 = vmatpush.msra.mxu0 0.0
        %11077 = vmatpush.msra.mxu0 0.0
        %11078 = vmatpush.msra.mxu0 0.0
        %11079 = vmatpush.msra.mxu0 0.0
        %11080 = vmatpush.msra.mxu0 0.0
        %11081 = vmatpush.msra.mxu0 0.0
        %11082 = vmatpush.msra.mxu0 0.0
        %11083 = vmatpush.msra.mxu0 0.0
        %11084 = vmatpush.msra.mxu0 %v11068
        %11085 = vmatpush.msra.mxu0 %v11062
        %11086 = vmatmul.f32.gmra.mxu0 %v11065
        %v11087 = vpop.f32.mrf.mxu0
        %v11088 = vadd.f32 0.0, %v11087
        %11089 = vdwg.mxu0
        %v11090 = vadd.f32 %v11060, %v11088
        %s11091 = scalar_lea.vmem %s7, 144
        %v11092 = vld [vmem:[%s11091] sm:$0xff]
        %v11093 = vld [vmem:[%s11091 + $0x8] sm:$0xf]
        %v11094 = vrot.slane %v10748, 4
        %v11095 = vsel %vm10822, %v11094, 0
        %v11098 = vsel %vm10826, %v11093, 0
        %11100 = vmatpush.msra.mxu0 0.0
        %11101 = vmatpush.msra.mxu0 0.0
        %11102 = vmatpush.msra.mxu0 0.0
        %11103 = vmatpush.msra.mxu0 0.0
        %11104 = vmatpush.msra.mxu0 0.0
        %11105 = vmatpush.msra.mxu0 0.0
        %11106 = vmatpush.msra.mxu0 0.0
        %11107 = vmatpush.msra.mxu0 0.0
        %11108 = vmatpush.msra.mxu0 0.0
        %11109 = vmatpush.msra.mxu0 0.0
        %11110 = vmatpush.msra.mxu0 0.0
        %11111 = vmatpush.msra.mxu0 0.0
        %11112 = vmatpush.msra.mxu0 0.0
        %11113 = vmatpush.msra.mxu0 0.0
        %11114 = vmatpush.msra.mxu0 %v11098
        %11115 = vmatpush.msra.mxu0 %v11092
        %11116 = vmatmul.f32.gmra.mxu0 %v11095
        %v11117 = vpop.f32.mrf.mxu0
        %v11118 = vadd.f32 0.0, %v11117
        %11119 = vdwg.mxu0
        %v11120 = vadd.f32 %v11090, %v11118
        %s11121 = scalar_lea.vmem %s7, 160
        %v11122 = vld [vmem:[%s11121] sm:$0xff]
        %v11123 = vld [vmem:[%s11121 + $0x8] sm:$0xf]
        %v11125 = vsel %vm10822, %v10771, 0
        %v11128 = vsel %vm10826, %v11123, 0
        %11130 = vmatpush.msra.mxu0 0.0
        %11131 = vmatpush.msra.mxu0 0.0
        %11132 = vmatpush.msra.mxu0 0.0
        %11133 = vmatpush.msra.mxu0 0.0
        %11134 = vmatpush.msra.mxu0 0.0
        %11135 = vmatpush.msra.mxu0 0.0
        %11136 = vmatpush.msra.mxu0 0.0
        %11137 = vmatpush.msra.mxu0 0.0
        %11138 = vmatpush.msra.mxu0 0.0
        %11139 = vmatpush.msra.mxu0 0.0
        %11140 = vmatpush.msra.mxu0 0.0
        %11141 = vmatpush.msra.mxu0 0.0
        %11142 = vmatpush.msra.mxu0 0.0
        %11143 = vmatpush.msra.mxu0 0.0
        %11144 = vmatpush.msra.mxu0 %v11128
        %11145 = vmatpush.msra.mxu0 %v11122
        %11146 = vmatmul.f32.gmra.mxu0 %v11125
        %v11147 = vpop.f32.mrf.mxu0
        %v11148 = vadd.f32 0.0, %v11147
        %11149 = vdwg.mxu0
        %v11150 = vadd.f32 %v11120, %v11148
        %s11151 = scalar_lea.vmem %s7, 176
        %v11152 = vld [vmem:[%s11151] sm:$0xff]
        %v11153 = vld [vmem:[%s11151 + $0x8] sm:$0xf]
        %v11154 = vrot.slane %v10771, 1
        %v11155 = vsel %vm10822, %v11154, 0
        %v11158 = vsel %vm10826, %v11153, 0
        %11160 = vmatpush.msra.mxu0 0.0
        %11161 = vmatpush.msra.mxu0 0.0
        %11162 = vmatpush.msra.mxu0 0.0
        %11163 = vmatpush.msra.mxu0 0.0
        %11164 = vmatpush.msra.mxu0 0.0
        %11165 = vmatpush.msra.mxu0 0.0
        %11166 = vmatpush.msra.mxu0 0.0
        %11167 = vmatpush.msra.mxu0 0.0
        %11168 = vmatpush.msra.mxu0 0.0
        %11169 = vmatpush.msra.mxu0 0.0
        %11170 = vmatpush.msra.mxu0 0.0
        %11171 = vmatpush.msra.mxu0 0.0
        %11172 = vmatpush.msra.mxu0 0.0
        %11173 = vmatpush.msra.mxu0 0.0
        %11174 = vmatpush.msra.mxu0 %v11158
        %11175 = vmatpush.msra.mxu0 %v11152
        %11176 = vmatmul.f32.gmra.mxu0 %v11155
        %v11177 = vpop.f32.mrf.mxu0
        %v11178 = vadd.f32 0.0, %v11177
        %11179 = vdwg.mxu0
        %v11180 = vadd.f32 %v11150, %v11178
        %s11181 = scalar_lea.vmem %s7, 192
        %v11182 = vld [vmem:[%s11181] sm:$0xff]
        %v11183 = vld [vmem:[%s11181 + $0x8] sm:$0xf]
        %v11184 = vrot.slane %v10771, 2
        %v11185 = vsel %vm10822, %v11184, 0
        %v11188 = vsel %vm10826, %v11183, 0
        %11190 = vmatpush.msra.mxu0 0.0
        %11191 = vmatpush.msra.mxu0 0.0
        %11192 = vmatpush.msra.mxu0 0.0
        %11193 = vmatpush.msra.mxu0 0.0
        %11194 = vmatpush.msra.mxu0 0.0
        %11195 = vmatpush.msra.mxu0 0.0
        %11196 = vmatpush.msra.mxu0 0.0
        %11197 = vmatpush.msra.mxu0 0.0
        %11198 = vmatpush.msra.mxu0 0.0
        %11199 = vmatpush.msra.mxu0 0.0
        %11200 = vmatpush.msra.mxu0 0.0
        %11201 = vmatpush.msra.mxu0 0.0
        %11202 = vmatpush.msra.mxu0 0.0
        %11203 = vmatpush.msra.mxu0 0.0
        %11204 = vmatpush.msra.mxu0 %v11188
        %11205 = vmatpush.msra.mxu0 %v11182
        %11206 = vmatmul.f32.gmra.mxu0 %v11185
        %v11207 = vpop.f32.mrf.mxu0
        %v11208 = vadd.f32 0.0, %v11207
        %11209 = vdwg.mxu0
        %v11210 = vadd.f32 %v11180, %v11208
        %s11211 = scalar_lea.vmem %s7, 208
        %v11212 = vld [vmem:[%s11211] sm:$0xff]
        %v11213 = vld [vmem:[%s11211 + $0x8] sm:$0xf]
        %v11214 = vrot.slane %v10771, 3
        %v11215 = vsel %vm10822, %v11214, 0
        %v11218 = vsel %vm10826, %v11213, 0
        %11220 = vmatpush.msra.mxu0 0.0
        %11221 = vmatpush.msra.mxu0 0.0
        %11222 = vmatpush.msra.mxu0 0.0
        %11223 = vmatpush.msra.mxu0 0.0
        %11224 = vmatpush.msra.mxu0 0.0
        %11225 = vmatpush.msra.mxu0 0.0
        %11226 = vmatpush.msra.mxu0 0.0
        %11227 = vmatpush.msra.mxu0 0.0
        %11228 = vmatpush.msra.mxu0 0.0
        %11229 = vmatpush.msra.mxu0 0.0
        %11230 = vmatpush.msra.mxu0 0.0
        %11231 = vmatpush.msra.mxu0 0.0
        %11232 = vmatpush.msra.mxu0 0.0
        %11233 = vmatpush.msra.mxu0 0.0
        %11234 = vmatpush.msra.mxu0 %v11218
        %11235 = vmatpush.msra.mxu0 %v11212
        %11236 = vmatmul.f32.gmra.mxu0 %v11215
        %v11237 = vpop.f32.mrf.mxu0
        %v11238 = vadd.f32 0.0, %v11237
        %11239 = vdwg.mxu0
        %v11240 = vadd.f32 %v11210, %v11238
        %s11241 = scalar_lea.vmem %s7, 224
        %v11242 = vld [vmem:[%s11241] sm:$0xff]
        %v11243 = vld [vmem:[%s11241 + $0x8] sm:$0xf]
        %v11244 = vrot.slane %v10771, 4
        %v11245 = vsel %vm10822, %v11244, 0
        %v11248 = vsel %vm10826, %v11243, 0
        %11250 = vmatpush.msra.mxu0 0.0
        %11251 = vmatpush.msra.mxu0 0.0
        %11252 = vmatpush.msra.mxu0 0.0
        %11253 = vmatpush.msra.mxu0 0.0
        %11254 = vmatpush.msra.mxu0 0.0
        %11255 = vmatpush.msra.mxu0 0.0
        %11256 = vmatpush.msra.mxu0 0.0
        %11257 = vmatpush.msra.mxu0 0.0
        %11258 = vmatpush.msra.mxu0 0.0
        %11259 = vmatpush.msra.mxu0 0.0
        %11260 = vmatpush.msra.mxu0 0.0
        %11261 = vmatpush.msra.mxu0 0.0
        %11262 = vmatpush.msra.mxu0 0.0
        %11263 = vmatpush.msra.mxu0 0.0
        %11264 = vmatpush.msra.mxu0 %v11248
        %11265 = vmatpush.msra.mxu0 %v11242
        %11266 = vmatmul.f32.gmra.mxu0 %v11245
        %v11267 = vpop.f32.mrf.mxu0
        %v11268 = vadd.f32 0.0, %v11267
        %11269 = vdwg.mxu0
        %v11270 = vadd.f32 %v11240, %v11268
        %s11271 = scalar_lea.vmem %s7, 240
        %v11272 = vld [vmem:[%s11271] sm:$0xff]
        %v11273 = vld [vmem:[%s11271 + $0x8] sm:$0xf]
        %v11275 = vsel %vm10822, %v10794, 0
        %v11278 = vsel %vm10826, %v11273, 0
        %11280 = vmatpush.msra.mxu0 0.0
        %11281 = vmatpush.msra.mxu0 0.0
        %11282 = vmatpush.msra.mxu0 0.0
        %11283 = vmatpush.msra.mxu0 0.0
        %11284 = vmatpush.msra.mxu0 0.0
        %11285 = vmatpush.msra.mxu0 0.0
        %11286 = vmatpush.msra.mxu0 0.0
        %11287 = vmatpush.msra.mxu0 0.0
        %11288 = vmatpush.msra.mxu0 0.0
        %11289 = vmatpush.msra.mxu0 0.0
        %11290 = vmatpush.msra.mxu0 0.0
        %11291 = vmatpush.msra.mxu0 0.0
        %11292 = vmatpush.msra.mxu0 0.0
        %11293 = vmatpush.msra.mxu0 0.0
        %11294 = vmatpush.msra.mxu0 %v11278
        %11295 = vmatpush.msra.mxu0 %v11272
        %11296 = vmatmul.f32.gmra.mxu0 %v11275
        %v11297 = vpop.f32.mrf.mxu0
        %v11298 = vadd.f32 0.0, %v11297
        %11299 = vdwg.mxu0
        %v11300 = vadd.f32 %v11270, %v11298
        %s11301 = scalar_lea.vmem %s7, 256
        %v11302 = vld [vmem:[%s11301] sm:$0xff]
        %v11303 = vld [vmem:[%s11301 + $0x8] sm:$0xf]
        %v11304 = vrot.slane %v10794, 1
        %v11305 = vsel %vm10822, %v11304, 0
        %v11308 = vsel %vm10826, %v11303, 0
        %11310 = vmatpush.msra.mxu0 0.0
        %11311 = vmatpush.msra.mxu0 0.0
        %11312 = vmatpush.msra.mxu0 0.0
        %11313 = vmatpush.msra.mxu0 0.0
        %11314 = vmatpush.msra.mxu0 0.0
        %11315 = vmatpush.msra.mxu0 0.0
        %11316 = vmatpush.msra.mxu0 0.0
        %11317 = vmatpush.msra.mxu0 0.0
        %11318 = vmatpush.msra.mxu0 0.0
        %11319 = vmatpush.msra.mxu0 0.0
        %11320 = vmatpush.msra.mxu0 0.0
        %11321 = vmatpush.msra.mxu0 0.0
        %11322 = vmatpush.msra.mxu0 0.0
        %11323 = vmatpush.msra.mxu0 0.0
        %11324 = vmatpush.msra.mxu0 %v11308
        %11325 = vmatpush.msra.mxu0 %v11302
        %11326 = vmatmul.f32.gmra.mxu0 %v11305
        %v11327 = vpop.f32.mrf.mxu0
        %v11328 = vadd.f32 0.0, %v11327
        %11329 = vdwg.mxu0
        %v11330 = vadd.f32 %v11300, %v11328
        %s11331 = scalar_lea.vmem %s7, 272
        %v11332 = vld [vmem:[%s11331] sm:$0xff]
        %v11333 = vld [vmem:[%s11331 + $0x8] sm:$0xf]
        %v11334 = vrot.slane %v10794, 2
        %v11335 = vsel %vm10822, %v11334, 0
        %v11338 = vsel %vm10826, %v11333, 0
        %11340 = vmatpush.msra.mxu0 0.0
        %11341 = vmatpush.msra.mxu0 0.0
        %11342 = vmatpush.msra.mxu0 0.0
        %11343 = vmatpush.msra.mxu0 0.0
        %11344 = vmatpush.msra.mxu0 0.0
        %11345 = vmatpush.msra.mxu0 0.0
        %11346 = vmatpush.msra.mxu0 0.0
        %11347 = vmatpush.msra.mxu0 0.0
        %11348 = vmatpush.msra.mxu0 0.0
        %11349 = vmatpush.msra.mxu0 0.0
        %11350 = vmatpush.msra.mxu0 0.0
        %11351 = vmatpush.msra.mxu0 0.0
        %11352 = vmatpush.msra.mxu0 0.0
        %11353 = vmatpush.msra.mxu0 0.0
        %11354 = vmatpush.msra.mxu0 %v11338
        %11355 = vmatpush.msra.mxu0 %v11332
        %11356 = vmatmul.f32.gmra.mxu0 %v11335
        %v11357 = vpop.f32.mrf.mxu0
        %v11358 = vadd.f32 0.0, %v11357
        %11359 = vdwg.mxu0
        %v11360 = vadd.f32 %v11330, %v11358
        %s11361 = scalar_lea.vmem %s7, 288
        %v11362 = vld [vmem:[%s11361] sm:$0xff]
        %v11363 = vld [vmem:[%s11361 + $0x8] sm:$0xf]
        %v11364 = vrot.slane %v10794, 3
        %v11365 = vsel %vm10822, %v11364, 0
        %v11368 = vsel %vm10826, %v11363, 0
        %11370 = vmatpush.msra.mxu0 0.0
        %11371 = vmatpush.msra.mxu0 0.0
        %11372 = vmatpush.msra.mxu0 0.0
        %11373 = vmatpush.msra.mxu0 0.0
        %11374 = vmatpush.msra.mxu0 0.0
        %11375 = vmatpush.msra.mxu0 0.0
        %11376 = vmatpush.msra.mxu0 0.0
        %11377 = vmatpush.msra.mxu0 0.0
        %11378 = vmatpush.msra.mxu0 0.0
        %11379 = vmatpush.msra.mxu0 0.0
        %11380 = vmatpush.msra.mxu0 0.0
        %11381 = vmatpush.msra.mxu0 0.0
        %11382 = vmatpush.msra.mxu0 0.0
        %11383 = vmatpush.msra.mxu0 0.0
        %11384 = vmatpush.msra.mxu0 %v11368
        %11385 = vmatpush.msra.mxu0 %v11362
        %11386 = vmatmul.f32.gmra.mxu0 %v11365
        %v11387 = vpop.f32.mrf.mxu0
        %v11388 = vadd.f32 0.0, %v11387
        %11389 = vdwg.mxu0
        %v11390 = vadd.f32 %v11360, %v11388
        %s11391 = scalar_lea.vmem %s7, 304
        %v11392 = vld [vmem:[%s11391] sm:$0xff]
        %v11393 = vld [vmem:[%s11391 + $0x8] sm:$0xf]
        %v11394 = vrot.slane %v10794, 4
        %v11395 = vsel %vm10822, %v11394, 0
        %v11398 = vsel %vm10826, %v11393, 0
        %11400 = vmatpush.msra.mxu0 0.0
        %11401 = vmatpush.msra.mxu0 0.0
        %11402 = vmatpush.msra.mxu0 0.0
        %11403 = vmatpush.msra.mxu0 0.0
        %11404 = vmatpush.msra.mxu0 0.0
        %11405 = vmatpush.msra.mxu0 0.0
        %11406 = vmatpush.msra.mxu0 0.0
        %11407 = vmatpush.msra.mxu0 0.0
        %11408 = vmatpush.msra.mxu0 0.0
        %11409 = vmatpush.msra.mxu0 0.0
        %11410 = vmatpush.msra.mxu0 0.0
        %11411 = vmatpush.msra.mxu0 0.0
        %11412 = vmatpush.msra.mxu0 0.0
        %11413 = vmatpush.msra.mxu0 0.0
        %11414 = vmatpush.msra.mxu0 %v11398
        %11415 = vmatpush.msra.mxu0 %v11392
        %11416 = vmatmul.f32.gmra.mxu0 %v11395
        %v11417 = vpop.f32.mrf.mxu0
        %v11418 = vadd.f32 0.0, %v11417
        %11419 = vdwg.mxu0
        %v11420 = vadd.f32 %v11390, %v11418
        %s11421 = scalar_lea.vmem %s7, 320
        %v11422 = vld [vmem:[%s11421] sm:$0xff]
        %v11423 = vld [vmem:[%s11421 + $0x8] sm:$0xf]
        %v11425 = vsel %vm10822, %v10817, 0
        %v11428 = vsel %vm10826, %v11423, 0
        %11430 = vmatpush.msra.mxu0 0.0
        %11431 = vmatpush.msra.mxu0 0.0
        %11432 = vmatpush.msra.mxu0 0.0
        %11433 = vmatpush.msra.mxu0 0.0
        %11434 = vmatpush.msra.mxu0 0.0
        %11435 = vmatpush.msra.mxu0 0.0
        %11436 = vmatpush.msra.mxu0 0.0
        %11437 = vmatpush.msra.mxu0 0.0
        %11438 = vmatpush.msra.mxu0 0.0
        %11439 = vmatpush.msra.mxu0 0.0
        %11440 = vmatpush.msra.mxu0 0.0
        %11441 = vmatpush.msra.mxu0 0.0
        %11442 = vmatpush.msra.mxu0 0.0
        %11443 = vmatpush.msra.mxu0 0.0
        %11444 = vmatpush.msra.mxu0 %v11428
        %11445 = vmatpush.msra.mxu0 %v11422
        %11446 = vmatmul.f32.gmra.mxu0 %v11425
        %v11447 = vpop.f32.mrf.mxu0
        %v11448 = vadd.f32 0.0, %v11447
        %11449 = vdwg.mxu0
        %v11450 = vadd.f32 %v11420, %v11448
        %s11451 = scalar_lea.vmem %s7, 336
        %v11452 = vld [vmem:[%s11451] sm:$0xff]
        %v11453 = vld [vmem:[%s11451 + $0x8] sm:$0xf]
        %v11454 = vrot.slane %v10817, 1
        %v11455 = vsel %vm10822, %v11454, 0
        %v11458 = vsel %vm10826, %v11453, 0
        %11460 = vmatpush.msra.mxu0 0.0
        %11461 = vmatpush.msra.mxu0 0.0
        %11462 = vmatpush.msra.mxu0 0.0
        %11463 = vmatpush.msra.mxu0 0.0
        %11464 = vmatpush.msra.mxu0 0.0
        %11465 = vmatpush.msra.mxu0 0.0
        %11466 = vmatpush.msra.mxu0 0.0
        %11467 = vmatpush.msra.mxu0 0.0
        %11468 = vmatpush.msra.mxu0 0.0
        %11469 = vmatpush.msra.mxu0 0.0
        %11470 = vmatpush.msra.mxu0 0.0
        %11471 = vmatpush.msra.mxu0 0.0
        %11472 = vmatpush.msra.mxu0 0.0
        %11473 = vmatpush.msra.mxu0 0.0
        %11474 = vmatpush.msra.mxu0 %v11458
        %11475 = vmatpush.msra.mxu0 %v11452
        %11476 = vmatmul.f32.gmra.mxu0 %v11455
        %v11477 = vpop.f32.mrf.mxu0
        %v11478 = vadd.f32 0.0, %v11477
        %11479 = vdwg.mxu0
        %v11480 = vadd.f32 %v11450, %v11478
        %s11481 = scalar_lea.vmem %s7, 352
        %v11482 = vld [vmem:[%s11481] sm:$0xff]
        %v11483 = vld [vmem:[%s11481 + $0x8] sm:$0xf]
        %v11484 = vrot.slane %v10817, 2
        %v11485 = vsel %vm10822, %v11484, 0
        %v11488 = vsel %vm10826, %v11483, 0
        %11490 = vmatpush.msra.mxu0 0.0
        %11491 = vmatpush.msra.mxu0 0.0
        %11492 = vmatpush.msra.mxu0 0.0
        %11493 = vmatpush.msra.mxu0 0.0
        %11494 = vmatpush.msra.mxu0 0.0
        %11495 = vmatpush.msra.mxu0 0.0
        %11496 = vmatpush.msra.mxu0 0.0
        %11497 = vmatpush.msra.mxu0 0.0
        %11498 = vmatpush.msra.mxu0 0.0
        %11499 = vmatpush.msra.mxu0 0.0
        %11500 = vmatpush.msra.mxu0 0.0
        %11501 = vmatpush.msra.mxu0 0.0
        %11502 = vmatpush.msra.mxu0 0.0
        %11503 = vmatpush.msra.mxu0 0.0
        %11504 = vmatpush.msra.mxu0 %v11488
        %11505 = vmatpush.msra.mxu0 %v11482
        %11506 = vmatmul.f32.gmra.mxu0 %v11485
        %v11507 = vpop.f32.mrf.mxu0
        %v11508 = vadd.f32 0.0, %v11507
        %11509 = vdwg.mxu0
        %v11510 = vadd.f32 %v11480, %v11508
        %s11511 = scalar_lea.vmem %s7, 368
        %v11512 = vld [vmem:[%s11511] sm:$0xff]
        %v11513 = vld [vmem:[%s11511 + $0x8] sm:$0xf]
        %v11514 = vrot.slane %v10817, 3
        %v11515 = vsel %vm10822, %v11514, 0
        %v11518 = vsel %vm10826, %v11513, 0
        %11520 = vmatpush.msra.mxu0 0.0
        %11521 = vmatpush.msra.mxu0 0.0
        %11522 = vmatpush.msra.mxu0 0.0
        %11523 = vmatpush.msra.mxu0 0.0
        %11524 = vmatpush.msra.mxu0 0.0
        %11525 = vmatpush.msra.mxu0 0.0
        %11526 = vmatpush.msra.mxu0 0.0
        %11527 = vmatpush.msra.mxu0 0.0
        %11528 = vmatpush.msra.mxu0 0.0
        %11529 = vmatpush.msra.mxu0 0.0
        %11530 = vmatpush.msra.mxu0 0.0
        %11531 = vmatpush.msra.mxu0 0.0
        %11532 = vmatpush.msra.mxu0 0.0
        %11533 = vmatpush.msra.mxu0 0.0
        %11534 = vmatpush.msra.mxu0 %v11518
        %11535 = vmatpush.msra.mxu0 %v11512
        %11536 = vmatmul.f32.gmra.mxu0 %v11515
        %v11537 = vpop.f32.mrf.mxu0
        %v11538 = vadd.f32 0.0, %v11537
        %11539 = vdwg.mxu0
        %v11540 = vadd.f32 %v11510, %v11538
        %s11541 = scalar_lea.vmem %s7, 384
        %v11542 = vld [vmem:[%s11541] sm:$0xff]
        %v11543 = vld [vmem:[%s11541 + $0x8] sm:$0xf]
        %v11544 = vrot.slane %v10817, 4
        %v11545 = vsel %vm10822, %v11544, 0
        %v11548 = vsel %vm10826, %v11543, 0
        %11550 = vmatpush.msra.mxu0 0.0
        %11551 = vmatpush.msra.mxu0 0.0
        %11552 = vmatpush.msra.mxu0 0.0
        %11553 = vmatpush.msra.mxu0 0.0
        %11554 = vmatpush.msra.mxu0 0.0
        %11555 = vmatpush.msra.mxu0 0.0
        %11556 = vmatpush.msra.mxu0 0.0
        %11557 = vmatpush.msra.mxu0 0.0
        %11558 = vmatpush.msra.mxu0 0.0
        %11559 = vmatpush.msra.mxu0 0.0
        %11560 = vmatpush.msra.mxu0 0.0
        %11561 = vmatpush.msra.mxu0 0.0
        %11562 = vmatpush.msra.mxu0 0.0
        %11563 = vmatpush.msra.mxu0 0.0
        %11564 = vmatpush.msra.mxu0 %v11548
        %11565 = vmatpush.msra.mxu0 %v11542
        %11566 = vmatmul.f32.gmra.mxu0 %v11545
        %v11567 = vpop.f32.mrf.mxu0
        %v11568 = vadd.f32 0.0, %v11567
        %11569 = vdwg.mxu0
        %v11570 = vadd.f32 %v11540, %v11568
        %v11571 = vmax.f32 %v11570, 0.0
        %v11572 = vld [vmem:[%s9] sm:$0xff]
        %v11573 = vld [vmem:[%s9 + $0x8] sm:$0xff]
        %v11574 = vld [vmem:[%s9 + $0x10] sm:$0xff]
        %v11575 = vld [vmem:[%s9 + $0x18] sm:$0xff]
        %v11576 = vld [vmem:[%s9 + $0x20] sm:$0xff]
        %v11577 = vld [vmem:[%s9 + $0x28] sm:$0xff]
        %v11578 = vld [vmem:[%s9 + $0x30] sm:$0xff]
        %v11579 = vld [vmem:[%s9 + $0x38] sm:$0xff]
        %v11580 = vld [vmem:[%s9 + $0x40] sm:$0xff]
        %v11581 = vld [vmem:[%s9 + $0x48] sm:$0xff]
        %v11582 = vld [vmem:[%s9 + $0x50] sm:$0xff]
        %v11583 = vld [vmem:[%s9 + $0x58] sm:$0xff]
        %v11584 = vld [vmem:[%s9 + $0x60] sm:$0xff]
        %v11585 = vld [vmem:[%s9 + $0x68] sm:$0xff]
        %v11586 = vld [vmem:[%s9 + $0x70] sm:$0xff]
        %v11587 = vld [vmem:[%s9 + $0x78] sm:$0xff]
        %v11588 = vld [vmem:[%s10] sm:$0x1]
        %11589 = vmatpush.msra.mxu0 %v11587
        %11590 = vmatpush.msra.mxu0 %v11586
        %11591 = vmatpush.msra.mxu0 %v11585
        %11592 = vmatpush.msra.mxu0 %v11584
        %11593 = vmatpush.msra.mxu0 %v11583
        %11594 = vmatpush.msra.mxu0 %v11582
        %11595 = vmatpush.msra.mxu0 %v11581
        %11596 = vmatpush.msra.mxu0 %v11580
        %11597 = vmatpush.msra.mxu0 %v11579
        %11598 = vmatpush.msra.mxu0 %v11578
        %11599 = vmatpush.msra.mxu0 %v11577
        %11600 = vmatpush.msra.mxu0 %v11576
        %11601 = vmatpush.msra.mxu0 %v11575
        %11602 = vmatpush.msra.mxu0 %v11574
        %11603 = vmatpush.msra.mxu0 %v11573
        %11604 = vmatpush.msra.mxu0 %v11572
        %11605 = vmatmul.f32.gmra.mxu0 %v11571
        %v11606 = vpop.f32.mrf.mxu0
        %v11607 = vadd.f32 %v11588, %v11606
        %11608 = vdwg.mxu0
        %v11609 = vmax.f32 %v11607, 0.0
        %v11610 = vld [vmem:[%s11] sm:$0xff]
        %v11611 = vld [vmem:[%s11 + $0x8] sm:$0xff]
        %v11612 = vld [vmem:[%s11 + $0x10] sm:$0xff]
        %v11613 = vld [vmem:[%s11 + $0x18] sm:$0xff]
        %v11614 = vld [vmem:[%s11 + $0x20] sm:$0xff]
        %v11615 = vld [vmem:[%s11 + $0x28] sm:$0xff]
        %v11616 = vld [vmem:[%s11 + $0x30] sm:$0xff]
        %v11617 = vld [vmem:[%s11 + $0x38] sm:$0xff]
        %v11618 = vld [vmem:[%s11 + $0x40] sm:$0xff]
        %v11619 = vld [vmem:[%s11 + $0x48] sm:$0xff]
        %v11620 = vld [vmem:[%s11 + $0x50] sm:$0xff]
        %v11621 = vld [vmem:[%s11 + $0x58] sm:$0xff]
        %v11622 = vld [vmem:[%s11 + $0x60] sm:$0xff]
        %v11623 = vld [vmem:[%s11 + $0x68] sm:$0xff]
        %v11624 = vld [vmem:[%s11 + $0x70] sm:$0xff]
        %v11625 = vld [vmem:[%s11 + $0x78] sm:$0xff]
        %v11626 = vld [vmem:[%s12] sm:$0x1]
        %11627 = vmatpush.msra.mxu0 %v11625
        %11628 = vmatpush.msra.mxu0 %v11624
        %11629 = vmatpush.msra.mxu0 %v11623
        %11630 = vmatpush.msra.mxu0 %v11622
        %11631 = vmatpush.msra.mxu0 %v11621
        %11632 = vmatpush.msra.mxu0 %v11620
        %11633 = vmatpush.msra.mxu0 %v11619
        %11634 = vmatpush.msra.mxu0 %v11618
        %11635 = vmatpush.msra.mxu0 %v11617
        %11636 = vmatpush.msra.mxu0 %v11616
        %11637 = vmatpush.msra.mxu0 %v11615
        %11638 = vmatpush.msra.mxu0 %v11614
        %11639 = vmatpush.msra.mxu0 %v11613
        %11640 = vmatpush.msra.mxu0 %v11612
        %11641 = vmatpush.msra.mxu0 %v11611
        %11642 = vmatpush.msra.mxu0 %v11610
        %11643 = vmatmul.f32.gmra.mxu0 %v11609
        %v11644 = vpop.f32.mrf.mxu0
        %v11645 = vadd.f32 %v11626, %v11644
        %11646 = vdwg.mxu0
        %vm11647 = vcmask 73728
        %v11648 = vsel %vm11647, %v11645, -inf
        %11649 = vmax.xlane.f32.xlu0 %v11648
        %v11650 = vpop.xlane.xlu0 %11649
        %v11651 = vsub.f32 %v11645, %v11650
        %v11652 = vmul.f32 %v11651, 1.442695
        %v11653 = vpow.pop %v11652
        %v11654 = vsel %vm11647, %v11653, 0.0
        %11655 = vadd.xlane.f32.xlu0 %v11654
        %v11656 = vpop.xlane.xlu0 %11655
        %v11657 = vlog2.pop %v11656
        %v11658 = vmul.f32 %v11657, 0.6931472
        %v11659 = vsub.f32 %v11651, %v11658
        %11660 = vst.msk [vmem:[%s432] sm:$0x1] %vm11647, %v11659
        %s11661 = sand.u32 %s313, 1
        %s11662 = scalar_lea.sflag [#allocation3], %s11661
        %s11663 = sand.u32 %s313, 1
        %s11664 = scalar_lea.vmem [#allocation2], %s11663
        // Predicated region
        $region73: #{lenet_forward_fn.1} parent=71 // pred_check
          %p11665 = pneg %p323
        $region74: #{lenet_forward_fn.1} parent=71 // pred_check_branch
          %11667 = sbr.rel (%p11665) target = $region76
        $region75: #{lenet_forward_fn.1} parent=71 // pred_region
          %11669 = vsyncadd %s11662, 0
          %s11670 = scalar_lea.hbm %s13, %s27
          %s11672 = sshll.u32 %s11664, 4
          %s11673 = int_to_ptr.vmem [resolvable:$true] %s11672
          %s11674 = sshll.u32 %s11670, 4
          %s11675 = int_to_ptr.hbm [resolvable:$true] %s11674
          %11677 = dma.vmem_to_hbm [thread:$0]  %s11673, 16, %s11675, %s11662
        $region76: #{lenet_forward_fn.1} parent=71 // pred_fallthru
          _
      $region72: #{lenet_forward_fn.1} parent=5 // pred_fallthru
        _
      %p11678 = scmp.le.s32.totalorder 2, %s22
      // Predicated region
      $region77: #{lenet_forward_fn.1} parent=5 // pred_check
        %p11679 = pneg %p11678
      $region78: #{lenet_forward_fn.1} parent=5 // pred_check_branch
        %11681 = sbr.rel (%p11679) target = $region80
      $region79: #{lenet_forward_fn.1} parent=5 // pred_region
        %s11682 = ssub.s32 %s22, 2
        // Predicated region
        $region81: #{lenet_forward_fn.1} parent=79 // pred_check
          %p11683 = pneg %p329
        $region82: #{lenet_forward_fn.1} parent=79 // pred_check_branch
          %11685 = sbr.rel (%p11683) target = $region84
        $region83: #{lenet_forward_fn.1} parent=79 // pred_region
          %s11686 = sand.u32 %s314, 1
          %s11687 = scalar_lea.sflag [#allocation3], %s11686
          %s11688 = sand.u32 %s314, 1
          %s11689 = scalar_lea.vmem [#allocation2], %s11688
          %11691 = dma.done %s11687, 16
        $region84: #{lenet_forward_fn.1} parent=79 // pred_fallthru
          _
      $region80: #{lenet_forward_fn.1} parent=5 // pred_fallthru
        _
    $region6: #{lenet_forward_fn.1} parent=1 // loop_footer
      %s26 = sadd.s32 1, %s22
    $region7: #{lenet_forward_fn.1} parent=1 // loop_footer_branch
      %21 = sbr.rel target = $region3
    $region8: #{lenet_forward_fn.1} parent=1 // loop_exit
      _
    %11692 = vsyncpa [#allocation3], 1
    %s11693 = scalar_lea.sflag [#allocation3], 1
    %11694 = vsyncpa %s11693, 1

</llo_original>
